<compile_context>
chip_gen: v5e
topology: v5e:2x2
jax: 0.10.0
libtpu: 0.0.40
codegen_flags: <defaults>
</compile_context>

<pallas_src>
import functools

import jax
import jax.numpy as jnp
from jax.experimental import pallas as pl
from jax.experimental.pallas import tpu as pltpu


def _round_up(x, m):
    return (x + m - 1) // m * m


def _pick_row_tile(rows, rows_per_sample, target):
    """Largest tile <= ~target rows that is a multiple of 8 and of whole samples."""
    m = 1
    while (rows_per_sample * m) % 8:
        m += 1
    unit = rows_per_sample * m
    n_units = max(1, min(max(target // unit, 1), max(rows // unit, 1)))
    return unit * n_units


# ----------------------------- Pallas kernels ------------------------------

def _conv_epilogue_kernel(x_ref, w_ref, b_ref, *rest,
                          act, slope, lrn, size, alpha, beta, k):
    """One row tile: o = epilogue(x @ w + b), all in VMEM.

    x/w are bf16, accumulation + epilogue (bias, act, LRN) are f32.
    The LRN cross-channel window sum is a matmul against a small resident band
    matrix (passed as an input with a constant index_map).
    """
    if lrn:
        band_ref, o_ref = rest
    else:
        (o_ref,) = rest

    acc = jnp.dot(x_ref[...], w_ref[...], preferred_element_type=jnp.float32)
    acc = acc + b_ref[...]                                   # (TR, N) + (1, N)
    if act == "leaky_relu":
        acc = jnp.maximum(acc, slope * acc)                  # valid for 0<=slope<=1
    elif act == "relu":
        acc = jnp.maximum(acc, 0.0)

    if lrn:
        ssum = jnp.dot(acc * acc, band_ref[...], preferred_element_type=jnp.float32)
        scale = k + (alpha / size) * ssum                    # >= k = 1
        if beta == 0.75:                                     # s^-0.75 = rsqrt(s)*sqrt(rsqrt(s))
            r = jax.lax.rsqrt(scale)
            acc = acc * (r * jnp.sqrt(r))
        else:
            acc = acc * jnp.exp(-beta * jnp.log(scale))

    o_ref[...] = acc.astype(o_ref.dtype)


def _head_kernel(p_ref, w4_ref, b4_ref, w5_ref, b5_ref, o_ref):
    """conv4(3x3)+ReLU -> conv5(1x1)+ReLU for one lane-dense column tile.

    Operands arrive channel-major / (batch*spatial)-minor, so the (8, Tc) result
    is lane-dense and already column-ordered b*S + s.
    """
    h = jnp.dot(w4_ref[...], p_ref[...], preferred_element_type=jnp.float32)
    h = jnp.maximum(h + b4_ref[...], 0.0)                                  # (16, Tc)
    y = jnp.dot(w5_ref[...], h.astype(w5_ref.dtype),
                preferred_element_type=jnp.float32)
    y = jnp.maximum(y + b5_ref[...], 0.0)                                  # (8, Tc)
    o_ref[...] = y.astype(o_ref.dtype)


# ------------------------------ kernel wrappers -----------------------------

_VMEM_LIMIT = 32 * 1024 * 1024  # safely above default scoped limit, below physical on all gens


def fused_conv_matmul(patches, wmat, bias, *, rows_per_sample,
                      act="leaky_relu", slope=0.01,
                      lrn=False, size=5, alpha=1e-4, beta=0.75, k=1.0,
                      row_target=1024, out_dtype=jnp.bfloat16):
    """act/LRN-fused (R, K) @ (K, N) + b with a row-tiled, parallel 1-D grid."""
    R, K = patches.shape
    K2, N = wmat.shape
    assert K == K2

    # Lane-align the contraction dim (zero rows/cols are numerically free).
    Kp = _round_up(K, 128)
    if Kp != K:
        patches = jnp.pad(patches, ((0, 0), (0, Kp - K)))
        wmat = jnp.pad(wmat, ((0, Kp - K), (0, 0)))

    # bf16 MXU operands; f32 accumulation / epilogue stay inside the kernel.
    patches = patches.astype(jnp.bfloat16)
    wmat = wmat.astype(jnp.bfloat16)
    bias = bias.astype(jnp.float32).reshape(1, N)

    tr = _pick_row_tile(R, rows_per_sample, row_target)
    rp = _round_up(R, tr)
    if rp != R:  # only for odd / leftover batches; whole-sample tiles otherwise
        patches = jnp.pad(patches, ((0, rp - R), (0, 0)))

    in_specs = [pl.BlockSpec((tr, Kp), lambda i: (i, 0)),
                pl.BlockSpec((Kp, N), lambda i: (0, 0)),
                pl.BlockSpec((1, N), lambda i: (0, 0))]
    args = [patches, wmat, bias]
    if lrn:
        half = (size - 1) // 2
        ci = jax.lax.broadcasted_iota(jnp.int32, (N, N), 0)
        cj = jax.lax.broadcasted_iota(jnp.int32, (N, N), 1)
        band = (jnp.abs(ci - cj) <= half).astype(jnp.float32)   # built once, VMEM-resident
        in_specs.append(pl.BlockSpec((N, N), lambda i: (0, 0)))
        args.append(band)

    kern = functools.partial(_conv_epilogue_kernel, act=act, slope=slope,
                             lrn=lrn, size=size, alpha=alpha, beta=beta, k=k)
    out = pl.pallas_call(
        kern,
        out_shape=jax.ShapeDtypeStruct((rp, N), out_dtype),
        grid_spec=pltpu.PrefetchScalarGridSpec(
            num_scalar_prefetch=0,
            grid=(rp // tr,),
            in_specs=in_specs,
            out_specs=pl.BlockSpec((tr, N), lambda i: (i, 0)),
        ),
        compiler_params=pltpu.CompilerParams(
            dimension_semantics=("parallel",),
            vmem_limit_bytes=_VMEM_LIMIT),
    )(*args)
    return out[:R] if rp != R else out


def fused_head(p_all, w4t, b4, w5t, b5, *, col_tile=512):
    """Batched conv4+ReLU+conv5+ReLU over a lane-dense (C, B*S) layout."""
    K4p, BS = p_all.shape
    C4 = w4t.shape[0]
    C5 = w5t.shape[0]
    tc = min(col_tile, _round_up(BS, 128))
    bsp = _round_up(BS, tc)
    if bsp != BS:
        p_all = jnp.pad(p_all, ((0, 0), (0, bsp - BS)))
    out = pl.pallas_call(
        _head_kernel,
        out_shape=jax.ShapeDtypeStruct((C5, bsp), jnp.float32),
        grid_spec=pltpu.PrefetchScalarGridSpec(
            num_scalar_prefetch=0,
            grid=(bsp // tc,),
            in_specs=[pl.BlockSpec((K4p, tc), lambda j: (0, j)),
                      pl.BlockSpec((C4, K4p), lambda j: (0, 0)),
                      pl.BlockSpec((C4, 1), lambda j: (0, 0)),
                      pl.BlockSpec((C5, C4), lambda j: (0, 0)),
                      pl.BlockSpec((C5, 1), lambda j: (0, 0))],
            out_specs=pl.BlockSpec((C5, tc), lambda j: (0, j)),
        ),
        compiler_params=pltpu.CompilerParams(
            dimension_semantics=("parallel",),
            vmem_limit_bytes=_VMEM_LIMIT),
    )(p_all, w4t, b4, w5t, b5)
    return out[:, :BS] if bsp != BS else out


# ------------------------------- JAX glue ----------------------------------

def im2col_nhwc(x, kh, kw, stride, pad):
    """x: [B, H, W, C] -> patches [B*OH*OW, KH*KW*C] (taps outer, C inner)."""
    B, H, W, C = x.shape
    if pad:
        x = jnp.pad(x, ((0, 0), (pad, pad), (pad, pad), (0, 0)))
    Hp, Wp = H + 2 * pad, W + 2 * pad
    OH = (Hp - kh) // stride + 1
    OW = (Wp - kw) // stride + 1
    cols = []
    for i in range(kh):
        for j in range(kw):
            cols.append(x[:, i:i + stride * OH:stride, j:j + stride * OW:stride, :])
    p = jnp.stack(cols, axis=3)                 # [B, OH, OW, KH*KW, C]
    return p.reshape(B * OH * OW, kh * kw * C), OH, OW


def _wmat(w):
    """torch (COUT, CIN, KH, KW) -> (KH*KW*CIN, COUT), tap-major / channel-inner."""
    cout = w.shape[0]
    return jnp.transpose(w, (2, 3, 1, 0)).reshape(-1, cout)


def _wmat_grouped_blockdiag(w, groups):
    """Grouped torch weight -> single block-diagonal (KH*KW*CIN_total, COUT) matrix."""
    cout, cin_g, kh, kw = w.shape
    cout_g = cout // groups
    blocks = []
    for g in range(groups):
        wg = jnp.transpose(w[g * cout_g:(g + 1) * cout_g], (2, 3, 1, 0))  # (kh,kw,cin_g,cout_g)
        row = [jnp.zeros_like(wg)] * groups
        row[g] = wg
        blocks.append(jnp.concatenate(row, axis=3))      # (kh, kw, cin_g, cout)
    wfull = jnp.concatenate(blocks, axis=2)              # (kh, kw, cin_total, cout)
    return wfull.reshape(kh * kw * cin_g * groups, cout)


def itracker_forward(params, x_nchw):
    # bf16 activations everywhere (f32 accumulation/epilogue inside the kernels).
    x = jnp.transpose(x_nchw, (0, 2, 3, 1)).astype(jnp.bfloat16)   # NCHW -> NHWC
    B = x.shape[0]

    # Conv2d(1, 32, k=11, s=4, p=0) + LeakyReLU + CrossMapLRN2d  -- one fused kernel
    p, oh, ow = im2col_nhwc(x, 11, 11, 4, 0)
    x = fused_conv_matmul(p, _wmat(params["w1"]), params["b1"],
                          rows_per_sample=oh * ow, act="leaky_relu", lrn=True)
    x = x.reshape(B, oh, ow, 32)

    # Conv2d(32, 64, k=5, s=1, p=2, groups=2) + LeakyReLU + LRN  -- one fused kernel
    # (both groups folded into a block-diagonal weight -> single N=64 matmul)
    p, oh, ow = im2col_nhwc(x, 5, 5, 1, 2)
    x = fused_conv_matmul(p, _wmat_grouped_blockdiag(params["w2"], 2), params["b2"],
                          rows_per_sample=oh * ow, act="leaky_relu", lrn=True)
    x = x.reshape(B, oh, ow, 64)

    # Conv2d(64, 32, k=5, s=2, p=1) + LeakyReLU
    p, oh, ow = im2col_nhwc(x, 5, 5, 2, 1)
    x = fused_conv_matmul(p, _wmat(params["w3"]), params["b3"],
                          rows_per_sample=oh * ow, act="leaky_relu", lrn=False)
    x = x.reshape(B, oh, ow, 32)

    # Conv2d(32,16,k=3)+ReLU -> Conv2d(16,8,k=1)+ReLU -> NCHW flatten
    # Batched, lane-dense head: operands as (K4, B*S), output (8, B*S).
    p, oh, ow = im2col_nhwc(x, 3, 3, 1, 0)
    S = oh * ow
    K4 = p.shape[1]
    K4p = _round_up(K4, 128)
    p_all = jnp.pad(p, ((0, 0), (0, K4p - K4))).T.astype(jnp.bfloat16)       # (K4p, B*S)
    w4t = jnp.transpose(params["w4"], (0, 2, 3, 1)).reshape(16, K4)          # (16, K4)
    w4t = jnp.pad(w4t, ((0, 0), (0, K4p - K4))).astype(jnp.bfloat16)
    w5t = params["w5"].reshape(8, 16).astype(jnp.bfloat16)
    out = fused_head(p_all, w4t,
                     params["b4"].reshape(16, 1).astype(jnp.float32),
                     w5t,
                     params["b5"].reshape(8, 1).astype(jnp.float32))         # (8, B*S)
    # columns are ordered b*S + s -> restore torch .view(B, -1) NCHW order
    out = out.reshape(8, B, S)
    return jnp.transpose(out, (1, 0, 2)).reshape(B, 8 * S)


# --------------------------------- main -------------------------------------

if __name__ == "__main__":
    key = jax.random.PRNGKey(0)
    keys = jax.random.split(key, 11)

    def init(k_, shape, scale=0.05):
        return (scale * jax.random.normal(k_, shape)).astype(jnp.float32)

    params = {
        "w1": init(keys[0], (32, 1, 11, 11)),  "b1": init(keys[1], (32,)),
        "w2": init(keys[2], (64, 16, 5, 5)),   "b2": init(keys[3], (64,)),
        "w3": init(keys[4], (32, 64, 5, 5)),   "b3": init(keys[5], (32,)),
        "w4": init(keys[6], (16, 32, 3, 3)),   "b4": init(keys[7], (16,)),
        "w5": init(keys[8], (8, 16, 1, 1)),    "b5": init(keys[9], (8,)),
    }

    # 63x63 grayscale input -> conv stack spatial sizes 14 -> 14 -> 6 -> 4 -> 4
    x = jax.random.normal(keys[10], (2, 1, 63, 63), dtype=jnp.float32)

    out = jax.jit(itracker_forward)(params, x)
    jax.block_until_ready(out)
    assert out.shape == (2, 8 * 4 * 4), out.shape
    print("KERNEL_OK")
</pallas_src>

<mosaic_0001>
module attributes {stable_mosaic.version = 11 : i64} {
  func.func @_conv_epilogue_kernel(%arg0: i32, %arg1: memref<392x128xbf16, #tpu.memory_space<vmem>>, %arg2: memref<128x32xbf16, #tpu.memory_space<vmem>>, %arg3: memref<1x32xf32, #tpu.memory_space<vmem>>, %arg4: memref<32x32xf32, #tpu.memory_space<vmem>>, %arg5: memref<392x32xbf16, #tpu.memory_space<vmem>>) attributes {dimension_semantics = [#tpu.dimension_semantics<parallel>], iteration_bounds = array<i64: 1>, scalar_prefetch = 0 : i64, scratch_operands = 0 : i64, tpu.core_type = #tpu.core_type<tc>, window_params = [{transform_indices = @transform_0, window_bounds = array<i64: 392, 128>}, {pipeline_mode = #tpu.pipeline_mode<synchronous>, transform_indices = @transform_1, window_bounds = array<i64: 128, 32>}, {pipeline_mode = #tpu.pipeline_mode<synchronous>, transform_indices = @transform_2, window_bounds = array<i64: 1, 32>}, {pipeline_mode = #tpu.pipeline_mode<synchronous>, transform_indices = @transform_3, window_bounds = array<i64: 32, 32>}, {transform_indices = @transform_4, window_bounds = array<i64: 392, 32>}]} {
    %c0 = arith.constant 0 : index
    %c0_0 = arith.constant 0 : index
    %0 = vector.load %arg1[%c0, %c0_0] : memref<392x128xbf16, #tpu.memory_space<vmem>>, vector<392x128xbf16>
    %c0_1 = arith.constant 0 : index
    %c0_2 = arith.constant 0 : index
    %1 = vector.load %arg2[%c0_1, %c0_2] : memref<128x32xbf16, #tpu.memory_space<vmem>>, vector<128x32xbf16>
    %cst = arith.constant dense<0.000000e+00> : vector<392x32xf32>
    %2 = tpu.matmul %0, %1, %cst {dimension_numbers = #tpu.dot_dimension_numbers<[1], [0], [0], [1], [0, 0, 1, 1], [], []>} : vector<392x128xbf16>, vector<128x32xbf16>, vector<392x32xf32> -> vector<392x32xf32>
    %c0_3 = arith.constant 0 : index
    %c0_4 = arith.constant 0 : index
    %3 = vector.load %arg3[%c0_3, %c0_4] : memref<1x32xf32, #tpu.memory_space<vmem>>, vector<1x32xf32>
    %4 = vector.broadcast %3 : vector<1x32xf32> to vector<392x32xf32>
    %5 = arith.addf %2, %4 : vector<392x32xf32>
    %cst_5 = arith.constant 0.00999999977 : f32
    %6 = vector.broadcast %cst_5 : f32 to vector<392x32xf32>
    %7 = arith.mulf %6, %5 : vector<392x32xf32>
    %8 = arith.maximumf %5, %7 : vector<392x32xf32>
    %9 = arith.mulf %8, %8 : vector<392x32xf32>
    %c0_6 = arith.constant 0 : index
    %c0_7 = arith.constant 0 : index
    %10 = vector.load %arg4[%c0_6, %c0_7] : memref<32x32xf32, #tpu.memory_space<vmem>>, vector<32x32xf32>
    %cst_8 = arith.constant dense<0.000000e+00> : vector<392x32xf32>
    %11 = tpu.matmul %9, %10, %cst_8 {dimension_numbers = #tpu.dot_dimension_numbers<[1], [0], [0], [1], [0, 0, 1, 1], [], []>} : vector<392x32xf32>, vector<32x32xf32>, vector<392x32xf32> -> vector<392x32xf32>
    %cst_9 = arith.constant 2.000000e-05 : f32
    %12 = vector.broadcast %cst_9 : f32 to vector<392x32xf32>
    %13 = arith.mulf %12, %11 : vector<392x32xf32>
    %cst_10 = arith.constant 1.000000e+00 : f32
    %14 = vector.broadcast %cst_10 : f32 to vector<392x32xf32>
    %15 = arith.addf %14, %13 : vector<392x32xf32>
    %16 = math.rsqrt %15 : vector<392x32xf32>
    %17 = math.sqrt %16 : vector<392x32xf32>
    %18 = arith.mulf %16, %17 : vector<392x32xf32>
    %19 = arith.mulf %8, %18 : vector<392x32xf32>
    %20 = arith.truncf %19 : vector<392x32xf32> to vector<392x32xbf16>
    %c0_11 = arith.constant 0 : index
    %c0_12 = arith.constant 0 : index
    %21 = vector.load %arg5[%c0_11, %c0_12] : memref<392x32xbf16, #tpu.memory_space<vmem>>, vector<392x32xbf16>
    tpu.vector_store %arg5[%c0_11, %c0_12], %20 {strides = array<i32>} : memref<392x32xbf16, #tpu.memory_space<vmem>>, vector<392x32xbf16>,
    return
  }
  func.func @transform_0(%arg0: i32) -> (i32, i32) {
    %c0_i32 = arith.constant 0 : i32
    %c0_i32_0 = arith.constant 0 : i32
    return %arg0, %c0_i32 : i32, i32
  }
  func.func @transform_1(%arg0: i32) -> (i32, i32) {
    %c0_i32 = arith.constant 0 : i32
    %c0_i32_0 = arith.constant 0 : i32
    %c0_i32_1 = arith.constant 0 : i32
    return %c0_i32, %c0_i32_0 : i32, i32
  }
  func.func @transform_2(%arg0: i32) -> (i32, i32) {
    %c0_i32 = arith.constant 0 : i32
    %c0_i32_0 = arith.constant 0 : i32
    %c0_i32_1 = arith.constant 0 : i32
    return %c0_i32, %c0_i32_0 : i32, i32
  }
  func.func @transform_3(%arg0: i32) -> (i32, i32) {
    %c0_i32 = arith.constant 0 : i32
    %c0_i32_0 = arith.constant 0 : i32
    %c0_i32_1 = arith.constant 0 : i32
    return %c0_i32, %c0_i32_0 : i32, i32
  }
  func.func @transform_4(%arg0: i32) -> (i32, i32) {
    %c0_i32 = arith.constant 0 : i32
    %c0_i32_0 = arith.constant 0 : i32
    return %arg0, %c0_i32 : i32, i32
  }
}

module attributes {stable_mosaic.version = 11 : i64} {
  func.func @_conv_epilogue_kernel(%arg0: i32, %arg1: memref<392x896xbf16, #tpu.memory_space<vmem>>, %arg2: memref<896x64xbf16, #tpu.memory_space<vmem>>, %arg3: memref<1x64xf32, #tpu.memory_space<vmem>>, %arg4: memref<64x64xf32, #tpu.memory_space<vmem>>, %arg5: memref<392x64xbf16, #tpu.memory_space<vmem>>) attributes {dimension_semantics = [#tpu.dimension_semantics<parallel>], iteration_bounds = array<i64: 1>, scalar_prefetch = 0 : i64, scratch_operands = 0 : i64, tpu.core_type = #tpu.core_type<tc>, window_params = [{transform_indices = @transform_0, window_bounds = array<i64: 392, 896>}, {pipeline_mode = #tpu.pipeline_mode<synchronous>, transform_indices = @transform_1, window_bounds = array<i64: 896, 64>}, {pipeline_mode = #tpu.pipeline_mode<synchronous>, transform_indices = @transform_2, window_bounds = array<i64: 1, 64>}, {pipeline_mode = #tpu.pipeline_mode<synchronous>, transform_indices = @transform_3, window_bounds = array<i64: 64, 64>}, {transform_indices = @transform_4, window_bounds = array<i64: 392, 64>}]} {
    %c0 = arith.constant 0 : index
    %c0_0 = arith.constant 0 : index
    %0 = vector.load %arg1[%c0, %c0_0] : memref<392x896xbf16, #tpu.memory_space<vmem>>, vector<392x896xbf16>
    %c0_1 = arith.constant 0 : index
    %c0_2 = arith.constant 0 : index
    %1 = vector.load %arg2[%c0_1, %c0_2] : memref<896x64xbf16, #tpu.memory_space<vmem>>, vector<896x64xbf16>
    %cst = arith.constant dense<0.000000e+00> : vector<392x64xf32>
    %2 = tpu.matmul %0, %1, %cst {dimension_numbers = #tpu.dot_dimension_numbers<[1], [0], [0], [1], [0, 0, 1, 1], [], []>} : vector<392x896xbf16>, vector<896x64xbf16>, vector<392x64xf32> -> vector<392x64xf32>
    %c0_3 = arith.constant 0 : index
    %c0_4 = arith.constant 0 : index
    %3 = vector.load %arg3[%c0_3, %c0_4] : memref<1x64xf32, #tpu.memory_space<vmem>>, vector<1x64xf32>
    %4 = vector.broadcast %3 : vector<1x64xf32> to vector<392x64xf32>
    %5 = arith.addf %2, %4 : vector<392x64xf32>
    %cst_5 = arith.constant 0.00999999977 : f32
    %6 = vector.broadcast %cst_5 : f32 to vector<392x64xf32>
    %7 = arith.mulf %6, %5 : vector<392x64xf32>
    %8 = arith.maximumf %5, %7 : vector<392x64xf32>
    %9 = arith.mulf %8, %8 : vector<392x64xf32>
    %c0_6 = arith.constant 0 : index
    %c0_7 = arith.constant 0 : index
    %10 = vector.load %arg4[%c0_6, %c0_7] : memref<64x64xf32, #tpu.memory_space<vmem>>, vector<64x64xf32>
    %cst_8 = arith.constant dense<0.000000e+00> : vector<392x64xf32>
    %11 = tpu.matmul %9, %10, %cst_8 {dimension_numbers = #tpu.dot_dimension_numbers<[1], [0], [0], [1], [0, 0, 1, 1], [], []>} : vector<392x64xf32>, vector<64x64xf32>, vector<392x64xf32> -> vector<392x64xf32>
    %cst_9 = arith.constant 2.000000e-05 : f32
    %12 = vector.broadcast %cst_9 : f32 to vector<392x64xf32>
    %13 = arith.mulf %12, %11 : vector<392x64xf32>
    %cst_10 = arith.constant 1.000000e+00 : f32
    %14 = vector.broadcast %cst_10 : f32 to vector<392x64xf32>
    %15 = arith.addf %14, %13 : vector<392x64xf32>
    %16 = math.rsqrt %15 : vector<392x64xf32>
    %17 = math.sqrt %16 : vector<392x64xf32>
    %18 = arith.mulf %16, %17 : vector<392x64xf32>
    %19 = arith.mulf %8, %18 : vector<392x64xf32>
    %20 = arith.truncf %19 : vector<392x64xf32> to vector<392x64xbf16>
    %c0_11 = arith.constant 0 : index
    %c0_12 = arith.constant 0 : index
    %21 = vector.load %arg5[%c0_11, %c0_12] : memref<392x64xbf16, #tpu.memory_space<vmem>>, vector<392x64xbf16>
    tpu.vector_store %arg5[%c0_11, %c0_12], %20 {strides = array<i32>} : memref<392x64xbf16, #tpu.memory_space<vmem>>, vector<392x64xbf16>,
    return
  }
  func.func @transform_0(%arg0: i32) -> (i32, i32) {
    %c0_i32 = arith.constant 0 : i32
    %c0_i32_0 = arith.constant 0 : i32
    return %arg0, %c0_i32 : i32, i32
  }
  func.func @transform_1(%arg0: i32) -> (i32, i32) {
    %c0_i32 = arith.constant 0 : i32
    %c0_i32_0 = arith.constant 0 : i32
    %c0_i32_1 = arith.constant 0 : i32
    return %c0_i32, %c0_i32_0 : i32, i32
  }
  func.func @transform_2(%arg0: i32) -> (i32, i32) {
    %c0_i32 = arith.constant 0 : i32
    %c0_i32_0 = arith.constant 0 : i32
    %c0_i32_1 = arith.constant 0 : i32
    return %c0_i32, %c0_i32_0 : i32, i32
  }
  func.func @transform_3(%arg0: i32) -> (i32, i32) {
    %c0_i32 = arith.constant 0 : i32
    %c0_i32_0 = arith.constant 0 : i32
    %c0_i32_1 = arith.constant 0 : i32
    return %c0_i32, %c0_i32_0 : i32, i32
  }
  func.func @transform_4(%arg0: i32) -> (i32, i32) {
    %c0_i32 = arith.constant 0 : i32
    %c0_i32_0 = arith.constant 0 : i32
    return %arg0, %c0_i32 : i32, i32
  }
}

module attributes {stable_mosaic.version = 11 : i64} {
  func.func @_conv_epilogue_kernel(%arg0: i32, %arg1: memref<72x1664xbf16, #tpu.memory_space<vmem>>, %arg2: memref<1664x32xbf16, #tpu.memory_space<vmem>>, %arg3: memref<1x32xf32, #tpu.memory_space<vmem>>, %arg4: memref<72x32xbf16, #tpu.memory_space<vmem>>) attributes {dimension_semantics = [#tpu.dimension_semantics<parallel>], iteration_bounds = array<i64: 1>, scalar_prefetch = 0 : i64, scratch_operands = 0 : i64, tpu.core_type = #tpu.core_type<tc>, window_params = [{transform_indices = @transform_0, window_bounds = array<i64: 72, 1664>}, {pipeline_mode = #tpu.pipeline_mode<synchronous>, transform_indices = @transform_1, window_bounds = array<i64: 1664, 32>}, {pipeline_mode = #tpu.pipeline_mode<synchronous>, transform_indices = @transform_2, window_bounds = array<i64: 1, 32>}, {transform_indices = @transform_3, window_bounds = array<i64: 72, 32>}]} {
    %c0 = arith.constant 0 : index
    %c0_0 = arith.constant 0 : index
    %0 = vector.load %arg1[%c0, %c0_0] : memref<72x1664xbf16, #tpu.memory_space<vmem>>, vector<72x1664xbf16>
    %c0_1 = arith.constant 0 : index
    %c0_2 = arith.constant 0 : index
    %1 = vector.load %arg2[%c0_1, %c0_2] : memref<1664x32xbf16, #tpu.memory_space<vmem>>, vector<1664x32xbf16>
    %cst = arith.constant dense<0.000000e+00> : vector<72x32xf32>
    %2 = tpu.matmul %0, %1, %cst {dimension_numbers = #tpu.dot_dimension_numbers<[1], [0], [0], [1], [0, 0, 1, 1], [], []>} : vector<72x1664xbf16>, vector<1664x32xbf16>, vector<72x32xf32> -> vector<72x32xf32>
    %c0_3 = arith.constant 0 : index
    %c0_4 = arith.constant 0 : index
    %3 = vector.load %arg3[%c0_3, %c0_4] : memref<1x32xf32, #tpu.memory_space<vmem>>, vector<1x32xf32>
    %4 = vector.broadcast %3 : vector<1x32xf32> to vector<72x32xf32>
    %5 = arith.addf %2, %4 : vector<72x32xf32>
    %cst_5 = arith.constant 0.00999999977 : f32
    %6 = vector.broadcast %cst_5 : f32 to vector<72x32xf32>
    %7 = arith.mulf %6, %5 : vector<72x32xf32>
    %8 = arith.maximumf %5, %7 : vector<72x32xf32>
    %9 = arith.truncf %8 : vector<72x32xf32> to vector<72x32xbf16>
    %c0_6 = arith.constant 0 : index
    %c0_7 = arith.constant 0 : index
    %10 = vector.load %arg4[%c0_6, %c0_7] : memref<72x32xbf16, #tpu.memory_space<vmem>>, vector<72x32xbf16>
    tpu.vector_store %arg4[%c0_6, %c0_7], %9 {strides = array<i32>} : memref<72x32xbf16, #tpu.memory_space<vmem>>, vector<72x32xbf16>,
    return
  }
  func.func @transform_0(%arg0: i32) -> (i32, i32) {
    %c0_i32 = arith.constant 0 : i32
    %c0_i32_0 = arith.constant 0 : i32
    return %arg0, %c0_i32 : i32, i32
  }
  func.func @transform_1(%arg0: i32) -> (i32, i32) {
    %c0_i32 = arith.constant 0 : i32
    %c0_i32_0 = arith.constant 0 : i32
    %c0_i32_1 = arith.constant 0 : i32
    return %c0_i32, %c0_i32_0 : i32, i32
  }
  func.func @transform_2(%arg0: i32) -> (i32, i32) {
    %c0_i32 = arith.constant 0 : i32
    %c0_i32_0 = arith.constant 0 : i32
    %c0_i32_1 = arith.constant 0 : i32
    return %c0_i32, %c0_i32_0 : i32, i32
  }
  func.func @transform_3(%arg0: i32) -> (i32, i32) {
    %c0_i32 = arith.constant 0 : i32
    %c0_i32_0 = arith.constant 0 : i32
    return %arg0, %c0_i32 : i32, i32
  }
}

module attributes {stable_mosaic.version = 11 : i64} {
  func.func @_head_kernel(%arg0: i32, %arg1: memref<384x128xbf16, #tpu.memory_space<vmem>>, %arg2: memref<16x384xbf16, #tpu.memory_space<vmem>>, %arg3: memref<16x1xf32, #tpu.memory_space<vmem>>, %arg4: memref<8x16xbf16, #tpu.memory_space<vmem>>, %arg5: memref<8x1xf32, #tpu.memory_space<vmem>>, %arg6: memref<8x128xf32, #tpu.memory_space<vmem>>) attributes {dimension_semantics = [#tpu.dimension_semantics<parallel>], iteration_bounds = array<i64: 1>, scalar_prefetch = 0 : i64, scratch_operands = 0 : i64, tpu.core_type = #tpu.core_type<tc>, window_params = [{transform_indices = @transform_0, window_bounds = array<i64: 384, 128>}, {pipeline_mode = #tpu.pipeline_mode<synchronous>, transform_indices = @transform_1, window_bounds = array<i64: 16, 384>}, {pipeline_mode = #tpu.pipeline_mode<synchronous>, transform_indices = @transform_2, window_bounds = array<i64: 16, 1>}, {pipeline_mode = #tpu.pipeline_mode<synchronous>, transform_indices = @transform_3, window_bounds = array<i64: 8, 16>}, {pipeline_mode = #tpu.pipeline_mode<synchronous>, transform_indices = @transform_4, window_bounds = array<i64: 8, 1>}, {transform_indices = @transform_5, window_bounds = array<i64: 8, 128>}]} {
    %c0 = arith.constant 0 : index
    %c0_0 = arith.constant 0 : index
    %0 = vector.load %arg2[%c0, %c0_0] : memref<16x384xbf16, #tpu.memory_space<vmem>>, vector<16x384xbf16>
    %c0_1 = arith.constant 0 : index
    %c0_2 = arith.constant 0 : index
    %1 = vector.load %arg1[%c0_1, %c0_2] : memref<384x128xbf16, #tpu.memory_space<vmem>>, vector<384x128xbf16>
    %cst = arith.constant dense<0.000000e+00> : vector<16x128xf32>
    %2 = tpu.matmul %0, %1, %cst {dimension_numbers = #tpu.dot_dimension_numbers<[1], [0], [0], [1], [0, 0, 1, 1], [], []>} : vector<16x384xbf16>, vector<384x128xbf16>, vector<16x128xf32> -> vector<16x128xf32>
    %c0_3 = arith.constant 0 : index
    %c0_4 = arith.constant 0 : index
    %3 = vector.load %arg3[%c0_3, %c0_4] : memref<16x1xf32, #tpu.memory_space<vmem>>, vector<16x1xf32>
    %4 = vector.broadcast %3 : vector<16x1xf32> to vector<16x128xf32>
    %5 = arith.addf %2, %4 : vector<16x128xf32>
    %cst_5 = arith.constant 0.000000e+00 : f32
    %6 = vector.broadcast %cst_5 : f32 to vector<16x128xf32>
    %7 = arith.maximumf %5, %6 : vector<16x128xf32>
    %c0_6 = arith.constant 0 : index
    %c0_7 = arith.constant 0 : index
    %8 = vector.load %arg4[%c0_6, %c0_7] : memref<8x16xbf16, #tpu.memory_space<vmem>>, vector<8x16xbf16>
    %9 = arith.truncf %7 : vector<16x128xf32> to vector<16x128xbf16>
    %cst_8 = arith.constant dense<0.000000e+00> : vector<8x128xf32>
    %10 = tpu.matmul %8, %9, %cst_8 {dimension_numbers = #tpu.dot_dimension_numbers<[1], [0], [0], [1], [0, 0, 1, 1], [], []>} : vector<8x16xbf16>, vector<16x128xbf16>, vector<8x128xf32> -> vector<8x128xf32>
    %c0_9 = arith.constant 0 : index
    %c0_10 = arith.constant 0 : index
    %11 = vector.load %arg5[%c0_9, %c0_10] : memref<8x1xf32, #tpu.memory_space<vmem>>, vector<8x1xf32>
    %12 = vector.broadcast %11 : vector<8x1xf32> to vector<8x128xf32>
    %13 = arith.addf %10, %12 : vector<8x128xf32>
    %cst_11 = arith.constant 0.000000e+00 : f32
    %14 = vector.broadcast %cst_11 : f32 to vector<8x128xf32>
    %15 = arith.maximumf %13, %14 : vector<8x128xf32>
    %c0_12 = arith.constant 0 : index
    %c0_13 = arith.constant 0 : index
    %16 = vector.load %arg6[%c0_12, %c0_13] : memref<8x128xf32, #tpu.memory_space<vmem>>, vector<8x128xf32>
    tpu.vector_store %arg6[%c0_12, %c0_13], %15 {strides = array<i32>} : memref<8x128xf32, #tpu.memory_space<vmem>>, vector<8x128xf32>,
    return
  }
  func.func @transform_0(%arg0: i32) -> (i32, i32) {
    %c0_i32 = arith.constant 0 : i32
    %c0_i32_0 = arith.constant 0 : i32
    return %c0_i32, %arg0 : i32, i32
  }
  func.func @transform_1(%arg0: i32) -> (i32, i32) {
    %c0_i32 = arith.constant 0 : i32
    %c0_i32_0 = arith.constant 0 : i32
    %c0_i32_1 = arith.constant 0 : i32
    return %c0_i32, %c0_i32_0 : i32, i32
  }
  func.func @transform_2(%arg0: i32) -> (i32, i32) {
    %c0_i32 = arith.constant 0 : i32
    %c0_i32_0 = arith.constant 0 : i32
    %c0_i32_1 = arith.constant 0 : i32
    return %c0_i32, %c0_i32_0 : i32, i32
  }
  func.func @transform_3(%arg0: i32) -> (i32, i32) {
    %c0_i32 = arith.constant 0 : i32
    %c0_i32_0 = arith.constant 0 : i32
    %c0_i32_1 = arith.constant 0 : i32
    return %c0_i32, %c0_i32_0 : i32, i32
  }
  func.func @transform_4(%arg0: i32) -> (i32, i32) {
    %c0_i32 = arith.constant 0 : i32
    %c0_i32_0 = arith.constant 0 : i32
    %c0_i32_1 = arith.constant 0 : i32
    return %c0_i32, %c0_i32_0 : i32, i32
  }
  func.func @transform_5(%arg0: i32) -> (i32, i32) {
    %c0_i32 = arith.constant 0 : i32
    %c0_i32_0 = arith.constant 0 : i32
    return %c0_i32, %arg0 : i32, i32
  }
}

</mosaic_0001>

<llo_original>
// kernel: itracker_forward.4
$region0: #{itracker_forward.4}
  #allocation0 [shape = 'u32[]', space=smem, size = 0x4, offset = 0x4, fixed_abs, tag = 'smem constant byte address 0x4 - core index']
  #allocation1 [shape = 'u32[72,128]{1,0:T(1,128)}', space=vmem, size = 0x9000, scoped, tag = 'internal scratch']
  %s0 = inlined_call_operand.vmem [shape: bf16[392,128], index: 0, kind: input, shape index: {}]
  %s1 = inlined_call_operand.vmem [shape: bf16[128,32], index: 1, kind: input, shape index: {}]
  %s2 = inlined_call_operand.vmem [shape: f32[1,32], index: 2, kind: input, shape index: {}]
  %s3 = inlined_call_operand.vmem [shape: f32[32,32], index: 3, kind: input, shape index: {}]
  %s4 = inlined_call_operand.vmem [shape: bf16[392,32], index: 4, kind: output, shape index: {}]
  %s5 = sld [smem:[#allocation0]]
  $region26: #{itracker_forward.4} parent=0
    _
  %s7 = ssub.s32 1, %s5
  %s8 = scalar_select 0, %s7, %s5
  // Predicated region
  $region2: #{itracker_forward.4} parent=0 // pred_check
    _
  $region3: #{itracker_forward.4} parent=0 // pred_check_branch
    %10 = sbr.rel (0) target = $region5
  $region4: #{itracker_forward.4} parent=0 // pred_region
    _
  $region5: #{itracker_forward.4} parent=0 // pred_fallthru
    _
  // Predicated region
  $region6: #{itracker_forward.4} parent=0 // pred_check
    _
  $region7: #{itracker_forward.4} parent=0 // pred_check_branch
    %12 = sbr.rel (0) target = $region9
  $region8: #{itracker_forward.4} parent=0 // pred_region
    _
  $region9: #{itracker_forward.4} parent=0 // pred_fallthru
    _
  // Predicated region
  $region10: #{itracker_forward.4} parent=0 // pred_check
    _
  $region11: #{itracker_forward.4} parent=0 // pred_check_branch
    %14 = sbr.rel (0) target = $region13
  $region12: #{itracker_forward.4} parent=0 // pred_region
    _
  $region13: #{itracker_forward.4} parent=0 // pred_fallthru
    _
  // Predicated region
  $region14: #{itracker_forward.4} parent=0 // pred_check
    _
  $region15: #{itracker_forward.4} parent=0 // pred_check_branch
    %16 = sbr.rel (0) target = $region17
  $region16: #{itracker_forward.4} parent=0 // pred_region
    _
  $region17: #{itracker_forward.4} parent=0 // pred_fallthru
    _
  %v17 = vld [vmem:[%s0] sm:$0xf]
  %v18 = vld [vmem:[%s0 + $0x4] sm:$0xf]
  %v19 = vld [vmem:[%s0 + $0x8] sm:$0xf]
  %v20 = vld [vmem:[%s0 + $0xc] sm:$0xf]
  %v21 = vld [vmem:[%s0 + $0x10] sm:$0xf]
  %v22 = vld [vmem:[%s0 + $0x14] sm:$0xf]
  %v23 = vld [vmem:[%s0 + $0x18] sm:$0xf]
  %v24 = vld [vmem:[%s0 + $0x1c] sm:$0xf]
  %v25 = vld [vmem:[%s0 + $0x20] sm:$0xf]
  %v26 = vld [vmem:[%s0 + $0x24] sm:$0xf]
  %v27 = vld [vmem:[%s0 + $0x28] sm:$0xf]
  %v28 = vld [vmem:[%s0 + $0x2c] sm:$0xf]
  %v29 = vld [vmem:[%s0 + $0x30] sm:$0xf]
  %v30 = vld [vmem:[%s0 + $0x34] sm:$0xf]
  %v31 = vld [vmem:[%s0 + $0x38] sm:$0xf]
  %v32 = vld [vmem:[%s0 + $0x3c] sm:$0xf]
  %v33 = vld [vmem:[%s0 + $0x40] sm:$0xf]
  %v34 = vld [vmem:[%s0 + $0x44] sm:$0xf]
  %v35 = vld [vmem:[%s0 + $0x48] sm:$0xf]
  %v36 = vld [vmem:[%s0 + $0x4c] sm:$0xf]
  %v37 = vld [vmem:[%s0 + $0x50] sm:$0xf]
  %v38 = vld [vmem:[%s0 + $0x54] sm:$0xf]
  %v39 = vld [vmem:[%s0 + $0x58] sm:$0xf]
  %v40 = vld [vmem:[%s0 + $0x5c] sm:$0xf]
  %v41 = vld [vmem:[%s0 + $0x60] sm:$0xf]
  %v42 = vld [vmem:[%s0 + $0x64] sm:$0xf]
  %v43 = vld [vmem:[%s0 + $0x68] sm:$0xf]
  %v44 = vld [vmem:[%s0 + $0x6c] sm:$0xf]
  %v45 = vld [vmem:[%s0 + $0x70] sm:$0xf]
  %v46 = vld [vmem:[%s0 + $0x74] sm:$0xf]
  %v47 = vld [vmem:[%s0 + $0x78] sm:$0xf]
  %v48 = vld [vmem:[%s0 + $0x7c] sm:$0xf]
  %v49 = vld [vmem:[%s0 + $0x80] sm:$0xf]
  %v50 = vld [vmem:[%s0 + $0x84] sm:$0xf]
  %v51 = vld [vmem:[%s0 + $0x88] sm:$0xf]
  %v52 = vld [vmem:[%s0 + $0x8c] sm:$0xf]
  %v53 = vld [vmem:[%s0 + $0x90] sm:$0xf]
  %v54 = vld [vmem:[%s0 + $0x94] sm:$0xf]
  %v55 = vld [vmem:[%s0 + $0x98] sm:$0xf]
  %v56 = vld [vmem:[%s0 + $0x9c] sm:$0xf]
  %v57 = vld [vmem:[%s0 + $0xa0] sm:$0xf]
  %v58 = vld [vmem:[%s0 + $0xa4] sm:$0xf]
  %v59 = vld [vmem:[%s0 + $0xa8] sm:$0xf]
  %v60 = vld [vmem:[%s0 + $0xac] sm:$0xf]
  %v61 = vld [vmem:[%s0 + $0xb0] sm:$0xf]
  %v62 = vld [vmem:[%s0 + $0xb4] sm:$0xf]
  %v63 = vld [vmem:[%s0 + $0xb8] sm:$0xf]
  %v64 = vld [vmem:[%s0 + $0xbc] sm:$0xf]
  %v65 = vld [vmem:[%s0 + $0xc0] sm:$0xf]
  %v66 = vld [vmem:[%s1] sm:$0xf]
  %v67 = vld [vmem:[%s1 + $0x4] sm:$0xf]
  %v68 = vld [vmem:[%s1 + $0x8] sm:$0xf]
  %v69 = vld [vmem:[%s1 + $0xc] sm:$0xf]
  %v70 = vld [vmem:[%s1 + $0x10] sm:$0xf]
  %v71 = vld [vmem:[%s1 + $0x14] sm:$0xf]
  %v72 = vld [vmem:[%s1 + $0x18] sm:$0xf]
  %v73 = vld [vmem:[%s1 + $0x1c] sm:$0xf]
  %v74 = vld [vmem:[%s1 + $0x20] sm:$0xf]
  %v75 = vld [vmem:[%s1 + $0x24] sm:$0xf]
  %v76 = vld [vmem:[%s1 + $0x28] sm:$0xf]
  %v77 = vld [vmem:[%s1 + $0x2c] sm:$0xf]
  %v78 = vld [vmem:[%s1 + $0x30] sm:$0xf]
  %v79 = vld [vmem:[%s1 + $0x34] sm:$0xf]
  %v80 = vld [vmem:[%s1 + $0x38] sm:$0xf]
  %v81 = vld [vmem:[%s1 + $0x3c] sm:$0xf]
  %v82 = vld [vmem:[%s2] sm:$0x1]
  %v84 = vperm.slane %v82, 0
  %v135 = vunpack.c.l.b16 %v17
  %v136 = vunpack.c.l.b16 %v18
  %v137 = vunpack.c.l.b16 %v19
  %v138 = vunpack.c.l.b16 %v20
  %v139 = vunpack.c.l.b16 %v21
  %v140 = vunpack.c.l.b16 %v22
  %v141 = vunpack.c.l.b16 %v23
  %v142 = vunpack.c.l.b16 %v24
  %v143 = vunpack.c.l.b16 %v25
  %v144 = vunpack.c.l.b16 %v26
  %v145 = vunpack.c.l.b16 %v27
  %v146 = vunpack.c.l.b16 %v28
  %v147 = vunpack.c.l.b16 %v29
  %v148 = vunpack.c.l.b16 %v30
  %v149 = vunpack.c.l.b16 %v31
  %v150 = vunpack.c.l.b16 %v32
  %v151 = vunpack.c.l.b16 %v33
  %v152 = vunpack.c.l.b16 %v34
  %v153 = vunpack.c.l.b16 %v35
  %v154 = vunpack.c.l.b16 %v36
  %v155 = vunpack.c.l.b16 %v37
  %v156 = vunpack.c.l.b16 %v38
  %v157 = vunpack.c.l.b16 %v39
  %v158 = vunpack.c.l.b16 %v40
  %v159 = vunpack.c.l.b16 %v41
  %v160 = vunpack.c.l.b16 %v42
  %v161 = vunpack.c.l.b16 %v43
  %v162 = vunpack.c.l.b16 %v44
  %v163 = vunpack.c.l.b16 %v45
  %v164 = vunpack.c.l.b16 %v46
  %v165 = vunpack.c.l.b16 %v47
  %v166 = vunpack.c.l.b16 %v48
  %v167 = vunpack.c.l.b16 %v49
  %v168 = vunpack.c.l.b16 %v50
  %v169 = vunpack.c.l.b16 %v51
  %v170 = vunpack.c.l.b16 %v52
  %v171 = vunpack.c.l.b16 %v53
  %v172 = vunpack.c.l.b16 %v54
  %v173 = vunpack.c.l.b16 %v55
  %v174 = vunpack.c.l.b16 %v56
  %v175 = vunpack.c.l.b16 %v57
  %v176 = vunpack.c.l.b16 %v58
  %v177 = vunpack.c.l.b16 %v59
  %v178 = vunpack.c.l.b16 %v60
  %v179 = vunpack.c.l.b16 %v61
  %v180 = vunpack.c.l.b16 %v62
  %v181 = vunpack.c.l.b16 %v63
  %v182 = vunpack.c.l.b16 %v64
  %v183 = vunpack.c.l.b16 %v65
  %v184 = vpack.c.b16 %v136, %v135
  %v185 = vpack.c.b16 %v138, %v137
  %v186 = vpack.c.b16 %v140, %v139
  %v187 = vpack.c.b16 %v142, %v141
  %v188 = vpack.c.b16 %v144, %v143
  %v189 = vpack.c.b16 %v146, %v145
  %v190 = vpack.c.b16 %v148, %v147
  %v191 = vpack.c.b16 %v150, %v149
  %v192 = vpack.c.b16 %v152, %v151
  %v193 = vpack.c.b16 %v154, %v153
  %v194 = vpack.c.b16 %v156, %v155
  %v195 = vpack.c.b16 %v158, %v157
  %v196 = vpack.c.b16 %v160, %v159
  %v197 = vpack.c.b16 %v162, %v161
  %v198 = vpack.c.b16 %v164, %v163
  %v199 = vpack.c.b16 %v166, %v165
  %v200 = vpack.c.b16 %v168, %v167
  %v201 = vpack.c.b16 %v170, %v169
  %v202 = vpack.c.b16 %v172, %v171
  %v203 = vpack.c.b16 %v174, %v173
  %v204 = vpack.c.b16 %v176, %v175
  %v205 = vpack.c.b16 %v178, %v177
  %v206 = vpack.c.b16 %v180, %v179
  %v207 = vpack.c.b16 %v182, %v181
  %v208 = vpack.c.b16 %v183, %v183
  %v250 = vunpack.c.l.b16 %v66
  %v251 = vunpack.c.l.b16 %v67
  %v252 = vunpack.c.l.b16 %v68
  %v253 = vunpack.c.l.b16 %v69
  %v254 = vunpack.c.l.b16 %v70
  %v255 = vunpack.c.l.b16 %v71
  %v256 = vunpack.c.l.b16 %v72
  %v257 = vunpack.c.l.b16 %v73
  %v258 = vunpack.c.l.b16 %v74
  %v259 = vunpack.c.l.b16 %v75
  %v260 = vunpack.c.l.b16 %v76
  %v261 = vunpack.c.l.b16 %v77
  %v262 = vunpack.c.l.b16 %v78
  %v263 = vunpack.c.l.b16 %v79
  %v264 = vunpack.c.l.b16 %v80
  %v265 = vunpack.c.l.b16 %v81
  %v266 = vpack.c.b16 %v251, %v250
  %v267 = vpack.c.b16 %v253, %v252
  %v268 = vpack.c.b16 %v255, %v254
  %v269 = vpack.c.b16 %v257, %v256
  %v270 = vpack.c.b16 %v259, %v258
  %v271 = vpack.c.b16 %v261, %v260
  %v272 = vpack.c.b16 %v263, %v262
  %v273 = vpack.c.b16 %v265, %v264
  %282 = vmatpush.bf16.msra.mxu0 %v273
  %283 = vmatpush.bf16.msra.mxu0 %v272
  %284 = vmatpush.bf16.msra.mxu0 %v271
  %285 = vmatpush.bf16.msra.mxu0 %v270
  %286 = vmatpush.bf16.msra.mxu0 %v269
  %287 = vmatpush.bf16.msra.mxu0 %v268
  %288 = vmatpush.bf16.msra.mxu0 %v267
  %289 = vmatpush.bf16.msra.mxu0 %v266
  %290 = vmatmul.bf16.gmra.mxu0 %v184
  %v291 = vpop.f32.mrf.mxu0
  %v292 = vadd.f32 %v84, %v291
  %v293 = vpop.f32.mrf.mxu0
  %v294 = vadd.f32 %v84, %v293
  %295 = vmatmul.bf16.gmra.mxu0 %v185
  %v296 = vpop.f32.mrf.mxu0
  %v297 = vadd.f32 %v84, %v296
  %v298 = vpop.f32.mrf.mxu0
  %v299 = vadd.f32 %v84, %v298
  %300 = vmatmul.bf16.gmra.mxu0 %v186
  %v301 = vpop.f32.mrf.mxu0
  %v302 = vadd.f32 %v84, %v301
  %v303 = vpop.f32.mrf.mxu0
  %v304 = vadd.f32 %v84, %v303
  %305 = vmatmul.bf16.gmra.mxu0 %v187
  %v306 = vpop.f32.mrf.mxu0
  %v307 = vadd.f32 %v84, %v306
  %v308 = vpop.f32.mrf.mxu0
  %v309 = vadd.f32 %v84, %v308
  %310 = vmatmul.bf16.gmra.mxu0 %v188
  %v311 = vpop.f32.mrf.mxu0
  %v312 = vadd.f32 %v84, %v311
  %v313 = vpop.f32.mrf.mxu0
  %v314 = vadd.f32 %v84, %v313
  %315 = vmatmul.bf16.gmra.mxu0 %v189
  %v316 = vpop.f32.mrf.mxu0
  %v317 = vadd.f32 %v84, %v316
  %v318 = vpop.f32.mrf.mxu0
  %v319 = vadd.f32 %v84, %v318
  %320 = vmatmul.bf16.gmra.mxu0 %v190
  %v321 = vpop.f32.mrf.mxu0
  %v322 = vadd.f32 %v84, %v321
  %v323 = vpop.f32.mrf.mxu0
  %v324 = vadd.f32 %v84, %v323
  %325 = vmatmul.bf16.gmra.mxu0 %v191
  %v326 = vpop.f32.mrf.mxu0
  %v327 = vadd.f32 %v84, %v326
  %v328 = vpop.f32.mrf.mxu0
  %v329 = vadd.f32 %v84, %v328
  %330 = vmatmul.bf16.gmra.mxu0 %v192
  %v331 = vpop.f32.mrf.mxu0
  %v332 = vadd.f32 %v84, %v331
  %v333 = vpop.f32.mrf.mxu0
  %v334 = vadd.f32 %v84, %v333
  %335 = vmatmul.bf16.gmra.mxu0 %v193
  %v336 = vpop.f32.mrf.mxu0
  %v337 = vadd.f32 %v84, %v336
  %v338 = vpop.f32.mrf.mxu0
  %v339 = vadd.f32 %v84, %v338
  %340 = vmatmul.bf16.gmra.mxu0 %v194
  %v341 = vpop.f32.mrf.mxu0
  %v342 = vadd.f32 %v84, %v341
  %v343 = vpop.f32.mrf.mxu0
  %v344 = vadd.f32 %v84, %v343
  %345 = vmatmul.bf16.gmra.mxu0 %v195
  %v346 = vpop.f32.mrf.mxu0
  %v347 = vadd.f32 %v84, %v346
  %v348 = vpop.f32.mrf.mxu0
  %v349 = vadd.f32 %v84, %v348
  %350 = vmatmul.bf16.gmra.mxu0 %v196
  %v351 = vpop.f32.mrf.mxu0
  %v352 = vadd.f32 %v84, %v351
  %v353 = vpop.f32.mrf.mxu0
  %v354 = vadd.f32 %v84, %v353
  %355 = vmatmul.bf16.gmra.mxu0 %v197
  %v356 = vpop.f32.mrf.mxu0
  %v357 = vadd.f32 %v84, %v356
  %v358 = vpop.f32.mrf.mxu0
  %v359 = vadd.f32 %v84, %v358
  %360 = vmatmul.bf16.gmra.mxu0 %v198
  %v361 = vpop.f32.mrf.mxu0
  %v362 = vadd.f32 %v84, %v361
  %v363 = vpop.f32.mrf.mxu0
  %v364 = vadd.f32 %v84, %v363
  %365 = vmatmul.bf16.gmra.mxu0 %v199
  %v366 = vpop.f32.mrf.mxu0
  %v367 = vadd.f32 %v84, %v366
  %v368 = vpop.f32.mrf.mxu0
  %v369 = vadd.f32 %v84, %v368
  %370 = vmatmul.bf16.gmra.mxu0 %v200
  %v371 = vpop.f32.mrf.mxu0
  %v372 = vadd.f32 %v84, %v371
  %v373 = vpop.f32.mrf.mxu0
  %v374 = vadd.f32 %v84, %v373
  %375 = vmatmul.bf16.gmra.mxu0 %v201
  %v376 = vpop.f32.mrf.mxu0
  %v377 = vadd.f32 %v84, %v376
  %v378 = vpop.f32.mrf.mxu0
  %v379 = vadd.f32 %v84, %v378
  %380 = vmatmul.bf16.gmra.mxu0 %v202
  %v381 = vpop.f32.mrf.mxu0
  %v382 = vadd.f32 %v84, %v381
  %v383 = vpop.f32.mrf.mxu0
  %v384 = vadd.f32 %v84, %v383
  %385 = vmatmul.bf16.gmra.mxu0 %v203
  %v386 = vpop.f32.mrf.mxu0
  %v387 = vadd.f32 %v84, %v386
  %v388 = vpop.f32.mrf.mxu0
  %v389 = vadd.f32 %v84, %v388
  %390 = vmatmul.bf16.gmra.mxu0 %v204
  %v391 = vpop.f32.mrf.mxu0
  %v392 = vadd.f32 %v84, %v391
  %v393 = vpop.f32.mrf.mxu0
  %v394 = vadd.f32 %v84, %v393
  %395 = vmatmul.bf16.gmra.mxu0 %v205
  %v396 = vpop.f32.mrf.mxu0
  %v397 = vadd.f32 %v84, %v396
  %v398 = vpop.f32.mrf.mxu0
  %v399 = vadd.f32 %v84, %v398
  %400 = vmatmul.bf16.gmra.mxu0 %v206
  %v401 = vpop.f32.mrf.mxu0
  %v402 = vadd.f32 %v84, %v401
  %v403 = vpop.f32.mrf.mxu0
  %v404 = vadd.f32 %v84, %v403
  %405 = vmatmul.bf16.gmra.mxu0 %v207
  %v406 = vpop.f32.mrf.mxu0
  %v407 = vadd.f32 %v84, %v406
  %v408 = vpop.f32.mrf.mxu0
  %v409 = vadd.f32 %v84, %v408
  %410 = vmatmul.bf16.gmra.mxu0 %v208
  %v411 = vpop.f32.mrf.mxu0
  %v412 = vadd.f32 %v84, %v411
  %v413 = vpop.f32.mrf.mxu0
  %414 = vdwg.mxu0
  %v415 = vmul.f32 %v292, 0.01
  %v416 = vmul.f32 %v294, 0.01
  %v417 = vmul.f32 %v297, 0.01
  %v418 = vmul.f32 %v299, 0.01
  %v419 = vmul.f32 %v302, 0.01
  %v420 = vmul.f32 %v304, 0.01
  %v421 = vmul.f32 %v307, 0.01
  %v422 = vmul.f32 %v309, 0.01
  %v423 = vmul.f32 %v312, 0.01
  %v424 = vmul.f32 %v314, 0.01
  %v425 = vmul.f32 %v317, 0.01
  %v426 = vmul.f32 %v319, 0.01
  %v427 = vmul.f32 %v322, 0.01
  %v428 = vmul.f32 %v324, 0.01
  %v429 = vmul.f32 %v327, 0.01
  %v430 = vmul.f32 %v329, 0.01
  %v431 = vmul.f32 %v332, 0.01
  %v432 = vmul.f32 %v334, 0.01
  %v433 = vmul.f32 %v337, 0.01
  %v434 = vmul.f32 %v339, 0.01
  %v435 = vmul.f32 %v342, 0.01
  %v436 = vmul.f32 %v344, 0.01
  %v437 = vmul.f32 %v347, 0.01
  %v438 = vmul.f32 %v349, 0.01
  %v439 = vmul.f32 %v352, 0.01
  %v440 = vmul.f32 %v354, 0.01
  %v441 = vmul.f32 %v357, 0.01
  %v442 = vmul.f32 %v359, 0.01
  %v443 = vmul.f32 %v362, 0.01
  %v444 = vmul.f32 %v364, 0.01
  %v445 = vmul.f32 %v367, 0.01
  %v446 = vmul.f32 %v369, 0.01
  %v447 = vmul.f32 %v372, 0.01
  %v448 = vmul.f32 %v374, 0.01
  %v449 = vmul.f32 %v377, 0.01
  %v450 = vmul.f32 %v379, 0.01
  %v451 = vmul.f32 %v382, 0.01
  %v452 = vmul.f32 %v384, 0.01
  %v453 = vmul.f32 %v387, 0.01
  %v454 = vmul.f32 %v389, 0.01
  %v455 = vmul.f32 %v392, 0.01
  %v456 = vmul.f32 %v394, 0.01
  %v457 = vmul.f32 %v397, 0.01
  %v458 = vmul.f32 %v399, 0.01
  %v459 = vmul.f32 %v402, 0.01
  %v460 = vmul.f32 %v404, 0.01
  %v461 = vmul.f32 %v407, 0.01
  %v462 = vmul.f32 %v409, 0.01
  %v463 = vmul.f32 %v412, 0.01
  %v464 = vmax.f32 %v292, %v415
  %v465 = vmax.f32 %v294, %v416
  %v466 = vmax.f32 %v297, %v417
  %v467 = vmax.f32 %v299, %v418
  %v468 = vmax.f32 %v302, %v419
  %v469 = vmax.f32 %v304, %v420
  %v470 = vmax.f32 %v307, %v421
  %v471 = vmax.f32 %v309, %v422
  %v472 = vmax.f32 %v312, %v423
  %v473 = vmax.f32 %v314, %v424
  %v474 = vmax.f32 %v317, %v425
  %v475 = vmax.f32 %v319, %v426
  %v476 = vmax.f32 %v322, %v427
  %v477 = vmax.f32 %v324, %v428
  %v478 = vmax.f32 %v327, %v429
  %v479 = vmax.f32 %v329, %v430
  %v480 = vmax.f32 %v332, %v431
  %v481 = vmax.f32 %v334, %v432
  %v482 = vmax.f32 %v337, %v433
  %v483 = vmax.f32 %v339, %v434
  %v484 = vmax.f32 %v342, %v435
  %v485 = vmax.f32 %v344, %v436
  %v486 = vmax.f32 %v347, %v437
  %v487 = vmax.f32 %v349, %v438
  %v488 = vmax.f32 %v352, %v439
  %v489 = vmax.f32 %v354, %v440
  %v490 = vmax.f32 %v357, %v441
  %v491 = vmax.f32 %v359, %v442
  %v492 = vmax.f32 %v362, %v443
  %v493 = vmax.f32 %v364, %v444
  %v494 = vmax.f32 %v367, %v445
  %v495 = vmax.f32 %v369, %v446
  %v496 = vmax.f32 %v372, %v447
  %v497 = vmax.f32 %v374, %v448
  %v498 = vmax.f32 %v377, %v449
  %v499 = vmax.f32 %v379, %v450
  %v500 = vmax.f32 %v382, %v451
  %v501 = vmax.f32 %v384, %v452
  %v502 = vmax.f32 %v387, %v453
  %v503 = vmax.f32 %v389, %v454
  %v504 = vmax.f32 %v392, %v455
  %v505 = vmax.f32 %v394, %v456
  %v506 = vmax.f32 %v397, %v457
  %v507 = vmax.f32 %v399, %v458
  %v508 = vmax.f32 %v402, %v459
  %v509 = vmax.f32 %v404, %v460
  %v510 = vmax.f32 %v407, %v461
  %v511 = vmax.f32 %v409, %v462
  %v512 = vmax.f32 %v412, %v463
  %v513 = vmul.f32 %v464, %v464
  %v514 = vmul.f32 %v465, %v465
  %v515 = vmul.f32 %v466, %v466
  %v516 = vmul.f32 %v467, %v467
  %v517 = vmul.f32 %v468, %v468
  %v518 = vmul.f32 %v469, %v469
  %v519 = vmul.f32 %v470, %v470
  %v520 = vmul.f32 %v471, %v471
  %v521 = vmul.f32 %v472, %v472
  %v522 = vmul.f32 %v473, %v473
  %v523 = vmul.f32 %v474, %v474
  %v524 = vmul.f32 %v475, %v475
  %v525 = vmul.f32 %v476, %v476
  %v526 = vmul.f32 %v477, %v477
  %v527 = vmul.f32 %v478, %v478
  %v528 = vmul.f32 %v479, %v479
  %v529 = vmul.f32 %v480, %v480
  %v530 = vmul.f32 %v481, %v481
  %v531 = vmul.f32 %v482, %v482
  %v532 = vmul.f32 %v483, %v483
  %v533 = vmul.f32 %v484, %v484
  %v534 = vmul.f32 %v485, %v485
  %v535 = vmul.f32 %v486, %v486
  %v536 = vmul.f32 %v487, %v487
  %v537 = vmul.f32 %v488, %v488
  %v538 = vmul.f32 %v489, %v489
  %v539 = vmul.f32 %v490, %v490
  %v540 = vmul.f32 %v491, %v491
  %v541 = vmul.f32 %v492, %v492
  %v542 = vmul.f32 %v493, %v493
  %v543 = vmul.f32 %v494, %v494
  %v544 = vmul.f32 %v495, %v495
  %v545 = vmul.f32 %v496, %v496
  %v546 = vmul.f32 %v497, %v497
  %v547 = vmul.f32 %v498, %v498
  %v548 = vmul.f32 %v499, %v499
  %v549 = vmul.f32 %v500, %v500
  %v550 = vmul.f32 %v501, %v501
  %v551 = vmul.f32 %v502, %v502
  %v552 = vmul.f32 %v503, %v503
  %v553 = vmul.f32 %v504, %v504
  %v554 = vmul.f32 %v505, %v505
  %v555 = vmul.f32 %v506, %v506
  %v556 = vmul.f32 %v507, %v507
  %v557 = vmul.f32 %v508, %v508
  %v558 = vmul.f32 %v509, %v509
  %v559 = vmul.f32 %v510, %v510
  %v560 = vmul.f32 %v511, %v511
  %v561 = vmul.f32 %v512, %v512
  %v562 = vld [vmem:[%s3] sm:$0xff]
  %v563 = vld [vmem:[%s3 + $0x8] sm:$0xff]
  %v564 = vld [vmem:[%s3 + $0x10] sm:$0xff]
  %v565 = vld [vmem:[%s3 + $0x18] sm:$0xff]
  %vm566 = vcmask 261120
  %v568 = vsel %vm566, %v513, 0
  %v571 = vsel %vm566, %v514, 0
  %v574 = vsel %vm566, %v515, 0
  %v577 = vsel %vm566, %v516, 0
  %v580 = vsel %vm566, %v517, 0
  %v583 = vsel %vm566, %v518, 0
  %v586 = vsel %vm566, %v519, 0
  %v589 = vsel %vm566, %v520, 0
  %v592 = vsel %vm566, %v521, 0
  %v595 = vsel %vm566, %v522, 0
  %v598 = vsel %vm566, %v523, 0
  %v601 = vsel %vm566, %v524, 0
  %v604 = vsel %vm566, %v525, 0
  %v607 = vsel %vm566, %v526, 0
  %v610 = vsel %vm566, %v527, 0
  %v613 = vsel %vm566, %v528, 0
  %v616 = vsel %vm566, %v529, 0
  %v619 = vsel %vm566, %v530, 0
  %v622 = vsel %vm566, %v531, 0
  %v625 = vsel %vm566, %v532, 0
  %v628 = vsel %vm566, %v533, 0
  %v631 = vsel %vm566, %v534, 0
  %v634 = vsel %vm566, %v535, 0
  %v637 = vsel %vm566, %v536, 0
  %v640 = vsel %vm566, %v537, 0
  %v643 = vsel %vm566, %v538, 0
  %v646 = vsel %vm566, %v539, 0
  %v649 = vsel %vm566, %v540, 0
  %v652 = vsel %vm566, %v541, 0
  %v655 = vsel %vm566, %v542, 0
  %v658 = vsel %vm566, %v543, 0
  %v661 = vsel %vm566, %v544, 0
  %v664 = vsel %vm566, %v545, 0
  %v667 = vsel %vm566, %v546, 0
  %v670 = vsel %vm566, %v547, 0
  %v673 = vsel %vm566, %v548, 0
  %v676 = vsel %vm566, %v549, 0
  %v679 = vsel %vm566, %v550, 0
  %v682 = vsel %vm566, %v551, 0
  %v685 = vsel %vm566, %v552, 0
  %v688 = vsel %vm566, %v553, 0
  %v691 = vsel %vm566, %v554, 0
  %v694 = vsel %vm566, %v555, 0
  %v697 = vsel %vm566, %v556, 0
  %v700 = vsel %vm566, %v557, 0
  %v703 = vsel %vm566, %v558, 0
  %v706 = vsel %vm566, %v559, 0
  %v709 = vsel %vm566, %v560, 0
  %v712 = vsel %vm566, %v561, 0
  %714 = vmatpush.msra.mxu0 0.0
  %715 = vmatpush.msra.mxu0 0.0
  %716 = vmatpush.msra.mxu0 0.0
  %717 = vmatpush.msra.mxu0 0.0
  %718 = vmatpush.msra.mxu0 0.0
  %719 = vmatpush.msra.mxu0 0.0
  %720 = vmatpush.msra.mxu0 0.0
  %721 = vmatpush.msra.mxu0 0.0
  %722 = vmatpush.msra.mxu0 0.0
  %723 = vmatpush.msra.mxu0 0.0
  %724 = vmatpush.msra.mxu0 0.0
  %725 = vmatpush.msra.mxu0 0.0
  %726 = vmatpush.msra.mxu0 %v565
  %727 = vmatpush.msra.mxu0 %v564
  %728 = vmatpush.msra.mxu0 %v563
  %729 = vmatpush.msra.mxu0 %v562
  %730 = vmatmul.f32.gmra.mxu0 %v568
  %v731 = vpop.f32.mrf.mxu0
  %v732 = vadd.f32 0.0, %v731
  %733 = vmatmul.f32.gmra.mxu0 %v571
  %v734 = vpop.f32.mrf.mxu0
  %v735 = vadd.f32 0.0, %v734
  %736 = vmatmul.f32.gmra.mxu0 %v574
  %v737 = vpop.f32.mrf.mxu0
  %v738 = vadd.f32 0.0, %v737
  %739 = vmatmul.f32.gmra.mxu0 %v577
  %v740 = vpop.f32.mrf.mxu0
  %v741 = vadd.f32 0.0, %v740
  %742 = vmatmul.f32.gmra.mxu0 %v580
  %v743 = vpop.f32.mrf.mxu0
  %v744 = vadd.f32 0.0, %v743
  %745 = vmatmul.f32.gmra.mxu0 %v583
  %v746 = vpop.f32.mrf.mxu0
  %v747 = vadd.f32 0.0, %v746
  %748 = vmatmul.f32.gmra.mxu0 %v586
  %v749 = vpop.f32.mrf.mxu0
  %v750 = vadd.f32 0.0, %v749
  %751 = vmatmul.f32.gmra.mxu0 %v589
  %v752 = vpop.f32.mrf.mxu0
  %v753 = vadd.f32 0.0, %v752
  %754 = vmatmul.f32.gmra.mxu0 %v592
  %v755 = vpop.f32.mrf.mxu0
  %v756 = vadd.f32 0.0, %v755
  %757 = vmatmul.f32.gmra.mxu0 %v595
  %v758 = vpop.f32.mrf.mxu0
  %v759 = vadd.f32 0.0, %v758
  %760 = vmatmul.f32.gmra.mxu0 %v598
  %v761 = vpop.f32.mrf.mxu0
  %v762 = vadd.f32 0.0, %v761
  %763 = vmatmul.f32.gmra.mxu0 %v601
  %v764 = vpop.f32.mrf.mxu0
  %v765 = vadd.f32 0.0, %v764
  %766 = vmatmul.f32.gmra.mxu0 %v604
  %v767 = vpop.f32.mrf.mxu0
  %v768 = vadd.f32 0.0, %v767
  %769 = vmatmul.f32.gmra.mxu0 %v607
  %v770 = vpop.f32.mrf.mxu0
  %v771 = vadd.f32 0.0, %v770
  %772 = vmatmul.f32.gmra.mxu0 %v610
  %v773 = vpop.f32.mrf.mxu0
  %v774 = vadd.f32 0.0, %v773
  %775 = vmatmul.f32.gmra.mxu0 %v613
  %v776 = vpop.f32.mrf.mxu0
  %v777 = vadd.f32 0.0, %v776
  %778 = vmatmul.f32.gmra.mxu0 %v616
  %v779 = vpop.f32.mrf.mxu0
  %v780 = vadd.f32 0.0, %v779
  %781 = vmatmul.f32.gmra.mxu0 %v619
  %v782 = vpop.f32.mrf.mxu0
  %v783 = vadd.f32 0.0, %v782
  %784 = vmatmul.f32.gmra.mxu0 %v622
  %v785 = vpop.f32.mrf.mxu0
  %v786 = vadd.f32 0.0, %v785
  %787 = vmatmul.f32.gmra.mxu0 %v625
  %v788 = vpop.f32.mrf.mxu0
  %v789 = vadd.f32 0.0, %v788
  %790 = vmatmul.f32.gmra.mxu0 %v628
  %v791 = vpop.f32.mrf.mxu0
  %v792 = vadd.f32 0.0, %v791
  %793 = vmatmul.f32.gmra.mxu0 %v631
  %v794 = vpop.f32.mrf.mxu0
  %v795 = vadd.f32 0.0, %v794
  %796 = vmatmul.f32.gmra.mxu0 %v634
  %v797 = vpop.f32.mrf.mxu0
  %v798 = vadd.f32 0.0, %v797
  %799 = vmatmul.f32.gmra.mxu0 %v637
  %v800 = vpop.f32.mrf.mxu0
  %v801 = vadd.f32 0.0, %v800
  %802 = vmatmul.f32.gmra.mxu0 %v640
  %v803 = vpop.f32.mrf.mxu0
  %v804 = vadd.f32 0.0, %v803
  %805 = vmatmul.f32.gmra.mxu0 %v643
  %v806 = vpop.f32.mrf.mxu0
  %v807 = vadd.f32 0.0, %v806
  %808 = vmatmul.f32.gmra.mxu0 %v646
  %v809 = vpop.f32.mrf.mxu0
  %v810 = vadd.f32 0.0, %v809
  %811 = vmatmul.f32.gmra.mxu0 %v649
  %v812 = vpop.f32.mrf.mxu0
  %v813 = vadd.f32 0.0, %v812
  %814 = vmatmul.f32.gmra.mxu0 %v652
  %v815 = vpop.f32.mrf.mxu0
  %v816 = vadd.f32 0.0, %v815
  %817 = vmatmul.f32.gmra.mxu0 %v655
  %v818 = vpop.f32.mrf.mxu0
  %v819 = vadd.f32 0.0, %v818
  %820 = vmatmul.f32.gmra.mxu0 %v658
  %v821 = vpop.f32.mrf.mxu0
  %v822 = vadd.f32 0.0, %v821
  %823 = vmatmul.f32.gmra.mxu0 %v661
  %v824 = vpop.f32.mrf.mxu0
  %v825 = vadd.f32 0.0, %v824
  %826 = vmatmul.f32.gmra.mxu0 %v664
  %v827 = vpop.f32.mrf.mxu0
  %v828 = vadd.f32 0.0, %v827
  %829 = vmatmul.f32.gmra.mxu0 %v667
  %v830 = vpop.f32.mrf.mxu0
  %v831 = vadd.f32 0.0, %v830
  %832 = vmatmul.f32.gmra.mxu0 %v670
  %v833 = vpop.f32.mrf.mxu0
  %v834 = vadd.f32 0.0, %v833
  %835 = vmatmul.f32.gmra.mxu0 %v673
  %v836 = vpop.f32.mrf.mxu0
  %v837 = vadd.f32 0.0, %v836
  %838 = vmatmul.f32.gmra.mxu0 %v676
  %v839 = vpop.f32.mrf.mxu0
  %v840 = vadd.f32 0.0, %v839
  %841 = vmatmul.f32.gmra.mxu0 %v679
  %v842 = vpop.f32.mrf.mxu0
  %v843 = vadd.f32 0.0, %v842
  %844 = vmatmul.f32.gmra.mxu0 %v682
  %v845 = vpop.f32.mrf.mxu0
  %v846 = vadd.f32 0.0, %v845
  %847 = vmatmul.f32.gmra.mxu0 %v685
  %v848 = vpop.f32.mrf.mxu0
  %v849 = vadd.f32 0.0, %v848
  %850 = vmatmul.f32.gmra.mxu0 %v688
  %v851 = vpop.f32.mrf.mxu0
  %v852 = vadd.f32 0.0, %v851
  %853 = vmatmul.f32.gmra.mxu0 %v691
  %v854 = vpop.f32.mrf.mxu0
  %v855 = vadd.f32 0.0, %v854
  %856 = vmatmul.f32.gmra.mxu0 %v694
  %v857 = vpop.f32.mrf.mxu0
  %v858 = vadd.f32 0.0, %v857
  %859 = vmatmul.f32.gmra.mxu0 %v697
  %v860 = vpop.f32.mrf.mxu0
  %v861 = vadd.f32 0.0, %v860
  %862 = vmatmul.f32.gmra.mxu0 %v700
  %v863 = vpop.f32.mrf.mxu0
  %v864 = vadd.f32 0.0, %v863
  %865 = vmatmul.f32.gmra.mxu0 %v703
  %v866 = vpop.f32.mrf.mxu0
  %v867 = vadd.f32 0.0, %v866
  %868 = vmatmul.f32.gmra.mxu0 %v706
  %v869 = vpop.f32.mrf.mxu0
  %v870 = vadd.f32 0.0, %v869
  %871 = vmatmul.f32.gmra.mxu0 %v709
  %v872 = vpop.f32.mrf.mxu0
  %v873 = vadd.f32 0.0, %v872
  %874 = vmatmul.f32.gmra.mxu0 %v712
  %v875 = vpop.f32.mrf.mxu0
  %v876 = vadd.f32 0.0, %v875
  %877 = vdwg.mxu0
  %v878 = vmul.f32 %v732, 2e-05
  %v879 = vmul.f32 %v735, 2e-05
  %v880 = vmul.f32 %v738, 2e-05
  %v881 = vmul.f32 %v741, 2e-05
  %v882 = vmul.f32 %v744, 2e-05
  %v883 = vmul.f32 %v747, 2e-05
  %v884 = vmul.f32 %v750, 2e-05
  %v885 = vmul.f32 %v753, 2e-05
  %v886 = vmul.f32 %v756, 2e-05
  %v887 = vmul.f32 %v759, 2e-05
  %v888 = vmul.f32 %v762, 2e-05
  %v889 = vmul.f32 %v765, 2e-05
  %v890 = vmul.f32 %v768, 2e-05
  %v891 = vmul.f32 %v771, 2e-05
  %v892 = vmul.f32 %v774, 2e-05
  %v893 = vmul.f32 %v777, 2e-05
  %v894 = vmul.f32 %v780, 2e-05
  %v895 = vmul.f32 %v783, 2e-05
  %v896 = vmul.f32 %v786, 2e-05
  %v897 = vmul.f32 %v789, 2e-05
  %v898 = vmul.f32 %v792, 2e-05
  %v899 = vmul.f32 %v795, 2e-05
  %v900 = vmul.f32 %v798, 2e-05
  %v901 = vmul.f32 %v801, 2e-05
  %v902 = vmul.f32 %v804, 2e-05
  %v903 = vmul.f32 %v807, 2e-05
  %v904 = vmul.f32 %v810, 2e-05
  %v905 = vmul.f32 %v813, 2e-05
  %v906 = vmul.f32 %v816, 2e-05
  %v907 = vmul.f32 %v819, 2e-05
  %v908 = vmul.f32 %v822, 2e-05
  %v909 = vmul.f32 %v825, 2e-05
  %v910 = vmul.f32 %v828, 2e-05
  %v911 = vmul.f32 %v831, 2e-05
  %v912 = vmul.f32 %v834, 2e-05
  %v913 = vmul.f32 %v837, 2e-05
  %v914 = vmul.f32 %v840, 2e-05
  %v915 = vmul.f32 %v843, 2e-05
  %v916 = vmul.f32 %v846, 2e-05
  %v917 = vmul.f32 %v849, 2e-05
  %v918 = vmul.f32 %v852, 2e-05
  %v919 = vmul.f32 %v855, 2e-05
  %v920 = vmul.f32 %v858, 2e-05
  %v921 = vmul.f32 %v861, 2e-05
  %v922 = vmul.f32 %v864, 2e-05
  %v923 = vmul.f32 %v867, 2e-05
  %v924 = vmul.f32 %v870, 2e-05
  %v925 = vmul.f32 %v873, 2e-05
  %v926 = vmul.f32 %v876, 2e-05
  %v927 = vadd.f32 %v878, 1.0
  %v928 = vadd.f32 %v879, 1.0
  %v929 = vadd.f32 %v880, 1.0
  %v930 = vadd.f32 %v881, 1.0
  %v931 = vadd.f32 %v882, 1.0
  %v932 = vadd.f32 %v883, 1.0
  %v933 = vadd.f32 %v884, 1.0
  %v934 = vadd.f32 %v885, 1.0
  %v935 = vadd.f32 %v886, 1.0
  %v936 = vadd.f32 %v887, 1.0
  %v937 = vadd.f32 %v888, 1.0
  %v938 = vadd.f32 %v889, 1.0
  %v939 = vadd.f32 %v890, 1.0
  %v940 = vadd.f32 %v891, 1.0
  %v941 = vadd.f32 %v892, 1.0
  %v942 = vadd.f32 %v893, 1.0
  %v943 = vadd.f32 %v894, 1.0
  %v944 = vadd.f32 %v895, 1.0
  %v945 = vadd.f32 %v896, 1.0
  %v946 = vadd.f32 %v897, 1.0
  %v947 = vadd.f32 %v898, 1.0
  %v948 = vadd.f32 %v899, 1.0
  %v949 = vadd.f32 %v900, 1.0
  %v950 = vadd.f32 %v901, 1.0
  %v951 = vadd.f32 %v902, 1.0
  %v952 = vadd.f32 %v903, 1.0
  %v953 = vadd.f32 %v904, 1.0
  %v954 = vadd.f32 %v905, 1.0
  %v955 = vadd.f32 %v906, 1.0
  %v956 = vadd.f32 %v907, 1.0
  %v957 = vadd.f32 %v908, 1.0
  %v958 = vadd.f32 %v909, 1.0
  %v959 = vadd.f32 %v910, 1.0
  %v960 = vadd.f32 %v911, 1.0
  %v961 = vadd.f32 %v912, 1.0
  %v962 = vadd.f32 %v913, 1.0
  %v963 = vadd.f32 %v914, 1.0
  %v964 = vadd.f32 %v915, 1.0
  %v965 = vadd.f32 %v916, 1.0
  %v966 = vadd.f32 %v917, 1.0
  %v967 = vadd.f32 %v918, 1.0
  %v968 = vadd.f32 %v919, 1.0
  %v969 = vadd.f32 %v920, 1.0
  %v970 = vadd.f32 %v921, 1.0
  %v971 = vadd.f32 %v922, 1.0
  %v972 = vadd.f32 %v923, 1.0
  %v973 = vadd.f32 %v924, 1.0
  %v974 = vadd.f32 %v925, 1.0
  %v975 = vadd.f32 %v926, 1.0
  %v976 = vrsqrt.pop %v927
  %v977 = vmul.f32 %v976, %v927
  %v978 = vmul.f32 %v977, %v976
  %v979 = vmul.f32 0.5, %v978
  %v980 = vsub.f32 1.5, %v979
  %v981 = vmul.f32 %v976, %v980
  %vm982 = vweird.f32 %v927
  %vm983 = vweird.f32 %v976
  %vm984 = vmor %vm982, %vm983
  %v985 = vsel %vm984, %v976, %v981
  %v986 = vrsqrt.pop %v928
  %v987 = vmul.f32 %v986, %v928
  %v988 = vmul.f32 %v987, %v986
  %v989 = vmul.f32 0.5, %v988
  %v990 = vsub.f32 1.5, %v989
  %v991 = vmul.f32 %v986, %v990
  %vm992 = vweird.f32 %v928
  %vm993 = vweird.f32 %v986
  %vm994 = vmor %vm992, %vm993
  %v995 = vsel %vm994, %v986, %v991
  %v996 = vrsqrt.pop %v929
  %v997 = vmul.f32 %v996, %v929
  %v998 = vmul.f32 %v997, %v996
  %v999 = vmul.f32 0.5, %v998
  %v1000 = vsub.f32 1.5, %v999
  %v1001 = vmul.f32 %v996, %v1000
  %vm1002 = vweird.f32 %v929
  %vm1003 = vweird.f32 %v996
  %vm1004 = vmor %vm1002, %vm1003
  %v1005 = vsel %vm1004, %v996, %v1001
  %v1006 = vrsqrt.pop %v930
  %v1007 = vmul.f32 %v1006, %v930
  %v1008 = vmul.f32 %v1007, %v1006
  %v1009 = vmul.f32 0.5, %v1008
  %v1010 = vsub.f32 1.5, %v1009
  %v1011 = vmul.f32 %v1006, %v1010
  %vm1012 = vweird.f32 %v930
  %vm1013 = vweird.f32 %v1006
  %vm1014 = vmor %vm1012, %vm1013
  %v1015 = vsel %vm1014, %v1006, %v1011
  %v1016 = vrsqrt.pop %v931
  %v1017 = vmul.f32 %v1016, %v931
  %v1018 = vmul.f32 %v1017, %v1016
  %v1019 = vmul.f32 0.5, %v1018
  %v1020 = vsub.f32 1.5, %v1019
  %v1021 = vmul.f32 %v1016, %v1020
  %vm1022 = vweird.f32 %v931
  %vm1023 = vweird.f32 %v1016
  %vm1024 = vmor %vm1022, %vm1023
  %v1025 = vsel %vm1024, %v1016, %v1021
  %v1026 = vrsqrt.pop %v932
  %v1027 = vmul.f32 %v1026, %v932
  %v1028 = vmul.f32 %v1027, %v1026
  %v1029 = vmul.f32 0.5, %v1028
  %v1030 = vsub.f32 1.5, %v1029
  %v1031 = vmul.f32 %v1026, %v1030
  %vm1032 = vweird.f32 %v932
  %vm1033 = vweird.f32 %v1026
  %vm1034 = vmor %vm1032, %vm1033
  %v1035 = vsel %vm1034, %v1026, %v1031
  %v1036 = vrsqrt.pop %v933
  %v1037 = vmul.f32 %v1036, %v933
  %v1038 = vmul.f32 %v1037, %v1036
  %v1039 = vmul.f32 0.5, %v1038
  %v1040 = vsub.f32 1.5, %v1039
  %v1041 = vmul.f32 %v1036, %v1040
  %vm1042 = vweird.f32 %v933
  %vm1043 = vweird.f32 %v1036
  %vm1044 = vmor %vm1042, %vm1043
  %v1045 = vsel %vm1044, %v1036, %v1041
  %v1046 = vrsqrt.pop %v934
  %v1047 = vmul.f32 %v1046, %v934
  %v1048 = vmul.f32 %v1047, %v1046
  %v1049 = vmul.f32 0.5, %v1048
  %v1050 = vsub.f32 1.5, %v1049
  %v1051 = vmul.f32 %v1046, %v1050
  %vm1052 = vweird.f32 %v934
  %vm1053 = vweird.f32 %v1046
  %vm1054 = vmor %vm1052, %vm1053
  %v1055 = vsel %vm1054, %v1046, %v1051
  %v1056 = vrsqrt.pop %v935
  %v1057 = vmul.f32 %v1056, %v935
  %v1058 = vmul.f32 %v1057, %v1056
  %v1059 = vmul.f32 0.5, %v1058
  %v1060 = vsub.f32 1.5, %v1059
  %v1061 = vmul.f32 %v1056, %v1060
  %vm1062 = vweird.f32 %v935
  %vm1063 = vweird.f32 %v1056
  %vm1064 = vmor %vm1062, %vm1063
  %v1065 = vsel %vm1064, %v1056, %v1061
  %v1066 = vrsqrt.pop %v936
  %v1067 = vmul.f32 %v1066, %v936
  %v1068 = vmul.f32 %v1067, %v1066
  %v1069 = vmul.f32 0.5, %v1068
  %v1070 = vsub.f32 1.5, %v1069
  %v1071 = vmul.f32 %v1066, %v1070
  %vm1072 = vweird.f32 %v936
  %vm1073 = vweird.f32 %v1066
  %vm1074 = vmor %vm1072, %vm1073
  %v1075 = vsel %vm1074, %v1066, %v1071
  %v1076 = vrsqrt.pop %v937
  %v1077 = vmul.f32 %v1076, %v937
  %v1078 = vmul.f32 %v1077, %v1076
  %v1079 = vmul.f32 0.5, %v1078
  %v1080 = vsub.f32 1.5, %v1079
  %v1081 = vmul.f32 %v1076, %v1080
  %vm1082 = vweird.f32 %v937
  %vm1083 = vweird.f32 %v1076
  %vm1084 = vmor %vm1082, %vm1083
  %v1085 = vsel %vm1084, %v1076, %v1081
  %v1086 = vrsqrt.pop %v938
  %v1087 = vmul.f32 %v1086, %v938
  %v1088 = vmul.f32 %v1087, %v1086
  %v1089 = vmul.f32 0.5, %v1088
  %v1090 = vsub.f32 1.5, %v1089
  %v1091 = vmul.f32 %v1086, %v1090
  %vm1092 = vweird.f32 %v938
  %vm1093 = vweird.f32 %v1086
  %vm1094 = vmor %vm1092, %vm1093
  %v1095 = vsel %vm1094, %v1086, %v1091
  %v1096 = vrsqrt.pop %v939
  %v1097 = vmul.f32 %v1096, %v939
  %v1098 = vmul.f32 %v1097, %v1096
  %v1099 = vmul.f32 0.5, %v1098
  %v1100 = vsub.f32 1.5, %v1099
  %v1101 = vmul.f32 %v1096, %v1100
  %vm1102 = vweird.f32 %v939
  %vm1103 = vweird.f32 %v1096
  %vm1104 = vmor %vm1102, %vm1103
  %v1105 = vsel %vm1104, %v1096, %v1101
  %v1106 = vrsqrt.pop %v940
  %v1107 = vmul.f32 %v1106, %v940
  %v1108 = vmul.f32 %v1107, %v1106
  %v1109 = vmul.f32 0.5, %v1108
  %v1110 = vsub.f32 1.5, %v1109
  %v1111 = vmul.f32 %v1106, %v1110
  %vm1112 = vweird.f32 %v940
  %vm1113 = vweird.f32 %v1106
  %vm1114 = vmor %vm1112, %vm1113
  %v1115 = vsel %vm1114, %v1106, %v1111
  %v1116 = vrsqrt.pop %v941
  %v1117 = vmul.f32 %v1116, %v941
  %v1118 = vmul.f32 %v1117, %v1116
  %v1119 = vmul.f32 0.5, %v1118
  %v1120 = vsub.f32 1.5, %v1119
  %v1121 = vmul.f32 %v1116, %v1120
  %vm1122 = vweird.f32 %v941
  %vm1123 = vweird.f32 %v1116
  %vm1124 = vmor %vm1122, %vm1123
  %v1125 = vsel %vm1124, %v1116, %v1121
  %v1126 = vrsqrt.pop %v942
  %v1127 = vmul.f32 %v1126, %v942
  %v1128 = vmul.f32 %v1127, %v1126
  %v1129 = vmul.f32 0.5, %v1128
  %v1130 = vsub.f32 1.5, %v1129
  %v1131 = vmul.f32 %v1126, %v1130
  %vm1132 = vweird.f32 %v942
  %vm1133 = vweird.f32 %v1126
  %vm1134 = vmor %vm1132, %vm1133
  %v1135 = vsel %vm1134, %v1126, %v1131
  %v1136 = vrsqrt.pop %v943
  %v1137 = vmul.f32 %v1136, %v943
  %v1138 = vmul.f32 %v1137, %v1136
  %v1139 = vmul.f32 0.5, %v1138
  %v1140 = vsub.f32 1.5, %v1139
  %v1141 = vmul.f32 %v1136, %v1140
  %vm1142 = vweird.f32 %v943
  %vm1143 = vweird.f32 %v1136
  %vm1144 = vmor %vm1142, %vm1143
  %v1145 = vsel %vm1144, %v1136, %v1141
  %v1146 = vrsqrt.pop %v944
  %v1147 = vmul.f32 %v1146, %v944
  %v1148 = vmul.f32 %v1147, %v1146
  %v1149 = vmul.f32 0.5, %v1148
  %v1150 = vsub.f32 1.5, %v1149
  %v1151 = vmul.f32 %v1146, %v1150
  %vm1152 = vweird.f32 %v944
  %vm1153 = vweird.f32 %v1146
  %vm1154 = vmor %vm1152, %vm1153
  %v1155 = vsel %vm1154, %v1146, %v1151
  %v1156 = vrsqrt.pop %v945
  %v1157 = vmul.f32 %v1156, %v945
  %v1158 = vmul.f32 %v1157, %v1156
  %v1159 = vmul.f32 0.5, %v1158
  %v1160 = vsub.f32 1.5, %v1159
  %v1161 = vmul.f32 %v1156, %v1160
  %vm1162 = vweird.f32 %v945
  %vm1163 = vweird.f32 %v1156
  %vm1164 = vmor %vm1162, %vm1163
  %v1165 = vsel %vm1164, %v1156, %v1161
  %v1166 = vrsqrt.pop %v946
  %v1167 = vmul.f32 %v1166, %v946
  %v1168 = vmul.f32 %v1167, %v1166
  %v1169 = vmul.f32 0.5, %v1168
  %v1170 = vsub.f32 1.5, %v1169
  %v1171 = vmul.f32 %v1166, %v1170
  %vm1172 = vweird.f32 %v946
  %vm1173 = vweird.f32 %v1166
  %vm1174 = vmor %vm1172, %vm1173
  %v1175 = vsel %vm1174, %v1166, %v1171
  %v1176 = vrsqrt.pop %v947
  %v1177 = vmul.f32 %v1176, %v947
  %v1178 = vmul.f32 %v1177, %v1176
  %v1179 = vmul.f32 0.5, %v1178
  %v1180 = vsub.f32 1.5, %v1179
  %v1181 = vmul.f32 %v1176, %v1180
  %vm1182 = vweird.f32 %v947
  %vm1183 = vweird.f32 %v1176
  %vm1184 = vmor %vm1182, %vm1183
  %v1185 = vsel %vm1184, %v1176, %v1181
  %v1186 = vrsqrt.pop %v948
  %v1187 = vmul.f32 %v1186, %v948
  %v1188 = vmul.f32 %v1187, %v1186
  %v1189 = vmul.f32 0.5, %v1188
  %v1190 = vsub.f32 1.5, %v1189
  %v1191 = vmul.f32 %v1186, %v1190
  %vm1192 = vweird.f32 %v948
  %vm1193 = vweird.f32 %v1186
  %vm1194 = vmor %vm1192, %vm1193
  %v1195 = vsel %vm1194, %v1186, %v1191
  %v1196 = vrsqrt.pop %v949
  %v1197 = vmul.f32 %v1196, %v949
  %v1198 = vmul.f32 %v1197, %v1196
  %v1199 = vmul.f32 0.5, %v1198
  %v1200 = vsub.f32 1.5, %v1199
  %v1201 = vmul.f32 %v1196, %v1200
  %vm1202 = vweird.f32 %v949
  %vm1203 = vweird.f32 %v1196
  %vm1204 = vmor %vm1202, %vm1203
  %v1205 = vsel %vm1204, %v1196, %v1201
  %v1206 = vrsqrt.pop %v950
  %v1207 = vmul.f32 %v1206, %v950
  %v1208 = vmul.f32 %v1207, %v1206
  %v1209 = vmul.f32 0.5, %v1208
  %v1210 = vsub.f32 1.5, %v1209
  %v1211 = vmul.f32 %v1206, %v1210
  %vm1212 = vweird.f32 %v950
  %vm1213 = vweird.f32 %v1206
  %vm1214 = vmor %vm1212, %vm1213
  %v1215 = vsel %vm1214, %v1206, %v1211
  %v1216 = vrsqrt.pop %v951
  %v1217 = vmul.f32 %v1216, %v951
  %v1218 = vmul.f32 %v1217, %v1216
  %v1219 = vmul.f32 0.5, %v1218
  %v1220 = vsub.f32 1.5, %v1219
  %v1221 = vmul.f32 %v1216, %v1220
  %vm1222 = vweird.f32 %v951
  %vm1223 = vweird.f32 %v1216
  %vm1224 = vmor %vm1222, %vm1223
  %v1225 = vsel %vm1224, %v1216, %v1221
  %v1226 = vrsqrt.pop %v952
  %v1227 = vmul.f32 %v1226, %v952
  %v1228 = vmul.f32 %v1227, %v1226
  %v1229 = vmul.f32 0.5, %v1228
  %v1230 = vsub.f32 1.5, %v1229
  %v1231 = vmul.f32 %v1226, %v1230
  %vm1232 = vweird.f32 %v952
  %vm1233 = vweird.f32 %v1226
  %vm1234 = vmor %vm1232, %vm1233
  %v1235 = vsel %vm1234, %v1226, %v1231
  %v1236 = vrsqrt.pop %v953
  %v1237 = vmul.f32 %v1236, %v953
  %v1238 = vmul.f32 %v1237, %v1236
  %v1239 = vmul.f32 0.5, %v1238
  %v1240 = vsub.f32 1.5, %v1239
  %v1241 = vmul.f32 %v1236, %v1240
  %vm1242 = vweird.f32 %v953
  %vm1243 = vweird.f32 %v1236
  %vm1244 = vmor %vm1242, %vm1243
  %v1245 = vsel %vm1244, %v1236, %v1241
  %v1246 = vrsqrt.pop %v954
  %v1247 = vmul.f32 %v1246, %v954
  %v1248 = vmul.f32 %v1247, %v1246
  %v1249 = vmul.f32 0.5, %v1248
  %v1250 = vsub.f32 1.5, %v1249
  %v1251 = vmul.f32 %v1246, %v1250
  %vm1252 = vweird.f32 %v954
  %vm1253 = vweird.f32 %v1246
  %vm1254 = vmor %vm1252, %vm1253
  %v1255 = vsel %vm1254, %v1246, %v1251
  %v1256 = vrsqrt.pop %v955
  %v1257 = vmul.f32 %v1256, %v955
  %v1258 = vmul.f32 %v1257, %v1256
  %v1259 = vmul.f32 0.5, %v1258
  %v1260 = vsub.f32 1.5, %v1259
  %v1261 = vmul.f32 %v1256, %v1260
  %vm1262 = vweird.f32 %v955
  %vm1263 = vweird.f32 %v1256
  %vm1264 = vmor %vm1262, %vm1263
  %v1265 = vsel %vm1264, %v1256, %v1261
  %v1266 = vrsqrt.pop %v956
  %v1267 = vmul.f32 %v1266, %v956
  %v1268 = vmul.f32 %v1267, %v1266
  %v1269 = vmul.f32 0.5, %v1268
  %v1270 = vsub.f32 1.5, %v1269
  %v1271 = vmul.f32 %v1266, %v1270
  %vm1272 = vweird.f32 %v956
  %vm1273 = vweird.f32 %v1266
  %vm1274 = vmor %vm1272, %vm1273
  %v1275 = vsel %vm1274, %v1266, %v1271
  %v1276 = vrsqrt.pop %v957
  %v1277 = vmul.f32 %v1276, %v957
  %v1278 = vmul.f32 %v1277, %v1276
  %v1279 = vmul.f32 0.5, %v1278
  %v1280 = vsub.f32 1.5, %v1279
  %v1281 = vmul.f32 %v1276, %v1280
  %vm1282 = vweird.f32 %v957
  %vm1283 = vweird.f32 %v1276
  %vm1284 = vmor %vm1282, %vm1283
  %v1285 = vsel %vm1284, %v1276, %v1281
  %v1286 = vrsqrt.pop %v958
  %v1287 = vmul.f32 %v1286, %v958
  %v1288 = vmul.f32 %v1287, %v1286
  %v1289 = vmul.f32 0.5, %v1288
  %v1290 = vsub.f32 1.5, %v1289
  %v1291 = vmul.f32 %v1286, %v1290
  %vm1292 = vweird.f32 %v958
  %vm1293 = vweird.f32 %v1286
  %vm1294 = vmor %vm1292, %vm1293
  %v1295 = vsel %vm1294, %v1286, %v1291
  %v1296 = vrsqrt.pop %v959
  %v1297 = vmul.f32 %v1296, %v959
  %v1298 = vmul.f32 %v1297, %v1296
  %v1299 = vmul.f32 0.5, %v1298
  %v1300 = vsub.f32 1.5, %v1299
  %v1301 = vmul.f32 %v1296, %v1300
  %vm1302 = vweird.f32 %v959
  %vm1303 = vweird.f32 %v1296
  %vm1304 = vmor %vm1302, %vm1303
  %v1305 = vsel %vm1304, %v1296, %v1301
  %v1306 = vrsqrt.pop %v960
  %v1307 = vmul.f32 %v1306, %v960
  %v1308 = vmul.f32 %v1307, %v1306
  %v1309 = vmul.f32 0.5, %v1308
  %v1310 = vsub.f32 1.5, %v1309
  %v1311 = vmul.f32 %v1306, %v1310
  %vm1312 = vweird.f32 %v960
  %vm1313 = vweird.f32 %v1306
  %vm1314 = vmor %vm1312, %vm1313
  %v1315 = vsel %vm1314, %v1306, %v1311
  %v1316 = vrsqrt.pop %v961
  %v1317 = vmul.f32 %v1316, %v961
  %v1318 = vmul.f32 %v1317, %v1316
  %v1319 = vmul.f32 0.5, %v1318
  %v1320 = vsub.f32 1.5, %v1319
  %v1321 = vmul.f32 %v1316, %v1320
  %vm1322 = vweird.f32 %v961
  %vm1323 = vweird.f32 %v1316
  %vm1324 = vmor %vm1322, %vm1323
  %v1325 = vsel %vm1324, %v1316, %v1321
  %v1326 = vrsqrt.pop %v962
  %v1327 = vmul.f32 %v1326, %v962
  %v1328 = vmul.f32 %v1327, %v1326
  %v1329 = vmul.f32 0.5, %v1328
  %v1330 = vsub.f32 1.5, %v1329
  %v1331 = vmul.f32 %v1326, %v1330
  %vm1332 = vweird.f32 %v962
  %vm1333 = vweird.f32 %v1326
  %vm1334 = vmor %vm1332, %vm1333
  %v1335 = vsel %vm1334, %v1326, %v1331
  %v1336 = vrsqrt.pop %v963
  %v1337 = vmul.f32 %v1336, %v963
  %v1338 = vmul.f32 %v1337, %v1336
  %v1339 = vmul.f32 0.5, %v1338
  %v1340 = vsub.f32 1.5, %v1339
  %v1341 = vmul.f32 %v1336, %v1340
  %vm1342 = vweird.f32 %v963
  %vm1343 = vweird.f32 %v1336
  %vm1344 = vmor %vm1342, %vm1343
  %v1345 = vsel %vm1344, %v1336, %v1341
  %v1346 = vrsqrt.pop %v964
  %v1347 = vmul.f32 %v1346, %v964
  %v1348 = vmul.f32 %v1347, %v1346
  %v1349 = vmul.f32 0.5, %v1348
  %v1350 = vsub.f32 1.5, %v1349
  %v1351 = vmul.f32 %v1346, %v1350
  %vm1352 = vweird.f32 %v964
  %vm1353 = vweird.f32 %v1346
  %vm1354 = vmor %vm1352, %vm1353
  %v1355 = vsel %vm1354, %v1346, %v1351
  %v1356 = vrsqrt.pop %v965
  %v1357 = vmul.f32 %v1356, %v965
  %v1358 = vmul.f32 %v1357, %v1356
  %v1359 = vmul.f32 0.5, %v1358
  %v1360 = vsub.f32 1.5, %v1359
  %v1361 = vmul.f32 %v1356, %v1360
  %vm1362 = vweird.f32 %v965
  %vm1363 = vweird.f32 %v1356
  %vm1364 = vmor %vm1362, %vm1363
  %v1365 = vsel %vm1364, %v1356, %v1361
  %v1366 = vrsqrt.pop %v966
  %v1367 = vmul.f32 %v1366, %v966
  %v1368 = vmul.f32 %v1367, %v1366
  %v1369 = vmul.f32 0.5, %v1368
  %v1370 = vsub.f32 1.5, %v1369
  %v1371 = vmul.f32 %v1366, %v1370
  %vm1372 = vweird.f32 %v966
  %vm1373 = vweird.f32 %v1366
  %vm1374 = vmor %vm1372, %vm1373
  %v1375 = vsel %vm1374, %v1366, %v1371
  %v1376 = vrsqrt.pop %v967
  %v1377 = vmul.f32 %v1376, %v967
  %v1378 = vmul.f32 %v1377, %v1376
  %v1379 = vmul.f32 0.5, %v1378
  %v1380 = vsub.f32 1.5, %v1379
  %v1381 = vmul.f32 %v1376, %v1380
  %vm1382 = vweird.f32 %v967
  %vm1383 = vweird.f32 %v1376
  %vm1384 = vmor %vm1382, %vm1383
  %v1385 = vsel %vm1384, %v1376, %v1381
  %v1386 = vrsqrt.pop %v968
  %v1387 = vmul.f32 %v1386, %v968
  %v1388 = vmul.f32 %v1387, %v1386
  %v1389 = vmul.f32 0.5, %v1388
  %v1390 = vsub.f32 1.5, %v1389
  %v1391 = vmul.f32 %v1386, %v1390
  %vm1392 = vweird.f32 %v968
  %vm1393 = vweird.f32 %v1386
  %vm1394 = vmor %vm1392, %vm1393
  %v1395 = vsel %vm1394, %v1386, %v1391
  %v1396 = vrsqrt.pop %v969
  %v1397 = vmul.f32 %v1396, %v969
  %v1398 = vmul.f32 %v1397, %v1396
  %v1399 = vmul.f32 0.5, %v1398
  %v1400 = vsub.f32 1.5, %v1399
  %v1401 = vmul.f32 %v1396, %v1400
  %vm1402 = vweird.f32 %v969
  %vm1403 = vweird.f32 %v1396
  %vm1404 = vmor %vm1402, %vm1403
  %v1405 = vsel %vm1404, %v1396, %v1401
  %v1406 = vrsqrt.pop %v970
  %v1407 = vmul.f32 %v1406, %v970
  %v1408 = vmul.f32 %v1407, %v1406
  %v1409 = vmul.f32 0.5, %v1408
  %v1410 = vsub.f32 1.5, %v1409
  %v1411 = vmul.f32 %v1406, %v1410
  %vm1412 = vweird.f32 %v970
  %vm1413 = vweird.f32 %v1406
  %vm1414 = vmor %vm1412, %vm1413
  %v1415 = vsel %vm1414, %v1406, %v1411
  %v1416 = vrsqrt.pop %v971
  %v1417 = vmul.f32 %v1416, %v971
  %v1418 = vmul.f32 %v1417, %v1416
  %v1419 = vmul.f32 0.5, %v1418
  %v1420 = vsub.f32 1.5, %v1419
  %v1421 = vmul.f32 %v1416, %v1420
  %vm1422 = vweird.f32 %v971
  %vm1423 = vweird.f32 %v1416
  %vm1424 = vmor %vm1422, %vm1423
  %v1425 = vsel %vm1424, %v1416, %v1421
  %v1426 = vrsqrt.pop %v972
  %v1427 = vmul.f32 %v1426, %v972
  %v1428 = vmul.f32 %v1427, %v1426
  %v1429 = vmul.f32 0.5, %v1428
  %v1430 = vsub.f32 1.5, %v1429
  %v1431 = vmul.f32 %v1426, %v1430
  %vm1432 = vweird.f32 %v972
  %vm1433 = vweird.f32 %v1426
  %vm1434 = vmor %vm1432, %vm1433
  %v1435 = vsel %vm1434, %v1426, %v1431
  %v1436 = vrsqrt.pop %v973
  %v1437 = vmul.f32 %v1436, %v973
  %v1438 = vmul.f32 %v1437, %v1436
  %v1439 = vmul.f32 0.5, %v1438
  %v1440 = vsub.f32 1.5, %v1439
  %v1441 = vmul.f32 %v1436, %v1440
  %vm1442 = vweird.f32 %v973
  %vm1443 = vweird.f32 %v1436
  %vm1444 = vmor %vm1442, %vm1443
  %v1445 = vsel %vm1444, %v1436, %v1441
  %v1446 = vrsqrt.pop %v974
  %v1447 = vmul.f32 %v1446, %v974
  %v1448 = vmul.f32 %v1447, %v1446
  %v1449 = vmul.f32 0.5, %v1448
  %v1450 = vsub.f32 1.5, %v1449
  %v1451 = vmul.f32 %v1446, %v1450
  %vm1452 = vweird.f32 %v974
  %vm1453 = vweird.f32 %v1446
  %vm1454 = vmor %vm1452, %vm1453
  %v1455 = vsel %vm1454, %v1446, %v1451
  %v1456 = vrsqrt.pop %v975
  %v1457 = vmul.f32 %v1456, %v975
  %v1458 = vmul.f32 %v1457, %v1456
  %v1459 = vmul.f32 0.5, %v1458
  %v1460 = vsub.f32 1.5, %v1459
  %v1461 = vmul.f32 %v1456, %v1460
  %vm1462 = vweird.f32 %v975
  %vm1463 = vweird.f32 %v1456
  %vm1464 = vmor %vm1462, %vm1463
  %v1465 = vsel %vm1464, %v1456, %v1461
  %v1466 = vrsqrt.pop %v985
  %v1467 = vmul.f32 %v1466, %v985
  %v1468 = vmul.f32 %v1467, %v1466
  %v1469 = vmul.f32 0.5, %v1468
  %v1470 = vsub.f32 1.5, %v1469
  %v1471 = vmul.f32 %v1466, %v1470
  %v1472 = vmul.f32 %v985, %v1471
  %vm1473 = vcmp.eq.f32.partialorder %v985, inf
  %v1474 = vsel %vm1473, %v985, %v1472
  %vm1475 = vcmp.eq.f32.partialorder %v985, 0.0
  %v1476 = vand.u32 %v985, 2147483648
  %v1477 = vsel %vm1475, %v1476, %v1474
  %v1478 = vrsqrt.pop %v995
  %v1479 = vmul.f32 %v1478, %v995
  %v1480 = vmul.f32 %v1479, %v1478
  %v1481 = vmul.f32 0.5, %v1480
  %v1482 = vsub.f32 1.5, %v1481
  %v1483 = vmul.f32 %v1478, %v1482
  %v1484 = vmul.f32 %v995, %v1483
  %vm1485 = vcmp.eq.f32.partialorder %v995, inf
  %v1486 = vsel %vm1485, %v995, %v1484
  %vm1487 = vcmp.eq.f32.partialorder %v995, 0.0
  %v1488 = vand.u32 %v995, 2147483648
  %v1489 = vsel %vm1487, %v1488, %v1486
  %v1490 = vrsqrt.pop %v1005
  %v1491 = vmul.f32 %v1490, %v1005
  %v1492 = vmul.f32 %v1491, %v1490
  %v1493 = vmul.f32 0.5, %v1492
  %v1494 = vsub.f32 1.5, %v1493
  %v1495 = vmul.f32 %v1490, %v1494
  %v1496 = vmul.f32 %v1005, %v1495
  %vm1497 = vcmp.eq.f32.partialorder %v1005, inf
  %v1498 = vsel %vm1497, %v1005, %v1496
  %vm1499 = vcmp.eq.f32.partialorder %v1005, 0.0
  %v1500 = vand.u32 %v1005, 2147483648
  %v1501 = vsel %vm1499, %v1500, %v1498
  %v1502 = vrsqrt.pop %v1015
  %v1503 = vmul.f32 %v1502, %v1015
  %v1504 = vmul.f32 %v1503, %v1502
  %v1505 = vmul.f32 0.5, %v1504
  %v1506 = vsub.f32 1.5, %v1505
  %v1507 = vmul.f32 %v1502, %v1506
  %v1508 = vmul.f32 %v1015, %v1507
  %vm1509 = vcmp.eq.f32.partialorder %v1015, inf
  %v1510 = vsel %vm1509, %v1015, %v1508
  %vm1511 = vcmp.eq.f32.partialorder %v1015, 0.0
  %v1512 = vand.u32 %v1015, 2147483648
  %v1513 = vsel %vm1511, %v1512, %v1510
  %v1514 = vrsqrt.pop %v1025
  %v1515 = vmul.f32 %v1514, %v1025
  %v1516 = vmul.f32 %v1515, %v1514
  %v1517 = vmul.f32 0.5, %v1516
  %v1518 = vsub.f32 1.5, %v1517
  %v1519 = vmul.f32 %v1514, %v1518
  %v1520 = vmul.f32 %v1025, %v1519
  %vm1521 = vcmp.eq.f32.partialorder %v1025, inf
  %v1522 = vsel %vm1521, %v1025, %v1520
  %vm1523 = vcmp.eq.f32.partialorder %v1025, 0.0
  %v1524 = vand.u32 %v1025, 2147483648
  %v1525 = vsel %vm1523, %v1524, %v1522
  %v1526 = vrsqrt.pop %v1035
  %v1527 = vmul.f32 %v1526, %v1035
  %v1528 = vmul.f32 %v1527, %v1526
  %v1529 = vmul.f32 0.5, %v1528
  %v1530 = vsub.f32 1.5, %v1529
  %v1531 = vmul.f32 %v1526, %v1530
  %v1532 = vmul.f32 %v1035, %v1531
  %vm1533 = vcmp.eq.f32.partialorder %v1035, inf
  %v1534 = vsel %vm1533, %v1035, %v1532
  %vm1535 = vcmp.eq.f32.partialorder %v1035, 0.0
  %v1536 = vand.u32 %v1035, 2147483648
  %v1537 = vsel %vm1535, %v1536, %v1534
  %v1538 = vrsqrt.pop %v1045
  %v1539 = vmul.f32 %v1538, %v1045
  %v1540 = vmul.f32 %v1539, %v1538
  %v1541 = vmul.f32 0.5, %v1540
  %v1542 = vsub.f32 1.5, %v1541
  %v1543 = vmul.f32 %v1538, %v1542
  %v1544 = vmul.f32 %v1045, %v1543
  %vm1545 = vcmp.eq.f32.partialorder %v1045, inf
  %v1546 = vsel %vm1545, %v1045, %v1544
  %vm1547 = vcmp.eq.f32.partialorder %v1045, 0.0
  %v1548 = vand.u32 %v1045, 2147483648
  %v1549 = vsel %vm1547, %v1548, %v1546
  %v1550 = vrsqrt.pop %v1055
  %v1551 = vmul.f32 %v1550, %v1055
  %v1552 = vmul.f32 %v1551, %v1550
  %v1553 = vmul.f32 0.5, %v1552
  %v1554 = vsub.f32 1.5, %v1553
  %v1555 = vmul.f32 %v1550, %v1554
  %v1556 = vmul.f32 %v1055, %v1555
  %vm1557 = vcmp.eq.f32.partialorder %v1055, inf
  %v1558 = vsel %vm1557, %v1055, %v1556
  %vm1559 = vcmp.eq.f32.partialorder %v1055, 0.0
  %v1560 = vand.u32 %v1055, 2147483648
  %v1561 = vsel %vm1559, %v1560, %v1558
  %v1562 = vrsqrt.pop %v1065
  %v1563 = vmul.f32 %v1562, %v1065
  %v1564 = vmul.f32 %v1563, %v1562
  %v1565 = vmul.f32 0.5, %v1564
  %v1566 = vsub.f32 1.5, %v1565
  %v1567 = vmul.f32 %v1562, %v1566
  %v1568 = vmul.f32 %v1065, %v1567
  %vm1569 = vcmp.eq.f32.partialorder %v1065, inf
  %v1570 = vsel %vm1569, %v1065, %v1568
  %vm1571 = vcmp.eq.f32.partialorder %v1065, 0.0
  %v1572 = vand.u32 %v1065, 2147483648
  %v1573 = vsel %vm1571, %v1572, %v1570
  %v1574 = vrsqrt.pop %v1075
  %v1575 = vmul.f32 %v1574, %v1075
  %v1576 = vmul.f32 %v1575, %v1574
  %v1577 = vmul.f32 0.5, %v1576
  %v1578 = vsub.f32 1.5, %v1577
  %v1579 = vmul.f32 %v1574, %v1578
  %v1580 = vmul.f32 %v1075, %v1579
  %vm1581 = vcmp.eq.f32.partialorder %v1075, inf
  %v1582 = vsel %vm1581, %v1075, %v1580
  %vm1583 = vcmp.eq.f32.partialorder %v1075, 0.0
  %v1584 = vand.u32 %v1075, 2147483648
  %v1585 = vsel %vm1583, %v1584, %v1582
  %v1586 = vrsqrt.pop %v1085
  %v1587 = vmul.f32 %v1586, %v1085
  %v1588 = vmul.f32 %v1587, %v1586
  %v1589 = vmul.f32 0.5, %v1588
  %v1590 = vsub.f32 1.5, %v1589
  %v1591 = vmul.f32 %v1586, %v1590
  %v1592 = vmul.f32 %v1085, %v1591
  %vm1593 = vcmp.eq.f32.partialorder %v1085, inf
  %v1594 = vsel %vm1593, %v1085, %v1592
  %vm1595 = vcmp.eq.f32.partialorder %v1085, 0.0
  %v1596 = vand.u32 %v1085, 2147483648
  %v1597 = vsel %vm1595, %v1596, %v1594
  %v1598 = vrsqrt.pop %v1095
  %v1599 = vmul.f32 %v1598, %v1095
  %v1600 = vmul.f32 %v1599, %v1598
  %v1601 = vmul.f32 0.5, %v1600
  %v1602 = vsub.f32 1.5, %v1601
  %v1603 = vmul.f32 %v1598, %v1602
  %v1604 = vmul.f32 %v1095, %v1603
  %vm1605 = vcmp.eq.f32.partialorder %v1095, inf
  %v1606 = vsel %vm1605, %v1095, %v1604
  %vm1607 = vcmp.eq.f32.partialorder %v1095, 0.0
  %v1608 = vand.u32 %v1095, 2147483648
  %v1609 = vsel %vm1607, %v1608, %v1606
  %v1610 = vrsqrt.pop %v1105
  %v1611 = vmul.f32 %v1610, %v1105
  %v1612 = vmul.f32 %v1611, %v1610
  %v1613 = vmul.f32 0.5, %v1612
  %v1614 = vsub.f32 1.5, %v1613
  %v1615 = vmul.f32 %v1610, %v1614
  %v1616 = vmul.f32 %v1105, %v1615
  %vm1617 = vcmp.eq.f32.partialorder %v1105, inf
  %v1618 = vsel %vm1617, %v1105, %v1616
  %vm1619 = vcmp.eq.f32.partialorder %v1105, 0.0
  %v1620 = vand.u32 %v1105, 2147483648
  %v1621 = vsel %vm1619, %v1620, %v1618
  %v1622 = vrsqrt.pop %v1115
  %v1623 = vmul.f32 %v1622, %v1115
  %v1624 = vmul.f32 %v1623, %v1622
  %v1625 = vmul.f32 0.5, %v1624
  %v1626 = vsub.f32 1.5, %v1625
  %v1627 = vmul.f32 %v1622, %v1626
  %v1628 = vmul.f32 %v1115, %v1627
  %vm1629 = vcmp.eq.f32.partialorder %v1115, inf
  %v1630 = vsel %vm1629, %v1115, %v1628
  %vm1631 = vcmp.eq.f32.partialorder %v1115, 0.0
  %v1632 = vand.u32 %v1115, 2147483648
  %v1633 = vsel %vm1631, %v1632, %v1630
  %v1634 = vrsqrt.pop %v1125
  %v1635 = vmul.f32 %v1634, %v1125
  %v1636 = vmul.f32 %v1635, %v1634
  %v1637 = vmul.f32 0.5, %v1636
  %v1638 = vsub.f32 1.5, %v1637
  %v1639 = vmul.f32 %v1634, %v1638
  %v1640 = vmul.f32 %v1125, %v1639
  %vm1641 = vcmp.eq.f32.partialorder %v1125, inf
  %v1642 = vsel %vm1641, %v1125, %v1640
  %vm1643 = vcmp.eq.f32.partialorder %v1125, 0.0
  %v1644 = vand.u32 %v1125, 2147483648
  %v1645 = vsel %vm1643, %v1644, %v1642
  %v1646 = vrsqrt.pop %v1135
  %v1647 = vmul.f32 %v1646, %v1135
  %v1648 = vmul.f32 %v1647, %v1646
  %v1649 = vmul.f32 0.5, %v1648
  %v1650 = vsub.f32 1.5, %v1649
  %v1651 = vmul.f32 %v1646, %v1650
  %v1652 = vmul.f32 %v1135, %v1651
  %vm1653 = vcmp.eq.f32.partialorder %v1135, inf
  %v1654 = vsel %vm1653, %v1135, %v1652
  %vm1655 = vcmp.eq.f32.partialorder %v1135, 0.0
  %v1656 = vand.u32 %v1135, 2147483648
  %v1657 = vsel %vm1655, %v1656, %v1654
  %v1658 = vrsqrt.pop %v1145
  %v1659 = vmul.f32 %v1658, %v1145
  %v1660 = vmul.f32 %v1659, %v1658
  %v1661 = vmul.f32 0.5, %v1660
  %v1662 = vsub.f32 1.5, %v1661
  %v1663 = vmul.f32 %v1658, %v1662
  %v1664 = vmul.f32 %v1145, %v1663
  %vm1665 = vcmp.eq.f32.partialorder %v1145, inf
  %v1666 = vsel %vm1665, %v1145, %v1664
  %vm1667 = vcmp.eq.f32.partialorder %v1145, 0.0
  %v1668 = vand.u32 %v1145, 2147483648
  %v1669 = vsel %vm1667, %v1668, %v1666
  %v1670 = vrsqrt.pop %v1155
  %v1671 = vmul.f32 %v1670, %v1155
  %v1672 = vmul.f32 %v1671, %v1670
  %v1673 = vmul.f32 0.5, %v1672
  %v1674 = vsub.f32 1.5, %v1673
  %v1675 = vmul.f32 %v1670, %v1674
  %v1676 = vmul.f32 %v1155, %v1675
  %vm1677 = vcmp.eq.f32.partialorder %v1155, inf
  %v1678 = vsel %vm1677, %v1155, %v1676
  %vm1679 = vcmp.eq.f32.partialorder %v1155, 0.0
  %v1680 = vand.u32 %v1155, 2147483648
  %v1681 = vsel %vm1679, %v1680, %v1678
  %v1682 = vrsqrt.pop %v1165
  %v1683 = vmul.f32 %v1682, %v1165
  %v1684 = vmul.f32 %v1683, %v1682
  %v1685 = vmul.f32 0.5, %v1684
  %v1686 = vsub.f32 1.5, %v1685
  %v1687 = vmul.f32 %v1682, %v1686
  %v1688 = vmul.f32 %v1165, %v1687
  %vm1689 = vcmp.eq.f32.partialorder %v1165, inf
  %v1690 = vsel %vm1689, %v1165, %v1688
  %vm1691 = vcmp.eq.f32.partialorder %v1165, 0.0
  %v1692 = vand.u32 %v1165, 2147483648
  %v1693 = vsel %vm1691, %v1692, %v1690
  %v1694 = vrsqrt.pop %v1175
  %v1695 = vmul.f32 %v1694, %v1175
  %v1696 = vmul.f32 %v1695, %v1694
  %v1697 = vmul.f32 0.5, %v1696
  %v1698 = vsub.f32 1.5, %v1697
  %v1699 = vmul.f32 %v1694, %v1698
  %v1700 = vmul.f32 %v1175, %v1699
  %vm1701 = vcmp.eq.f32.partialorder %v1175, inf
  %v1702 = vsel %vm1701, %v1175, %v1700
  %vm1703 = vcmp.eq.f32.partialorder %v1175, 0.0
  %v1704 = vand.u32 %v1175, 2147483648
  %v1705 = vsel %vm1703, %v1704, %v1702
  %v1706 = vrsqrt.pop %v1185
  %v1707 = vmul.f32 %v1706, %v1185
  %v1708 = vmul.f32 %v1707, %v1706
  %v1709 = vmul.f32 0.5, %v1708
  %v1710 = vsub.f32 1.5, %v1709
  %v1711 = vmul.f32 %v1706, %v1710
  %v1712 = vmul.f32 %v1185, %v1711
  %vm1713 = vcmp.eq.f32.partialorder %v1185, inf
  %v1714 = vsel %vm1713, %v1185, %v1712
  %vm1715 = vcmp.eq.f32.partialorder %v1185, 0.0
  %v1716 = vand.u32 %v1185, 2147483648
  %v1717 = vsel %vm1715, %v1716, %v1714
  %v1718 = vrsqrt.pop %v1195
  %v1719 = vmul.f32 %v1718, %v1195
  %v1720 = vmul.f32 %v1719, %v1718
  %v1721 = vmul.f32 0.5, %v1720
  %v1722 = vsub.f32 1.5, %v1721
  %v1723 = vmul.f32 %v1718, %v1722
  %v1724 = vmul.f32 %v1195, %v1723
  %vm1725 = vcmp.eq.f32.partialorder %v1195, inf
  %v1726 = vsel %vm1725, %v1195, %v1724
  %vm1727 = vcmp.eq.f32.partialorder %v1195, 0.0
  %v1728 = vand.u32 %v1195, 2147483648
  %v1729 = vsel %vm1727, %v1728, %v1726
  %v1730 = vrsqrt.pop %v1205
  %v1731 = vmul.f32 %v1730, %v1205
  %v1732 = vmul.f32 %v1731, %v1730
  %v1733 = vmul.f32 0.5, %v1732
  %v1734 = vsub.f32 1.5, %v1733
  %v1735 = vmul.f32 %v1730, %v1734
  %v1736 = vmul.f32 %v1205, %v1735
  %vm1737 = vcmp.eq.f32.partialorder %v1205, inf
  %v1738 = vsel %vm1737, %v1205, %v1736
  %vm1739 = vcmp.eq.f32.partialorder %v1205, 0.0
  %v1740 = vand.u32 %v1205, 2147483648
  %v1741 = vsel %vm1739, %v1740, %v1738
  %v1742 = vrsqrt.pop %v1215
  %v1743 = vmul.f32 %v1742, %v1215
  %v1744 = vmul.f32 %v1743, %v1742
  %v1745 = vmul.f32 0.5, %v1744
  %v1746 = vsub.f32 1.5, %v1745
  %v1747 = vmul.f32 %v1742, %v1746
  %v1748 = vmul.f32 %v1215, %v1747
  %vm1749 = vcmp.eq.f32.partialorder %v1215, inf
  %v1750 = vsel %vm1749, %v1215, %v1748
  %vm1751 = vcmp.eq.f32.partialorder %v1215, 0.0
  %v1752 = vand.u32 %v1215, 2147483648
  %v1753 = vsel %vm1751, %v1752, %v1750
  %v1754 = vrsqrt.pop %v1225
  %v1755 = vmul.f32 %v1754, %v1225
  %v1756 = vmul.f32 %v1755, %v1754
  %v1757 = vmul.f32 0.5, %v1756
  %v1758 = vsub.f32 1.5, %v1757
  %v1759 = vmul.f32 %v1754, %v1758
  %v1760 = vmul.f32 %v1225, %v1759
  %vm1761 = vcmp.eq.f32.partialorder %v1225, inf
  %v1762 = vsel %vm1761, %v1225, %v1760
  %vm1763 = vcmp.eq.f32.partialorder %v1225, 0.0
  %v1764 = vand.u32 %v1225, 2147483648
  %v1765 = vsel %vm1763, %v1764, %v1762
  %v1766 = vrsqrt.pop %v1235
  %v1767 = vmul.f32 %v1766, %v1235
  %v1768 = vmul.f32 %v1767, %v1766
  %v1769 = vmul.f32 0.5, %v1768
  %v1770 = vsub.f32 1.5, %v1769
  %v1771 = vmul.f32 %v1766, %v1770
  %v1772 = vmul.f32 %v1235, %v1771
  %vm1773 = vcmp.eq.f32.partialorder %v1235, inf
  %v1774 = vsel %vm1773, %v1235, %v1772
  %vm1775 = vcmp.eq.f32.partialorder %v1235, 0.0
  %v1776 = vand.u32 %v1235, 2147483648
  %v1777 = vsel %vm1775, %v1776, %v1774
  %v1778 = vrsqrt.pop %v1245
  %v1779 = vmul.f32 %v1778, %v1245
  %v1780 = vmul.f32 %v1779, %v1778
  %v1781 = vmul.f32 0.5, %v1780
  %v1782 = vsub.f32 1.5, %v1781
  %v1783 = vmul.f32 %v1778, %v1782
  %v1784 = vmul.f32 %v1245, %v1783
  %vm1785 = vcmp.eq.f32.partialorder %v1245, inf
  %v1786 = vsel %vm1785, %v1245, %v1784
  %vm1787 = vcmp.eq.f32.partialorder %v1245, 0.0
  %v1788 = vand.u32 %v1245, 2147483648
  %v1789 = vsel %vm1787, %v1788, %v1786
  %v1790 = vrsqrt.pop %v1255
  %v1791 = vmul.f32 %v1790, %v1255
  %v1792 = vmul.f32 %v1791, %v1790
  %v1793 = vmul.f32 0.5, %v1792
  %v1794 = vsub.f32 1.5, %v1793
  %v1795 = vmul.f32 %v1790, %v1794
  %v1796 = vmul.f32 %v1255, %v1795
  %vm1797 = vcmp.eq.f32.partialorder %v1255, inf
  %v1798 = vsel %vm1797, %v1255, %v1796
  %vm1799 = vcmp.eq.f32.partialorder %v1255, 0.0
  %v1800 = vand.u32 %v1255, 2147483648
  %v1801 = vsel %vm1799, %v1800, %v1798
  %v1802 = vrsqrt.pop %v1265
  %v1803 = vmul.f32 %v1802, %v1265
  %v1804 = vmul.f32 %v1803, %v1802
  %v1805 = vmul.f32 0.5, %v1804
  %v1806 = vsub.f32 1.5, %v1805
  %v1807 = vmul.f32 %v1802, %v1806
  %v1808 = vmul.f32 %v1265, %v1807
  %vm1809 = vcmp.eq.f32.partialorder %v1265, inf
  %v1810 = vsel %vm1809, %v1265, %v1808
  %vm1811 = vcmp.eq.f32.partialorder %v1265, 0.0
  %v1812 = vand.u32 %v1265, 2147483648
  %v1813 = vsel %vm1811, %v1812, %v1810
  %v1814 = vrsqrt.pop %v1275
  %v1815 = vmul.f32 %v1814, %v1275
  %v1816 = vmul.f32 %v1815, %v1814
  %v1817 = vmul.f32 0.5, %v1816
  %v1818 = vsub.f32 1.5, %v1817
  %v1819 = vmul.f32 %v1814, %v1818
  %v1820 = vmul.f32 %v1275, %v1819
  %vm1821 = vcmp.eq.f32.partialorder %v1275, inf
  %v1822 = vsel %vm1821, %v1275, %v1820
  %vm1823 = vcmp.eq.f32.partialorder %v1275, 0.0
  %v1824 = vand.u32 %v1275, 2147483648
  %v1825 = vsel %vm1823, %v1824, %v1822
  %v1826 = vrsqrt.pop %v1285
  %v1827 = vmul.f32 %v1826, %v1285
  %v1828 = vmul.f32 %v1827, %v1826
  %v1829 = vmul.f32 0.5, %v1828
  %v1830 = vsub.f32 1.5, %v1829
  %v1831 = vmul.f32 %v1826, %v1830
  %v1832 = vmul.f32 %v1285, %v1831
  %vm1833 = vcmp.eq.f32.partialorder %v1285, inf
  %v1834 = vsel %vm1833, %v1285, %v1832
  %vm1835 = vcmp.eq.f32.partialorder %v1285, 0.0
  %v1836 = vand.u32 %v1285, 2147483648
  %v1837 = vsel %vm1835, %v1836, %v1834
  %v1838 = vrsqrt.pop %v1295
  %v1839 = vmul.f32 %v1838, %v1295
  %v1840 = vmul.f32 %v1839, %v1838
  %v1841 = vmul.f32 0.5, %v1840
  %v1842 = vsub.f32 1.5, %v1841
  %v1843 = vmul.f32 %v1838, %v1842
  %v1844 = vmul.f32 %v1295, %v1843
  %vm1845 = vcmp.eq.f32.partialorder %v1295, inf
  %v1846 = vsel %vm1845, %v1295, %v1844
  %vm1847 = vcmp.eq.f32.partialorder %v1295, 0.0
  %v1848 = vand.u32 %v1295, 2147483648
  %v1849 = vsel %vm1847, %v1848, %v1846
  %v1850 = vrsqrt.pop %v1305
  %v1851 = vmul.f32 %v1850, %v1305
  %v1852 = vmul.f32 %v1851, %v1850
  %v1853 = vmul.f32 0.5, %v1852
  %v1854 = vsub.f32 1.5, %v1853
  %v1855 = vmul.f32 %v1850, %v1854
  %v1856 = vmul.f32 %v1305, %v1855
  %vm1857 = vcmp.eq.f32.partialorder %v1305, inf
  %v1858 = vsel %vm1857, %v1305, %v1856
  %vm1859 = vcmp.eq.f32.partialorder %v1305, 0.0
  %v1860 = vand.u32 %v1305, 2147483648
  %v1861 = vsel %vm1859, %v1860, %v1858
  %v1862 = vrsqrt.pop %v1315
  %v1863 = vmul.f32 %v1862, %v1315
  %v1864 = vmul.f32 %v1863, %v1862
  %v1865 = vmul.f32 0.5, %v1864
  %v1866 = vsub.f32 1.5, %v1865
  %v1867 = vmul.f32 %v1862, %v1866
  %v1868 = vmul.f32 %v1315, %v1867
  %vm1869 = vcmp.eq.f32.partialorder %v1315, inf
  %v1870 = vsel %vm1869, %v1315, %v1868
  %vm1871 = vcmp.eq.f32.partialorder %v1315, 0.0
  %v1872 = vand.u32 %v1315, 2147483648
  %v1873 = vsel %vm1871, %v1872, %v1870
  %v1874 = vrsqrt.pop %v1325
  %v1875 = vmul.f32 %v1874, %v1325
  %v1876 = vmul.f32 %v1875, %v1874
  %v1877 = vmul.f32 0.5, %v1876
  %v1878 = vsub.f32 1.5, %v1877
  %v1879 = vmul.f32 %v1874, %v1878
  %v1880 = vmul.f32 %v1325, %v1879
  %vm1881 = vcmp.eq.f32.partialorder %v1325, inf
  %v1882 = vsel %vm1881, %v1325, %v1880
  %vm1883 = vcmp.eq.f32.partialorder %v1325, 0.0
  %v1884 = vand.u32 %v1325, 2147483648
  %v1885 = vsel %vm1883, %v1884, %v1882
  %v1886 = vrsqrt.pop %v1335
  %v1887 = vmul.f32 %v1886, %v1335
  %v1888 = vmul.f32 %v1887, %v1886
  %v1889 = vmul.f32 0.5, %v1888
  %v1890 = vsub.f32 1.5, %v1889
  %v1891 = vmul.f32 %v1886, %v1890
  %v1892 = vmul.f32 %v1335, %v1891
  %vm1893 = vcmp.eq.f32.partialorder %v1335, inf
  %v1894 = vsel %vm1893, %v1335, %v1892
  %vm1895 = vcmp.eq.f32.partialorder %v1335, 0.0
  %v1896 = vand.u32 %v1335, 2147483648
  %v1897 = vsel %vm1895, %v1896, %v1894
  %v1898 = vrsqrt.pop %v1345
  %v1899 = vmul.f32 %v1898, %v1345
  %v1900 = vmul.f32 %v1899, %v1898
  %v1901 = vmul.f32 0.5, %v1900
  %v1902 = vsub.f32 1.5, %v1901
  %v1903 = vmul.f32 %v1898, %v1902
  %v1904 = vmul.f32 %v1345, %v1903
  %vm1905 = vcmp.eq.f32.partialorder %v1345, inf
  %v1906 = vsel %vm1905, %v1345, %v1904
  %vm1907 = vcmp.eq.f32.partialorder %v1345, 0.0
  %v1908 = vand.u32 %v1345, 2147483648
  %v1909 = vsel %vm1907, %v1908, %v1906
  %v1910 = vrsqrt.pop %v1355
  %v1911 = vmul.f32 %v1910, %v1355
  %v1912 = vmul.f32 %v1911, %v1910
  %v1913 = vmul.f32 0.5, %v1912
  %v1914 = vsub.f32 1.5, %v1913
  %v1915 = vmul.f32 %v1910, %v1914
  %v1916 = vmul.f32 %v1355, %v1915
  %vm1917 = vcmp.eq.f32.partialorder %v1355, inf
  %v1918 = vsel %vm1917, %v1355, %v1916
  %vm1919 = vcmp.eq.f32.partialorder %v1355, 0.0
  %v1920 = vand.u32 %v1355, 2147483648
  %v1921 = vsel %vm1919, %v1920, %v1918
  %v1922 = vrsqrt.pop %v1365
  %v1923 = vmul.f32 %v1922, %v1365
  %v1924 = vmul.f32 %v1923, %v1922
  %v1925 = vmul.f32 0.5, %v1924
  %v1926 = vsub.f32 1.5, %v1925
  %v1927 = vmul.f32 %v1922, %v1926
  %v1928 = vmul.f32 %v1365, %v1927
  %vm1929 = vcmp.eq.f32.partialorder %v1365, inf
  %v1930 = vsel %vm1929, %v1365, %v1928
  %vm1931 = vcmp.eq.f32.partialorder %v1365, 0.0
  %v1932 = vand.u32 %v1365, 2147483648
  %v1933 = vsel %vm1931, %v1932, %v1930
  %v1934 = vrsqrt.pop %v1375
  %v1935 = vmul.f32 %v1934, %v1375
  %v1936 = vmul.f32 %v1935, %v1934
  %v1937 = vmul.f32 0.5, %v1936
  %v1938 = vsub.f32 1.5, %v1937
  %v1939 = vmul.f32 %v1934, %v1938
  %v1940 = vmul.f32 %v1375, %v1939
  %vm1941 = vcmp.eq.f32.partialorder %v1375, inf
  %v1942 = vsel %vm1941, %v1375, %v1940
  %vm1943 = vcmp.eq.f32.partialorder %v1375, 0.0
  %v1944 = vand.u32 %v1375, 2147483648
  %v1945 = vsel %vm1943, %v1944, %v1942
  %v1946 = vrsqrt.pop %v1385
  %v1947 = vmul.f32 %v1946, %v1385
  %v1948 = vmul.f32 %v1947, %v1946
  %v1949 = vmul.f32 0.5, %v1948
  %v1950 = vsub.f32 1.5, %v1949
  %v1951 = vmul.f32 %v1946, %v1950
  %v1952 = vmul.f32 %v1385, %v1951
  %vm1953 = vcmp.eq.f32.partialorder %v1385, inf
  %v1954 = vsel %vm1953, %v1385, %v1952
  %vm1955 = vcmp.eq.f32.partialorder %v1385, 0.0
  %v1956 = vand.u32 %v1385, 2147483648
  %v1957 = vsel %vm1955, %v1956, %v1954
  %v1958 = vrsqrt.pop %v1395
  %v1959 = vmul.f32 %v1958, %v1395
  %v1960 = vmul.f32 %v1959, %v1958
  %v1961 = vmul.f32 0.5, %v1960
  %v1962 = vsub.f32 1.5, %v1961
  %v1963 = vmul.f32 %v1958, %v1962
  %v1964 = vmul.f32 %v1395, %v1963
  %vm1965 = vcmp.eq.f32.partialorder %v1395, inf
  %v1966 = vsel %vm1965, %v1395, %v1964
  %vm1967 = vcmp.eq.f32.partialorder %v1395, 0.0
  %v1968 = vand.u32 %v1395, 2147483648
  %v1969 = vsel %vm1967, %v1968, %v1966
  %v1970 = vrsqrt.pop %v1405
  %v1971 = vmul.f32 %v1970, %v1405
  %v1972 = vmul.f32 %v1971, %v1970
  %v1973 = vmul.f32 0.5, %v1972
  %v1974 = vsub.f32 1.5, %v1973
  %v1975 = vmul.f32 %v1970, %v1974
  %v1976 = vmul.f32 %v1405, %v1975
  %vm1977 = vcmp.eq.f32.partialorder %v1405, inf
  %v1978 = vsel %vm1977, %v1405, %v1976
  %vm1979 = vcmp.eq.f32.partialorder %v1405, 0.0
  %v1980 = vand.u32 %v1405, 2147483648
  %v1981 = vsel %vm1979, %v1980, %v1978
  %v1982 = vrsqrt.pop %v1415
  %v1983 = vmul.f32 %v1982, %v1415
  %v1984 = vmul.f32 %v1983, %v1982
  %v1985 = vmul.f32 0.5, %v1984
  %v1986 = vsub.f32 1.5, %v1985
  %v1987 = vmul.f32 %v1982, %v1986
  %v1988 = vmul.f32 %v1415, %v1987
  %vm1989 = vcmp.eq.f32.partialorder %v1415, inf
  %v1990 = vsel %vm1989, %v1415, %v1988
  %vm1991 = vcmp.eq.f32.partialorder %v1415, 0.0
  %v1992 = vand.u32 %v1415, 2147483648
  %v1993 = vsel %vm1991, %v1992, %v1990
  %v1994 = vrsqrt.pop %v1425
  %v1995 = vmul.f32 %v1994, %v1425
  %v1996 = vmul.f32 %v1995, %v1994
  %v1997 = vmul.f32 0.5, %v1996
  %v1998 = vsub.f32 1.5, %v1997
  %v1999 = vmul.f32 %v1994, %v1998
  %v2000 = vmul.f32 %v1425, %v1999
  %vm2001 = vcmp.eq.f32.partialorder %v1425, inf
  %v2002 = vsel %vm2001, %v1425, %v2000
  %vm2003 = vcmp.eq.f32.partialorder %v1425, 0.0
  %v2004 = vand.u32 %v1425, 2147483648
  %v2005 = vsel %vm2003, %v2004, %v2002
  %v2006 = vrsqrt.pop %v1435
  %v2007 = vmul.f32 %v2006, %v1435
  %v2008 = vmul.f32 %v2007, %v2006
  %v2009 = vmul.f32 0.5, %v2008
  %v2010 = vsub.f32 1.5, %v2009
  %v2011 = vmul.f32 %v2006, %v2010
  %v2012 = vmul.f32 %v1435, %v2011
  %vm2013 = vcmp.eq.f32.partialorder %v1435, inf
  %v2014 = vsel %vm2013, %v1435, %v2012
  %vm2015 = vcmp.eq.f32.partialorder %v1435, 0.0
  %v2016 = vand.u32 %v1435, 2147483648
  %v2017 = vsel %vm2015, %v2016, %v2014
  %v2018 = vrsqrt.pop %v1445
  %v2019 = vmul.f32 %v2018, %v1445
  %v2020 = vmul.f32 %v2019, %v2018
  %v2021 = vmul.f32 0.5, %v2020
  %v2022 = vsub.f32 1.5, %v2021
  %v2023 = vmul.f32 %v2018, %v2022
  %v2024 = vmul.f32 %v1445, %v2023
  %vm2025 = vcmp.eq.f32.partialorder %v1445, inf
  %v2026 = vsel %vm2025, %v1445, %v2024
  %vm2027 = vcmp.eq.f32.partialorder %v1445, 0.0
  %v2028 = vand.u32 %v1445, 2147483648
  %v2029 = vsel %vm2027, %v2028, %v2026
  %v2030 = vrsqrt.pop %v1455
  %v2031 = vmul.f32 %v2030, %v1455
  %v2032 = vmul.f32 %v2031, %v2030
  %v2033 = vmul.f32 0.5, %v2032
  %v2034 = vsub.f32 1.5, %v2033
  %v2035 = vmul.f32 %v2030, %v2034
  %v2036 = vmul.f32 %v1455, %v2035
  %vm2037 = vcmp.eq.f32.partialorder %v1455, inf
  %v2038 = vsel %vm2037, %v1455, %v2036
  %vm2039 = vcmp.eq.f32.partialorder %v1455, 0.0
  %v2040 = vand.u32 %v1455, 2147483648
  %v2041 = vsel %vm2039, %v2040, %v2038
  %v2042 = vrsqrt.pop %v1465
  %v2043 = vmul.f32 %v2042, %v1465
  %v2044 = vmul.f32 %v2043, %v2042
  %v2045 = vmul.f32 0.5, %v2044
  %v2046 = vsub.f32 1.5, %v2045
  %v2047 = vmul.f32 %v2042, %v2046
  %v2048 = vmul.f32 %v1465, %v2047
  %vm2049 = vcmp.eq.f32.partialorder %v1465, inf
  %v2050 = vsel %vm2049, %v1465, %v2048
  %vm2051 = vcmp.eq.f32.partialorder %v1465, 0.0
  %v2052 = vand.u32 %v1465, 2147483648
  %v2053 = vsel %vm2051, %v2052, %v2050
  %v2054 = vmul.f32 %v985, %v1477
  %v2055 = vmul.f32 %v995, %v1489
  %v2056 = vmul.f32 %v1005, %v1501
  %v2057 = vmul.f32 %v1015, %v1513
  %v2058 = vmul.f32 %v1025, %v1525
  %v2059 = vmul.f32 %v1035, %v1537
  %v2060 = vmul.f32 %v1045, %v1549
  %v2061 = vmul.f32 %v1055, %v1561
  %v2062 = vmul.f32 %v1065, %v1573
  %v2063 = vmul.f32 %v1075, %v1585
  %v2064 = vmul.f32 %v1085, %v1597
  %v2065 = vmul.f32 %v1095, %v1609
  %v2066 = vmul.f32 %v1105, %v1621
  %v2067 = vmul.f32 %v1115, %v1633
  %v2068 = vmul.f32 %v1125, %v1645
  %v2069 = vmul.f32 %v1135, %v1657
  %v2070 = vmul.f32 %v1145, %v1669
  %v2071 = vmul.f32 %v1155, %v1681
  %v2072 = vmul.f32 %v1165, %v1693
  %v2073 = vmul.f32 %v1175, %v1705
  %v2074 = vmul.f32 %v1185, %v1717
  %v2075 = vmul.f32 %v1195, %v1729
  %v2076 = vmul.f32 %v1205, %v1741
  %v2077 = vmul.f32 %v1215, %v1753
  %v2078 = vmul.f32 %v1225, %v1765
  %v2079 = vmul.f32 %v1235, %v1777
  %v2080 = vmul.f32 %v1245, %v1789
  %v2081 = vmul.f32 %v1255, %v1801
  %v2082 = vmul.f32 %v1265, %v1813
  %v2083 = vmul.f32 %v1275, %v1825
  %v2084 = vmul.f32 %v1285, %v1837
  %v2085 = vmul.f32 %v1295, %v1849
  %v2086 = vmul.f32 %v1305, %v1861
  %v2087 = vmul.f32 %v1315, %v1873
  %v2088 = vmul.f32 %v1325, %v1885
  %v2089 = vmul.f32 %v1335, %v1897
  %v2090 = vmul.f32 %v1345, %v1909
  %v2091 = vmul.f32 %v1355, %v1921
  %v2092 = vmul.f32 %v1365, %v1933
  %v2093 = vmul.f32 %v1375, %v1945
  %v2094 = vmul.f32 %v1385, %v1957
  %v2095 = vmul.f32 %v1395, %v1969
  %v2096 = vmul.f32 %v1405, %v1981
  %v2097 = vmul.f32 %v1415, %v1993
  %v2098 = vmul.f32 %v1425, %v2005
  %v2099 = vmul.f32 %v1435, %v2017
  %v2100 = vmul.f32 %v1445, %v2029
  %v2101 = vmul.f32 %v1455, %v2041
  %v2102 = vmul.f32 %v1465, %v2053
  %v2103 = vmul.f32 %v464, %v2054
  %v2104 = vmul.f32 %v465, %v2055
  %v2105 = vmul.f32 %v466, %v2056
  %v2106 = vmul.f32 %v467, %v2057
  %v2107 = vmul.f32 %v468, %v2058
  %v2108 = vmul.f32 %v469, %v2059
  %v2109 = vmul.f32 %v470, %v2060
  %v2110 = vmul.f32 %v471, %v2061
  %v2111 = vmul.f32 %v472, %v2062
  %v2112 = vmul.f32 %v473, %v2063
  %v2113 = vmul.f32 %v474, %v2064
  %v2114 = vmul.f32 %v475, %v2065
  %v2115 = vmul.f32 %v476, %v2066
  %v2116 = vmul.f32 %v477, %v2067
  %v2117 = vmul.f32 %v478, %v2068
  %v2118 = vmul.f32 %v479, %v2069
  %v2119 = vmul.f32 %v480, %v2070
  %v2120 = vmul.f32 %v481, %v2071
  %v2121 = vmul.f32 %v482, %v2072
  %v2122 = vmul.f32 %v483, %v2073
  %v2123 = vmul.f32 %v484, %v2074
  %v2124 = vmul.f32 %v485, %v2075
  %v2125 = vmul.f32 %v486, %v2076
  %v2126 = vmul.f32 %v487, %v2077
  %v2127 = vmul.f32 %v488, %v2078
  %v2128 = vmul.f32 %v489, %v2079
  %v2129 = vmul.f32 %v490, %v2080
  %v2130 = vmul.f32 %v491, %v2081
  %v2131 = vmul.f32 %v492, %v2082
  %v2132 = vmul.f32 %v493, %v2083
  %v2133 = vmul.f32 %v494, %v2084
  %v2134 = vmul.f32 %v495, %v2085
  %v2135 = vmul.f32 %v496, %v2086
  %v2136 = vmul.f32 %v497, %v2087
  %v2137 = vmul.f32 %v498, %v2088
  %v2138 = vmul.f32 %v499, %v2089
  %v2139 = vmul.f32 %v500, %v2090
  %v2140 = vmul.f32 %v501, %v2091
  %v2141 = vmul.f32 %v502, %v2092
  %v2142 = vmul.f32 %v503, %v2093
  %v2143 = vmul.f32 %v504, %v2094
  %v2144 = vmul.f32 %v505, %v2095
  %v2145 = vmul.f32 %v506, %v2096
  %v2146 = vmul.f32 %v507, %v2097
  %v2147 = vmul.f32 %v508, %v2098
  %v2148 = vmul.f32 %v509, %v2099
  %v2149 = vmul.f32 %v510, %v2100
  %v2150 = vmul.f32 %v511, %v2101
  %v2151 = vmul.f32 %v512, %v2102
  %v2152 = vpack.c.bf16 %v2103, %v2103
  %v2153 = vpack.c.bf16 %v2104, %v2104
  %v2154 = vpack.c.bf16 %v2105, %v2105
  %v2155 = vpack.c.bf16 %v2106, %v2106
  %v2156 = vpack.c.bf16 %v2107, %v2107
  %v2157 = vpack.c.bf16 %v2108, %v2108
  %v2158 = vpack.c.bf16 %v2109, %v2109
  %v2159 = vpack.c.bf16 %v2110, %v2110
  %v2160 = vpack.c.bf16 %v2111, %v2111
  %v2161 = vpack.c.bf16 %v2112, %v2112
  %v2162 = vpack.c.bf16 %v2113, %v2113
  %v2163 = vpack.c.bf16 %v2114, %v2114
  %v2164 = vpack.c.bf16 %v2115, %v2115
  %v2165 = vpack.c.bf16 %v2116, %v2116
  %v2166 = vpack.c.bf16 %v2117, %v2117
  %v2167 = vpack.c.bf16 %v2118, %v2118
  %v2168 = vpack.c.bf16 %v2119, %v2119
  %v2169 = vpack.c.bf16 %v2120, %v2120
  %v2170 = vpack.c.bf16 %v2121, %v2121
  %v2171 = vpack.c.bf16 %v2122, %v2122
  %v2172 = vpack.c.bf16 %v2123, %v2123
  %v2173 = vpack.c.bf16 %v2124, %v2124
  %v2174 = vpack.c.bf16 %v2125, %v2125
  %v2175 = vpack.c.bf16 %v2126, %v2126
  %v2176 = vpack.c.bf16 %v2127, %v2127
  %v2177 = vpack.c.bf16 %v2128, %v2128
  %v2178 = vpack.c.bf16 %v2129, %v2129
  %v2179 = vpack.c.bf16 %v2130, %v2130
  %v2180 = vpack.c.bf16 %v2131, %v2131
  %v2181 = vpack.c.bf16 %v2132, %v2132
  %v2182 = vpack.c.bf16 %v2133, %v2133
  %v2183 = vpack.c.bf16 %v2134, %v2134
  %v2184 = vpack.c.bf16 %v2135, %v2135
  %v2185 = vpack.c.bf16 %v2136, %v2136
  %v2186 = vpack.c.bf16 %v2137, %v2137
  %v2187 = vpack.c.bf16 %v2138, %v2138
  %v2188 = vpack.c.bf16 %v2139, %v2139
  %v2189 = vpack.c.bf16 %v2140, %v2140
  %v2190 = vpack.c.bf16 %v2141, %v2141
  %v2191 = vpack.c.bf16 %v2142, %v2142
  %v2192 = vpack.c.bf16 %v2143, %v2143
  %v2193 = vpack.c.bf16 %v2144, %v2144
  %v2194 = vpack.c.bf16 %v2145, %v2145
  %v2195 = vpack.c.bf16 %v2146, %v2146
  %v2196 = vpack.c.bf16 %v2147, %v2147
  %v2197 = vpack.c.bf16 %v2148, %v2148
  %v2198 = vpack.c.bf16 %v2149, %v2149
  %v2199 = vpack.c.bf16 %v2150, %v2150
  %v2200 = vpack.c.bf16 %v2151, %v2151
  %vm2201 = vcmask 257024
  %2202 = vst.msk [vmem:[%s4] sm:$0xf] %vm2201, %v2152
  %2203 = vst.msk [vmem:[%s4 + $0x4] sm:$0xf] %vm2201, %v2153
  %2204 = vst.msk [vmem:[%s4 + $0x8] sm:$0xf] %vm2201, %v2154
  %2205 = vst.msk [vmem:[%s4 + $0xc] sm:$0xf] %vm2201, %v2155
  %2206 = vst.msk [vmem:[%s4 + $0x10] sm:$0xf] %vm2201, %v2156
  %2207 = vst.msk [vmem:[%s4 + $0x14] sm:$0xf] %vm2201, %v2157
  %2208 = vst.msk [vmem:[%s4 + $0x18] sm:$0xf] %vm2201, %v2158
  %2209 = vst.msk [vmem:[%s4 + $0x1c] sm:$0xf] %vm2201, %v2159
  %2210 = vst.msk [vmem:[%s4 + $0x20] sm:$0xf] %vm2201, %v2160
  %2211 = vst.msk [vmem:[%s4 + $0x24] sm:$0xf] %vm2201, %v2161
  %2212 = vst.msk [vmem:[%s4 + $0x28] sm:$0xf] %vm2201, %v2162
  %2213 = vst.msk [vmem:[%s4 + $0x2c] sm:$0xf] %vm2201, %v2163
  %2214 = vst.msk [vmem:[%s4 + $0x30] sm:$0xf] %vm2201, %v2164
  %2215 = vst.msk [vmem:[%s4 + $0x34] sm:$0xf] %vm2201, %v2165
  %2216 = vst.msk [vmem:[%s4 + $0x38] sm:$0xf] %vm2201, %v2166
  %2217 = vst.msk [vmem:[%s4 + $0x3c] sm:$0xf] %vm2201, %v2167
  %2218 = vst.msk [vmem:[%s4 + $0x40] sm:$0xf] %vm2201, %v2168
  %2219 = vst.msk [vmem:[%s4 + $0x44] sm:$0xf] %vm2201, %v2169
  %2220 = vst.msk [vmem:[%s4 + $0x48] sm:$0xf] %vm2201, %v2170
  %2221 = vst.msk [vmem:[%s4 + $0x4c] sm:$0xf] %vm2201, %v2171
  %2222 = vst.msk [vmem:[%s4 + $0x50] sm:$0xf] %vm2201, %v2172
  %2223 = vst.msk [vmem:[%s4 + $0x54] sm:$0xf] %vm2201, %v2173
  %2224 = vst.msk [vmem:[%s4 + $0x58] sm:$0xf] %vm2201, %v2174
  %2225 = vst.msk [vmem:[%s4 + $0x5c] sm:$0xf] %vm2201, %v2175
  %2226 = vst.msk [vmem:[%s4 + $0x60] sm:$0xf] %vm2201, %v2176
  %2227 = vst.msk [vmem:[%s4 + $0x64] sm:$0xf] %vm2201, %v2177
  %2228 = vst.msk [vmem:[%s4 + $0x68] sm:$0xf] %vm2201, %v2178
  %2229 = vst.msk [vmem:[%s4 + $0x6c] sm:$0xf] %vm2201, %v2179
  %2230 = vst.msk [vmem:[%s4 + $0x70] sm:$0xf] %vm2201, %v2180
  %2231 = vst.msk [vmem:[%s4 + $0x74] sm:$0xf] %vm2201, %v2181
  %2232 = vst.msk [vmem:[%s4 + $0x78] sm:$0xf] %vm2201, %v2182
  %2233 = vst.msk [vmem:[%s4 + $0x7c] sm:$0xf] %vm2201, %v2183
  %2234 = vst.msk [vmem:[%s4 + $0x80] sm:$0xf] %vm2201, %v2184
  %2235 = vst.msk [vmem:[%s4 + $0x84] sm:$0xf] %vm2201, %v2185
  %2236 = vst.msk [vmem:[%s4 + $0x88] sm:$0xf] %vm2201, %v2186
  %2237 = vst.msk [vmem:[%s4 + $0x8c] sm:$0xf] %vm2201, %v2187
  %2238 = vst.msk [vmem:[%s4 + $0x90] sm:$0xf] %vm2201, %v2188
  %2239 = vst.msk [vmem:[%s4 + $0x94] sm:$0xf] %vm2201, %v2189
  %2240 = vst.msk [vmem:[%s4 + $0x98] sm:$0xf] %vm2201, %v2190
  %2241 = vst.msk [vmem:[%s4 + $0x9c] sm:$0xf] %vm2201, %v2191
  %2242 = vst.msk [vmem:[%s4 + $0xa0] sm:$0xf] %vm2201, %v2192
  %2243 = vst.msk [vmem:[%s4 + $0xa4] sm:$0xf] %vm2201, %v2193
  %2244 = vst.msk [vmem:[%s4 + $0xa8] sm:$0xf] %vm2201, %v2194
  %2245 = vst.msk [vmem:[%s4 + $0xac] sm:$0xf] %vm2201, %v2195
  %2246 = vst.msk [vmem:[%s4 + $0xb0] sm:$0xf] %vm2201, %v2196
  %2247 = vst.msk [vmem:[%s4 + $0xb4] sm:$0xf] %vm2201, %v2197
  %2248 = vst.msk [vmem:[%s4 + $0xb8] sm:$0xf] %vm2201, %v2198
  %2249 = vst.msk [vmem:[%s4 + $0xbc] sm:$0xf] %vm2201, %v2199
  %2250 = vst.msk [vmem:[%s4 + $0xc0] sm:$0xf] %vm2201, %v2200
  // Predicated region
  $region18: #{itracker_forward.4} parent=0 // pred_check
    _
  $region19: #{itracker_forward.4} parent=0 // pred_check_branch
    %2252 = sbr.rel (0) target = $region21
  $region20: #{itracker_forward.4} parent=0 // pred_region
    _
  $region21: #{itracker_forward.4} parent=0 // pred_fallthru
    _
  // Predicated region
  $region22: #{itracker_forward.4} parent=0 // pred_check
    _
  $region23: #{itracker_forward.4} parent=0 // pred_check_branch
    %2254 = sbr.rel (0) target = $region25
  $region24: #{itracker_forward.4} parent=0 // pred_region
    _
  $region25: #{itracker_forward.4} parent=0 // pred_fallthru
    _

// kernel: itracker_forward.5
$region0: #{itracker_forward.5}
  #allocation0 [shape = 'u32[]', space=smem, size = 0x4, offset = 0x4, fixed_abs, tag = 'smem constant byte address 0x4 - core index']
  #allocation1 [shape = 'u32[72,128]{1,0:T(1,128)}', space=vmem, size = 0x9000, scoped, tag = 'internal scratch']
  %s0 = inlined_call_operand.vmem [shape: bf16[392,896], index: 0, kind: input, shape index: {}]
  %s1 = inlined_call_operand.vmem [shape: bf16[896,64], index: 1, kind: input, shape index: {}]
  %s2 = inlined_call_operand.vmem [shape: f32[1,64], index: 2, kind: input, shape index: {}]
  %s3 = inlined_call_operand.vmem [shape: f32[64,64], index: 3, kind: input, shape index: {}]
  %s4 = inlined_call_operand.vmem [shape: bf16[392,64], index: 4, kind: output, shape index: {}]
  %s5 = sld [smem:[#allocation0]]
  $region26: #{itracker_forward.5} parent=0
    _
  %s7 = ssub.s32 1, %s5
  %s8 = scalar_select 0, %s7, %s5
  // Predicated region
  $region2: #{itracker_forward.5} parent=0 // pred_check
    _
  $region3: #{itracker_forward.5} parent=0 // pred_check_branch
    %10 = sbr.rel (0) target = $region5
  $region4: #{itracker_forward.5} parent=0 // pred_region
    _
  $region5: #{itracker_forward.5} parent=0 // pred_fallthru
    _
  // Predicated region
  $region6: #{itracker_forward.5} parent=0 // pred_check
    _
  $region7: #{itracker_forward.5} parent=0 // pred_check_branch
    %12 = sbr.rel (0) target = $region9
  $region8: #{itracker_forward.5} parent=0 // pred_region
    _
  $region9: #{itracker_forward.5} parent=0 // pred_fallthru
    _
  // Predicated region
  $region10: #{itracker_forward.5} parent=0 // pred_check
    _
  $region11: #{itracker_forward.5} parent=0 // pred_check_branch
    %14 = sbr.rel (0) target = $region13
  $region12: #{itracker_forward.5} parent=0 // pred_region
    _
  $region13: #{itracker_forward.5} parent=0 // pred_fallthru
    _
  // Predicated region
  $region14: #{itracker_forward.5} parent=0 // pred_check
    _
  $region15: #{itracker_forward.5} parent=0 // pred_check_branch
    %16 = sbr.rel (0) target = $region17
  $region16: #{itracker_forward.5} parent=0 // pred_region
    _
  $region17: #{itracker_forward.5} parent=0 // pred_fallthru
    _
  %v17 = vld [vmem:[%s0] sm:$0xff]
  %v18 = vld [vmem:[%s0 + $0x8] sm:$0xff]
  %v19 = vld [vmem:[%s0 + $0x10] sm:$0xff]
  %v20 = vld [vmem:[%s0 + $0x18] sm:$0xf]
  %v21 = vld [vmem:[%s0 + $0x1c] sm:$0xff]
  %v22 = vld [vmem:[%s0 + $0x24] sm:$0xff]
  %v23 = vld [vmem:[%s0 + $0x2c] sm:$0xff]
  %v24 = vld [vmem:[%s0 + $0x34] sm:$0xf]
  %v25 = vld [vmem:[%s0 + $0x38] sm:$0xff]
  %v26 = vld [vmem:[%s0 + $0x40] sm:$0xff]
  %v27 = vld [vmem:[%s0 + $0x48] sm:$0xff]
  %v28 = vld [vmem:[%s0 + $0x50] sm:$0xf]
  %v29 = vld [vmem:[%s0 + $0x54] sm:$0xff]
  %v30 = vld [vmem:[%s0 + $0x5c] sm:$0xff]
  %v31 = vld [vmem:[%s0 + $0x64] sm:$0xff]
  %v32 = vld [vmem:[%s0 + $0x6c] sm:$0xf]
  %v33 = vld [vmem:[%s0 + $0x70] sm:$0xff]
  %v34 = vld [vmem:[%s0 + $0x78] sm:$0xff]
  %v35 = vld [vmem:[%s0 + $0x80] sm:$0xff]
  %v36 = vld [vmem:[%s0 + $0x88] sm:$0xf]
  %v37 = vld [vmem:[%s0 + $0x8c] sm:$0xff]
  %v38 = vld [vmem:[%s0 + $0x94] sm:$0xff]
  %v39 = vld [vmem:[%s0 + $0x9c] sm:$0xff]
  %v40 = vld [vmem:[%s0 + $0xa4] sm:$0xf]
  %v41 = vld [vmem:[%s0 + $0xa8] sm:$0xff]
  %v42 = vld [vmem:[%s0 + $0xb0] sm:$0xff]
  %v43 = vld [vmem:[%s0 + $0xb8] sm:$0xff]
  %v44 = vld [vmem:[%s0 + $0xc0] sm:$0xf]
  %v45 = vld [vmem:[%s0 + $0xc4] sm:$0xff]
  %v46 = vld [vmem:[%s0 + $0xcc] sm:$0xff]
  %v47 = vld [vmem:[%s0 + $0xd4] sm:$0xff]
  %v48 = vld [vmem:[%s0 + $0xdc] sm:$0xf]
  %v49 = vld [vmem:[%s0 + $0xe0] sm:$0xff]
  %v50 = vld [vmem:[%s0 + $0xe8] sm:$0xff]
  %v51 = vld [vmem:[%s0 + $0xf0] sm:$0xff]
  %v52 = vld [vmem:[%s0 + $0xf8] sm:$0xf]
  %v53 = vld [vmem:[%s0 + $0xfc] sm:$0xff]
  %v54 = vld [vmem:[%s0 + $0x104] sm:$0xff]
  %v55 = vld [vmem:[%s0 + $0x10c] sm:$0xff]
  %v56 = vld [vmem:[%s0 + $0x114] sm:$0xf]
  %v57 = vld [vmem:[%s0 + $0x118] sm:$0xff]
  %v58 = vld [vmem:[%s0 + $0x120] sm:$0xff]
  %v59 = vld [vmem:[%s0 + $0x128] sm:$0xff]
  %v60 = vld [vmem:[%s0 + $0x130] sm:$0xf]
  %v61 = vld [vmem:[%s0 + $0x134] sm:$0xff]
  %v62 = vld [vmem:[%s0 + $0x13c] sm:$0xff]
  %v63 = vld [vmem:[%s0 + $0x144] sm:$0xff]
  %v64 = vld [vmem:[%s0 + $0x14c] sm:$0xf]
  %v65 = vld [vmem:[%s0 + $0x150] sm:$0xff]
  %v66 = vld [vmem:[%s0 + $0x158] sm:$0xff]
  %v67 = vld [vmem:[%s0 + $0x160] sm:$0xff]
  %v68 = vld [vmem:[%s0 + $0x168] sm:$0xf]
  %v69 = vld [vmem:[%s0 + $0x16c] sm:$0xff]
  %v70 = vld [vmem:[%s0 + $0x174] sm:$0xff]
  %v71 = vld [vmem:[%s0 + $0x17c] sm:$0xff]
  %v72 = vld [vmem:[%s0 + $0x184] sm:$0xf]
  %v73 = vld [vmem:[%s0 + $0x188] sm:$0xff]
  %v74 = vld [vmem:[%s0 + $0x190] sm:$0xff]
  %v75 = vld [vmem:[%s0 + $0x198] sm:$0xff]
  %v76 = vld [vmem:[%s0 + $0x1a0] sm:$0xf]
  %v77 = vld [vmem:[%s0 + $0x1a4] sm:$0xff]
  %v78 = vld [vmem:[%s0 + $0x1ac] sm:$0xff]
  %v79 = vld [vmem:[%s0 + $0x1b4] sm:$0xff]
  %v80 = vld [vmem:[%s0 + $0x1bc] sm:$0xf]
  %v81 = vld [vmem:[%s0 + $0x1c0] sm:$0xff]
  %v82 = vld [vmem:[%s0 + $0x1c8] sm:$0xff]
  %v83 = vld [vmem:[%s0 + $0x1d0] sm:$0xff]
  %v84 = vld [vmem:[%s0 + $0x1d8] sm:$0xf]
  %v85 = vld [vmem:[%s0 + $0x1dc] sm:$0xff]
  %v86 = vld [vmem:[%s0 + $0x1e4] sm:$0xff]
  %v87 = vld [vmem:[%s0 + $0x1ec] sm:$0xff]
  %v88 = vld [vmem:[%s0 + $0x1f4] sm:$0xf]
  %v89 = vld [vmem:[%s0 + $0x1f8] sm:$0xff]
  %v90 = vld [vmem:[%s0 + $0x200] sm:$0xff]
  %v91 = vld [vmem:[%s0 + $0x208] sm:$0xff]
  %v92 = vld [vmem:[%s0 + $0x210] sm:$0xf]
  %v93 = vld [vmem:[%s0 + $0x214] sm:$0xff]
  %v94 = vld [vmem:[%s0 + $0x21c] sm:$0xff]
  %v95 = vld [vmem:[%s0 + $0x224] sm:$0xff]
  %v96 = vld [vmem:[%s0 + $0x22c] sm:$0xf]
  %v97 = vld [vmem:[%s0 + $0x230] sm:$0xff]
  %v98 = vld [vmem:[%s0 + $0x238] sm:$0xff]
  %v99 = vld [vmem:[%s0 + $0x240] sm:$0xff]
  %v100 = vld [vmem:[%s0 + $0x248] sm:$0xf]
  %v101 = vld [vmem:[%s0 + $0x24c] sm:$0xff]
  %v102 = vld [vmem:[%s0 + $0x254] sm:$0xff]
  %v103 = vld [vmem:[%s0 + $0x25c] sm:$0xff]
  %v104 = vld [vmem:[%s0 + $0x264] sm:$0xf]
  %v105 = vld [vmem:[%s0 + $0x268] sm:$0xff]
  %v106 = vld [vmem:[%s0 + $0x270] sm:$0xff]
  %v107 = vld [vmem:[%s0 + $0x278] sm:$0xff]
  %v108 = vld [vmem:[%s0 + $0x280] sm:$0xf]
  %v109 = vld [vmem:[%s0 + $0x284] sm:$0xff]
  %v110 = vld [vmem:[%s0 + $0x28c] sm:$0xff]
  %v111 = vld [vmem:[%s0 + $0x294] sm:$0xff]
  %v112 = vld [vmem:[%s0 + $0x29c] sm:$0xf]
  %v113 = vld [vmem:[%s0 + $0x2a0] sm:$0xff]
  %v114 = vld [vmem:[%s0 + $0x2a8] sm:$0xff]
  %v115 = vld [vmem:[%s0 + $0x2b0] sm:$0xff]
  %v116 = vld [vmem:[%s0 + $0x2b8] sm:$0xf]
  %v117 = vld [vmem:[%s0 + $0x2bc] sm:$0xff]
  %v118 = vld [vmem:[%s0 + $0x2c4] sm:$0xff]
  %v119 = vld [vmem:[%s0 + $0x2cc] sm:$0xff]
  %v120 = vld [vmem:[%s0 + $0x2d4] sm:$0xf]
  %v121 = vld [vmem:[%s0 + $0x2d8] sm:$0xff]
  %v122 = vld [vmem:[%s0 + $0x2e0] sm:$0xff]
  %v123 = vld [vmem:[%s0 + $0x2e8] sm:$0xff]
  %v124 = vld [vmem:[%s0 + $0x2f0] sm:$0xf]
  %v125 = vld [vmem:[%s0 + $0x2f4] sm:$0xff]
  %v126 = vld [vmem:[%s0 + $0x2fc] sm:$0xff]
  %v127 = vld [vmem:[%s0 + $0x304] sm:$0xff]
  %v128 = vld [vmem:[%s0 + $0x30c] sm:$0xf]
  %v129 = vld [vmem:[%s0 + $0x310] sm:$0xff]
  %v130 = vld [vmem:[%s0 + $0x318] sm:$0xff]
  %v131 = vld [vmem:[%s0 + $0x320] sm:$0xff]
  %v132 = vld [vmem:[%s0 + $0x328] sm:$0xf]
  %v133 = vld [vmem:[%s0 + $0x32c] sm:$0xff]
  %v134 = vld [vmem:[%s0 + $0x334] sm:$0xff]
  %v135 = vld [vmem:[%s0 + $0x33c] sm:$0xff]
  %v136 = vld [vmem:[%s0 + $0x344] sm:$0xf]
  %v137 = vld [vmem:[%s0 + $0x348] sm:$0xff]
  %v138 = vld [vmem:[%s0 + $0x350] sm:$0xff]
  %v139 = vld [vmem:[%s0 + $0x358] sm:$0xff]
  %v140 = vld [vmem:[%s0 + $0x360] sm:$0xf]
  %v141 = vld [vmem:[%s0 + $0x364] sm:$0xff]
  %v142 = vld [vmem:[%s0 + $0x36c] sm:$0xff]
  %v143 = vld [vmem:[%s0 + $0x374] sm:$0xff]
  %v144 = vld [vmem:[%s0 + $0x37c] sm:$0xf]
  %v145 = vld [vmem:[%s0 + $0x380] sm:$0xff]
  %v146 = vld [vmem:[%s0 + $0x388] sm:$0xff]
  %v147 = vld [vmem:[%s0 + $0x390] sm:$0xff]
  %v148 = vld [vmem:[%s0 + $0x398] sm:$0xf]
  %v149 = vld [vmem:[%s0 + $0x39c] sm:$0xff]
  %v150 = vld [vmem:[%s0 + $0x3a4] sm:$0xff]
  %v151 = vld [vmem:[%s0 + $0x3ac] sm:$0xff]
  %v152 = vld [vmem:[%s0 + $0x3b4] sm:$0xf]
  %v153 = vld [vmem:[%s0 + $0x3b8] sm:$0xff]
  %v154 = vld [vmem:[%s0 + $0x3c0] sm:$0xff]
  %v155 = vld [vmem:[%s0 + $0x3c8] sm:$0xff]
  %v156 = vld [vmem:[%s0 + $0x3d0] sm:$0xf]
  %v157 = vld [vmem:[%s0 + $0x3d4] sm:$0xff]
  %v158 = vld [vmem:[%s0 + $0x3dc] sm:$0xff]
  %v159 = vld [vmem:[%s0 + $0x3e4] sm:$0xff]
  %v160 = vld [vmem:[%s0 + $0x3ec] sm:$0xf]
  %v161 = vld [vmem:[%s0 + $0x3f0] sm:$0xff]
  %v162 = vld [vmem:[%s0 + $0x3f8] sm:$0xff]
  %v163 = vld [vmem:[%s0 + $0x400] sm:$0xff]
  %v164 = vld [vmem:[%s0 + $0x408] sm:$0xf]
  %v165 = vld [vmem:[%s0 + $0x40c] sm:$0xff]
  %v166 = vld [vmem:[%s0 + $0x414] sm:$0xff]
  %v167 = vld [vmem:[%s0 + $0x41c] sm:$0xff]
  %v168 = vld [vmem:[%s0 + $0x424] sm:$0xf]
  %v169 = vld [vmem:[%s0 + $0x428] sm:$0xff]
  %v170 = vld [vmem:[%s0 + $0x430] sm:$0xff]
  %v171 = vld [vmem:[%s0 + $0x438] sm:$0xff]
  %v172 = vld [vmem:[%s0 + $0x440] sm:$0xf]
  %v173 = vld [vmem:[%s0 + $0x444] sm:$0xff]
  %v174 = vld [vmem:[%s0 + $0x44c] sm:$0xff]
  %v175 = vld [vmem:[%s0 + $0x454] sm:$0xff]
  %v176 = vld [vmem:[%s0 + $0x45c] sm:$0xf]
  %v177 = vld [vmem:[%s0 + $0x460] sm:$0xff]
  %v178 = vld [vmem:[%s0 + $0x468] sm:$0xff]
  %v179 = vld [vmem:[%s0 + $0x470] sm:$0xff]
  %v180 = vld [vmem:[%s0 + $0x478] sm:$0xf]
  %v181 = vld [vmem:[%s0 + $0x47c] sm:$0xff]
  %v182 = vld [vmem:[%s0 + $0x484] sm:$0xff]
  %v183 = vld [vmem:[%s0 + $0x48c] sm:$0xff]
  %v184 = vld [vmem:[%s0 + $0x494] sm:$0xf]
  %v185 = vld [vmem:[%s0 + $0x498] sm:$0xff]
  %v186 = vld [vmem:[%s0 + $0x4a0] sm:$0xff]
  %v187 = vld [vmem:[%s0 + $0x4a8] sm:$0xff]
  %v188 = vld [vmem:[%s0 + $0x4b0] sm:$0xf]
  %v189 = vld [vmem:[%s0 + $0x4b4] sm:$0xff]
  %v190 = vld [vmem:[%s0 + $0x4bc] sm:$0xff]
  %v191 = vld [vmem:[%s0 + $0x4c4] sm:$0xff]
  %v192 = vld [vmem:[%s0 + $0x4cc] sm:$0xf]
  %v193 = vld [vmem:[%s0 + $0x4d0] sm:$0xff]
  %v194 = vld [vmem:[%s0 + $0x4d8] sm:$0xff]
  %v195 = vld [vmem:[%s0 + $0x4e0] sm:$0xff]
  %v196 = vld [vmem:[%s0 + $0x4e8] sm:$0xf]
  %v197 = vld [vmem:[%s0 + $0x4ec] sm:$0xff]
  %v198 = vld [vmem:[%s0 + $0x4f4] sm:$0xff]
  %v199 = vld [vmem:[%s0 + $0x4fc] sm:$0xff]
  %v200 = vld [vmem:[%s0 + $0x504] sm:$0xf]
  %v201 = vld [vmem:[%s0 + $0x508] sm:$0xff]
  %v202 = vld [vmem:[%s0 + $0x510] sm:$0xff]
  %v203 = vld [vmem:[%s0 + $0x518] sm:$0xff]
  %v204 = vld [vmem:[%s0 + $0x520] sm:$0xf]
  %v205 = vld [vmem:[%s0 + $0x524] sm:$0xff]
  %v206 = vld [vmem:[%s0 + $0x52c] sm:$0xff]
  %v207 = vld [vmem:[%s0 + $0x534] sm:$0xff]
  %v208 = vld [vmem:[%s0 + $0x53c] sm:$0xf]
  %v209 = vld [vmem:[%s0 + $0x540] sm:$0xff]
  %v210 = vld [vmem:[%s0 + $0x548] sm:$0xff]
  %v211 = vld [vmem:[%s0 + $0x550] sm:$0xff]
  %v212 = vld [vmem:[%s0 + $0x558] sm:$0xf]
  %v213 = vld [vmem:[%s1] sm:$0xf]
  %v214 = vld [vmem:[%s1 + $0x4] sm:$0xf]
  %v215 = vld [vmem:[%s1 + $0x8] sm:$0xf]
  %v216 = vld [vmem:[%s1 + $0xc] sm:$0xf]
  %v217 = vld [vmem:[%s1 + $0x10] sm:$0xf]
  %v218 = vld [vmem:[%s1 + $0x14] sm:$0xf]
  %v219 = vld [vmem:[%s1 + $0x18] sm:$0xf]
  %v220 = vld [vmem:[%s1 + $0x1c] sm:$0xf]
  %v221 = vld [vmem:[%s1 + $0x20] sm:$0xf]
  %v222 = vld [vmem:[%s1 + $0x24] sm:$0xf]
  %v223 = vld [vmem:[%s1 + $0x28] sm:$0xf]
  %v224 = vld [vmem:[%s1 + $0x2c] sm:$0xf]
  %v225 = vld [vmem:[%s1 + $0x30] sm:$0xf]
  %v226 = vld [vmem:[%s1 + $0x34] sm:$0xf]
  %v227 = vld [vmem:[%s1 + $0x38] sm:$0xf]
  %v228 = vld [vmem:[%s1 + $0x3c] sm:$0xf]
  %v229 = vld [vmem:[%s1 + $0x40] sm:$0xf]
  %v230 = vld [vmem:[%s1 + $0x44] sm:$0xf]
  %v231 = vld [vmem:[%s1 + $0x48] sm:$0xf]
  %v232 = vld [vmem:[%s1 + $0x4c] sm:$0xf]
  %v233 = vld [vmem:[%s1 + $0x50] sm:$0xf]
  %v234 = vld [vmem:[%s1 + $0x54] sm:$0xf]
  %v235 = vld [vmem:[%s1 + $0x58] sm:$0xf]
  %v236 = vld [vmem:[%s1 + $0x5c] sm:$0xf]
  %v237 = vld [vmem:[%s1 + $0x60] sm:$0xf]
  %v238 = vld [vmem:[%s1 + $0x64] sm:$0xf]
  %v239 = vld [vmem:[%s1 + $0x68] sm:$0xf]
  %v240 = vld [vmem:[%s1 + $0x6c] sm:$0xf]
  %v241 = vld [vmem:[%s1 + $0x70] sm:$0xf]
  %v242 = vld [vmem:[%s1 + $0x74] sm:$0xf]
  %v243 = vld [vmem:[%s1 + $0x78] sm:$0xf]
  %v244 = vld [vmem:[%s1 + $0x7c] sm:$0xf]
  %v245 = vld [vmem:[%s1 + $0x80] sm:$0xf]
  %v246 = vld [vmem:[%s1 + $0x84] sm:$0xf]
  %v247 = vld [vmem:[%s1 + $0x88] sm:$0xf]
  %v248 = vld [vmem:[%s1 + $0x8c] sm:$0xf]
  %v249 = vld [vmem:[%s1 + $0x90] sm:$0xf]
  %v250 = vld [vmem:[%s1 + $0x94] sm:$0xf]
  %v251 = vld [vmem:[%s1 + $0x98] sm:$0xf]
  %v252 = vld [vmem:[%s1 + $0x9c] sm:$0xf]
  %v253 = vld [vmem:[%s1 + $0xa0] sm:$0xf]
  %v254 = vld [vmem:[%s1 + $0xa4] sm:$0xf]
  %v255 = vld [vmem:[%s1 + $0xa8] sm:$0xf]
  %v256 = vld [vmem:[%s1 + $0xac] sm:$0xf]
  %v257 = vld [vmem:[%s1 + $0xb0] sm:$0xf]
  %v258 = vld [vmem:[%s1 + $0xb4] sm:$0xf]
  %v259 = vld [vmem:[%s1 + $0xb8] sm:$0xf]
  %v260 = vld [vmem:[%s1 + $0xbc] sm:$0xf]
  %v261 = vld [vmem:[%s1 + $0xc0] sm:$0xf]
  %v262 = vld [vmem:[%s1 + $0xc4] sm:$0xf]
  %v263 = vld [vmem:[%s1 + $0xc8] sm:$0xf]
  %v264 = vld [vmem:[%s1 + $0xcc] sm:$0xf]
  %v265 = vld [vmem:[%s1 + $0xd0] sm:$0xf]
  %v266 = vld [vmem:[%s1 + $0xd4] sm:$0xf]
  %v267 = vld [vmem:[%s1 + $0xd8] sm:$0xf]
  %v268 = vld [vmem:[%s1 + $0xdc] sm:$0xf]
  %v269 = vld [vmem:[%s1 + $0xe0] sm:$0xf]
  %v270 = vld [vmem:[%s1 + $0xe4] sm:$0xf]
  %v271 = vld [vmem:[%s1 + $0xe8] sm:$0xf]
  %v272 = vld [vmem:[%s1 + $0xec] sm:$0xf]
  %v273 = vld [vmem:[%s1 + $0xf0] sm:$0xf]
  %v274 = vld [vmem:[%s1 + $0xf4] sm:$0xf]
  %v275 = vld [vmem:[%s1 + $0xf8] sm:$0xf]
  %v276 = vld [vmem:[%s1 + $0xfc] sm:$0xf]
  %v277 = vld [vmem:[%s1 + $0x100] sm:$0xf]
  %v278 = vld [vmem:[%s1 + $0x104] sm:$0xf]
  %v279 = vld [vmem:[%s1 + $0x108] sm:$0xf]
  %v280 = vld [vmem:[%s1 + $0x10c] sm:$0xf]
  %v281 = vld [vmem:[%s1 + $0x110] sm:$0xf]
  %v282 = vld [vmem:[%s1 + $0x114] sm:$0xf]
  %v283 = vld [vmem:[%s1 + $0x118] sm:$0xf]
  %v284 = vld [vmem:[%s1 + $0x11c] sm:$0xf]
  %v285 = vld [vmem:[%s1 + $0x120] sm:$0xf]
  %v286 = vld [vmem:[%s1 + $0x124] sm:$0xf]
  %v287 = vld [vmem:[%s1 + $0x128] sm:$0xf]
  %v288 = vld [vmem:[%s1 + $0x12c] sm:$0xf]
  %v289 = vld [vmem:[%s1 + $0x130] sm:$0xf]
  %v290 = vld [vmem:[%s1 + $0x134] sm:$0xf]
  %v291 = vld [vmem:[%s1 + $0x138] sm:$0xf]
  %v292 = vld [vmem:[%s1 + $0x13c] sm:$0xf]
  %v293 = vld [vmem:[%s1 + $0x140] sm:$0xf]
  %v294 = vld [vmem:[%s1 + $0x144] sm:$0xf]
  %v295 = vld [vmem:[%s1 + $0x148] sm:$0xf]
  %v296 = vld [vmem:[%s1 + $0x14c] sm:$0xf]
  %v297 = vld [vmem:[%s1 + $0x150] sm:$0xf]
  %v298 = vld [vmem:[%s1 + $0x154] sm:$0xf]
  %v299 = vld [vmem:[%s1 + $0x158] sm:$0xf]
  %v300 = vld [vmem:[%s1 + $0x15c] sm:$0xf]
  %v301 = vld [vmem:[%s1 + $0x160] sm:$0xf]
  %v302 = vld [vmem:[%s1 + $0x164] sm:$0xf]
  %v303 = vld [vmem:[%s1 + $0x168] sm:$0xf]
  %v304 = vld [vmem:[%s1 + $0x16c] sm:$0xf]
  %v305 = vld [vmem:[%s1 + $0x170] sm:$0xf]
  %v306 = vld [vmem:[%s1 + $0x174] sm:$0xf]
  %v307 = vld [vmem:[%s1 + $0x178] sm:$0xf]
  %v308 = vld [vmem:[%s1 + $0x17c] sm:$0xf]
  %v309 = vld [vmem:[%s1 + $0x180] sm:$0xf]
  %v310 = vld [vmem:[%s1 + $0x184] sm:$0xf]
  %v311 = vld [vmem:[%s1 + $0x188] sm:$0xf]
  %v312 = vld [vmem:[%s1 + $0x18c] sm:$0xf]
  %v313 = vld [vmem:[%s1 + $0x190] sm:$0xf]
  %v314 = vld [vmem:[%s1 + $0x194] sm:$0xf]
  %v315 = vld [vmem:[%s1 + $0x198] sm:$0xf]
  %v316 = vld [vmem:[%s1 + $0x19c] sm:$0xf]
  %v317 = vld [vmem:[%s1 + $0x1a0] sm:$0xf]
  %v318 = vld [vmem:[%s1 + $0x1a4] sm:$0xf]
  %v319 = vld [vmem:[%s1 + $0x1a8] sm:$0xf]
  %v320 = vld [vmem:[%s1 + $0x1ac] sm:$0xf]
  %v321 = vld [vmem:[%s1 + $0x1b0] sm:$0xf]
  %v322 = vld [vmem:[%s1 + $0x1b4] sm:$0xf]
  %v323 = vld [vmem:[%s1 + $0x1b8] sm:$0xf]
  %v324 = vld [vmem:[%s1 + $0x1bc] sm:$0xf]
  %v325 = vld [vmem:[%s2] sm:$0x1]
  %v327 = vperm.slane %v325, 0
  %v525 = vunpack.c.l.b16 %v17
  %v526 = vunpack.c.h.b16 %v17
  %v527 = vunpack.c.l.b16 %v18
  %v528 = vunpack.c.h.b16 %v18
  %v529 = vunpack.c.l.b16 %v19
  %v530 = vunpack.c.h.b16 %v19
  %v531 = vunpack.c.l.b16 %v20
  %v532 = vunpack.c.l.b16 %v21
  %v533 = vunpack.c.h.b16 %v21
  %v534 = vunpack.c.l.b16 %v22
  %v535 = vunpack.c.h.b16 %v22
  %v536 = vunpack.c.l.b16 %v23
  %v537 = vunpack.c.h.b16 %v23
  %v538 = vunpack.c.l.b16 %v24
  %v539 = vunpack.c.l.b16 %v25
  %v540 = vunpack.c.h.b16 %v25
  %v541 = vunpack.c.l.b16 %v26
  %v542 = vunpack.c.h.b16 %v26
  %v543 = vunpack.c.l.b16 %v27
  %v544 = vunpack.c.h.b16 %v27
  %v545 = vunpack.c.l.b16 %v28
  %v546 = vunpack.c.l.b16 %v29
  %v547 = vunpack.c.h.b16 %v29
  %v548 = vunpack.c.l.b16 %v30
  %v549 = vunpack.c.h.b16 %v30
  %v550 = vunpack.c.l.b16 %v31
  %v551 = vunpack.c.h.b16 %v31
  %v552 = vunpack.c.l.b16 %v32
  %v553 = vunpack.c.l.b16 %v33
  %v554 = vunpack.c.h.b16 %v33
  %v555 = vunpack.c.l.b16 %v34
  %v556 = vunpack.c.h.b16 %v34
  %v557 = vunpack.c.l.b16 %v35
  %v558 = vunpack.c.h.b16 %v35
  %v559 = vunpack.c.l.b16 %v36
  %v560 = vunpack.c.l.b16 %v37
  %v561 = vunpack.c.h.b16 %v37
  %v562 = vunpack.c.l.b16 %v38
  %v563 = vunpack.c.h.b16 %v38
  %v564 = vunpack.c.l.b16 %v39
  %v565 = vunpack.c.h.b16 %v39
  %v566 = vunpack.c.l.b16 %v40
  %v567 = vunpack.c.l.b16 %v41
  %v568 = vunpack.c.h.b16 %v41
  %v569 = vunpack.c.l.b16 %v42
  %v570 = vunpack.c.h.b16 %v42
  %v571 = vunpack.c.l.b16 %v43
  %v572 = vunpack.c.h.b16 %v43
  %v573 = vunpack.c.l.b16 %v44
  %v574 = vunpack.c.l.b16 %v45
  %v575 = vunpack.c.h.b16 %v45
  %v576 = vunpack.c.l.b16 %v46
  %v577 = vunpack.c.h.b16 %v46
  %v578 = vunpack.c.l.b16 %v47
  %v579 = vunpack.c.h.b16 %v47
  %v580 = vunpack.c.l.b16 %v48
  %v581 = vunpack.c.l.b16 %v49
  %v582 = vunpack.c.h.b16 %v49
  %v583 = vunpack.c.l.b16 %v50
  %v584 = vunpack.c.h.b16 %v50
  %v585 = vunpack.c.l.b16 %v51
  %v586 = vunpack.c.h.b16 %v51
  %v587 = vunpack.c.l.b16 %v52
  %v588 = vunpack.c.l.b16 %v53
  %v589 = vunpack.c.h.b16 %v53
  %v590 = vunpack.c.l.b16 %v54
  %v591 = vunpack.c.h.b16 %v54
  %v592 = vunpack.c.l.b16 %v55
  %v593 = vunpack.c.h.b16 %v55
  %v594 = vunpack.c.l.b16 %v56
  %v595 = vunpack.c.l.b16 %v57
  %v596 = vunpack.c.h.b16 %v57
  %v597 = vunpack.c.l.b16 %v58
  %v598 = vunpack.c.h.b16 %v58
  %v599 = vunpack.c.l.b16 %v59
  %v600 = vunpack.c.h.b16 %v59
  %v601 = vunpack.c.l.b16 %v60
  %v602 = vunpack.c.l.b16 %v61
  %v603 = vunpack.c.h.b16 %v61
  %v604 = vunpack.c.l.b16 %v62
  %v605 = vunpack.c.h.b16 %v62
  %v606 = vunpack.c.l.b16 %v63
  %v607 = vunpack.c.h.b16 %v63
  %v608 = vunpack.c.l.b16 %v64
  %v609 = vunpack.c.l.b16 %v65
  %v610 = vunpack.c.h.b16 %v65
  %v611 = vunpack.c.l.b16 %v66
  %v612 = vunpack.c.h.b16 %v66
  %v613 = vunpack.c.l.b16 %v67
  %v614 = vunpack.c.h.b16 %v67
  %v615 = vunpack.c.l.b16 %v68
  %v616 = vunpack.c.l.b16 %v69
  %v617 = vunpack.c.h.b16 %v69
  %v618 = vunpack.c.l.b16 %v70
  %v619 = vunpack.c.h.b16 %v70
  %v620 = vunpack.c.l.b16 %v71
  %v621 = vunpack.c.h.b16 %v71
  %v622 = vunpack.c.l.b16 %v72
  %v623 = vunpack.c.l.b16 %v73
  %v624 = vunpack.c.h.b16 %v73
  %v625 = vunpack.c.l.b16 %v74
  %v626 = vunpack.c.h.b16 %v74
  %v627 = vunpack.c.l.b16 %v75
  %v628 = vunpack.c.h.b16 %v75
  %v629 = vunpack.c.l.b16 %v76
  %v630 = vunpack.c.l.b16 %v77
  %v631 = vunpack.c.h.b16 %v77
  %v632 = vunpack.c.l.b16 %v78
  %v633 = vunpack.c.h.b16 %v78
  %v634 = vunpack.c.l.b16 %v79
  %v635 = vunpack.c.h.b16 %v79
  %v636 = vunpack.c.l.b16 %v80
  %v637 = vunpack.c.l.b16 %v81
  %v638 = vunpack.c.h.b16 %v81
  %v639 = vunpack.c.l.b16 %v82
  %v640 = vunpack.c.h.b16 %v82
  %v641 = vunpack.c.l.b16 %v83
  %v642 = vunpack.c.h.b16 %v83
  %v643 = vunpack.c.l.b16 %v84
  %v644 = vunpack.c.l.b16 %v85
  %v645 = vunpack.c.h.b16 %v85
  %v646 = vunpack.c.l.b16 %v86
  %v647 = vunpack.c.h.b16 %v86
  %v648 = vunpack.c.l.b16 %v87
  %v649 = vunpack.c.h.b16 %v87
  %v650 = vunpack.c.l.b16 %v88
  %v651 = vunpack.c.l.b16 %v89
  %v652 = vunpack.c.h.b16 %v89
  %v653 = vunpack.c.l.b16 %v90
  %v654 = vunpack.c.h.b16 %v90
  %v655 = vunpack.c.l.b16 %v91
  %v656 = vunpack.c.h.b16 %v91
  %v657 = vunpack.c.l.b16 %v92
  %v658 = vunpack.c.l.b16 %v93
  %v659 = vunpack.c.h.b16 %v93
  %v660 = vunpack.c.l.b16 %v94
  %v661 = vunpack.c.h.b16 %v94
  %v662 = vunpack.c.l.b16 %v95
  %v663 = vunpack.c.h.b16 %v95
  %v664 = vunpack.c.l.b16 %v96
  %v665 = vunpack.c.l.b16 %v97
  %v666 = vunpack.c.h.b16 %v97
  %v667 = vunpack.c.l.b16 %v98
  %v668 = vunpack.c.h.b16 %v98
  %v669 = vunpack.c.l.b16 %v99
  %v670 = vunpack.c.h.b16 %v99
  %v671 = vunpack.c.l.b16 %v100
  %v672 = vunpack.c.l.b16 %v101
  %v673 = vunpack.c.h.b16 %v101
  %v674 = vunpack.c.l.b16 %v102
  %v675 = vunpack.c.h.b16 %v102
  %v676 = vunpack.c.l.b16 %v103
  %v677 = vunpack.c.h.b16 %v103
  %v678 = vunpack.c.l.b16 %v104
  %v679 = vunpack.c.l.b16 %v105
  %v680 = vunpack.c.h.b16 %v105
  %v681 = vunpack.c.l.b16 %v106
  %v682 = vunpack.c.h.b16 %v106
  %v683 = vunpack.c.l.b16 %v107
  %v684 = vunpack.c.h.b16 %v107
  %v685 = vunpack.c.l.b16 %v108
  %v686 = vunpack.c.l.b16 %v109
  %v687 = vunpack.c.h.b16 %v109
  %v688 = vunpack.c.l.b16 %v110
  %v689 = vunpack.c.h.b16 %v110
  %v690 = vunpack.c.l.b16 %v111
  %v691 = vunpack.c.h.b16 %v111
  %v692 = vunpack.c.l.b16 %v112
  %v693 = vunpack.c.l.b16 %v113
  %v694 = vunpack.c.h.b16 %v113
  %v695 = vunpack.c.l.b16 %v114
  %v696 = vunpack.c.h.b16 %v114
  %v697 = vunpack.c.l.b16 %v115
  %v698 = vunpack.c.h.b16 %v115
  %v699 = vunpack.c.l.b16 %v116
  %v700 = vunpack.c.l.b16 %v117
  %v701 = vunpack.c.h.b16 %v117
  %v702 = vunpack.c.l.b16 %v118
  %v703 = vunpack.c.h.b16 %v118
  %v704 = vunpack.c.l.b16 %v119
  %v705 = vunpack.c.h.b16 %v119
  %v706 = vunpack.c.l.b16 %v120
  %v707 = vunpack.c.l.b16 %v121
  %v708 = vunpack.c.h.b16 %v121
  %v709 = vunpack.c.l.b16 %v122
  %v710 = vunpack.c.h.b16 %v122
  %v711 = vunpack.c.l.b16 %v123
  %v712 = vunpack.c.h.b16 %v123
  %v713 = vunpack.c.l.b16 %v124
  %v714 = vunpack.c.l.b16 %v125
  %v715 = vunpack.c.h.b16 %v125
  %v716 = vunpack.c.l.b16 %v126
  %v717 = vunpack.c.h.b16 %v126
  %v718 = vunpack.c.l.b16 %v127
  %v719 = vunpack.c.h.b16 %v127
  %v720 = vunpack.c.l.b16 %v128
  %v721 = vunpack.c.l.b16 %v129
  %v722 = vunpack.c.h.b16 %v129
  %v723 = vunpack.c.l.b16 %v130
  %v724 = vunpack.c.h.b16 %v130
  %v725 = vunpack.c.l.b16 %v131
  %v726 = vunpack.c.h.b16 %v131
  %v727 = vunpack.c.l.b16 %v132
  %v728 = vunpack.c.l.b16 %v133
  %v729 = vunpack.c.h.b16 %v133
  %v730 = vunpack.c.l.b16 %v134
  %v731 = vunpack.c.h.b16 %v134
  %v732 = vunpack.c.l.b16 %v135
  %v733 = vunpack.c.h.b16 %v135
  %v734 = vunpack.c.l.b16 %v136
  %v735 = vunpack.c.l.b16 %v137
  %v736 = vunpack.c.h.b16 %v137
  %v737 = vunpack.c.l.b16 %v138
  %v738 = vunpack.c.h.b16 %v138
  %v739 = vunpack.c.l.b16 %v139
  %v740 = vunpack.c.h.b16 %v139
  %v741 = vunpack.c.l.b16 %v140
  %v742 = vunpack.c.l.b16 %v141
  %v743 = vunpack.c.h.b16 %v141
  %v744 = vunpack.c.l.b16 %v142
  %v745 = vunpack.c.h.b16 %v142
  %v746 = vunpack.c.l.b16 %v143
  %v747 = vunpack.c.h.b16 %v143
  %v748 = vunpack.c.l.b16 %v144
  %v749 = vunpack.c.l.b16 %v145
  %v750 = vunpack.c.h.b16 %v145
  %v751 = vunpack.c.l.b16 %v146
  %v752 = vunpack.c.h.b16 %v146
  %v753 = vunpack.c.l.b16 %v147
  %v754 = vunpack.c.h.b16 %v147
  %v755 = vunpack.c.l.b16 %v148
  %v756 = vunpack.c.l.b16 %v149
  %v757 = vunpack.c.h.b16 %v149
  %v758 = vunpack.c.l.b16 %v150
  %v759 = vunpack.c.h.b16 %v150
  %v760 = vunpack.c.l.b16 %v151
  %v761 = vunpack.c.h.b16 %v151
  %v762 = vunpack.c.l.b16 %v152
  %v763 = vunpack.c.l.b16 %v153
  %v764 = vunpack.c.h.b16 %v153
  %v765 = vunpack.c.l.b16 %v154
  %v766 = vunpack.c.h.b16 %v154
  %v767 = vunpack.c.l.b16 %v155
  %v768 = vunpack.c.h.b16 %v155
  %v769 = vunpack.c.l.b16 %v156
  %v770 = vunpack.c.l.b16 %v157
  %v771 = vunpack.c.h.b16 %v157
  %v772 = vunpack.c.l.b16 %v158
  %v773 = vunpack.c.h.b16 %v158
  %v774 = vunpack.c.l.b16 %v159
  %v775 = vunpack.c.h.b16 %v159
  %v776 = vunpack.c.l.b16 %v160
  %v777 = vunpack.c.l.b16 %v161
  %v778 = vunpack.c.h.b16 %v161
  %v779 = vunpack.c.l.b16 %v162
  %v780 = vunpack.c.h.b16 %v162
  %v781 = vunpack.c.l.b16 %v163
  %v782 = vunpack.c.h.b16 %v163
  %v783 = vunpack.c.l.b16 %v164
  %v784 = vunpack.c.l.b16 %v165
  %v785 = vunpack.c.h.b16 %v165
  %v786 = vunpack.c.l.b16 %v166
  %v787 = vunpack.c.h.b16 %v166
  %v788 = vunpack.c.l.b16 %v167
  %v789 = vunpack.c.h.b16 %v167
  %v790 = vunpack.c.l.b16 %v168
  %v791 = vunpack.c.l.b16 %v169
  %v792 = vunpack.c.h.b16 %v169
  %v793 = vunpack.c.l.b16 %v170
  %v794 = vunpack.c.h.b16 %v170
  %v795 = vunpack.c.l.b16 %v171
  %v796 = vunpack.c.h.b16 %v171
  %v797 = vunpack.c.l.b16 %v172
  %v798 = vunpack.c.l.b16 %v173
  %v799 = vunpack.c.h.b16 %v173
  %v800 = vunpack.c.l.b16 %v174
  %v801 = vunpack.c.h.b16 %v174
  %v802 = vunpack.c.l.b16 %v175
  %v803 = vunpack.c.h.b16 %v175
  %v804 = vunpack.c.l.b16 %v176
  %v805 = vunpack.c.l.b16 %v177
  %v806 = vunpack.c.h.b16 %v177
  %v807 = vunpack.c.l.b16 %v178
  %v808 = vunpack.c.h.b16 %v178
  %v809 = vunpack.c.l.b16 %v179
  %v810 = vunpack.c.h.b16 %v179
  %v811 = vunpack.c.l.b16 %v180
  %v812 = vunpack.c.l.b16 %v181
  %v813 = vunpack.c.h.b16 %v181
  %v814 = vunpack.c.l.b16 %v182
  %v815 = vunpack.c.h.b16 %v182
  %v816 = vunpack.c.l.b16 %v183
  %v817 = vunpack.c.h.b16 %v183
  %v818 = vunpack.c.l.b16 %v184
  %v819 = vunpack.c.l.b16 %v185
  %v820 = vunpack.c.h.b16 %v185
  %v821 = vunpack.c.l.b16 %v186
  %v822 = vunpack.c.h.b16 %v186
  %v823 = vunpack.c.l.b16 %v187
  %v824 = vunpack.c.h.b16 %v187
  %v825 = vunpack.c.l.b16 %v188
  %v826 = vunpack.c.l.b16 %v189
  %v827 = vunpack.c.h.b16 %v189
  %v828 = vunpack.c.l.b16 %v190
  %v829 = vunpack.c.h.b16 %v190
  %v830 = vunpack.c.l.b16 %v191
  %v831 = vunpack.c.h.b16 %v191
  %v832 = vunpack.c.l.b16 %v192
  %v833 = vunpack.c.l.b16 %v193
  %v834 = vunpack.c.h.b16 %v193
  %v835 = vunpack.c.l.b16 %v194
  %v836 = vunpack.c.h.b16 %v194
  %v837 = vunpack.c.l.b16 %v195
  %v838 = vunpack.c.h.b16 %v195
  %v839 = vunpack.c.l.b16 %v196
  %v840 = vunpack.c.l.b16 %v197
  %v841 = vunpack.c.h.b16 %v197
  %v842 = vunpack.c.l.b16 %v198
  %v843 = vunpack.c.h.b16 %v198
  %v844 = vunpack.c.l.b16 %v199
  %v845 = vunpack.c.h.b16 %v199
  %v846 = vunpack.c.l.b16 %v200
  %v847 = vunpack.c.l.b16 %v201
  %v848 = vunpack.c.h.b16 %v201
  %v849 = vunpack.c.l.b16 %v202
  %v850 = vunpack.c.h.b16 %v202
  %v851 = vunpack.c.l.b16 %v203
  %v852 = vunpack.c.h.b16 %v203
  %v853 = vunpack.c.l.b16 %v204
  %v854 = vunpack.c.l.b16 %v205
  %v855 = vunpack.c.h.b16 %v205
  %v856 = vunpack.c.l.b16 %v206
  %v857 = vunpack.c.h.b16 %v206
  %v858 = vunpack.c.l.b16 %v207
  %v859 = vunpack.c.h.b16 %v207
  %v860 = vunpack.c.l.b16 %v208
  %v861 = vunpack.c.l.b16 %v209
  %v862 = vunpack.c.h.b16 %v209
  %v863 = vunpack.c.l.b16 %v210
  %v864 = vunpack.c.h.b16 %v210
  %v865 = vunpack.c.l.b16 %v211
  %v866 = vunpack.c.h.b16 %v211
  %v867 = vunpack.c.l.b16 %v212
  %v868 = vpack.c.b16 %v532, %v525
  %v869 = vpack.c.b16 %v533, %v526
  %v870 = vpack.c.b16 %v534, %v527
  %v871 = vpack.c.b16 %v535, %v528
  %v872 = vpack.c.b16 %v536, %v529
  %v873 = vpack.c.b16 %v537, %v530
  %v874 = vpack.c.b16 %v538, %v531
  %v875 = vpack.c.b16 %v546, %v539
  %v876 = vpack.c.b16 %v547, %v540
  %v877 = vpack.c.b16 %v548, %v541
  %v878 = vpack.c.b16 %v549, %v542
  %v879 = vpack.c.b16 %v550, %v543
  %v880 = vpack.c.b16 %v551, %v544
  %v881 = vpack.c.b16 %v552, %v545
  %v882 = vpack.c.b16 %v560, %v553
  %v883 = vpack.c.b16 %v561, %v554
  %v884 = vpack.c.b16 %v562, %v555
  %v885 = vpack.c.b16 %v563, %v556
  %v886 = vpack.c.b16 %v564, %v557
  %v887 = vpack.c.b16 %v565, %v558
  %v888 = vpack.c.b16 %v566, %v559
  %v889 = vpack.c.b16 %v574, %v567
  %v890 = vpack.c.b16 %v575, %v568
  %v891 = vpack.c.b16 %v576, %v569
  %v892 = vpack.c.b16 %v577, %v570
  %v893 = vpack.c.b16 %v578, %v571
  %v894 = vpack.c.b16 %v579, %v572
  %v895 = vpack.c.b16 %v580, %v573
  %v896 = vpack.c.b16 %v588, %v581
  %v897 = vpack.c.b16 %v589, %v582
  %v898 = vpack.c.b16 %v590, %v583
  %v899 = vpack.c.b16 %v591, %v584
  %v900 = vpack.c.b16 %v592, %v585
  %v901 = vpack.c.b16 %v593, %v586
  %v902 = vpack.c.b16 %v594, %v587
  %v903 = vpack.c.b16 %v602, %v595
  %v904 = vpack.c.b16 %v603, %v596
  %v905 = vpack.c.b16 %v604, %v597
  %v906 = vpack.c.b16 %v605, %v598
  %v907 = vpack.c.b16 %v606, %v599
  %v908 = vpack.c.b16 %v607, %v600
  %v909 = vpack.c.b16 %v608, %v601
  %v910 = vpack.c.b16 %v616, %v609
  %v911 = vpack.c.b16 %v617, %v610
  %v912 = vpack.c.b16 %v618, %v611
  %v913 = vpack.c.b16 %v619, %v612
  %v914 = vpack.c.b16 %v620, %v613
  %v915 = vpack.c.b16 %v621, %v614
  %v916 = vpack.c.b16 %v622, %v615
  %v917 = vpack.c.b16 %v630, %v623
  %v918 = vpack.c.b16 %v631, %v624
  %v919 = vpack.c.b16 %v632, %v625
  %v920 = vpack.c.b16 %v633, %v626
  %v921 = vpack.c.b16 %v634, %v627
  %v922 = vpack.c.b16 %v635, %v628
  %v923 = vpack.c.b16 %v636, %v629
  %v924 = vpack.c.b16 %v644, %v637
  %v925 = vpack.c.b16 %v645, %v638
  %v926 = vpack.c.b16 %v646, %v639
  %v927 = vpack.c.b16 %v647, %v640
  %v928 = vpack.c.b16 %v648, %v641
  %v929 = vpack.c.b16 %v649, %v642
  %v930 = vpack.c.b16 %v650, %v643
  %v931 = vpack.c.b16 %v658, %v651
  %v932 = vpack.c.b16 %v659, %v652
  %v933 = vpack.c.b16 %v660, %v653
  %v934 = vpack.c.b16 %v661, %v654
  %v935 = vpack.c.b16 %v662, %v655
  %v936 = vpack.c.b16 %v663, %v656
  %v937 = vpack.c.b16 %v664, %v657
  %v938 = vpack.c.b16 %v672, %v665
  %v939 = vpack.c.b16 %v673, %v666
  %v940 = vpack.c.b16 %v674, %v667
  %v941 = vpack.c.b16 %v675, %v668
  %v942 = vpack.c.b16 %v676, %v669
  %v943 = vpack.c.b16 %v677, %v670
  %v944 = vpack.c.b16 %v678, %v671
  %v945 = vpack.c.b16 %v686, %v679
  %v946 = vpack.c.b16 %v687, %v680
  %v947 = vpack.c.b16 %v688, %v681
  %v948 = vpack.c.b16 %v689, %v682
  %v949 = vpack.c.b16 %v690, %v683
  %v950 = vpack.c.b16 %v691, %v684
  %v951 = vpack.c.b16 %v692, %v685
  %v952 = vpack.c.b16 %v700, %v693
  %v953 = vpack.c.b16 %v701, %v694
  %v954 = vpack.c.b16 %v702, %v695
  %v955 = vpack.c.b16 %v703, %v696
  %v956 = vpack.c.b16 %v704, %v697
  %v957 = vpack.c.b16 %v705, %v698
  %v958 = vpack.c.b16 %v706, %v699
  %v959 = vpack.c.b16 %v714, %v707
  %v960 = vpack.c.b16 %v715, %v708
  %v961 = vpack.c.b16 %v716, %v709
  %v962 = vpack.c.b16 %v717, %v710
  %v963 = vpack.c.b16 %v718, %v711
  %v964 = vpack.c.b16 %v719, %v712
  %v965 = vpack.c.b16 %v720, %v713
  %v966 = vpack.c.b16 %v728, %v721
  %v967 = vpack.c.b16 %v729, %v722
  %v968 = vpack.c.b16 %v730, %v723
  %v969 = vpack.c.b16 %v731, %v724
  %v970 = vpack.c.b16 %v732, %v725
  %v971 = vpack.c.b16 %v733, %v726
  %v972 = vpack.c.b16 %v734, %v727
  %v973 = vpack.c.b16 %v742, %v735
  %v974 = vpack.c.b16 %v743, %v736
  %v975 = vpack.c.b16 %v744, %v737
  %v976 = vpack.c.b16 %v745, %v738
  %v977 = vpack.c.b16 %v746, %v739
  %v978 = vpack.c.b16 %v747, %v740
  %v979 = vpack.c.b16 %v748, %v741
  %v980 = vpack.c.b16 %v756, %v749
  %v981 = vpack.c.b16 %v757, %v750
  %v982 = vpack.c.b16 %v758, %v751
  %v983 = vpack.c.b16 %v759, %v752
  %v984 = vpack.c.b16 %v760, %v753
  %v985 = vpack.c.b16 %v761, %v754
  %v986 = vpack.c.b16 %v762, %v755
  %v987 = vpack.c.b16 %v770, %v763
  %v988 = vpack.c.b16 %v771, %v764
  %v989 = vpack.c.b16 %v772, %v765
  %v990 = vpack.c.b16 %v773, %v766
  %v991 = vpack.c.b16 %v774, %v767
  %v992 = vpack.c.b16 %v775, %v768
  %v993 = vpack.c.b16 %v776, %v769
  %v994 = vpack.c.b16 %v784, %v777
  %v995 = vpack.c.b16 %v785, %v778
  %v996 = vpack.c.b16 %v786, %v779
  %v997 = vpack.c.b16 %v787, %v780
  %v998 = vpack.c.b16 %v788, %v781
  %v999 = vpack.c.b16 %v789, %v782
  %v1000 = vpack.c.b16 %v790, %v783
  %v1001 = vpack.c.b16 %v798, %v791
  %v1002 = vpack.c.b16 %v799, %v792
  %v1003 = vpack.c.b16 %v800, %v793
  %v1004 = vpack.c.b16 %v801, %v794
  %v1005 = vpack.c.b16 %v802, %v795
  %v1006 = vpack.c.b16 %v803, %v796
  %v1007 = vpack.c.b16 %v804, %v797
  %v1008 = vpack.c.b16 %v812, %v805
  %v1009 = vpack.c.b16 %v813, %v806
  %v1010 = vpack.c.b16 %v814, %v807
  %v1011 = vpack.c.b16 %v815, %v808
  %v1012 = vpack.c.b16 %v816, %v809
  %v1013 = vpack.c.b16 %v817, %v810
  %v1014 = vpack.c.b16 %v818, %v811
  %v1015 = vpack.c.b16 %v826, %v819
  %v1016 = vpack.c.b16 %v827, %v820
  %v1017 = vpack.c.b16 %v828, %v821
  %v1018 = vpack.c.b16 %v829, %v822
  %v1019 = vpack.c.b16 %v830, %v823
  %v1020 = vpack.c.b16 %v831, %v824
  %v1021 = vpack.c.b16 %v832, %v825
  %v1022 = vpack.c.b16 %v840, %v833
  %v1023 = vpack.c.b16 %v841, %v834
  %v1024 = vpack.c.b16 %v842, %v835
  %v1025 = vpack.c.b16 %v843, %v836
  %v1026 = vpack.c.b16 %v844, %v837
  %v1027 = vpack.c.b16 %v845, %v838
  %v1028 = vpack.c.b16 %v846, %v839
  %v1029 = vpack.c.b16 %v854, %v847
  %v1030 = vpack.c.b16 %v855, %v848
  %v1031 = vpack.c.b16 %v856, %v849
  %v1032 = vpack.c.b16 %v857, %v850
  %v1033 = vpack.c.b16 %v858, %v851
  %v1034 = vpack.c.b16 %v859, %v852
  %v1035 = vpack.c.b16 %v860, %v853
  %v1036 = vpack.c.b16 %v861, %v861
  %v1037 = vpack.c.b16 %v862, %v862
  %v1038 = vpack.c.b16 %v863, %v863
  %v1039 = vpack.c.b16 %v864, %v864
  %v1040 = vpack.c.b16 %v865, %v865
  %v1041 = vpack.c.b16 %v866, %v866
  %v1042 = vpack.c.b16 %v867, %v867
  %v1330 = vunpack.c.l.b16 %v213
  %v1331 = vunpack.c.l.b16 %v214
  %v1332 = vunpack.c.l.b16 %v215
  %v1333 = vunpack.c.l.b16 %v216
  %v1334 = vunpack.c.l.b16 %v217
  %v1335 = vunpack.c.l.b16 %v218
  %v1336 = vunpack.c.l.b16 %v219
  %v1337 = vunpack.c.l.b16 %v220
  %v1338 = vunpack.c.l.b16 %v221
  %v1339 = vunpack.c.l.b16 %v222
  %v1340 = vunpack.c.l.b16 %v223
  %v1341 = vunpack.c.l.b16 %v224
  %v1342 = vunpack.c.l.b16 %v225
  %v1343 = vunpack.c.l.b16 %v226
  %v1344 = vunpack.c.l.b16 %v227
  %v1345 = vunpack.c.l.b16 %v228
  %v1346 = vunpack.c.l.b16 %v229
  %v1347 = vunpack.c.l.b16 %v230
  %v1348 = vunpack.c.l.b16 %v231
  %v1349 = vunpack.c.l.b16 %v232
  %v1350 = vunpack.c.l.b16 %v233
  %v1351 = vunpack.c.l.b16 %v234
  %v1352 = vunpack.c.l.b16 %v235
  %v1353 = vunpack.c.l.b16 %v236
  %v1354 = vunpack.c.l.b16 %v237
  %v1355 = vunpack.c.l.b16 %v238
  %v1356 = vunpack.c.l.b16 %v239
  %v1357 = vunpack.c.l.b16 %v240
  %v1358 = vunpack.c.l.b16 %v241
  %v1359 = vunpack.c.l.b16 %v242
  %v1360 = vunpack.c.l.b16 %v243
  %v1361 = vunpack.c.l.b16 %v244
  %v1362 = vunpack.c.l.b16 %v245
  %v1363 = vunpack.c.l.b16 %v246
  %v1364 = vunpack.c.l.b16 %v247
  %v1365 = vunpack.c.l.b16 %v248
  %v1366 = vunpack.c.l.b16 %v249
  %v1367 = vunpack.c.l.b16 %v250
  %v1368 = vunpack.c.l.b16 %v251
  %v1369 = vunpack.c.l.b16 %v252
  %v1370 = vunpack.c.l.b16 %v253
  %v1371 = vunpack.c.l.b16 %v254
  %v1372 = vunpack.c.l.b16 %v255
  %v1373 = vunpack.c.l.b16 %v256
  %v1374 = vunpack.c.l.b16 %v257
  %v1375 = vunpack.c.l.b16 %v258
  %v1376 = vunpack.c.l.b16 %v259
  %v1377 = vunpack.c.l.b16 %v260
  %v1378 = vunpack.c.l.b16 %v261
  %v1379 = vunpack.c.l.b16 %v262
  %v1380 = vunpack.c.l.b16 %v263
  %v1381 = vunpack.c.l.b16 %v264
  %v1382 = vunpack.c.l.b16 %v265
  %v1383 = vunpack.c.l.b16 %v266
  %v1384 = vunpack.c.l.b16 %v267
  %v1385 = vunpack.c.l.b16 %v268
  %v1386 = vunpack.c.l.b16 %v269
  %v1387 = vunpack.c.l.b16 %v270
  %v1388 = vunpack.c.l.b16 %v271
  %v1389 = vunpack.c.l.b16 %v272
  %v1390 = vunpack.c.l.b16 %v273
  %v1391 = vunpack.c.l.b16 %v274
  %v1392 = vunpack.c.l.b16 %v275
  %v1393 = vunpack.c.l.b16 %v276
  %v1394 = vunpack.c.l.b16 %v277
  %v1395 = vunpack.c.l.b16 %v278
  %v1396 = vunpack.c.l.b16 %v279
  %v1397 = vunpack.c.l.b16 %v280
  %v1398 = vunpack.c.l.b16 %v281
  %v1399 = vunpack.c.l.b16 %v282
  %v1400 = vunpack.c.l.b16 %v283
  %v1401 = vunpack.c.l.b16 %v284
  %v1402 = vunpack.c.l.b16 %v285
  %v1403 = vunpack.c.l.b16 %v286
  %v1404 = vunpack.c.l.b16 %v287
  %v1405 = vunpack.c.l.b16 %v288
  %v1406 = vunpack.c.l.b16 %v289
  %v1407 = vunpack.c.l.b16 %v290
  %v1408 = vunpack.c.l.b16 %v291
  %v1409 = vunpack.c.l.b16 %v292
  %v1410 = vunpack.c.l.b16 %v293
  %v1411 = vunpack.c.l.b16 %v294
  %v1412 = vunpack.c.l.b16 %v295
  %v1413 = vunpack.c.l.b16 %v296
  %v1414 = vunpack.c.l.b16 %v297
  %v1415 = vunpack.c.l.b16 %v298
  %v1416 = vunpack.c.l.b16 %v299
  %v1417 = vunpack.c.l.b16 %v300
  %v1418 = vunpack.c.l.b16 %v301
  %v1419 = vunpack.c.l.b16 %v302
  %v1420 = vunpack.c.l.b16 %v303
  %v1421 = vunpack.c.l.b16 %v304
  %v1422 = vunpack.c.l.b16 %v305
  %v1423 = vunpack.c.l.b16 %v306
  %v1424 = vunpack.c.l.b16 %v307
  %v1425 = vunpack.c.l.b16 %v308
  %v1426 = vunpack.c.l.b16 %v309
  %v1427 = vunpack.c.l.b16 %v310
  %v1428 = vunpack.c.l.b16 %v311
  %v1429 = vunpack.c.l.b16 %v312
  %v1430 = vunpack.c.l.b16 %v313
  %v1431 = vunpack.c.l.b16 %v314
  %v1432 = vunpack.c.l.b16 %v315
  %v1433 = vunpack.c.l.b16 %v316
  %v1434 = vunpack.c.l.b16 %v317
  %v1435 = vunpack.c.l.b16 %v318
  %v1436 = vunpack.c.l.b16 %v319
  %v1437 = vunpack.c.l.b16 %v320
  %v1438 = vunpack.c.l.b16 %v321
  %v1439 = vunpack.c.l.b16 %v322
  %v1440 = vunpack.c.l.b16 %v323
  %v1441 = vunpack.c.l.b16 %v324
  %v1442 = vpack.c.b16 %v1331, %v1330
  %v1443 = vpack.c.b16 %v1333, %v1332
  %v1444 = vpack.c.b16 %v1335, %v1334
  %v1445 = vpack.c.b16 %v1337, %v1336
  %v1446 = vpack.c.b16 %v1339, %v1338
  %v1447 = vpack.c.b16 %v1341, %v1340
  %v1448 = vpack.c.b16 %v1343, %v1342
  %v1449 = vpack.c.b16 %v1345, %v1344
  %v1450 = vpack.c.b16 %v1347, %v1346
  %v1451 = vpack.c.b16 %v1349, %v1348
  %v1452 = vpack.c.b16 %v1351, %v1350
  %v1453 = vpack.c.b16 %v1353, %v1352
  %v1454 = vpack.c.b16 %v1355, %v1354
  %v1455 = vpack.c.b16 %v1357, %v1356
  %v1456 = vpack.c.b16 %v1359, %v1358
  %v1457 = vpack.c.b16 %v1361, %v1360
  %v1458 = vpack.c.b16 %v1363, %v1362
  %v1459 = vpack.c.b16 %v1365, %v1364
  %v1460 = vpack.c.b16 %v1367, %v1366
  %v1461 = vpack.c.b16 %v1369, %v1368
  %v1462 = vpack.c.b16 %v1371, %v1370
  %v1463 = vpack.c.b16 %v1373, %v1372
  %v1464 = vpack.c.b16 %v1375, %v1374
  %v1465 = vpack.c.b16 %v1377, %v1376
  %v1466 = vpack.c.b16 %v1379, %v1378
  %v1467 = vpack.c.b16 %v1381, %v1380
  %v1468 = vpack.c.b16 %v1383, %v1382
  %v1469 = vpack.c.b16 %v1385, %v1384
  %v1470 = vpack.c.b16 %v1387, %v1386
  %v1471 = vpack.c.b16 %v1389, %v1388
  %v1472 = vpack.c.b16 %v1391, %v1390
  %v1473 = vpack.c.b16 %v1393, %v1392
  %v1474 = vpack.c.b16 %v1395, %v1394
  %v1475 = vpack.c.b16 %v1397, %v1396
  %v1476 = vpack.c.b16 %v1399, %v1398
  %v1477 = vpack.c.b16 %v1401, %v1400
  %v1478 = vpack.c.b16 %v1403, %v1402
  %v1479 = vpack.c.b16 %v1405, %v1404
  %v1480 = vpack.c.b16 %v1407, %v1406
  %v1481 = vpack.c.b16 %v1409, %v1408
  %v1482 = vpack.c.b16 %v1411, %v1410
  %v1483 = vpack.c.b16 %v1413, %v1412
  %v1484 = vpack.c.b16 %v1415, %v1414
  %v1485 = vpack.c.b16 %v1417, %v1416
  %v1486 = vpack.c.b16 %v1419, %v1418
  %v1487 = vpack.c.b16 %v1421, %v1420
  %v1488 = vpack.c.b16 %v1423, %v1422
  %v1489 = vpack.c.b16 %v1425, %v1424
  %v1490 = vpack.c.b16 %v1427, %v1426
  %v1491 = vpack.c.b16 %v1429, %v1428
  %v1492 = vpack.c.b16 %v1431, %v1430
  %v1493 = vpack.c.b16 %v1433, %v1432
  %v1494 = vpack.c.b16 %v1435, %v1434
  %v1495 = vpack.c.b16 %v1437, %v1436
  %v1496 = vpack.c.b16 %v1439, %v1438
  %v1497 = vpack.c.b16 %v1441, %v1440
  %1554 = vmatpush.bf16.msra.mxu0 %v1449
  %1555 = vmatpush.bf16.msra.mxu0 %v1448
  %1556 = vmatpush.bf16.msra.mxu0 %v1447
  %1557 = vmatpush.bf16.msra.mxu0 %v1446
  %1558 = vmatpush.bf16.msra.mxu0 %v1445
  %1559 = vmatpush.bf16.msra.mxu0 %v1444
  %1560 = vmatpush.bf16.msra.mxu0 %v1443
  %1561 = vmatpush.bf16.msra.mxu0 %v1442
  %1562 = vmatmul.bf16.gmra.mxu0 %v868
  %v1563 = vpop.f32.mrf.mxu0
  %v1564 = vadd.f32 %v327, %v1563
  %v1565 = vpop.f32.mrf.mxu0
  %v1566 = vadd.f32 %v327, %v1565
  %1567 = vmatmul.bf16.gmra.mxu0 %v875
  %v1568 = vpop.f32.mrf.mxu0
  %v1569 = vadd.f32 %v327, %v1568
  %v1570 = vpop.f32.mrf.mxu0
  %v1571 = vadd.f32 %v327, %v1570
  %1572 = vmatmul.bf16.gmra.mxu0 %v882
  %v1573 = vpop.f32.mrf.mxu0
  %v1574 = vadd.f32 %v327, %v1573
  %v1575 = vpop.f32.mrf.mxu0
  %v1576 = vadd.f32 %v327, %v1575
  %1577 = vmatmul.bf16.gmra.mxu0 %v889
  %v1578 = vpop.f32.mrf.mxu0
  %v1579 = vadd.f32 %v327, %v1578
  %v1580 = vpop.f32.mrf.mxu0
  %v1581 = vadd.f32 %v327, %v1580
  %1582 = vmatmul.bf16.gmra.mxu0 %v896
  %v1583 = vpop.f32.mrf.mxu0
  %v1584 = vadd.f32 %v327, %v1583
  %v1585 = vpop.f32.mrf.mxu0
  %v1586 = vadd.f32 %v327, %v1585
  %1587 = vmatmul.bf16.gmra.mxu0 %v903
  %v1588 = vpop.f32.mrf.mxu0
  %v1589 = vadd.f32 %v327, %v1588
  %v1590 = vpop.f32.mrf.mxu0
  %v1591 = vadd.f32 %v327, %v1590
  %1592 = vmatmul.bf16.gmra.mxu0 %v910
  %v1593 = vpop.f32.mrf.mxu0
  %v1594 = vadd.f32 %v327, %v1593
  %v1595 = vpop.f32.mrf.mxu0
  %v1596 = vadd.f32 %v327, %v1595
  %1597 = vmatmul.bf16.gmra.mxu0 %v917
  %v1598 = vpop.f32.mrf.mxu0
  %v1599 = vadd.f32 %v327, %v1598
  %v1600 = vpop.f32.mrf.mxu0
  %v1601 = vadd.f32 %v327, %v1600
  %1602 = vmatmul.bf16.gmra.mxu0 %v924
  %v1603 = vpop.f32.mrf.mxu0
  %v1604 = vadd.f32 %v327, %v1603
  %v1605 = vpop.f32.mrf.mxu0
  %v1606 = vadd.f32 %v327, %v1605
  %1607 = vmatmul.bf16.gmra.mxu0 %v931
  %v1608 = vpop.f32.mrf.mxu0
  %v1609 = vadd.f32 %v327, %v1608
  %v1610 = vpop.f32.mrf.mxu0
  %v1611 = vadd.f32 %v327, %v1610
  %1612 = vmatmul.bf16.gmra.mxu0 %v938
  %v1613 = vpop.f32.mrf.mxu0
  %v1614 = vadd.f32 %v327, %v1613
  %v1615 = vpop.f32.mrf.mxu0
  %v1616 = vadd.f32 %v327, %v1615
  %1617 = vmatmul.bf16.gmra.mxu0 %v945
  %v1618 = vpop.f32.mrf.mxu0
  %v1619 = vadd.f32 %v327, %v1618
  %v1620 = vpop.f32.mrf.mxu0
  %v1621 = vadd.f32 %v327, %v1620
  %1622 = vmatmul.bf16.gmra.mxu0 %v952
  %v1623 = vpop.f32.mrf.mxu0
  %v1624 = vadd.f32 %v327, %v1623
  %v1625 = vpop.f32.mrf.mxu0
  %v1626 = vadd.f32 %v327, %v1625
  %1627 = vmatmul.bf16.gmra.mxu0 %v959
  %v1628 = vpop.f32.mrf.mxu0
  %v1629 = vadd.f32 %v327, %v1628
  %v1630 = vpop.f32.mrf.mxu0
  %v1631 = vadd.f32 %v327, %v1630
  %1632 = vmatmul.bf16.gmra.mxu0 %v966
  %v1633 = vpop.f32.mrf.mxu0
  %v1634 = vadd.f32 %v327, %v1633
  %v1635 = vpop.f32.mrf.mxu0
  %v1636 = vadd.f32 %v327, %v1635
  %1637 = vmatmul.bf16.gmra.mxu0 %v973
  %v1638 = vpop.f32.mrf.mxu0
  %v1639 = vadd.f32 %v327, %v1638
  %v1640 = vpop.f32.mrf.mxu0
  %v1641 = vadd.f32 %v327, %v1640
  %1642 = vmatmul.bf16.gmra.mxu0 %v980
  %v1643 = vpop.f32.mrf.mxu0
  %v1644 = vadd.f32 %v327, %v1643
  %v1645 = vpop.f32.mrf.mxu0
  %v1646 = vadd.f32 %v327, %v1645
  %1647 = vmatmul.bf16.gmra.mxu0 %v987
  %v1648 = vpop.f32.mrf.mxu0
  %v1649 = vadd.f32 %v327, %v1648
  %v1650 = vpop.f32.mrf.mxu0
  %v1651 = vadd.f32 %v327, %v1650
  %1652 = vmatmul.bf16.gmra.mxu0 %v994
  %v1653 = vpop.f32.mrf.mxu0
  %v1654 = vadd.f32 %v327, %v1653
  %v1655 = vpop.f32.mrf.mxu0
  %v1656 = vadd.f32 %v327, %v1655
  %1657 = vmatmul.bf16.gmra.mxu0 %v1001
  %v1658 = vpop.f32.mrf.mxu0
  %v1659 = vadd.f32 %v327, %v1658
  %v1660 = vpop.f32.mrf.mxu0
  %v1661 = vadd.f32 %v327, %v1660
  %1662 = vmatmul.bf16.gmra.mxu0 %v1008
  %v1663 = vpop.f32.mrf.mxu0
  %v1664 = vadd.f32 %v327, %v1663
  %v1665 = vpop.f32.mrf.mxu0
  %v1666 = vadd.f32 %v327, %v1665
  %1667 = vmatmul.bf16.gmra.mxu0 %v1015
  %v1668 = vpop.f32.mrf.mxu0
  %v1669 = vadd.f32 %v327, %v1668
  %v1670 = vpop.f32.mrf.mxu0
  %v1671 = vadd.f32 %v327, %v1670
  %1672 = vmatmul.bf16.gmra.mxu0 %v1022
  %v1673 = vpop.f32.mrf.mxu0
  %v1674 = vadd.f32 %v327, %v1673
  %v1675 = vpop.f32.mrf.mxu0
  %v1676 = vadd.f32 %v327, %v1675
  %1677 = vmatmul.bf16.gmra.mxu0 %v1029
  %v1678 = vpop.f32.mrf.mxu0
  %v1679 = vadd.f32 %v327, %v1678
  %v1680 = vpop.f32.mrf.mxu0
  %v1681 = vadd.f32 %v327, %v1680
  %1682 = vmatmul.bf16.gmra.mxu0 %v1036
  %v1683 = vpop.f32.mrf.mxu0
  %v1684 = vadd.f32 %v327, %v1683
  %v1685 = vpop.f32.mrf.mxu0
  %1686 = vdwg.mxu0
  %1687 = vmatpush.bf16.msra.mxu0 %v1457
  %1688 = vmatpush.bf16.msra.mxu0 %v1456
  %1689 = vmatpush.bf16.msra.mxu0 %v1455
  %1690 = vmatpush.bf16.msra.mxu0 %v1454
  %1691 = vmatpush.bf16.msra.mxu0 %v1453
  %1692 = vmatpush.bf16.msra.mxu0 %v1452
  %1693 = vmatpush.bf16.msra.mxu0 %v1451
  %1694 = vmatpush.bf16.msra.mxu0 %v1450
  %1695 = vmatmul.bf16.gmra.mxu0 %v869
  %v1696 = vpop.f32.mrf.mxu0
  %v1697 = vadd.f32 %v1564, %v1696
  %v1698 = vpop.f32.mrf.mxu0
  %v1699 = vadd.f32 %v1566, %v1698
  %1700 = vmatmul.bf16.gmra.mxu0 %v876
  %v1701 = vpop.f32.mrf.mxu0
  %v1702 = vadd.f32 %v1569, %v1701
  %v1703 = vpop.f32.mrf.mxu0
  %v1704 = vadd.f32 %v1571, %v1703
  %1705 = vmatmul.bf16.gmra.mxu0 %v883
  %v1706 = vpop.f32.mrf.mxu0
  %v1707 = vadd.f32 %v1574, %v1706
  %v1708 = vpop.f32.mrf.mxu0
  %v1709 = vadd.f32 %v1576, %v1708
  %1710 = vmatmul.bf16.gmra.mxu0 %v890
  %v1711 = vpop.f32.mrf.mxu0
  %v1712 = vadd.f32 %v1579, %v1711
  %v1713 = vpop.f32.mrf.mxu0
  %v1714 = vadd.f32 %v1581, %v1713
  %1715 = vmatmul.bf16.gmra.mxu0 %v897
  %v1716 = vpop.f32.mrf.mxu0
  %v1717 = vadd.f32 %v1584, %v1716
  %v1718 = vpop.f32.mrf.mxu0
  %v1719 = vadd.f32 %v1586, %v1718
  %1720 = vmatmul.bf16.gmra.mxu0 %v904
  %v1721 = vpop.f32.mrf.mxu0
  %v1722 = vadd.f32 %v1589, %v1721
  %v1723 = vpop.f32.mrf.mxu0
  %v1724 = vadd.f32 %v1591, %v1723
  %1725 = vmatmul.bf16.gmra.mxu0 %v911
  %v1726 = vpop.f32.mrf.mxu0
  %v1727 = vadd.f32 %v1594, %v1726
  %v1728 = vpop.f32.mrf.mxu0
  %v1729 = vadd.f32 %v1596, %v1728
  %1730 = vmatmul.bf16.gmra.mxu0 %v918
  %v1731 = vpop.f32.mrf.mxu0
  %v1732 = vadd.f32 %v1599, %v1731
  %v1733 = vpop.f32.mrf.mxu0
  %v1734 = vadd.f32 %v1601, %v1733
  %1735 = vmatmul.bf16.gmra.mxu0 %v925
  %v1736 = vpop.f32.mrf.mxu0
  %v1737 = vadd.f32 %v1604, %v1736
  %v1738 = vpop.f32.mrf.mxu0
  %v1739 = vadd.f32 %v1606, %v1738
  %1740 = vmatmul.bf16.gmra.mxu0 %v932
  %v1741 = vpop.f32.mrf.mxu0
  %v1742 = vadd.f32 %v1609, %v1741
  %v1743 = vpop.f32.mrf.mxu0
  %v1744 = vadd.f32 %v1611, %v1743
  %1745 = vmatmul.bf16.gmra.mxu0 %v939
  %v1746 = vpop.f32.mrf.mxu0
  %v1747 = vadd.f32 %v1614, %v1746
  %v1748 = vpop.f32.mrf.mxu0
  %v1749 = vadd.f32 %v1616, %v1748
  %1750 = vmatmul.bf16.gmra.mxu0 %v946
  %v1751 = vpop.f32.mrf.mxu0
  %v1752 = vadd.f32 %v1619, %v1751
  %v1753 = vpop.f32.mrf.mxu0
  %v1754 = vadd.f32 %v1621, %v1753
  %1755 = vmatmul.bf16.gmra.mxu0 %v953
  %v1756 = vpop.f32.mrf.mxu0
  %v1757 = vadd.f32 %v1624, %v1756
  %v1758 = vpop.f32.mrf.mxu0
  %v1759 = vadd.f32 %v1626, %v1758
  %1760 = vmatmul.bf16.gmra.mxu0 %v960
  %v1761 = vpop.f32.mrf.mxu0
  %v1762 = vadd.f32 %v1629, %v1761
  %v1763 = vpop.f32.mrf.mxu0
  %v1764 = vadd.f32 %v1631, %v1763
  %1765 = vmatmul.bf16.gmra.mxu0 %v967
  %v1766 = vpop.f32.mrf.mxu0
  %v1767 = vadd.f32 %v1634, %v1766
  %v1768 = vpop.f32.mrf.mxu0
  %v1769 = vadd.f32 %v1636, %v1768
  %1770 = vmatmul.bf16.gmra.mxu0 %v974
  %v1771 = vpop.f32.mrf.mxu0
  %v1772 = vadd.f32 %v1639, %v1771
  %v1773 = vpop.f32.mrf.mxu0
  %v1774 = vadd.f32 %v1641, %v1773
  %1775 = vmatmul.bf16.gmra.mxu0 %v981
  %v1776 = vpop.f32.mrf.mxu0
  %v1777 = vadd.f32 %v1644, %v1776
  %v1778 = vpop.f32.mrf.mxu0
  %v1779 = vadd.f32 %v1646, %v1778
  %1780 = vmatmul.bf16.gmra.mxu0 %v988
  %v1781 = vpop.f32.mrf.mxu0
  %v1782 = vadd.f32 %v1649, %v1781
  %v1783 = vpop.f32.mrf.mxu0
  %v1784 = vadd.f32 %v1651, %v1783
  %1785 = vmatmul.bf16.gmra.mxu0 %v995
  %v1786 = vpop.f32.mrf.mxu0
  %v1787 = vadd.f32 %v1654, %v1786
  %v1788 = vpop.f32.mrf.mxu0
  %v1789 = vadd.f32 %v1656, %v1788
  %1790 = vmatmul.bf16.gmra.mxu0 %v1002
  %v1791 = vpop.f32.mrf.mxu0
  %v1792 = vadd.f32 %v1659, %v1791
  %v1793 = vpop.f32.mrf.mxu0
  %v1794 = vadd.f32 %v1661, %v1793
  %1795 = vmatmul.bf16.gmra.mxu0 %v1009
  %v1796 = vpop.f32.mrf.mxu0
  %v1797 = vadd.f32 %v1664, %v1796
  %v1798 = vpop.f32.mrf.mxu0
  %v1799 = vadd.f32 %v1666, %v1798
  %1800 = vmatmul.bf16.gmra.mxu0 %v1016
  %v1801 = vpop.f32.mrf.mxu0
  %v1802 = vadd.f32 %v1669, %v1801
  %v1803 = vpop.f32.mrf.mxu0
  %v1804 = vadd.f32 %v1671, %v1803
  %1805 = vmatmul.bf16.gmra.mxu0 %v1023
  %v1806 = vpop.f32.mrf.mxu0
  %v1807 = vadd.f32 %v1674, %v1806
  %v1808 = vpop.f32.mrf.mxu0
  %v1809 = vadd.f32 %v1676, %v1808
  %1810 = vmatmul.bf16.gmra.mxu0 %v1030
  %v1811 = vpop.f32.mrf.mxu0
  %v1812 = vadd.f32 %v1679, %v1811
  %v1813 = vpop.f32.mrf.mxu0
  %v1814 = vadd.f32 %v1681, %v1813
  %1815 = vmatmul.bf16.gmra.mxu0 %v1037
  %v1816 = vpop.f32.mrf.mxu0
  %v1817 = vadd.f32 %v1684, %v1816
  %v1818 = vpop.f32.mrf.mxu0
  %1819 = vdwg.mxu0
  %1820 = vmatpush.bf16.msra.mxu0 %v1465
  %1821 = vmatpush.bf16.msra.mxu0 %v1464
  %1822 = vmatpush.bf16.msra.mxu0 %v1463
  %1823 = vmatpush.bf16.msra.mxu0 %v1462
  %1824 = vmatpush.bf16.msra.mxu0 %v1461
  %1825 = vmatpush.bf16.msra.mxu0 %v1460
  %1826 = vmatpush.bf16.msra.mxu0 %v1459
  %1827 = vmatpush.bf16.msra.mxu0 %v1458
  %1828 = vmatmul.bf16.gmra.mxu0 %v870
  %v1829 = vpop.f32.mrf.mxu0
  %v1830 = vadd.f32 %v1697, %v1829
  %v1831 = vpop.f32.mrf.mxu0
  %v1832 = vadd.f32 %v1699, %v1831
  %1833 = vmatmul.bf16.gmra.mxu0 %v877
  %v1834 = vpop.f32.mrf.mxu0
  %v1835 = vadd.f32 %v1702, %v1834
  %v1836 = vpop.f32.mrf.mxu0
  %v1837 = vadd.f32 %v1704, %v1836
  %1838 = vmatmul.bf16.gmra.mxu0 %v884
  %v1839 = vpop.f32.mrf.mxu0
  %v1840 = vadd.f32 %v1707, %v1839
  %v1841 = vpop.f32.mrf.mxu0
  %v1842 = vadd.f32 %v1709, %v1841
  %1843 = vmatmul.bf16.gmra.mxu0 %v891
  %v1844 = vpop.f32.mrf.mxu0
  %v1845 = vadd.f32 %v1712, %v1844
  %v1846 = vpop.f32.mrf.mxu0
  %v1847 = vadd.f32 %v1714, %v1846
  %1848 = vmatmul.bf16.gmra.mxu0 %v898
  %v1849 = vpop.f32.mrf.mxu0
  %v1850 = vadd.f32 %v1717, %v1849
  %v1851 = vpop.f32.mrf.mxu0
  %v1852 = vadd.f32 %v1719, %v1851
  %1853 = vmatmul.bf16.gmra.mxu0 %v905
  %v1854 = vpop.f32.mrf.mxu0
  %v1855 = vadd.f32 %v1722, %v1854
  %v1856 = vpop.f32.mrf.mxu0
  %v1857 = vadd.f32 %v1724, %v1856
  %1858 = vmatmul.bf16.gmra.mxu0 %v912
  %v1859 = vpop.f32.mrf.mxu0
  %v1860 = vadd.f32 %v1727, %v1859
  %v1861 = vpop.f32.mrf.mxu0
  %v1862 = vadd.f32 %v1729, %v1861
  %1863 = vmatmul.bf16.gmra.mxu0 %v919
  %v1864 = vpop.f32.mrf.mxu0
  %v1865 = vadd.f32 %v1732, %v1864
  %v1866 = vpop.f32.mrf.mxu0
  %v1867 = vadd.f32 %v1734, %v1866
  %1868 = vmatmul.bf16.gmra.mxu0 %v926
  %v1869 = vpop.f32.mrf.mxu0
  %v1870 = vadd.f32 %v1737, %v1869
  %v1871 = vpop.f32.mrf.mxu0
  %v1872 = vadd.f32 %v1739, %v1871
  %1873 = vmatmul.bf16.gmra.mxu0 %v933
  %v1874 = vpop.f32.mrf.mxu0
  %v1875 = vadd.f32 %v1742, %v1874
  %v1876 = vpop.f32.mrf.mxu0
  %v1877 = vadd.f32 %v1744, %v1876
  %1878 = vmatmul.bf16.gmra.mxu0 %v940
  %v1879 = vpop.f32.mrf.mxu0
  %v1880 = vadd.f32 %v1747, %v1879
  %v1881 = vpop.f32.mrf.mxu0
  %v1882 = vadd.f32 %v1749, %v1881
  %1883 = vmatmul.bf16.gmra.mxu0 %v947
  %v1884 = vpop.f32.mrf.mxu0
  %v1885 = vadd.f32 %v1752, %v1884
  %v1886 = vpop.f32.mrf.mxu0
  %v1887 = vadd.f32 %v1754, %v1886
  %1888 = vmatmul.bf16.gmra.mxu0 %v954
  %v1889 = vpop.f32.mrf.mxu0
  %v1890 = vadd.f32 %v1757, %v1889
  %v1891 = vpop.f32.mrf.mxu0
  %v1892 = vadd.f32 %v1759, %v1891
  %1893 = vmatmul.bf16.gmra.mxu0 %v961
  %v1894 = vpop.f32.mrf.mxu0
  %v1895 = vadd.f32 %v1762, %v1894
  %v1896 = vpop.f32.mrf.mxu0
  %v1897 = vadd.f32 %v1764, %v1896
  %1898 = vmatmul.bf16.gmra.mxu0 %v968
  %v1899 = vpop.f32.mrf.mxu0
  %v1900 = vadd.f32 %v1767, %v1899
  %v1901 = vpop.f32.mrf.mxu0
  %v1902 = vadd.f32 %v1769, %v1901
  %1903 = vmatmul.bf16.gmra.mxu0 %v975
  %v1904 = vpop.f32.mrf.mxu0
  %v1905 = vadd.f32 %v1772, %v1904
  %v1906 = vpop.f32.mrf.mxu0
  %v1907 = vadd.f32 %v1774, %v1906
  %1908 = vmatmul.bf16.gmra.mxu0 %v982
  %v1909 = vpop.f32.mrf.mxu0
  %v1910 = vadd.f32 %v1777, %v1909
  %v1911 = vpop.f32.mrf.mxu0
  %v1912 = vadd.f32 %v1779, %v1911
  %1913 = vmatmul.bf16.gmra.mxu0 %v989
  %v1914 = vpop.f32.mrf.mxu0
  %v1915 = vadd.f32 %v1782, %v1914
  %v1916 = vpop.f32.mrf.mxu0
  %v1917 = vadd.f32 %v1784, %v1916
  %1918 = vmatmul.bf16.gmra.mxu0 %v996
  %v1919 = vpop.f32.mrf.mxu0
  %v1920 = vadd.f32 %v1787, %v1919
  %v1921 = vpop.f32.mrf.mxu0
  %v1922 = vadd.f32 %v1789, %v1921
  %1923 = vmatmul.bf16.gmra.mxu0 %v1003
  %v1924 = vpop.f32.mrf.mxu0
  %v1925 = vadd.f32 %v1792, %v1924
  %v1926 = vpop.f32.mrf.mxu0
  %v1927 = vadd.f32 %v1794, %v1926
  %1928 = vmatmul.bf16.gmra.mxu0 %v1010
  %v1929 = vpop.f32.mrf.mxu0
  %v1930 = vadd.f32 %v1797, %v1929
  %v1931 = vpop.f32.mrf.mxu0
  %v1932 = vadd.f32 %v1799, %v1931
  %1933 = vmatmul.bf16.gmra.mxu0 %v1017
  %v1934 = vpop.f32.mrf.mxu0
  %v1935 = vadd.f32 %v1802, %v1934
  %v1936 = vpop.f32.mrf.mxu0
  %v1937 = vadd.f32 %v1804, %v1936
  %1938 = vmatmul.bf16.gmra.mxu0 %v1024
  %v1939 = vpop.f32.mrf.mxu0
  %v1940 = vadd.f32 %v1807, %v1939
  %v1941 = vpop.f32.mrf.mxu0
  %v1942 = vadd.f32 %v1809, %v1941
  %1943 = vmatmul.bf16.gmra.mxu0 %v1031
  %v1944 = vpop.f32.mrf.mxu0
  %v1945 = vadd.f32 %v1812, %v1944
  %v1946 = vpop.f32.mrf.mxu0
  %v1947 = vadd.f32 %v1814, %v1946
  %1948 = vmatmul.bf16.gmra.mxu0 %v1038
  %v1949 = vpop.f32.mrf.mxu0
  %v1950 = vadd.f32 %v1817, %v1949
  %v1951 = vpop.f32.mrf.mxu0
  %1952 = vdwg.mxu0
  %1953 = vmatpush.bf16.msra.mxu0 %v1473
  %1954 = vmatpush.bf16.msra.mxu0 %v1472
  %1955 = vmatpush.bf16.msra.mxu0 %v1471
  %1956 = vmatpush.bf16.msra.mxu0 %v1470
  %1957 = vmatpush.bf16.msra.mxu0 %v1469
  %1958 = vmatpush.bf16.msra.mxu0 %v1468
  %1959 = vmatpush.bf16.msra.mxu0 %v1467
  %1960 = vmatpush.bf16.msra.mxu0 %v1466
  %1961 = vmatmul.bf16.gmra.mxu0 %v871
  %v1962 = vpop.f32.mrf.mxu0
  %v1963 = vadd.f32 %v1830, %v1962
  %v1964 = vpop.f32.mrf.mxu0
  %v1965 = vadd.f32 %v1832, %v1964
  %1966 = vmatmul.bf16.gmra.mxu0 %v878
  %v1967 = vpop.f32.mrf.mxu0
  %v1968 = vadd.f32 %v1835, %v1967
  %v1969 = vpop.f32.mrf.mxu0
  %v1970 = vadd.f32 %v1837, %v1969
  %1971 = vmatmul.bf16.gmra.mxu0 %v885
  %v1972 = vpop.f32.mrf.mxu0
  %v1973 = vadd.f32 %v1840, %v1972
  %v1974 = vpop.f32.mrf.mxu0
  %v1975 = vadd.f32 %v1842, %v1974
  %1976 = vmatmul.bf16.gmra.mxu0 %v892
  %v1977 = vpop.f32.mrf.mxu0
  %v1978 = vadd.f32 %v1845, %v1977
  %v1979 = vpop.f32.mrf.mxu0
  %v1980 = vadd.f32 %v1847, %v1979
  %1981 = vmatmul.bf16.gmra.mxu0 %v899
  %v1982 = vpop.f32.mrf.mxu0
  %v1983 = vadd.f32 %v1850, %v1982
  %v1984 = vpop.f32.mrf.mxu0
  %v1985 = vadd.f32 %v1852, %v1984
  %1986 = vmatmul.bf16.gmra.mxu0 %v906
  %v1987 = vpop.f32.mrf.mxu0
  %v1988 = vadd.f32 %v1855, %v1987
  %v1989 = vpop.f32.mrf.mxu0
  %v1990 = vadd.f32 %v1857, %v1989
  %1991 = vmatmul.bf16.gmra.mxu0 %v913
  %v1992 = vpop.f32.mrf.mxu0
  %v1993 = vadd.f32 %v1860, %v1992
  %v1994 = vpop.f32.mrf.mxu0
  %v1995 = vadd.f32 %v1862, %v1994
  %1996 = vmatmul.bf16.gmra.mxu0 %v920
  %v1997 = vpop.f32.mrf.mxu0
  %v1998 = vadd.f32 %v1865, %v1997
  %v1999 = vpop.f32.mrf.mxu0
  %v2000 = vadd.f32 %v1867, %v1999
  %2001 = vmatmul.bf16.gmra.mxu0 %v927
  %v2002 = vpop.f32.mrf.mxu0
  %v2003 = vadd.f32 %v1870, %v2002
  %v2004 = vpop.f32.mrf.mxu0
  %v2005 = vadd.f32 %v1872, %v2004
  %2006 = vmatmul.bf16.gmra.mxu0 %v934
  %v2007 = vpop.f32.mrf.mxu0
  %v2008 = vadd.f32 %v1875, %v2007
  %v2009 = vpop.f32.mrf.mxu0
  %v2010 = vadd.f32 %v1877, %v2009
  %2011 = vmatmul.bf16.gmra.mxu0 %v941
  %v2012 = vpop.f32.mrf.mxu0
  %v2013 = vadd.f32 %v1880, %v2012
  %v2014 = vpop.f32.mrf.mxu0
  %v2015 = vadd.f32 %v1882, %v2014
  %2016 = vmatmul.bf16.gmra.mxu0 %v948
  %v2017 = vpop.f32.mrf.mxu0
  %v2018 = vadd.f32 %v1885, %v2017
  %v2019 = vpop.f32.mrf.mxu0
  %v2020 = vadd.f32 %v1887, %v2019
  %2021 = vmatmul.bf16.gmra.mxu0 %v955
  %v2022 = vpop.f32.mrf.mxu0
  %v2023 = vadd.f32 %v1890, %v2022
  %v2024 = vpop.f32.mrf.mxu0
  %v2025 = vadd.f32 %v1892, %v2024
  %2026 = vmatmul.bf16.gmra.mxu0 %v962
  %v2027 = vpop.f32.mrf.mxu0
  %v2028 = vadd.f32 %v1895, %v2027
  %v2029 = vpop.f32.mrf.mxu0
  %v2030 = vadd.f32 %v1897, %v2029
  %2031 = vmatmul.bf16.gmra.mxu0 %v969
  %v2032 = vpop.f32.mrf.mxu0
  %v2033 = vadd.f32 %v1900, %v2032
  %v2034 = vpop.f32.mrf.mxu0
  %v2035 = vadd.f32 %v1902, %v2034
  %2036 = vmatmul.bf16.gmra.mxu0 %v976
  %v2037 = vpop.f32.mrf.mxu0
  %v2038 = vadd.f32 %v1905, %v2037
  %v2039 = vpop.f32.mrf.mxu0
  %v2040 = vadd.f32 %v1907, %v2039
  %2041 = vmatmul.bf16.gmra.mxu0 %v983
  %v2042 = vpop.f32.mrf.mxu0
  %v2043 = vadd.f32 %v1910, %v2042
  %v2044 = vpop.f32.mrf.mxu0
  %v2045 = vadd.f32 %v1912, %v2044
  %2046 = vmatmul.bf16.gmra.mxu0 %v990
  %v2047 = vpop.f32.mrf.mxu0
  %v2048 = vadd.f32 %v1915, %v2047
  %v2049 = vpop.f32.mrf.mxu0
  %v2050 = vadd.f32 %v1917, %v2049
  %2051 = vmatmul.bf16.gmra.mxu0 %v997
  %v2052 = vpop.f32.mrf.mxu0
  %v2053 = vadd.f32 %v1920, %v2052
  %v2054 = vpop.f32.mrf.mxu0
  %v2055 = vadd.f32 %v1922, %v2054
  %2056 = vmatmul.bf16.gmra.mxu0 %v1004
  %v2057 = vpop.f32.mrf.mxu0
  %v2058 = vadd.f32 %v1925, %v2057
  %v2059 = vpop.f32.mrf.mxu0
  %v2060 = vadd.f32 %v1927, %v2059
  %2061 = vmatmul.bf16.gmra.mxu0 %v1011
  %v2062 = vpop.f32.mrf.mxu0
  %v2063 = vadd.f32 %v1930, %v2062
  %v2064 = vpop.f32.mrf.mxu0
  %v2065 = vadd.f32 %v1932, %v2064
  %2066 = vmatmul.bf16.gmra.mxu0 %v1018
  %v2067 = vpop.f32.mrf.mxu0
  %v2068 = vadd.f32 %v1935, %v2067
  %v2069 = vpop.f32.mrf.mxu0
  %v2070 = vadd.f32 %v1937, %v2069
  %2071 = vmatmul.bf16.gmra.mxu0 %v1025
  %v2072 = vpop.f32.mrf.mxu0
  %v2073 = vadd.f32 %v1940, %v2072
  %v2074 = vpop.f32.mrf.mxu0
  %v2075 = vadd.f32 %v1942, %v2074
  %2076 = vmatmul.bf16.gmra.mxu0 %v1032
  %v2077 = vpop.f32.mrf.mxu0
  %v2078 = vadd.f32 %v1945, %v2077
  %v2079 = vpop.f32.mrf.mxu0
  %v2080 = vadd.f32 %v1947, %v2079
  %2081 = vmatmul.bf16.gmra.mxu0 %v1039
  %v2082 = vpop.f32.mrf.mxu0
  %v2083 = vadd.f32 %v1950, %v2082
  %v2084 = vpop.f32.mrf.mxu0
  %2085 = vdwg.mxu0
  %2086 = vmatpush.bf16.msra.mxu0 %v1481
  %2087 = vmatpush.bf16.msra.mxu0 %v1480
  %2088 = vmatpush.bf16.msra.mxu0 %v1479
  %2089 = vmatpush.bf16.msra.mxu0 %v1478
  %2090 = vmatpush.bf16.msra.mxu0 %v1477
  %2091 = vmatpush.bf16.msra.mxu0 %v1476
  %2092 = vmatpush.bf16.msra.mxu0 %v1475
  %2093 = vmatpush.bf16.msra.mxu0 %v1474
  %2094 = vmatmul.bf16.gmra.mxu0 %v872
  %v2095 = vpop.f32.mrf.mxu0
  %v2096 = vadd.f32 %v1963, %v2095
  %v2097 = vpop.f32.mrf.mxu0
  %v2098 = vadd.f32 %v1965, %v2097
  %2099 = vmatmul.bf16.gmra.mxu0 %v879
  %v2100 = vpop.f32.mrf.mxu0
  %v2101 = vadd.f32 %v1968, %v2100
  %v2102 = vpop.f32.mrf.mxu0
  %v2103 = vadd.f32 %v1970, %v2102
  %2104 = vmatmul.bf16.gmra.mxu0 %v886
  %v2105 = vpop.f32.mrf.mxu0
  %v2106 = vadd.f32 %v1973, %v2105
  %v2107 = vpop.f32.mrf.mxu0
  %v2108 = vadd.f32 %v1975, %v2107
  %2109 = vmatmul.bf16.gmra.mxu0 %v893
  %v2110 = vpop.f32.mrf.mxu0
  %v2111 = vadd.f32 %v1978, %v2110
  %v2112 = vpop.f32.mrf.mxu0
  %v2113 = vadd.f32 %v1980, %v2112
  %2114 = vmatmul.bf16.gmra.mxu0 %v900
  %v2115 = vpop.f32.mrf.mxu0
  %v2116 = vadd.f32 %v1983, %v2115
  %v2117 = vpop.f32.mrf.mxu0
  %v2118 = vadd.f32 %v1985, %v2117
  %2119 = vmatmul.bf16.gmra.mxu0 %v907
  %v2120 = vpop.f32.mrf.mxu0
  %v2121 = vadd.f32 %v1988, %v2120
  %v2122 = vpop.f32.mrf.mxu0
  %v2123 = vadd.f32 %v1990, %v2122
  %2124 = vmatmul.bf16.gmra.mxu0 %v914
  %v2125 = vpop.f32.mrf.mxu0
  %v2126 = vadd.f32 %v1993, %v2125
  %v2127 = vpop.f32.mrf.mxu0
  %v2128 = vadd.f32 %v1995, %v2127
  %2129 = vmatmul.bf16.gmra.mxu0 %v921
  %v2130 = vpop.f32.mrf.mxu0
  %v2131 = vadd.f32 %v1998, %v2130
  %v2132 = vpop.f32.mrf.mxu0
  %v2133 = vadd.f32 %v2000, %v2132
  %2134 = vmatmul.bf16.gmra.mxu0 %v928
  %v2135 = vpop.f32.mrf.mxu0
  %v2136 = vadd.f32 %v2003, %v2135
  %v2137 = vpop.f32.mrf.mxu0
  %v2138 = vadd.f32 %v2005, %v2137
  %2139 = vmatmul.bf16.gmra.mxu0 %v935
  %v2140 = vpop.f32.mrf.mxu0
  %v2141 = vadd.f32 %v2008, %v2140
  %v2142 = vpop.f32.mrf.mxu0
  %v2143 = vadd.f32 %v2010, %v2142
  %2144 = vmatmul.bf16.gmra.mxu0 %v942
  %v2145 = vpop.f32.mrf.mxu0
  %v2146 = vadd.f32 %v2013, %v2145
  %v2147 = vpop.f32.mrf.mxu0
  %v2148 = vadd.f32 %v2015, %v2147
  %2149 = vmatmul.bf16.gmra.mxu0 %v949
  %v2150 = vpop.f32.mrf.mxu0
  %v2151 = vadd.f32 %v2018, %v2150
  %v2152 = vpop.f32.mrf.mxu0
  %v2153 = vadd.f32 %v2020, %v2152
  %2154 = vmatmul.bf16.gmra.mxu0 %v956
  %v2155 = vpop.f32.mrf.mxu0
  %v2156 = vadd.f32 %v2023, %v2155
  %v2157 = vpop.f32.mrf.mxu0
  %v2158 = vadd.f32 %v2025, %v2157
  %2159 = vmatmul.bf16.gmra.mxu0 %v963
  %v2160 = vpop.f32.mrf.mxu0
  %v2161 = vadd.f32 %v2028, %v2160
  %v2162 = vpop.f32.mrf.mxu0
  %v2163 = vadd.f32 %v2030, %v2162
  %2164 = vmatmul.bf16.gmra.mxu0 %v970
  %v2165 = vpop.f32.mrf.mxu0
  %v2166 = vadd.f32 %v2033, %v2165
  %v2167 = vpop.f32.mrf.mxu0
  %v2168 = vadd.f32 %v2035, %v2167
  %2169 = vmatmul.bf16.gmra.mxu0 %v977
  %v2170 = vpop.f32.mrf.mxu0
  %v2171 = vadd.f32 %v2038, %v2170
  %v2172 = vpop.f32.mrf.mxu0
  %v2173 = vadd.f32 %v2040, %v2172
  %2174 = vmatmul.bf16.gmra.mxu0 %v984
  %v2175 = vpop.f32.mrf.mxu0
  %v2176 = vadd.f32 %v2043, %v2175
  %v2177 = vpop.f32.mrf.mxu0
  %v2178 = vadd.f32 %v2045, %v2177
  %2179 = vmatmul.bf16.gmra.mxu0 %v991
  %v2180 = vpop.f32.mrf.mxu0
  %v2181 = vadd.f32 %v2048, %v2180
  %v2182 = vpop.f32.mrf.mxu0
  %v2183 = vadd.f32 %v2050, %v2182
  %2184 = vmatmul.bf16.gmra.mxu0 %v998
  %v2185 = vpop.f32.mrf.mxu0
  %v2186 = vadd.f32 %v2053, %v2185
  %v2187 = vpop.f32.mrf.mxu0
  %v2188 = vadd.f32 %v2055, %v2187
  %2189 = vmatmul.bf16.gmra.mxu0 %v1005
  %v2190 = vpop.f32.mrf.mxu0
  %v2191 = vadd.f32 %v2058, %v2190
  %v2192 = vpop.f32.mrf.mxu0
  %v2193 = vadd.f32 %v2060, %v2192
  %2194 = vmatmul.bf16.gmra.mxu0 %v1012
  %v2195 = vpop.f32.mrf.mxu0
  %v2196 = vadd.f32 %v2063, %v2195
  %v2197 = vpop.f32.mrf.mxu0
  %v2198 = vadd.f32 %v2065, %v2197
  %2199 = vmatmul.bf16.gmra.mxu0 %v1019
  %v2200 = vpop.f32.mrf.mxu0
  %v2201 = vadd.f32 %v2068, %v2200
  %v2202 = vpop.f32.mrf.mxu0
  %v2203 = vadd.f32 %v2070, %v2202
  %2204 = vmatmul.bf16.gmra.mxu0 %v1026
  %v2205 = vpop.f32.mrf.mxu0
  %v2206 = vadd.f32 %v2073, %v2205
  %v2207 = vpop.f32.mrf.mxu0
  %v2208 = vadd.f32 %v2075, %v2207
  %2209 = vmatmul.bf16.gmra.mxu0 %v1033
  %v2210 = vpop.f32.mrf.mxu0
  %v2211 = vadd.f32 %v2078, %v2210
  %v2212 = vpop.f32.mrf.mxu0
  %v2213 = vadd.f32 %v2080, %v2212
  %2214 = vmatmul.bf16.gmra.mxu0 %v1040
  %v2215 = vpop.f32.mrf.mxu0
  %v2216 = vadd.f32 %v2083, %v2215
  %v2217 = vpop.f32.mrf.mxu0
  %2218 = vdwg.mxu0
  %2219 = vmatpush.bf16.msra.mxu0 %v1489
  %2220 = vmatpush.bf16.msra.mxu0 %v1488
  %2221 = vmatpush.bf16.msra.mxu0 %v1487
  %2222 = vmatpush.bf16.msra.mxu0 %v1486
  %2223 = vmatpush.bf16.msra.mxu0 %v1485
  %2224 = vmatpush.bf16.msra.mxu0 %v1484
  %2225 = vmatpush.bf16.msra.mxu0 %v1483
  %2226 = vmatpush.bf16.msra.mxu0 %v1482
  %2227 = vmatmul.bf16.gmra.mxu0 %v873
  %v2228 = vpop.f32.mrf.mxu0
  %v2229 = vadd.f32 %v2096, %v2228
  %v2230 = vpop.f32.mrf.mxu0
  %v2231 = vadd.f32 %v2098, %v2230
  %2232 = vmatmul.bf16.gmra.mxu0 %v880
  %v2233 = vpop.f32.mrf.mxu0
  %v2234 = vadd.f32 %v2101, %v2233
  %v2235 = vpop.f32.mrf.mxu0
  %v2236 = vadd.f32 %v2103, %v2235
  %2237 = vmatmul.bf16.gmra.mxu0 %v887
  %v2238 = vpop.f32.mrf.mxu0
  %v2239 = vadd.f32 %v2106, %v2238
  %v2240 = vpop.f32.mrf.mxu0
  %v2241 = vadd.f32 %v2108, %v2240
  %2242 = vmatmul.bf16.gmra.mxu0 %v894
  %v2243 = vpop.f32.mrf.mxu0
  %v2244 = vadd.f32 %v2111, %v2243
  %v2245 = vpop.f32.mrf.mxu0
  %v2246 = vadd.f32 %v2113, %v2245
  %2247 = vmatmul.bf16.gmra.mxu0 %v901
  %v2248 = vpop.f32.mrf.mxu0
  %v2249 = vadd.f32 %v2116, %v2248
  %v2250 = vpop.f32.mrf.mxu0
  %v2251 = vadd.f32 %v2118, %v2250
  %2252 = vmatmul.bf16.gmra.mxu0 %v908
  %v2253 = vpop.f32.mrf.mxu0
  %v2254 = vadd.f32 %v2121, %v2253
  %v2255 = vpop.f32.mrf.mxu0
  %v2256 = vadd.f32 %v2123, %v2255
  %2257 = vmatmul.bf16.gmra.mxu0 %v915
  %v2258 = vpop.f32.mrf.mxu0
  %v2259 = vadd.f32 %v2126, %v2258
  %v2260 = vpop.f32.mrf.mxu0
  %v2261 = vadd.f32 %v2128, %v2260
  %2262 = vmatmul.bf16.gmra.mxu0 %v922
  %v2263 = vpop.f32.mrf.mxu0
  %v2264 = vadd.f32 %v2131, %v2263
  %v2265 = vpop.f32.mrf.mxu0
  %v2266 = vadd.f32 %v2133, %v2265
  %2267 = vmatmul.bf16.gmra.mxu0 %v929
  %v2268 = vpop.f32.mrf.mxu0
  %v2269 = vadd.f32 %v2136, %v2268
  %v2270 = vpop.f32.mrf.mxu0
  %v2271 = vadd.f32 %v2138, %v2270
  %2272 = vmatmul.bf16.gmra.mxu0 %v936
  %v2273 = vpop.f32.mrf.mxu0
  %v2274 = vadd.f32 %v2141, %v2273
  %v2275 = vpop.f32.mrf.mxu0
  %v2276 = vadd.f32 %v2143, %v2275
  %2277 = vmatmul.bf16.gmra.mxu0 %v943
  %v2278 = vpop.f32.mrf.mxu0
  %v2279 = vadd.f32 %v2146, %v2278
  %v2280 = vpop.f32.mrf.mxu0
  %v2281 = vadd.f32 %v2148, %v2280
  %2282 = vmatmul.bf16.gmra.mxu0 %v950
  %v2283 = vpop.f32.mrf.mxu0
  %v2284 = vadd.f32 %v2151, %v2283
  %v2285 = vpop.f32.mrf.mxu0
  %v2286 = vadd.f32 %v2153, %v2285
  %2287 = vmatmul.bf16.gmra.mxu0 %v957
  %v2288 = vpop.f32.mrf.mxu0
  %v2289 = vadd.f32 %v2156, %v2288
  %v2290 = vpop.f32.mrf.mxu0
  %v2291 = vadd.f32 %v2158, %v2290
  %2292 = vmatmul.bf16.gmra.mxu0 %v964
  %v2293 = vpop.f32.mrf.mxu0
  %v2294 = vadd.f32 %v2161, %v2293
  %v2295 = vpop.f32.mrf.mxu0
  %v2296 = vadd.f32 %v2163, %v2295
  %2297 = vmatmul.bf16.gmra.mxu0 %v971
  %v2298 = vpop.f32.mrf.mxu0
  %v2299 = vadd.f32 %v2166, %v2298
  %v2300 = vpop.f32.mrf.mxu0
  %v2301 = vadd.f32 %v2168, %v2300
  %2302 = vmatmul.bf16.gmra.mxu0 %v978
  %v2303 = vpop.f32.mrf.mxu0
  %v2304 = vadd.f32 %v2171, %v2303
  %v2305 = vpop.f32.mrf.mxu0
  %v2306 = vadd.f32 %v2173, %v2305
  %2307 = vmatmul.bf16.gmra.mxu0 %v985
  %v2308 = vpop.f32.mrf.mxu0
  %v2309 = vadd.f32 %v2176, %v2308
  %v2310 = vpop.f32.mrf.mxu0
  %v2311 = vadd.f32 %v2178, %v2310
  %2312 = vmatmul.bf16.gmra.mxu0 %v992
  %v2313 = vpop.f32.mrf.mxu0
  %v2314 = vadd.f32 %v2181, %v2313
  %v2315 = vpop.f32.mrf.mxu0
  %v2316 = vadd.f32 %v2183, %v2315
  %2317 = vmatmul.bf16.gmra.mxu0 %v999
  %v2318 = vpop.f32.mrf.mxu0
  %v2319 = vadd.f32 %v2186, %v2318
  %v2320 = vpop.f32.mrf.mxu0
  %v2321 = vadd.f32 %v2188, %v2320
  %2322 = vmatmul.bf16.gmra.mxu0 %v1006
  %v2323 = vpop.f32.mrf.mxu0
  %v2324 = vadd.f32 %v2191, %v2323
  %v2325 = vpop.f32.mrf.mxu0
  %v2326 = vadd.f32 %v2193, %v2325
  %2327 = vmatmul.bf16.gmra.mxu0 %v1013
  %v2328 = vpop.f32.mrf.mxu0
  %v2329 = vadd.f32 %v2196, %v2328
  %v2330 = vpop.f32.mrf.mxu0
  %v2331 = vadd.f32 %v2198, %v2330
  %2332 = vmatmul.bf16.gmra.mxu0 %v1020
  %v2333 = vpop.f32.mrf.mxu0
  %v2334 = vadd.f32 %v2201, %v2333
  %v2335 = vpop.f32.mrf.mxu0
  %v2336 = vadd.f32 %v2203, %v2335
  %2337 = vmatmul.bf16.gmra.mxu0 %v1027
  %v2338 = vpop.f32.mrf.mxu0
  %v2339 = vadd.f32 %v2206, %v2338
  %v2340 = vpop.f32.mrf.mxu0
  %v2341 = vadd.f32 %v2208, %v2340
  %2342 = vmatmul.bf16.gmra.mxu0 %v1034
  %v2343 = vpop.f32.mrf.mxu0
  %v2344 = vadd.f32 %v2211, %v2343
  %v2345 = vpop.f32.mrf.mxu0
  %v2346 = vadd.f32 %v2213, %v2345
  %2347 = vmatmul.bf16.gmra.mxu0 %v1041
  %v2348 = vpop.f32.mrf.mxu0
  %v2349 = vadd.f32 %v2216, %v2348
  %v2350 = vpop.f32.mrf.mxu0
  %2351 = vdwg.mxu0
  %2352 = vmatpush.bf16.msra.mxu0 %v1497
  %2353 = vmatpush.bf16.msra.mxu0 %v1496
  %2354 = vmatpush.bf16.msra.mxu0 %v1495
  %2355 = vmatpush.bf16.msra.mxu0 %v1494
  %2356 = vmatpush.bf16.msra.mxu0 %v1493
  %2357 = vmatpush.bf16.msra.mxu0 %v1492
  %2358 = vmatpush.bf16.msra.mxu0 %v1491
  %2359 = vmatpush.bf16.msra.mxu0 %v1490
  %2360 = vmatmul.bf16.gmra.mxu0 %v874
  %v2361 = vpop.f32.mrf.mxu0
  %v2362 = vadd.f32 %v2229, %v2361
  %v2363 = vpop.f32.mrf.mxu0
  %v2364 = vadd.f32 %v2231, %v2363
  %2365 = vmatmul.bf16.gmra.mxu0 %v881
  %v2366 = vpop.f32.mrf.mxu0
  %v2367 = vadd.f32 %v2234, %v2366
  %v2368 = vpop.f32.mrf.mxu0
  %v2369 = vadd.f32 %v2236, %v2368
  %2370 = vmatmul.bf16.gmra.mxu0 %v888
  %v2371 = vpop.f32.mrf.mxu0
  %v2372 = vadd.f32 %v2239, %v2371
  %v2373 = vpop.f32.mrf.mxu0
  %v2374 = vadd.f32 %v2241, %v2373
  %2375 = vmatmul.bf16.gmra.mxu0 %v895
  %v2376 = vpop.f32.mrf.mxu0
  %v2377 = vadd.f32 %v2244, %v2376
  %v2378 = vpop.f32.mrf.mxu0
  %v2379 = vadd.f32 %v2246, %v2378
  %2380 = vmatmul.bf16.gmra.mxu0 %v902
  %v2381 = vpop.f32.mrf.mxu0
  %v2382 = vadd.f32 %v2249, %v2381
  %v2383 = vpop.f32.mrf.mxu0
  %v2384 = vadd.f32 %v2251, %v2383
  %2385 = vmatmul.bf16.gmra.mxu0 %v909
  %v2386 = vpop.f32.mrf.mxu0
  %v2387 = vadd.f32 %v2254, %v2386
  %v2388 = vpop.f32.mrf.mxu0
  %v2389 = vadd.f32 %v2256, %v2388
  %2390 = vmatmul.bf16.gmra.mxu0 %v916
  %v2391 = vpop.f32.mrf.mxu0
  %v2392 = vadd.f32 %v2259, %v2391
  %v2393 = vpop.f32.mrf.mxu0
  %v2394 = vadd.f32 %v2261, %v2393
  %2395 = vmatmul.bf16.gmra.mxu0 %v923
  %v2396 = vpop.f32.mrf.mxu0
  %v2397 = vadd.f32 %v2264, %v2396
  %v2398 = vpop.f32.mrf.mxu0
  %v2399 = vadd.f32 %v2266, %v2398
  %2400 = vmatmul.bf16.gmra.mxu0 %v930
  %v2401 = vpop.f32.mrf.mxu0
  %v2402 = vadd.f32 %v2269, %v2401
  %v2403 = vpop.f32.mrf.mxu0
  %v2404 = vadd.f32 %v2271, %v2403
  %2405 = vmatmul.bf16.gmra.mxu0 %v937
  %v2406 = vpop.f32.mrf.mxu0
  %v2407 = vadd.f32 %v2274, %v2406
  %v2408 = vpop.f32.mrf.mxu0
  %v2409 = vadd.f32 %v2276, %v2408
  %2410 = vmatmul.bf16.gmra.mxu0 %v944
  %v2411 = vpop.f32.mrf.mxu0
  %v2412 = vadd.f32 %v2279, %v2411
  %v2413 = vpop.f32.mrf.mxu0
  %v2414 = vadd.f32 %v2281, %v2413
  %2415 = vmatmul.bf16.gmra.mxu0 %v951
  %v2416 = vpop.f32.mrf.mxu0
  %v2417 = vadd.f32 %v2284, %v2416
  %v2418 = vpop.f32.mrf.mxu0
  %v2419 = vadd.f32 %v2286, %v2418
  %2420 = vmatmul.bf16.gmra.mxu0 %v958
  %v2421 = vpop.f32.mrf.mxu0
  %v2422 = vadd.f32 %v2289, %v2421
  %v2423 = vpop.f32.mrf.mxu0
  %v2424 = vadd.f32 %v2291, %v2423
  %2425 = vmatmul.bf16.gmra.mxu0 %v965
  %v2426 = vpop.f32.mrf.mxu0
  %v2427 = vadd.f32 %v2294, %v2426
  %v2428 = vpop.f32.mrf.mxu0
  %v2429 = vadd.f32 %v2296, %v2428
  %2430 = vmatmul.bf16.gmra.mxu0 %v972
  %v2431 = vpop.f32.mrf.mxu0
  %v2432 = vadd.f32 %v2299, %v2431
  %v2433 = vpop.f32.mrf.mxu0
  %v2434 = vadd.f32 %v2301, %v2433
  %2435 = vmatmul.bf16.gmra.mxu0 %v979
  %v2436 = vpop.f32.mrf.mxu0
  %v2437 = vadd.f32 %v2304, %v2436
  %v2438 = vpop.f32.mrf.mxu0
  %v2439 = vadd.f32 %v2306, %v2438
  %2440 = vmatmul.bf16.gmra.mxu0 %v986
  %v2441 = vpop.f32.mrf.mxu0
  %v2442 = vadd.f32 %v2309, %v2441
  %v2443 = vpop.f32.mrf.mxu0
  %v2444 = vadd.f32 %v2311, %v2443
  %2445 = vmatmul.bf16.gmra.mxu0 %v993
  %v2446 = vpop.f32.mrf.mxu0
  %v2447 = vadd.f32 %v2314, %v2446
  %v2448 = vpop.f32.mrf.mxu0
  %v2449 = vadd.f32 %v2316, %v2448
  %2450 = vmatmul.bf16.gmra.mxu0 %v1000
  %v2451 = vpop.f32.mrf.mxu0
  %v2452 = vadd.f32 %v2319, %v2451
  %v2453 = vpop.f32.mrf.mxu0
  %v2454 = vadd.f32 %v2321, %v2453
  %2455 = vmatmul.bf16.gmra.mxu0 %v1007
  %v2456 = vpop.f32.mrf.mxu0
  %v2457 = vadd.f32 %v2324, %v2456
  %v2458 = vpop.f32.mrf.mxu0
  %v2459 = vadd.f32 %v2326, %v2458
  %2460 = vmatmul.bf16.gmra.mxu0 %v1014
  %v2461 = vpop.f32.mrf.mxu0
  %v2462 = vadd.f32 %v2329, %v2461
  %v2463 = vpop.f32.mrf.mxu0
  %v2464 = vadd.f32 %v2331, %v2463
  %2465 = vmatmul.bf16.gmra.mxu0 %v1021
  %v2466 = vpop.f32.mrf.mxu0
  %v2467 = vadd.f32 %v2334, %v2466
  %v2468 = vpop.f32.mrf.mxu0
  %v2469 = vadd.f32 %v2336, %v2468
  %2470 = vmatmul.bf16.gmra.mxu0 %v1028
  %v2471 = vpop.f32.mrf.mxu0
  %v2472 = vadd.f32 %v2339, %v2471
  %v2473 = vpop.f32.mrf.mxu0
  %v2474 = vadd.f32 %v2341, %v2473
  %2475 = vmatmul.bf16.gmra.mxu0 %v1035
  %v2476 = vpop.f32.mrf.mxu0
  %v2477 = vadd.f32 %v2344, %v2476
  %v2478 = vpop.f32.mrf.mxu0
  %v2479 = vadd.f32 %v2346, %v2478
  %2480 = vmatmul.bf16.gmra.mxu0 %v1042
  %v2481 = vpop.f32.mrf.mxu0
  %v2482 = vadd.f32 %v2349, %v2481
  %v2483 = vpop.f32.mrf.mxu0
  %2484 = vdwg.mxu0
  %v2485 = vmul.f32 %v2362, 0.01
  %v2486 = vmul.f32 %v2364, 0.01
  %v2487 = vmul.f32 %v2367, 0.01
  %v2488 = vmul.f32 %v2369, 0.01
  %v2489 = vmul.f32 %v2372, 0.01
  %v2490 = vmul.f32 %v2374, 0.01
  %v2491 = vmul.f32 %v2377, 0.01
  %v2492 = vmul.f32 %v2379, 0.01
  %v2493 = vmul.f32 %v2382, 0.01
  %v2494 = vmul.f32 %v2384, 0.01
  %v2495 = vmul.f32 %v2387, 0.01
  %v2496 = vmul.f32 %v2389, 0.01
  %v2497 = vmul.f32 %v2392, 0.01
  %v2498 = vmul.f32 %v2394, 0.01
  %v2499 = vmul.f32 %v2397, 0.01
  %v2500 = vmul.f32 %v2399, 0.01
  %v2501 = vmul.f32 %v2402, 0.01
  %v2502 = vmul.f32 %v2404, 0.01
  %v2503 = vmul.f32 %v2407, 0.01
  %v2504 = vmul.f32 %v2409, 0.01
  %v2505 = vmul.f32 %v2412, 0.01
  %v2506 = vmul.f32 %v2414, 0.01
  %v2507 = vmul.f32 %v2417, 0.01
  %v2508 = vmul.f32 %v2419, 0.01
  %v2509 = vmul.f32 %v2422, 0.01
  %v2510 = vmul.f32 %v2424, 0.01
  %v2511 = vmul.f32 %v2427, 0.01
  %v2512 = vmul.f32 %v2429, 0.01
  %v2513 = vmul.f32 %v2432, 0.01
  %v2514 = vmul.f32 %v2434, 0.01
  %v2515 = vmul.f32 %v2437, 0.01
  %v2516 = vmul.f32 %v2439, 0.01
  %v2517 = vmul.f32 %v2442, 0.01
  %v2518 = vmul.f32 %v2444, 0.01
  %v2519 = vmul.f32 %v2447, 0.01
  %v2520 = vmul.f32 %v2449, 0.01
  %v2521 = vmul.f32 %v2452, 0.01
  %v2522 = vmul.f32 %v2454, 0.01
  %v2523 = vmul.f32 %v2457, 0.01
  %v2524 = vmul.f32 %v2459, 0.01
  %v2525 = vmul.f32 %v2462, 0.01
  %v2526 = vmul.f32 %v2464, 0.01
  %v2527 = vmul.f32 %v2467, 0.01
  %v2528 = vmul.f32 %v2469, 0.01
  %v2529 = vmul.f32 %v2472, 0.01
  %v2530 = vmul.f32 %v2474, 0.01
  %v2531 = vmul.f32 %v2477, 0.01
  %v2532 = vmul.f32 %v2479, 0.01
  %v2533 = vmul.f32 %v2482, 0.01
  %v2534 = vmax.f32 %v2362, %v2485
  %v2535 = vmax.f32 %v2364, %v2486
  %v2536 = vmax.f32 %v2367, %v2487
  %v2537 = vmax.f32 %v2369, %v2488
  %v2538 = vmax.f32 %v2372, %v2489
  %v2539 = vmax.f32 %v2374, %v2490
  %v2540 = vmax.f32 %v2377, %v2491
  %v2541 = vmax.f32 %v2379, %v2492
  %v2542 = vmax.f32 %v2382, %v2493
  %v2543 = vmax.f32 %v2384, %v2494
  %v2544 = vmax.f32 %v2387, %v2495
  %v2545 = vmax.f32 %v2389, %v2496
  %v2546 = vmax.f32 %v2392, %v2497
  %v2547 = vmax.f32 %v2394, %v2498
  %v2548 = vmax.f32 %v2397, %v2499
  %v2549 = vmax.f32 %v2399, %v2500
  %v2550 = vmax.f32 %v2402, %v2501
  %v2551 = vmax.f32 %v2404, %v2502
  %v2552 = vmax.f32 %v2407, %v2503
  %v2553 = vmax.f32 %v2409, %v2504
  %v2554 = vmax.f32 %v2412, %v2505
  %v2555 = vmax.f32 %v2414, %v2506
  %v2556 = vmax.f32 %v2417, %v2507
  %v2557 = vmax.f32 %v2419, %v2508
  %v2558 = vmax.f32 %v2422, %v2509
  %v2559 = vmax.f32 %v2424, %v2510
  %v2560 = vmax.f32 %v2427, %v2511
  %v2561 = vmax.f32 %v2429, %v2512
  %v2562 = vmax.f32 %v2432, %v2513
  %v2563 = vmax.f32 %v2434, %v2514
  %v2564 = vmax.f32 %v2437, %v2515
  %v2565 = vmax.f32 %v2439, %v2516
  %v2566 = vmax.f32 %v2442, %v2517
  %v2567 = vmax.f32 %v2444, %v2518
  %v2568 = vmax.f32 %v2447, %v2519
  %v2569 = vmax.f32 %v2449, %v2520
  %v2570 = vmax.f32 %v2452, %v2521
  %v2571 = vmax.f32 %v2454, %v2522
  %v2572 = vmax.f32 %v2457, %v2523
  %v2573 = vmax.f32 %v2459, %v2524
  %v2574 = vmax.f32 %v2462, %v2525
  %v2575 = vmax.f32 %v2464, %v2526
  %v2576 = vmax.f32 %v2467, %v2527
  %v2577 = vmax.f32 %v2469, %v2528
  %v2578 = vmax.f32 %v2472, %v2529
  %v2579 = vmax.f32 %v2474, %v2530
  %v2580 = vmax.f32 %v2477, %v2531
  %v2581 = vmax.f32 %v2479, %v2532
  %v2582 = vmax.f32 %v2482, %v2533
  %v2583 = vmul.f32 %v2534, %v2534
  %v2584 = vmul.f32 %v2535, %v2535
  %v2585 = vmul.f32 %v2536, %v2536
  %v2586 = vmul.f32 %v2537, %v2537
  %v2587 = vmul.f32 %v2538, %v2538
  %v2588 = vmul.f32 %v2539, %v2539
  %v2589 = vmul.f32 %v2540, %v2540
  %v2590 = vmul.f32 %v2541, %v2541
  %v2591 = vmul.f32 %v2542, %v2542
  %v2592 = vmul.f32 %v2543, %v2543
  %v2593 = vmul.f32 %v2544, %v2544
  %v2594 = vmul.f32 %v2545, %v2545
  %v2595 = vmul.f32 %v2546, %v2546
  %v2596 = vmul.f32 %v2547, %v2547
  %v2597 = vmul.f32 %v2548, %v2548
  %v2598 = vmul.f32 %v2549, %v2549
  %v2599 = vmul.f32 %v2550, %v2550
  %v2600 = vmul.f32 %v2551, %v2551
  %v2601 = vmul.f32 %v2552, %v2552
  %v2602 = vmul.f32 %v2553, %v2553
  %v2603 = vmul.f32 %v2554, %v2554
  %v2604 = vmul.f32 %v2555, %v2555
  %v2605 = vmul.f32 %v2556, %v2556
  %v2606 = vmul.f32 %v2557, %v2557
  %v2607 = vmul.f32 %v2558, %v2558
  %v2608 = vmul.f32 %v2559, %v2559
  %v2609 = vmul.f32 %v2560, %v2560
  %v2610 = vmul.f32 %v2561, %v2561
  %v2611 = vmul.f32 %v2562, %v2562
  %v2612 = vmul.f32 %v2563, %v2563
  %v2613 = vmul.f32 %v2564, %v2564
  %v2614 = vmul.f32 %v2565, %v2565
  %v2615 = vmul.f32 %v2566, %v2566
  %v2616 = vmul.f32 %v2567, %v2567
  %v2617 = vmul.f32 %v2568, %v2568
  %v2618 = vmul.f32 %v2569, %v2569
  %v2619 = vmul.f32 %v2570, %v2570
  %v2620 = vmul.f32 %v2571, %v2571
  %v2621 = vmul.f32 %v2572, %v2572
  %v2622 = vmul.f32 %v2573, %v2573
  %v2623 = vmul.f32 %v2574, %v2574
  %v2624 = vmul.f32 %v2575, %v2575
  %v2625 = vmul.f32 %v2576, %v2576
  %v2626 = vmul.f32 %v2577, %v2577
  %v2627 = vmul.f32 %v2578, %v2578
  %v2628 = vmul.f32 %v2579, %v2579
  %v2629 = vmul.f32 %v2580, %v2580
  %v2630 = vmul.f32 %v2581, %v2581
  %v2631 = vmul.f32 %v2582, %v2582
  %v2632 = vld [vmem:[%s3] sm:$0xff]
  %v2633 = vld [vmem:[%s3 + $0x8] sm:$0xff]
  %v2634 = vld [vmem:[%s3 + $0x10] sm:$0xff]
  %v2635 = vld [vmem:[%s3 + $0x18] sm:$0xff]
  %v2636 = vld [vmem:[%s3 + $0x20] sm:$0xff]
  %v2637 = vld [vmem:[%s3 + $0x28] sm:$0xff]
  %v2638 = vld [vmem:[%s3 + $0x30] sm:$0xff]
  %v2639 = vld [vmem:[%s3 + $0x38] sm:$0xff]
  %vm2640 = vcmask 523264
  %v2642 = vsel %vm2640, %v2583, 0
  %v2645 = vsel %vm2640, %v2584, 0
  %v2648 = vsel %vm2640, %v2585, 0
  %v2651 = vsel %vm2640, %v2586, 0
  %v2654 = vsel %vm2640, %v2587, 0
  %v2657 = vsel %vm2640, %v2588, 0
  %v2660 = vsel %vm2640, %v2589, 0
  %v2663 = vsel %vm2640, %v2590, 0
  %v2666 = vsel %vm2640, %v2591, 0
  %v2669 = vsel %vm2640, %v2592, 0
  %v2672 = vsel %vm2640, %v2593, 0
  %v2675 = vsel %vm2640, %v2594, 0
  %v2678 = vsel %vm2640, %v2595, 0
  %v2681 = vsel %vm2640, %v2596, 0
  %v2684 = vsel %vm2640, %v2597, 0
  %v2687 = vsel %vm2640, %v2598, 0
  %v2690 = vsel %vm2640, %v2599, 0
  %v2693 = vsel %vm2640, %v2600, 0
  %v2696 = vsel %vm2640, %v2601, 0
  %v2699 = vsel %vm2640, %v2602, 0
  %v2702 = vsel %vm2640, %v2603, 0
  %v2705 = vsel %vm2640, %v2604, 0
  %v2708 = vsel %vm2640, %v2605, 0
  %v2711 = vsel %vm2640, %v2606, 0
  %v2714 = vsel %vm2640, %v2607, 0
  %v2717 = vsel %vm2640, %v2608, 0
  %v2720 = vsel %vm2640, %v2609, 0
  %v2723 = vsel %vm2640, %v2610, 0
  %v2726 = vsel %vm2640, %v2611, 0
  %v2729 = vsel %vm2640, %v2612, 0
  %v2732 = vsel %vm2640, %v2613, 0
  %v2735 = vsel %vm2640, %v2614, 0
  %v2738 = vsel %vm2640, %v2615, 0
  %v2741 = vsel %vm2640, %v2616, 0
  %v2744 = vsel %vm2640, %v2617, 0
  %v2747 = vsel %vm2640, %v2618, 0
  %v2750 = vsel %vm2640, %v2619, 0
  %v2753 = vsel %vm2640, %v2620, 0
  %v2756 = vsel %vm2640, %v2621, 0
  %v2759 = vsel %vm2640, %v2622, 0
  %v2762 = vsel %vm2640, %v2623, 0
  %v2765 = vsel %vm2640, %v2624, 0
  %v2768 = vsel %vm2640, %v2625, 0
  %v2771 = vsel %vm2640, %v2626, 0
  %v2774 = vsel %vm2640, %v2627, 0
  %v2777 = vsel %vm2640, %v2628, 0
  %v2780 = vsel %vm2640, %v2629, 0
  %v2783 = vsel %vm2640, %v2630, 0
  %v2786 = vsel %vm2640, %v2631, 0
  %2788 = vmatpush.msra.mxu0 0.0
  %2789 = vmatpush.msra.mxu0 0.0
  %2790 = vmatpush.msra.mxu0 0.0
  %2791 = vmatpush.msra.mxu0 0.0
  %2792 = vmatpush.msra.mxu0 0.0
  %2793 = vmatpush.msra.mxu0 0.0
  %2794 = vmatpush.msra.mxu0 0.0
  %2795 = vmatpush.msra.mxu0 0.0
  %2796 = vmatpush.msra.mxu0 %v2639
  %2797 = vmatpush.msra.mxu0 %v2638
  %2798 = vmatpush.msra.mxu0 %v2637
  %2799 = vmatpush.msra.mxu0 %v2636
  %2800 = vmatpush.msra.mxu0 %v2635
  %2801 = vmatpush.msra.mxu0 %v2634
  %2802 = vmatpush.msra.mxu0 %v2633
  %2803 = vmatpush.msra.mxu0 %v2632
  %2804 = vmatmul.f32.gmra.mxu0 %v2642
  %v2805 = vpop.f32.mrf.mxu0
  %v2806 = vadd.f32 0.0, %v2805
  %2807 = vmatmul.f32.gmra.mxu0 %v2645
  %v2808 = vpop.f32.mrf.mxu0
  %v2809 = vadd.f32 0.0, %v2808
  %2810 = vmatmul.f32.gmra.mxu0 %v2648
  %v2811 = vpop.f32.mrf.mxu0
  %v2812 = vadd.f32 0.0, %v2811
  %2813 = vmatmul.f32.gmra.mxu0 %v2651
  %v2814 = vpop.f32.mrf.mxu0
  %v2815 = vadd.f32 0.0, %v2814
  %2816 = vmatmul.f32.gmra.mxu0 %v2654
  %v2817 = vpop.f32.mrf.mxu0
  %v2818 = vadd.f32 0.0, %v2817
  %2819 = vmatmul.f32.gmra.mxu0 %v2657
  %v2820 = vpop.f32.mrf.mxu0
  %v2821 = vadd.f32 0.0, %v2820
  %2822 = vmatmul.f32.gmra.mxu0 %v2660
  %v2823 = vpop.f32.mrf.mxu0
  %v2824 = vadd.f32 0.0, %v2823
  %2825 = vmatmul.f32.gmra.mxu0 %v2663
  %v2826 = vpop.f32.mrf.mxu0
  %v2827 = vadd.f32 0.0, %v2826
  %2828 = vmatmul.f32.gmra.mxu0 %v2666
  %v2829 = vpop.f32.mrf.mxu0
  %v2830 = vadd.f32 0.0, %v2829
  %2831 = vmatmul.f32.gmra.mxu0 %v2669
  %v2832 = vpop.f32.mrf.mxu0
  %v2833 = vadd.f32 0.0, %v2832
  %2834 = vmatmul.f32.gmra.mxu0 %v2672
  %v2835 = vpop.f32.mrf.mxu0
  %v2836 = vadd.f32 0.0, %v2835
  %2837 = vmatmul.f32.gmra.mxu0 %v2675
  %v2838 = vpop.f32.mrf.mxu0
  %v2839 = vadd.f32 0.0, %v2838
  %2840 = vmatmul.f32.gmra.mxu0 %v2678
  %v2841 = vpop.f32.mrf.mxu0
  %v2842 = vadd.f32 0.0, %v2841
  %2843 = vmatmul.f32.gmra.mxu0 %v2681
  %v2844 = vpop.f32.mrf.mxu0
  %v2845 = vadd.f32 0.0, %v2844
  %2846 = vmatmul.f32.gmra.mxu0 %v2684
  %v2847 = vpop.f32.mrf.mxu0
  %v2848 = vadd.f32 0.0, %v2847
  %2849 = vmatmul.f32.gmra.mxu0 %v2687
  %v2850 = vpop.f32.mrf.mxu0
  %v2851 = vadd.f32 0.0, %v2850
  %2852 = vmatmul.f32.gmra.mxu0 %v2690
  %v2853 = vpop.f32.mrf.mxu0
  %v2854 = vadd.f32 0.0, %v2853
  %2855 = vmatmul.f32.gmra.mxu0 %v2693
  %v2856 = vpop.f32.mrf.mxu0
  %v2857 = vadd.f32 0.0, %v2856
  %2858 = vmatmul.f32.gmra.mxu0 %v2696
  %v2859 = vpop.f32.mrf.mxu0
  %v2860 = vadd.f32 0.0, %v2859
  %2861 = vmatmul.f32.gmra.mxu0 %v2699
  %v2862 = vpop.f32.mrf.mxu0
  %v2863 = vadd.f32 0.0, %v2862
  %2864 = vmatmul.f32.gmra.mxu0 %v2702
  %v2865 = vpop.f32.mrf.mxu0
  %v2866 = vadd.f32 0.0, %v2865
  %2867 = vmatmul.f32.gmra.mxu0 %v2705
  %v2868 = vpop.f32.mrf.mxu0
  %v2869 = vadd.f32 0.0, %v2868
  %2870 = vmatmul.f32.gmra.mxu0 %v2708
  %v2871 = vpop.f32.mrf.mxu0
  %v2872 = vadd.f32 0.0, %v2871
  %2873 = vmatmul.f32.gmra.mxu0 %v2711
  %v2874 = vpop.f32.mrf.mxu0
  %v2875 = vadd.f32 0.0, %v2874
  %2876 = vmatmul.f32.gmra.mxu0 %v2714
  %v2877 = vpop.f32.mrf.mxu0
  %v2878 = vadd.f32 0.0, %v2877
  %2879 = vmatmul.f32.gmra.mxu0 %v2717
  %v2880 = vpop.f32.mrf.mxu0
  %v2881 = vadd.f32 0.0, %v2880
  %2882 = vmatmul.f32.gmra.mxu0 %v2720
  %v2883 = vpop.f32.mrf.mxu0
  %v2884 = vadd.f32 0.0, %v2883
  %2885 = vmatmul.f32.gmra.mxu0 %v2723
  %v2886 = vpop.f32.mrf.mxu0
  %v2887 = vadd.f32 0.0, %v2886
  %2888 = vmatmul.f32.gmra.mxu0 %v2726
  %v2889 = vpop.f32.mrf.mxu0
  %v2890 = vadd.f32 0.0, %v2889
  %2891 = vmatmul.f32.gmra.mxu0 %v2729
  %v2892 = vpop.f32.mrf.mxu0
  %v2893 = vadd.f32 0.0, %v2892
  %2894 = vmatmul.f32.gmra.mxu0 %v2732
  %v2895 = vpop.f32.mrf.mxu0
  %v2896 = vadd.f32 0.0, %v2895
  %2897 = vmatmul.f32.gmra.mxu0 %v2735
  %v2898 = vpop.f32.mrf.mxu0
  %v2899 = vadd.f32 0.0, %v2898
  %2900 = vmatmul.f32.gmra.mxu0 %v2738
  %v2901 = vpop.f32.mrf.mxu0
  %v2902 = vadd.f32 0.0, %v2901
  %2903 = vmatmul.f32.gmra.mxu0 %v2741
  %v2904 = vpop.f32.mrf.mxu0
  %v2905 = vadd.f32 0.0, %v2904
  %2906 = vmatmul.f32.gmra.mxu0 %v2744
  %v2907 = vpop.f32.mrf.mxu0
  %v2908 = vadd.f32 0.0, %v2907
  %2909 = vmatmul.f32.gmra.mxu0 %v2747
  %v2910 = vpop.f32.mrf.mxu0
  %v2911 = vadd.f32 0.0, %v2910
  %2912 = vmatmul.f32.gmra.mxu0 %v2750
  %v2913 = vpop.f32.mrf.mxu0
  %v2914 = vadd.f32 0.0, %v2913
  %2915 = vmatmul.f32.gmra.mxu0 %v2753
  %v2916 = vpop.f32.mrf.mxu0
  %v2917 = vadd.f32 0.0, %v2916
  %2918 = vmatmul.f32.gmra.mxu0 %v2756
  %v2919 = vpop.f32.mrf.mxu0
  %v2920 = vadd.f32 0.0, %v2919
  %2921 = vmatmul.f32.gmra.mxu0 %v2759
  %v2922 = vpop.f32.mrf.mxu0
  %v2923 = vadd.f32 0.0, %v2922
  %2924 = vmatmul.f32.gmra.mxu0 %v2762
  %v2925 = vpop.f32.mrf.mxu0
  %v2926 = vadd.f32 0.0, %v2925
  %2927 = vmatmul.f32.gmra.mxu0 %v2765
  %v2928 = vpop.f32.mrf.mxu0
  %v2929 = vadd.f32 0.0, %v2928
  %2930 = vmatmul.f32.gmra.mxu0 %v2768
  %v2931 = vpop.f32.mrf.mxu0
  %v2932 = vadd.f32 0.0, %v2931
  %2933 = vmatmul.f32.gmra.mxu0 %v2771
  %v2934 = vpop.f32.mrf.mxu0
  %v2935 = vadd.f32 0.0, %v2934
  %2936 = vmatmul.f32.gmra.mxu0 %v2774
  %v2937 = vpop.f32.mrf.mxu0
  %v2938 = vadd.f32 0.0, %v2937
  %2939 = vmatmul.f32.gmra.mxu0 %v2777
  %v2940 = vpop.f32.mrf.mxu0
  %v2941 = vadd.f32 0.0, %v2940
  %2942 = vmatmul.f32.gmra.mxu0 %v2780
  %v2943 = vpop.f32.mrf.mxu0
  %v2944 = vadd.f32 0.0, %v2943
  %2945 = vmatmul.f32.gmra.mxu0 %v2783
  %v2946 = vpop.f32.mrf.mxu0
  %v2947 = vadd.f32 0.0, %v2946
  %2948 = vmatmul.f32.gmra.mxu0 %v2786
  %v2949 = vpop.f32.mrf.mxu0
  %v2950 = vadd.f32 0.0, %v2949
  %2951 = vdwg.mxu0
  %v2952 = vmul.f32 %v2806, 2e-05
  %v2953 = vmul.f32 %v2809, 2e-05
  %v2954 = vmul.f32 %v2812, 2e-05
  %v2955 = vmul.f32 %v2815, 2e-05
  %v2956 = vmul.f32 %v2818, 2e-05
  %v2957 = vmul.f32 %v2821, 2e-05
  %v2958 = vmul.f32 %v2824, 2e-05
  %v2959 = vmul.f32 %v2827, 2e-05
  %v2960 = vmul.f32 %v2830, 2e-05
  %v2961 = vmul.f32 %v2833, 2e-05
  %v2962 = vmul.f32 %v2836, 2e-05
  %v2963 = vmul.f32 %v2839, 2e-05
  %v2964 = vmul.f32 %v2842, 2e-05
  %v2965 = vmul.f32 %v2845, 2e-05
  %v2966 = vmul.f32 %v2848, 2e-05
  %v2967 = vmul.f32 %v2851, 2e-05
  %v2968 = vmul.f32 %v2854, 2e-05
  %v2969 = vmul.f32 %v2857, 2e-05
  %v2970 = vmul.f32 %v2860, 2e-05
  %v2971 = vmul.f32 %v2863, 2e-05
  %v2972 = vmul.f32 %v2866, 2e-05
  %v2973 = vmul.f32 %v2869, 2e-05
  %v2974 = vmul.f32 %v2872, 2e-05
  %v2975 = vmul.f32 %v2875, 2e-05
  %v2976 = vmul.f32 %v2878, 2e-05
  %v2977 = vmul.f32 %v2881, 2e-05
  %v2978 = vmul.f32 %v2884, 2e-05
  %v2979 = vmul.f32 %v2887, 2e-05
  %v2980 = vmul.f32 %v2890, 2e-05
  %v2981 = vmul.f32 %v2893, 2e-05
  %v2982 = vmul.f32 %v2896, 2e-05
  %v2983 = vmul.f32 %v2899, 2e-05
  %v2984 = vmul.f32 %v2902, 2e-05
  %v2985 = vmul.f32 %v2905, 2e-05
  %v2986 = vmul.f32 %v2908, 2e-05
  %v2987 = vmul.f32 %v2911, 2e-05
  %v2988 = vmul.f32 %v2914, 2e-05
  %v2989 = vmul.f32 %v2917, 2e-05
  %v2990 = vmul.f32 %v2920, 2e-05
  %v2991 = vmul.f32 %v2923, 2e-05
  %v2992 = vmul.f32 %v2926, 2e-05
  %v2993 = vmul.f32 %v2929, 2e-05
  %v2994 = vmul.f32 %v2932, 2e-05
  %v2995 = vmul.f32 %v2935, 2e-05
  %v2996 = vmul.f32 %v2938, 2e-05
  %v2997 = vmul.f32 %v2941, 2e-05
  %v2998 = vmul.f32 %v2944, 2e-05
  %v2999 = vmul.f32 %v2947, 2e-05
  %v3000 = vmul.f32 %v2950, 2e-05
  %v3001 = vadd.f32 %v2952, 1.0
  %v3002 = vadd.f32 %v2953, 1.0
  %v3003 = vadd.f32 %v2954, 1.0
  %v3004 = vadd.f32 %v2955, 1.0
  %v3005 = vadd.f32 %v2956, 1.0
  %v3006 = vadd.f32 %v2957, 1.0
  %v3007 = vadd.f32 %v2958, 1.0
  %v3008 = vadd.f32 %v2959, 1.0
  %v3009 = vadd.f32 %v2960, 1.0
  %v3010 = vadd.f32 %v2961, 1.0
  %v3011 = vadd.f32 %v2962, 1.0
  %v3012 = vadd.f32 %v2963, 1.0
  %v3013 = vadd.f32 %v2964, 1.0
  %v3014 = vadd.f32 %v2965, 1.0
  %v3015 = vadd.f32 %v2966, 1.0
  %v3016 = vadd.f32 %v2967, 1.0
  %v3017 = vadd.f32 %v2968, 1.0
  %v3018 = vadd.f32 %v2969, 1.0
  %v3019 = vadd.f32 %v2970, 1.0
  %v3020 = vadd.f32 %v2971, 1.0
  %v3021 = vadd.f32 %v2972, 1.0
  %v3022 = vadd.f32 %v2973, 1.0
  %v3023 = vadd.f32 %v2974, 1.0
  %v3024 = vadd.f32 %v2975, 1.0
  %v3025 = vadd.f32 %v2976, 1.0
  %v3026 = vadd.f32 %v2977, 1.0
  %v3027 = vadd.f32 %v2978, 1.0
  %v3028 = vadd.f32 %v2979, 1.0
  %v3029 = vadd.f32 %v2980, 1.0
  %v3030 = vadd.f32 %v2981, 1.0
  %v3031 = vadd.f32 %v2982, 1.0
  %v3032 = vadd.f32 %v2983, 1.0
  %v3033 = vadd.f32 %v2984, 1.0
  %v3034 = vadd.f32 %v2985, 1.0
  %v3035 = vadd.f32 %v2986, 1.0
  %v3036 = vadd.f32 %v2987, 1.0
  %v3037 = vadd.f32 %v2988, 1.0
  %v3038 = vadd.f32 %v2989, 1.0
  %v3039 = vadd.f32 %v2990, 1.0
  %v3040 = vadd.f32 %v2991, 1.0
  %v3041 = vadd.f32 %v2992, 1.0
  %v3042 = vadd.f32 %v2993, 1.0
  %v3043 = vadd.f32 %v2994, 1.0
  %v3044 = vadd.f32 %v2995, 1.0
  %v3045 = vadd.f32 %v2996, 1.0
  %v3046 = vadd.f32 %v2997, 1.0
  %v3047 = vadd.f32 %v2998, 1.0
  %v3048 = vadd.f32 %v2999, 1.0
  %v3049 = vadd.f32 %v3000, 1.0
  %v3050 = vrsqrt.pop %v3001
  %v3051 = vmul.f32 %v3050, %v3001
  %v3052 = vmul.f32 %v3051, %v3050
  %v3053 = vmul.f32 0.5, %v3052
  %v3054 = vsub.f32 1.5, %v3053
  %v3055 = vmul.f32 %v3050, %v3054
  %vm3056 = vweird.f32 %v3001
  %vm3057 = vweird.f32 %v3050
  %vm3058 = vmor %vm3056, %vm3057
  %v3059 = vsel %vm3058, %v3050, %v3055
  %v3060 = vrsqrt.pop %v3002
  %v3061 = vmul.f32 %v3060, %v3002
  %v3062 = vmul.f32 %v3061, %v3060
  %v3063 = vmul.f32 0.5, %v3062
  %v3064 = vsub.f32 1.5, %v3063
  %v3065 = vmul.f32 %v3060, %v3064
  %vm3066 = vweird.f32 %v3002
  %vm3067 = vweird.f32 %v3060
  %vm3068 = vmor %vm3066, %vm3067
  %v3069 = vsel %vm3068, %v3060, %v3065
  %v3070 = vrsqrt.pop %v3003
  %v3071 = vmul.f32 %v3070, %v3003
  %v3072 = vmul.f32 %v3071, %v3070
  %v3073 = vmul.f32 0.5, %v3072
  %v3074 = vsub.f32 1.5, %v3073
  %v3075 = vmul.f32 %v3070, %v3074
  %vm3076 = vweird.f32 %v3003
  %vm3077 = vweird.f32 %v3070
  %vm3078 = vmor %vm3076, %vm3077
  %v3079 = vsel %vm3078, %v3070, %v3075
  %v3080 = vrsqrt.pop %v3004
  %v3081 = vmul.f32 %v3080, %v3004
  %v3082 = vmul.f32 %v3081, %v3080
  %v3083 = vmul.f32 0.5, %v3082
  %v3084 = vsub.f32 1.5, %v3083
  %v3085 = vmul.f32 %v3080, %v3084
  %vm3086 = vweird.f32 %v3004
  %vm3087 = vweird.f32 %v3080
  %vm3088 = vmor %vm3086, %vm3087
  %v3089 = vsel %vm3088, %v3080, %v3085
  %v3090 = vrsqrt.pop %v3005
  %v3091 = vmul.f32 %v3090, %v3005
  %v3092 = vmul.f32 %v3091, %v3090
  %v3093 = vmul.f32 0.5, %v3092
  %v3094 = vsub.f32 1.5, %v3093
  %v3095 = vmul.f32 %v3090, %v3094
  %vm3096 = vweird.f32 %v3005
  %vm3097 = vweird.f32 %v3090
  %vm3098 = vmor %vm3096, %vm3097
  %v3099 = vsel %vm3098, %v3090, %v3095
  %v3100 = vrsqrt.pop %v3006
  %v3101 = vmul.f32 %v3100, %v3006
  %v3102 = vmul.f32 %v3101, %v3100
  %v3103 = vmul.f32 0.5, %v3102
  %v3104 = vsub.f32 1.5, %v3103
  %v3105 = vmul.f32 %v3100, %v3104
  %vm3106 = vweird.f32 %v3006
  %vm3107 = vweird.f32 %v3100
  %vm3108 = vmor %vm3106, %vm3107
  %v3109 = vsel %vm3108, %v3100, %v3105
  %v3110 = vrsqrt.pop %v3007
  %v3111 = vmul.f32 %v3110, %v3007
  %v3112 = vmul.f32 %v3111, %v3110
  %v3113 = vmul.f32 0.5, %v3112
  %v3114 = vsub.f32 1.5, %v3113
  %v3115 = vmul.f32 %v3110, %v3114
  %vm3116 = vweird.f32 %v3007
  %vm3117 = vweird.f32 %v3110
  %vm3118 = vmor %vm3116, %vm3117
  %v3119 = vsel %vm3118, %v3110, %v3115
  %v3120 = vrsqrt.pop %v3008
  %v3121 = vmul.f32 %v3120, %v3008
  %v3122 = vmul.f32 %v3121, %v3120
  %v3123 = vmul.f32 0.5, %v3122
  %v3124 = vsub.f32 1.5, %v3123
  %v3125 = vmul.f32 %v3120, %v3124
  %vm3126 = vweird.f32 %v3008
  %vm3127 = vweird.f32 %v3120
  %vm3128 = vmor %vm3126, %vm3127
  %v3129 = vsel %vm3128, %v3120, %v3125
  %v3130 = vrsqrt.pop %v3009
  %v3131 = vmul.f32 %v3130, %v3009
  %v3132 = vmul.f32 %v3131, %v3130
  %v3133 = vmul.f32 0.5, %v3132
  %v3134 = vsub.f32 1.5, %v3133
  %v3135 = vmul.f32 %v3130, %v3134
  %vm3136 = vweird.f32 %v3009
  %vm3137 = vweird.f32 %v3130
  %vm3138 = vmor %vm3136, %vm3137
  %v3139 = vsel %vm3138, %v3130, %v3135
  %v3140 = vrsqrt.pop %v3010
  %v3141 = vmul.f32 %v3140, %v3010
  %v3142 = vmul.f32 %v3141, %v3140
  %v3143 = vmul.f32 0.5, %v3142
  %v3144 = vsub.f32 1.5, %v3143
  %v3145 = vmul.f32 %v3140, %v3144
  %vm3146 = vweird.f32 %v3010
  %vm3147 = vweird.f32 %v3140
  %vm3148 = vmor %vm3146, %vm3147
  %v3149 = vsel %vm3148, %v3140, %v3145
  %v3150 = vrsqrt.pop %v3011
  %v3151 = vmul.f32 %v3150, %v3011
  %v3152 = vmul.f32 %v3151, %v3150
  %v3153 = vmul.f32 0.5, %v3152
  %v3154 = vsub.f32 1.5, %v3153
  %v3155 = vmul.f32 %v3150, %v3154
  %vm3156 = vweird.f32 %v3011
  %vm3157 = vweird.f32 %v3150
  %vm3158 = vmor %vm3156, %vm3157
  %v3159 = vsel %vm3158, %v3150, %v3155
  %v3160 = vrsqrt.pop %v3012
  %v3161 = vmul.f32 %v3160, %v3012
  %v3162 = vmul.f32 %v3161, %v3160
  %v3163 = vmul.f32 0.5, %v3162
  %v3164 = vsub.f32 1.5, %v3163
  %v3165 = vmul.f32 %v3160, %v3164
  %vm3166 = vweird.f32 %v3012
  %vm3167 = vweird.f32 %v3160
  %vm3168 = vmor %vm3166, %vm3167
  %v3169 = vsel %vm3168, %v3160, %v3165
  %v3170 = vrsqrt.pop %v3013
  %v3171 = vmul.f32 %v3170, %v3013
  %v3172 = vmul.f32 %v3171, %v3170
  %v3173 = vmul.f32 0.5, %v3172
  %v3174 = vsub.f32 1.5, %v3173
  %v3175 = vmul.f32 %v3170, %v3174
  %vm3176 = vweird.f32 %v3013
  %vm3177 = vweird.f32 %v3170
  %vm3178 = vmor %vm3176, %vm3177
  %v3179 = vsel %vm3178, %v3170, %v3175
  %v3180 = vrsqrt.pop %v3014
  %v3181 = vmul.f32 %v3180, %v3014
  %v3182 = vmul.f32 %v3181, %v3180
  %v3183 = vmul.f32 0.5, %v3182
  %v3184 = vsub.f32 1.5, %v3183
  %v3185 = vmul.f32 %v3180, %v3184
  %vm3186 = vweird.f32 %v3014
  %vm3187 = vweird.f32 %v3180
  %vm3188 = vmor %vm3186, %vm3187
  %v3189 = vsel %vm3188, %v3180, %v3185
  %v3190 = vrsqrt.pop %v3015
  %v3191 = vmul.f32 %v3190, %v3015
  %v3192 = vmul.f32 %v3191, %v3190
  %v3193 = vmul.f32 0.5, %v3192
  %v3194 = vsub.f32 1.5, %v3193
  %v3195 = vmul.f32 %v3190, %v3194
  %vm3196 = vweird.f32 %v3015
  %vm3197 = vweird.f32 %v3190
  %vm3198 = vmor %vm3196, %vm3197
  %v3199 = vsel %vm3198, %v3190, %v3195
  %v3200 = vrsqrt.pop %v3016
  %v3201 = vmul.f32 %v3200, %v3016
  %v3202 = vmul.f32 %v3201, %v3200
  %v3203 = vmul.f32 0.5, %v3202
  %v3204 = vsub.f32 1.5, %v3203
  %v3205 = vmul.f32 %v3200, %v3204
  %vm3206 = vweird.f32 %v3016
  %vm3207 = vweird.f32 %v3200
  %vm3208 = vmor %vm3206, %vm3207
  %v3209 = vsel %vm3208, %v3200, %v3205
  %v3210 = vrsqrt.pop %v3017
  %v3211 = vmul.f32 %v3210, %v3017
  %v3212 = vmul.f32 %v3211, %v3210
  %v3213 = vmul.f32 0.5, %v3212
  %v3214 = vsub.f32 1.5, %v3213
  %v3215 = vmul.f32 %v3210, %v3214
  %vm3216 = vweird.f32 %v3017
  %vm3217 = vweird.f32 %v3210
  %vm3218 = vmor %vm3216, %vm3217
  %v3219 = vsel %vm3218, %v3210, %v3215
  %v3220 = vrsqrt.pop %v3018
  %v3221 = vmul.f32 %v3220, %v3018
  %v3222 = vmul.f32 %v3221, %v3220
  %v3223 = vmul.f32 0.5, %v3222
  %v3224 = vsub.f32 1.5, %v3223
  %v3225 = vmul.f32 %v3220, %v3224
  %vm3226 = vweird.f32 %v3018
  %vm3227 = vweird.f32 %v3220
  %vm3228 = vmor %vm3226, %vm3227
  %v3229 = vsel %vm3228, %v3220, %v3225
  %v3230 = vrsqrt.pop %v3019
  %v3231 = vmul.f32 %v3230, %v3019
  %v3232 = vmul.f32 %v3231, %v3230
  %v3233 = vmul.f32 0.5, %v3232
  %v3234 = vsub.f32 1.5, %v3233
  %v3235 = vmul.f32 %v3230, %v3234
  %vm3236 = vweird.f32 %v3019
  %vm3237 = vweird.f32 %v3230
  %vm3238 = vmor %vm3236, %vm3237
  %v3239 = vsel %vm3238, %v3230, %v3235
  %v3240 = vrsqrt.pop %v3020
  %v3241 = vmul.f32 %v3240, %v3020
  %v3242 = vmul.f32 %v3241, %v3240
  %v3243 = vmul.f32 0.5, %v3242
  %v3244 = vsub.f32 1.5, %v3243
  %v3245 = vmul.f32 %v3240, %v3244
  %vm3246 = vweird.f32 %v3020
  %vm3247 = vweird.f32 %v3240
  %vm3248 = vmor %vm3246, %vm3247
  %v3249 = vsel %vm3248, %v3240, %v3245
  %v3250 = vrsqrt.pop %v3021
  %v3251 = vmul.f32 %v3250, %v3021
  %v3252 = vmul.f32 %v3251, %v3250
  %v3253 = vmul.f32 0.5, %v3252
  %v3254 = vsub.f32 1.5, %v3253
  %v3255 = vmul.f32 %v3250, %v3254
  %vm3256 = vweird.f32 %v3021
  %vm3257 = vweird.f32 %v3250
  %vm3258 = vmor %vm3256, %vm3257
  %v3259 = vsel %vm3258, %v3250, %v3255
  %v3260 = vrsqrt.pop %v3022
  %v3261 = vmul.f32 %v3260, %v3022
  %v3262 = vmul.f32 %v3261, %v3260
  %v3263 = vmul.f32 0.5, %v3262
  %v3264 = vsub.f32 1.5, %v3263
  %v3265 = vmul.f32 %v3260, %v3264
  %vm3266 = vweird.f32 %v3022
  %vm3267 = vweird.f32 %v3260
  %vm3268 = vmor %vm3266, %vm3267
  %v3269 = vsel %vm3268, %v3260, %v3265
  %v3270 = vrsqrt.pop %v3023
  %v3271 = vmul.f32 %v3270, %v3023
  %v3272 = vmul.f32 %v3271, %v3270
  %v3273 = vmul.f32 0.5, %v3272
  %v3274 = vsub.f32 1.5, %v3273
  %v3275 = vmul.f32 %v3270, %v3274
  %vm3276 = vweird.f32 %v3023
  %vm3277 = vweird.f32 %v3270
  %vm3278 = vmor %vm3276, %vm3277
  %v3279 = vsel %vm3278, %v3270, %v3275
  %v3280 = vrsqrt.pop %v3024
  %v3281 = vmul.f32 %v3280, %v3024
  %v3282 = vmul.f32 %v3281, %v3280
  %v3283 = vmul.f32 0.5, %v3282
  %v3284 = vsub.f32 1.5, %v3283
  %v3285 = vmul.f32 %v3280, %v3284
  %vm3286 = vweird.f32 %v3024
  %vm3287 = vweird.f32 %v3280
  %vm3288 = vmor %vm3286, %vm3287
  %v3289 = vsel %vm3288, %v3280, %v3285
  %v3290 = vrsqrt.pop %v3025
  %v3291 = vmul.f32 %v3290, %v3025
  %v3292 = vmul.f32 %v3291, %v3290
  %v3293 = vmul.f32 0.5, %v3292
  %v3294 = vsub.f32 1.5, %v3293
  %v3295 = vmul.f32 %v3290, %v3294
  %vm3296 = vweird.f32 %v3025
  %vm3297 = vweird.f32 %v3290
  %vm3298 = vmor %vm3296, %vm3297
  %v3299 = vsel %vm3298, %v3290, %v3295
  %v3300 = vrsqrt.pop %v3026
  %v3301 = vmul.f32 %v3300, %v3026
  %v3302 = vmul.f32 %v3301, %v3300
  %v3303 = vmul.f32 0.5, %v3302
  %v3304 = vsub.f32 1.5, %v3303
  %v3305 = vmul.f32 %v3300, %v3304
  %vm3306 = vweird.f32 %v3026
  %vm3307 = vweird.f32 %v3300
  %vm3308 = vmor %vm3306, %vm3307
  %v3309 = vsel %vm3308, %v3300, %v3305
  %v3310 = vrsqrt.pop %v3027
  %v3311 = vmul.f32 %v3310, %v3027
  %v3312 = vmul.f32 %v3311, %v3310
  %v3313 = vmul.f32 0.5, %v3312
  %v3314 = vsub.f32 1.5, %v3313
  %v3315 = vmul.f32 %v3310, %v3314
  %vm3316 = vweird.f32 %v3027
  %vm3317 = vweird.f32 %v3310
  %vm3318 = vmor %vm3316, %vm3317
  %v3319 = vsel %vm3318, %v3310, %v3315
  %v3320 = vrsqrt.pop %v3028
  %v3321 = vmul.f32 %v3320, %v3028
  %v3322 = vmul.f32 %v3321, %v3320
  %v3323 = vmul.f32 0.5, %v3322
  %v3324 = vsub.f32 1.5, %v3323
  %v3325 = vmul.f32 %v3320, %v3324
  %vm3326 = vweird.f32 %v3028
  %vm3327 = vweird.f32 %v3320
  %vm3328 = vmor %vm3326, %vm3327
  %v3329 = vsel %vm3328, %v3320, %v3325
  %v3330 = vrsqrt.pop %v3029
  %v3331 = vmul.f32 %v3330, %v3029
  %v3332 = vmul.f32 %v3331, %v3330
  %v3333 = vmul.f32 0.5, %v3332
  %v3334 = vsub.f32 1.5, %v3333
  %v3335 = vmul.f32 %v3330, %v3334
  %vm3336 = vweird.f32 %v3029
  %vm3337 = vweird.f32 %v3330
  %vm3338 = vmor %vm3336, %vm3337
  %v3339 = vsel %vm3338, %v3330, %v3335
  %v3340 = vrsqrt.pop %v3030
  %v3341 = vmul.f32 %v3340, %v3030
  %v3342 = vmul.f32 %v3341, %v3340
  %v3343 = vmul.f32 0.5, %v3342
  %v3344 = vsub.f32 1.5, %v3343
  %v3345 = vmul.f32 %v3340, %v3344
  %vm3346 = vweird.f32 %v3030
  %vm3347 = vweird.f32 %v3340
  %vm3348 = vmor %vm3346, %vm3347
  %v3349 = vsel %vm3348, %v3340, %v3345
  %v3350 = vrsqrt.pop %v3031
  %v3351 = vmul.f32 %v3350, %v3031
  %v3352 = vmul.f32 %v3351, %v3350
  %v3353 = vmul.f32 0.5, %v3352
  %v3354 = vsub.f32 1.5, %v3353
  %v3355 = vmul.f32 %v3350, %v3354
  %vm3356 = vweird.f32 %v3031
  %vm3357 = vweird.f32 %v3350
  %vm3358 = vmor %vm3356, %vm3357
  %v3359 = vsel %vm3358, %v3350, %v3355
  %v3360 = vrsqrt.pop %v3032
  %v3361 = vmul.f32 %v3360, %v3032
  %v3362 = vmul.f32 %v3361, %v3360
  %v3363 = vmul.f32 0.5, %v3362
  %v3364 = vsub.f32 1.5, %v3363
  %v3365 = vmul.f32 %v3360, %v3364
  %vm3366 = vweird.f32 %v3032
  %vm3367 = vweird.f32 %v3360
  %vm3368 = vmor %vm3366, %vm3367
  %v3369 = vsel %vm3368, %v3360, %v3365
  %v3370 = vrsqrt.pop %v3033
  %v3371 = vmul.f32 %v3370, %v3033
  %v3372 = vmul.f32 %v3371, %v3370
  %v3373 = vmul.f32 0.5, %v3372
  %v3374 = vsub.f32 1.5, %v3373
  %v3375 = vmul.f32 %v3370, %v3374
  %vm3376 = vweird.f32 %v3033
  %vm3377 = vweird.f32 %v3370
  %vm3378 = vmor %vm3376, %vm3377
  %v3379 = vsel %vm3378, %v3370, %v3375
  %v3380 = vrsqrt.pop %v3034
  %v3381 = vmul.f32 %v3380, %v3034
  %v3382 = vmul.f32 %v3381, %v3380
  %v3383 = vmul.f32 0.5, %v3382
  %v3384 = vsub.f32 1.5, %v3383
  %v3385 = vmul.f32 %v3380, %v3384
  %vm3386 = vweird.f32 %v3034
  %vm3387 = vweird.f32 %v3380
  %vm3388 = vmor %vm3386, %vm3387
  %v3389 = vsel %vm3388, %v3380, %v3385
  %v3390 = vrsqrt.pop %v3035
  %v3391 = vmul.f32 %v3390, %v3035
  %v3392 = vmul.f32 %v3391, %v3390
  %v3393 = vmul.f32 0.5, %v3392
  %v3394 = vsub.f32 1.5, %v3393
  %v3395 = vmul.f32 %v3390, %v3394
  %vm3396 = vweird.f32 %v3035
  %vm3397 = vweird.f32 %v3390
  %vm3398 = vmor %vm3396, %vm3397
  %v3399 = vsel %vm3398, %v3390, %v3395
  %v3400 = vrsqrt.pop %v3036
  %v3401 = vmul.f32 %v3400, %v3036
  %v3402 = vmul.f32 %v3401, %v3400
  %v3403 = vmul.f32 0.5, %v3402
  %v3404 = vsub.f32 1.5, %v3403
  %v3405 = vmul.f32 %v3400, %v3404
  %vm3406 = vweird.f32 %v3036
  %vm3407 = vweird.f32 %v3400
  %vm3408 = vmor %vm3406, %vm3407
  %v3409 = vsel %vm3408, %v3400, %v3405
  %v3410 = vrsqrt.pop %v3037
  %v3411 = vmul.f32 %v3410, %v3037
  %v3412 = vmul.f32 %v3411, %v3410
  %v3413 = vmul.f32 0.5, %v3412
  %v3414 = vsub.f32 1.5, %v3413
  %v3415 = vmul.f32 %v3410, %v3414
  %vm3416 = vweird.f32 %v3037
  %vm3417 = vweird.f32 %v3410
  %vm3418 = vmor %vm3416, %vm3417
  %v3419 = vsel %vm3418, %v3410, %v3415
  %v3420 = vrsqrt.pop %v3038
  %v3421 = vmul.f32 %v3420, %v3038
  %v3422 = vmul.f32 %v3421, %v3420
  %v3423 = vmul.f32 0.5, %v3422
  %v3424 = vsub.f32 1.5, %v3423
  %v3425 = vmul.f32 %v3420, %v3424
  %vm3426 = vweird.f32 %v3038
  %vm3427 = vweird.f32 %v3420
  %vm3428 = vmor %vm3426, %vm3427
  %v3429 = vsel %vm3428, %v3420, %v3425
  %v3430 = vrsqrt.pop %v3039
  %v3431 = vmul.f32 %v3430, %v3039
  %v3432 = vmul.f32 %v3431, %v3430
  %v3433 = vmul.f32 0.5, %v3432
  %v3434 = vsub.f32 1.5, %v3433
  %v3435 = vmul.f32 %v3430, %v3434
  %vm3436 = vweird.f32 %v3039
  %vm3437 = vweird.f32 %v3430
  %vm3438 = vmor %vm3436, %vm3437
  %v3439 = vsel %vm3438, %v3430, %v3435
  %v3440 = vrsqrt.pop %v3040
  %v3441 = vmul.f32 %v3440, %v3040
  %v3442 = vmul.f32 %v3441, %v3440
  %v3443 = vmul.f32 0.5, %v3442
  %v3444 = vsub.f32 1.5, %v3443
  %v3445 = vmul.f32 %v3440, %v3444
  %vm3446 = vweird.f32 %v3040
  %vm3447 = vweird.f32 %v3440
  %vm3448 = vmor %vm3446, %vm3447
  %v3449 = vsel %vm3448, %v3440, %v3445
  %v3450 = vrsqrt.pop %v3041
  %v3451 = vmul.f32 %v3450, %v3041
  %v3452 = vmul.f32 %v3451, %v3450
  %v3453 = vmul.f32 0.5, %v3452
  %v3454 = vsub.f32 1.5, %v3453
  %v3455 = vmul.f32 %v3450, %v3454
  %vm3456 = vweird.f32 %v3041
  %vm3457 = vweird.f32 %v3450
  %vm3458 = vmor %vm3456, %vm3457
  %v3459 = vsel %vm3458, %v3450, %v3455
  %v3460 = vrsqrt.pop %v3042
  %v3461 = vmul.f32 %v3460, %v3042
  %v3462 = vmul.f32 %v3461, %v3460
  %v3463 = vmul.f32 0.5, %v3462
  %v3464 = vsub.f32 1.5, %v3463
  %v3465 = vmul.f32 %v3460, %v3464
  %vm3466 = vweird.f32 %v3042
  %vm3467 = vweird.f32 %v3460
  %vm3468 = vmor %vm3466, %vm3467
  %v3469 = vsel %vm3468, %v3460, %v3465
  %v3470 = vrsqrt.pop %v3043
  %v3471 = vmul.f32 %v3470, %v3043
  %v3472 = vmul.f32 %v3471, %v3470
  %v3473 = vmul.f32 0.5, %v3472
  %v3474 = vsub.f32 1.5, %v3473
  %v3475 = vmul.f32 %v3470, %v3474
  %vm3476 = vweird.f32 %v3043
  %vm3477 = vweird.f32 %v3470
  %vm3478 = vmor %vm3476, %vm3477
  %v3479 = vsel %vm3478, %v3470, %v3475
  %v3480 = vrsqrt.pop %v3044
  %v3481 = vmul.f32 %v3480, %v3044
  %v3482 = vmul.f32 %v3481, %v3480
  %v3483 = vmul.f32 0.5, %v3482
  %v3484 = vsub.f32 1.5, %v3483
  %v3485 = vmul.f32 %v3480, %v3484
  %vm3486 = vweird.f32 %v3044
  %vm3487 = vweird.f32 %v3480
  %vm3488 = vmor %vm3486, %vm3487
  %v3489 = vsel %vm3488, %v3480, %v3485
  %v3490 = vrsqrt.pop %v3045
  %v3491 = vmul.f32 %v3490, %v3045
  %v3492 = vmul.f32 %v3491, %v3490
  %v3493 = vmul.f32 0.5, %v3492
  %v3494 = vsub.f32 1.5, %v3493
  %v3495 = vmul.f32 %v3490, %v3494
  %vm3496 = vweird.f32 %v3045
  %vm3497 = vweird.f32 %v3490
  %vm3498 = vmor %vm3496, %vm3497
  %v3499 = vsel %vm3498, %v3490, %v3495
  %v3500 = vrsqrt.pop %v3046
  %v3501 = vmul.f32 %v3500, %v3046
  %v3502 = vmul.f32 %v3501, %v3500
  %v3503 = vmul.f32 0.5, %v3502
  %v3504 = vsub.f32 1.5, %v3503
  %v3505 = vmul.f32 %v3500, %v3504
  %vm3506 = vweird.f32 %v3046
  %vm3507 = vweird.f32 %v3500
  %vm3508 = vmor %vm3506, %vm3507
  %v3509 = vsel %vm3508, %v3500, %v3505
  %v3510 = vrsqrt.pop %v3047
  %v3511 = vmul.f32 %v3510, %v3047
  %v3512 = vmul.f32 %v3511, %v3510
  %v3513 = vmul.f32 0.5, %v3512
  %v3514 = vsub.f32 1.5, %v3513
  %v3515 = vmul.f32 %v3510, %v3514
  %vm3516 = vweird.f32 %v3047
  %vm3517 = vweird.f32 %v3510
  %vm3518 = vmor %vm3516, %vm3517
  %v3519 = vsel %vm3518, %v3510, %v3515
  %v3520 = vrsqrt.pop %v3048
  %v3521 = vmul.f32 %v3520, %v3048
  %v3522 = vmul.f32 %v3521, %v3520
  %v3523 = vmul.f32 0.5, %v3522
  %v3524 = vsub.f32 1.5, %v3523
  %v3525 = vmul.f32 %v3520, %v3524
  %vm3526 = vweird.f32 %v3048
  %vm3527 = vweird.f32 %v3520
  %vm3528 = vmor %vm3526, %vm3527
  %v3529 = vsel %vm3528, %v3520, %v3525
  %v3530 = vrsqrt.pop %v3049
  %v3531 = vmul.f32 %v3530, %v3049
  %v3532 = vmul.f32 %v3531, %v3530
  %v3533 = vmul.f32 0.5, %v3532
  %v3534 = vsub.f32 1.5, %v3533
  %v3535 = vmul.f32 %v3530, %v3534
  %vm3536 = vweird.f32 %v3049
  %vm3537 = vweird.f32 %v3530
  %vm3538 = vmor %vm3536, %vm3537
  %v3539 = vsel %vm3538, %v3530, %v3535
  %v3540 = vrsqrt.pop %v3059
  %v3541 = vmul.f32 %v3540, %v3059
  %v3542 = vmul.f32 %v3541, %v3540
  %v3543 = vmul.f32 0.5, %v3542
  %v3544 = vsub.f32 1.5, %v3543
  %v3545 = vmul.f32 %v3540, %v3544
  %v3546 = vmul.f32 %v3059, %v3545
  %vm3547 = vcmp.eq.f32.partialorder %v3059, inf
  %v3548 = vsel %vm3547, %v3059, %v3546
  %vm3549 = vcmp.eq.f32.partialorder %v3059, 0.0
  %v3550 = vand.u32 %v3059, 2147483648
  %v3551 = vsel %vm3549, %v3550, %v3548
  %v3552 = vrsqrt.pop %v3069
  %v3553 = vmul.f32 %v3552, %v3069
  %v3554 = vmul.f32 %v3553, %v3552
  %v3555 = vmul.f32 0.5, %v3554
  %v3556 = vsub.f32 1.5, %v3555
  %v3557 = vmul.f32 %v3552, %v3556
  %v3558 = vmul.f32 %v3069, %v3557
  %vm3559 = vcmp.eq.f32.partialorder %v3069, inf
  %v3560 = vsel %vm3559, %v3069, %v3558
  %vm3561 = vcmp.eq.f32.partialorder %v3069, 0.0
  %v3562 = vand.u32 %v3069, 2147483648
  %v3563 = vsel %vm3561, %v3562, %v3560
  %v3564 = vrsqrt.pop %v3079
  %v3565 = vmul.f32 %v3564, %v3079
  %v3566 = vmul.f32 %v3565, %v3564
  %v3567 = vmul.f32 0.5, %v3566
  %v3568 = vsub.f32 1.5, %v3567
  %v3569 = vmul.f32 %v3564, %v3568
  %v3570 = vmul.f32 %v3079, %v3569
  %vm3571 = vcmp.eq.f32.partialorder %v3079, inf
  %v3572 = vsel %vm3571, %v3079, %v3570
  %vm3573 = vcmp.eq.f32.partialorder %v3079, 0.0
  %v3574 = vand.u32 %v3079, 2147483648
  %v3575 = vsel %vm3573, %v3574, %v3572
  %v3576 = vrsqrt.pop %v3089
  %v3577 = vmul.f32 %v3576, %v3089
  %v3578 = vmul.f32 %v3577, %v3576
  %v3579 = vmul.f32 0.5, %v3578
  %v3580 = vsub.f32 1.5, %v3579
  %v3581 = vmul.f32 %v3576, %v3580
  %v3582 = vmul.f32 %v3089, %v3581
  %vm3583 = vcmp.eq.f32.partialorder %v3089, inf
  %v3584 = vsel %vm3583, %v3089, %v3582
  %vm3585 = vcmp.eq.f32.partialorder %v3089, 0.0
  %v3586 = vand.u32 %v3089, 2147483648
  %v3587 = vsel %vm3585, %v3586, %v3584
  %v3588 = vrsqrt.pop %v3099
  %v3589 = vmul.f32 %v3588, %v3099
  %v3590 = vmul.f32 %v3589, %v3588
  %v3591 = vmul.f32 0.5, %v3590
  %v3592 = vsub.f32 1.5, %v3591
  %v3593 = vmul.f32 %v3588, %v3592
  %v3594 = vmul.f32 %v3099, %v3593
  %vm3595 = vcmp.eq.f32.partialorder %v3099, inf
  %v3596 = vsel %vm3595, %v3099, %v3594
  %vm3597 = vcmp.eq.f32.partialorder %v3099, 0.0
  %v3598 = vand.u32 %v3099, 2147483648
  %v3599 = vsel %vm3597, %v3598, %v3596
  %v3600 = vrsqrt.pop %v3109
  %v3601 = vmul.f32 %v3600, %v3109
  %v3602 = vmul.f32 %v3601, %v3600
  %v3603 = vmul.f32 0.5, %v3602
  %v3604 = vsub.f32 1.5, %v3603
  %v3605 = vmul.f32 %v3600, %v3604
  %v3606 = vmul.f32 %v3109, %v3605
  %vm3607 = vcmp.eq.f32.partialorder %v3109, inf
  %v3608 = vsel %vm3607, %v3109, %v3606
  %vm3609 = vcmp.eq.f32.partialorder %v3109, 0.0
  %v3610 = vand.u32 %v3109, 2147483648
  %v3611 = vsel %vm3609, %v3610, %v3608
  %v3612 = vrsqrt.pop %v3119
  %v3613 = vmul.f32 %v3612, %v3119
  %v3614 = vmul.f32 %v3613, %v3612
  %v3615 = vmul.f32 0.5, %v3614
  %v3616 = vsub.f32 1.5, %v3615
  %v3617 = vmul.f32 %v3612, %v3616
  %v3618 = vmul.f32 %v3119, %v3617
  %vm3619 = vcmp.eq.f32.partialorder %v3119, inf
  %v3620 = vsel %vm3619, %v3119, %v3618
  %vm3621 = vcmp.eq.f32.partialorder %v3119, 0.0
  %v3622 = vand.u32 %v3119, 2147483648
  %v3623 = vsel %vm3621, %v3622, %v3620
  %v3624 = vrsqrt.pop %v3129
  %v3625 = vmul.f32 %v3624, %v3129
  %v3626 = vmul.f32 %v3625, %v3624
  %v3627 = vmul.f32 0.5, %v3626
  %v3628 = vsub.f32 1.5, %v3627
  %v3629 = vmul.f32 %v3624, %v3628
  %v3630 = vmul.f32 %v3129, %v3629
  %vm3631 = vcmp.eq.f32.partialorder %v3129, inf
  %v3632 = vsel %vm3631, %v3129, %v3630
  %vm3633 = vcmp.eq.f32.partialorder %v3129, 0.0
  %v3634 = vand.u32 %v3129, 2147483648
  %v3635 = vsel %vm3633, %v3634, %v3632
  %v3636 = vrsqrt.pop %v3139
  %v3637 = vmul.f32 %v3636, %v3139
  %v3638 = vmul.f32 %v3637, %v3636
  %v3639 = vmul.f32 0.5, %v3638
  %v3640 = vsub.f32 1.5, %v3639
  %v3641 = vmul.f32 %v3636, %v3640
  %v3642 = vmul.f32 %v3139, %v3641
  %vm3643 = vcmp.eq.f32.partialorder %v3139, inf
  %v3644 = vsel %vm3643, %v3139, %v3642
  %vm3645 = vcmp.eq.f32.partialorder %v3139, 0.0
  %v3646 = vand.u32 %v3139, 2147483648
  %v3647 = vsel %vm3645, %v3646, %v3644
  %v3648 = vrsqrt.pop %v3149
  %v3649 = vmul.f32 %v3648, %v3149
  %v3650 = vmul.f32 %v3649, %v3648
  %v3651 = vmul.f32 0.5, %v3650
  %v3652 = vsub.f32 1.5, %v3651
  %v3653 = vmul.f32 %v3648, %v3652
  %v3654 = vmul.f32 %v3149, %v3653
  %vm3655 = vcmp.eq.f32.partialorder %v3149, inf
  %v3656 = vsel %vm3655, %v3149, %v3654
  %vm3657 = vcmp.eq.f32.partialorder %v3149, 0.0
  %v3658 = vand.u32 %v3149, 2147483648
  %v3659 = vsel %vm3657, %v3658, %v3656
  %v3660 = vrsqrt.pop %v3159
  %v3661 = vmul.f32 %v3660, %v3159
  %v3662 = vmul.f32 %v3661, %v3660
  %v3663 = vmul.f32 0.5, %v3662
  %v3664 = vsub.f32 1.5, %v3663
  %v3665 = vmul.f32 %v3660, %v3664
  %v3666 = vmul.f32 %v3159, %v3665
  %vm3667 = vcmp.eq.f32.partialorder %v3159, inf
  %v3668 = vsel %vm3667, %v3159, %v3666
  %vm3669 = vcmp.eq.f32.partialorder %v3159, 0.0
  %v3670 = vand.u32 %v3159, 2147483648
  %v3671 = vsel %vm3669, %v3670, %v3668
  %v3672 = vrsqrt.pop %v3169
  %v3673 = vmul.f32 %v3672, %v3169
  %v3674 = vmul.f32 %v3673, %v3672
  %v3675 = vmul.f32 0.5, %v3674
  %v3676 = vsub.f32 1.5, %v3675
  %v3677 = vmul.f32 %v3672, %v3676
  %v3678 = vmul.f32 %v3169, %v3677
  %vm3679 = vcmp.eq.f32.partialorder %v3169, inf
  %v3680 = vsel %vm3679, %v3169, %v3678
  %vm3681 = vcmp.eq.f32.partialorder %v3169, 0.0
  %v3682 = vand.u32 %v3169, 2147483648
  %v3683 = vsel %vm3681, %v3682, %v3680
  %v3684 = vrsqrt.pop %v3179
  %v3685 = vmul.f32 %v3684, %v3179
  %v3686 = vmul.f32 %v3685, %v3684
  %v3687 = vmul.f32 0.5, %v3686
  %v3688 = vsub.f32 1.5, %v3687
  %v3689 = vmul.f32 %v3684, %v3688
  %v3690 = vmul.f32 %v3179, %v3689
  %vm3691 = vcmp.eq.f32.partialorder %v3179, inf
  %v3692 = vsel %vm3691, %v3179, %v3690
  %vm3693 = vcmp.eq.f32.partialorder %v3179, 0.0
  %v3694 = vand.u32 %v3179, 2147483648
  %v3695 = vsel %vm3693, %v3694, %v3692
  %v3696 = vrsqrt.pop %v3189
  %v3697 = vmul.f32 %v3696, %v3189
  %v3698 = vmul.f32 %v3697, %v3696
  %v3699 = vmul.f32 0.5, %v3698
  %v3700 = vsub.f32 1.5, %v3699
  %v3701 = vmul.f32 %v3696, %v3700
  %v3702 = vmul.f32 %v3189, %v3701
  %vm3703 = vcmp.eq.f32.partialorder %v3189, inf
  %v3704 = vsel %vm3703, %v3189, %v3702
  %vm3705 = vcmp.eq.f32.partialorder %v3189, 0.0
  %v3706 = vand.u32 %v3189, 2147483648
  %v3707 = vsel %vm3705, %v3706, %v3704
  %v3708 = vrsqrt.pop %v3199
  %v3709 = vmul.f32 %v3708, %v3199
  %v3710 = vmul.f32 %v3709, %v3708
  %v3711 = vmul.f32 0.5, %v3710
  %v3712 = vsub.f32 1.5, %v3711
  %v3713 = vmul.f32 %v3708, %v3712
  %v3714 = vmul.f32 %v3199, %v3713
  %vm3715 = vcmp.eq.f32.partialorder %v3199, inf
  %v3716 = vsel %vm3715, %v3199, %v3714
  %vm3717 = vcmp.eq.f32.partialorder %v3199, 0.0
  %v3718 = vand.u32 %v3199, 2147483648
  %v3719 = vsel %vm3717, %v3718, %v3716
  %v3720 = vrsqrt.pop %v3209
  %v3721 = vmul.f32 %v3720, %v3209
  %v3722 = vmul.f32 %v3721, %v3720
  %v3723 = vmul.f32 0.5, %v3722
  %v3724 = vsub.f32 1.5, %v3723
  %v3725 = vmul.f32 %v3720, %v3724
  %v3726 = vmul.f32 %v3209, %v3725
  %vm3727 = vcmp.eq.f32.partialorder %v3209, inf
  %v3728 = vsel %vm3727, %v3209, %v3726
  %vm3729 = vcmp.eq.f32.partialorder %v3209, 0.0
  %v3730 = vand.u32 %v3209, 2147483648
  %v3731 = vsel %vm3729, %v3730, %v3728
  %v3732 = vrsqrt.pop %v3219
  %v3733 = vmul.f32 %v3732, %v3219
  %v3734 = vmul.f32 %v3733, %v3732
  %v3735 = vmul.f32 0.5, %v3734
  %v3736 = vsub.f32 1.5, %v3735
  %v3737 = vmul.f32 %v3732, %v3736
  %v3738 = vmul.f32 %v3219, %v3737
  %vm3739 = vcmp.eq.f32.partialorder %v3219, inf
  %v3740 = vsel %vm3739, %v3219, %v3738
  %vm3741 = vcmp.eq.f32.partialorder %v3219, 0.0
  %v3742 = vand.u32 %v3219, 2147483648
  %v3743 = vsel %vm3741, %v3742, %v3740
  %v3744 = vrsqrt.pop %v3229
  %v3745 = vmul.f32 %v3744, %v3229
  %v3746 = vmul.f32 %v3745, %v3744
  %v3747 = vmul.f32 0.5, %v3746
  %v3748 = vsub.f32 1.5, %v3747
  %v3749 = vmul.f32 %v3744, %v3748
  %v3750 = vmul.f32 %v3229, %v3749
  %vm3751 = vcmp.eq.f32.partialorder %v3229, inf
  %v3752 = vsel %vm3751, %v3229, %v3750
  %vm3753 = vcmp.eq.f32.partialorder %v3229, 0.0
  %v3754 = vand.u32 %v3229, 2147483648
  %v3755 = vsel %vm3753, %v3754, %v3752
  %v3756 = vrsqrt.pop %v3239
  %v3757 = vmul.f32 %v3756, %v3239
  %v3758 = vmul.f32 %v3757, %v3756
  %v3759 = vmul.f32 0.5, %v3758
  %v3760 = vsub.f32 1.5, %v3759
  %v3761 = vmul.f32 %v3756, %v3760
  %v3762 = vmul.f32 %v3239, %v3761
  %vm3763 = vcmp.eq.f32.partialorder %v3239, inf
  %v3764 = vsel %vm3763, %v3239, %v3762
  %vm3765 = vcmp.eq.f32.partialorder %v3239, 0.0
  %v3766 = vand.u32 %v3239, 2147483648
  %v3767 = vsel %vm3765, %v3766, %v3764
  %v3768 = vrsqrt.pop %v3249
  %v3769 = vmul.f32 %v3768, %v3249
  %v3770 = vmul.f32 %v3769, %v3768
  %v3771 = vmul.f32 0.5, %v3770
  %v3772 = vsub.f32 1.5, %v3771
  %v3773 = vmul.f32 %v3768, %v3772
  %v3774 = vmul.f32 %v3249, %v3773
  %vm3775 = vcmp.eq.f32.partialorder %v3249, inf
  %v3776 = vsel %vm3775, %v3249, %v3774
  %vm3777 = vcmp.eq.f32.partialorder %v3249, 0.0
  %v3778 = vand.u32 %v3249, 2147483648
  %v3779 = vsel %vm3777, %v3778, %v3776
  %v3780 = vrsqrt.pop %v3259
  %v3781 = vmul.f32 %v3780, %v3259
  %v3782 = vmul.f32 %v3781, %v3780
  %v3783 = vmul.f32 0.5, %v3782
  %v3784 = vsub.f32 1.5, %v3783
  %v3785 = vmul.f32 %v3780, %v3784
  %v3786 = vmul.f32 %v3259, %v3785
  %vm3787 = vcmp.eq.f32.partialorder %v3259, inf
  %v3788 = vsel %vm3787, %v3259, %v3786
  %vm3789 = vcmp.eq.f32.partialorder %v3259, 0.0
  %v3790 = vand.u32 %v3259, 2147483648
  %v3791 = vsel %vm3789, %v3790, %v3788
  %v3792 = vrsqrt.pop %v3269
  %v3793 = vmul.f32 %v3792, %v3269
  %v3794 = vmul.f32 %v3793, %v3792
  %v3795 = vmul.f32 0.5, %v3794
  %v3796 = vsub.f32 1.5, %v3795
  %v3797 = vmul.f32 %v3792, %v3796
  %v3798 = vmul.f32 %v3269, %v3797
  %vm3799 = vcmp.eq.f32.partialorder %v3269, inf
  %v3800 = vsel %vm3799, %v3269, %v3798
  %vm3801 = vcmp.eq.f32.partialorder %v3269, 0.0
  %v3802 = vand.u32 %v3269, 2147483648
  %v3803 = vsel %vm3801, %v3802, %v3800
  %v3804 = vrsqrt.pop %v3279
  %v3805 = vmul.f32 %v3804, %v3279
  %v3806 = vmul.f32 %v3805, %v3804
  %v3807 = vmul.f32 0.5, %v3806
  %v3808 = vsub.f32 1.5, %v3807
  %v3809 = vmul.f32 %v3804, %v3808
  %v3810 = vmul.f32 %v3279, %v3809
  %vm3811 = vcmp.eq.f32.partialorder %v3279, inf
  %v3812 = vsel %vm3811, %v3279, %v3810
  %vm3813 = vcmp.eq.f32.partialorder %v3279, 0.0
  %v3814 = vand.u32 %v3279, 2147483648
  %v3815 = vsel %vm3813, %v3814, %v3812
  %v3816 = vrsqrt.pop %v3289
  %v3817 = vmul.f32 %v3816, %v3289
  %v3818 = vmul.f32 %v3817, %v3816
  %v3819 = vmul.f32 0.5, %v3818
  %v3820 = vsub.f32 1.5, %v3819
  %v3821 = vmul.f32 %v3816, %v3820
  %v3822 = vmul.f32 %v3289, %v3821
  %vm3823 = vcmp.eq.f32.partialorder %v3289, inf
  %v3824 = vsel %vm3823, %v3289, %v3822
  %vm3825 = vcmp.eq.f32.partialorder %v3289, 0.0
  %v3826 = vand.u32 %v3289, 2147483648
  %v3827 = vsel %vm3825, %v3826, %v3824
  %v3828 = vrsqrt.pop %v3299
  %v3829 = vmul.f32 %v3828, %v3299
  %v3830 = vmul.f32 %v3829, %v3828
  %v3831 = vmul.f32 0.5, %v3830
  %v3832 = vsub.f32 1.5, %v3831
  %v3833 = vmul.f32 %v3828, %v3832
  %v3834 = vmul.f32 %v3299, %v3833
  %vm3835 = vcmp.eq.f32.partialorder %v3299, inf
  %v3836 = vsel %vm3835, %v3299, %v3834
  %vm3837 = vcmp.eq.f32.partialorder %v3299, 0.0
  %v3838 = vand.u32 %v3299, 2147483648
  %v3839 = vsel %vm3837, %v3838, %v3836
  %v3840 = vrsqrt.pop %v3309
  %v3841 = vmul.f32 %v3840, %v3309
  %v3842 = vmul.f32 %v3841, %v3840
  %v3843 = vmul.f32 0.5, %v3842
  %v3844 = vsub.f32 1.5, %v3843
  %v3845 = vmul.f32 %v3840, %v3844
  %v3846 = vmul.f32 %v3309, %v3845
  %vm3847 = vcmp.eq.f32.partialorder %v3309, inf
  %v3848 = vsel %vm3847, %v3309, %v3846
  %vm3849 = vcmp.eq.f32.partialorder %v3309, 0.0
  %v3850 = vand.u32 %v3309, 2147483648
  %v3851 = vsel %vm3849, %v3850, %v3848
  %v3852 = vrsqrt.pop %v3319
  %v3853 = vmul.f32 %v3852, %v3319
  %v3854 = vmul.f32 %v3853, %v3852
  %v3855 = vmul.f32 0.5, %v3854
  %v3856 = vsub.f32 1.5, %v3855
  %v3857 = vmul.f32 %v3852, %v3856
  %v3858 = vmul.f32 %v3319, %v3857
  %vm3859 = vcmp.eq.f32.partialorder %v3319, inf
  %v3860 = vsel %vm3859, %v3319, %v3858
  %vm3861 = vcmp.eq.f32.partialorder %v3319, 0.0
  %v3862 = vand.u32 %v3319, 2147483648
  %v3863 = vsel %vm3861, %v3862, %v3860
  %v3864 = vrsqrt.pop %v3329
  %v3865 = vmul.f32 %v3864, %v3329
  %v3866 = vmul.f32 %v3865, %v3864
  %v3867 = vmul.f32 0.5, %v3866
  %v3868 = vsub.f32 1.5, %v3867
  %v3869 = vmul.f32 %v3864, %v3868
  %v3870 = vmul.f32 %v3329, %v3869
  %vm3871 = vcmp.eq.f32.partialorder %v3329, inf
  %v3872 = vsel %vm3871, %v3329, %v3870
  %vm3873 = vcmp.eq.f32.partialorder %v3329, 0.0
  %v3874 = vand.u32 %v3329, 2147483648
  %v3875 = vsel %vm3873, %v3874, %v3872
  %v3876 = vrsqrt.pop %v3339
  %v3877 = vmul.f32 %v3876, %v3339
  %v3878 = vmul.f32 %v3877, %v3876
  %v3879 = vmul.f32 0.5, %v3878
  %v3880 = vsub.f32 1.5, %v3879
  %v3881 = vmul.f32 %v3876, %v3880
  %v3882 = vmul.f32 %v3339, %v3881
  %vm3883 = vcmp.eq.f32.partialorder %v3339, inf
  %v3884 = vsel %vm3883, %v3339, %v3882
  %vm3885 = vcmp.eq.f32.partialorder %v3339, 0.0
  %v3886 = vand.u32 %v3339, 2147483648
  %v3887 = vsel %vm3885, %v3886, %v3884
  %v3888 = vrsqrt.pop %v3349
  %v3889 = vmul.f32 %v3888, %v3349
  %v3890 = vmul.f32 %v3889, %v3888
  %v3891 = vmul.f32 0.5, %v3890
  %v3892 = vsub.f32 1.5, %v3891
  %v3893 = vmul.f32 %v3888, %v3892
  %v3894 = vmul.f32 %v3349, %v3893
  %vm3895 = vcmp.eq.f32.partialorder %v3349, inf
  %v3896 = vsel %vm3895, %v3349, %v3894
  %vm3897 = vcmp.eq.f32.partialorder %v3349, 0.0
  %v3898 = vand.u32 %v3349, 2147483648
  %v3899 = vsel %vm3897, %v3898, %v3896
  %v3900 = vrsqrt.pop %v3359
  %v3901 = vmul.f32 %v3900, %v3359
  %v3902 = vmul.f32 %v3901, %v3900
  %v3903 = vmul.f32 0.5, %v3902
  %v3904 = vsub.f32 1.5, %v3903
  %v3905 = vmul.f32 %v3900, %v3904
  %v3906 = vmul.f32 %v3359, %v3905
  %vm3907 = vcmp.eq.f32.partialorder %v3359, inf
  %v3908 = vsel %vm3907, %v3359, %v3906
  %vm3909 = vcmp.eq.f32.partialorder %v3359, 0.0
  %v3910 = vand.u32 %v3359, 2147483648
  %v3911 = vsel %vm3909, %v3910, %v3908
  %v3912 = vrsqrt.pop %v3369
  %v3913 = vmul.f32 %v3912, %v3369
  %v3914 = vmul.f32 %v3913, %v3912
  %v3915 = vmul.f32 0.5, %v3914
  %v3916 = vsub.f32 1.5, %v3915
  %v3917 = vmul.f32 %v3912, %v3916
  %v3918 = vmul.f32 %v3369, %v3917
  %vm3919 = vcmp.eq.f32.partialorder %v3369, inf
  %v3920 = vsel %vm3919, %v3369, %v3918
  %vm3921 = vcmp.eq.f32.partialorder %v3369, 0.0
  %v3922 = vand.u32 %v3369, 2147483648
  %v3923 = vsel %vm3921, %v3922, %v3920
  %v3924 = vrsqrt.pop %v3379
  %v3925 = vmul.f32 %v3924, %v3379
  %v3926 = vmul.f32 %v3925, %v3924
  %v3927 = vmul.f32 0.5, %v3926
  %v3928 = vsub.f32 1.5, %v3927
  %v3929 = vmul.f32 %v3924, %v3928
  %v3930 = vmul.f32 %v3379, %v3929
  %vm3931 = vcmp.eq.f32.partialorder %v3379, inf
  %v3932 = vsel %vm3931, %v3379, %v3930
  %vm3933 = vcmp.eq.f32.partialorder %v3379, 0.0
  %v3934 = vand.u32 %v3379, 2147483648
  %v3935 = vsel %vm3933, %v3934, %v3932
  %v3936 = vrsqrt.pop %v3389
  %v3937 = vmul.f32 %v3936, %v3389
  %v3938 = vmul.f32 %v3937, %v3936
  %v3939 = vmul.f32 0.5, %v3938
  %v3940 = vsub.f32 1.5, %v3939
  %v3941 = vmul.f32 %v3936, %v3940
  %v3942 = vmul.f32 %v3389, %v3941
  %vm3943 = vcmp.eq.f32.partialorder %v3389, inf
  %v3944 = vsel %vm3943, %v3389, %v3942
  %vm3945 = vcmp.eq.f32.partialorder %v3389, 0.0
  %v3946 = vand.u32 %v3389, 2147483648
  %v3947 = vsel %vm3945, %v3946, %v3944
  %v3948 = vrsqrt.pop %v3399
  %v3949 = vmul.f32 %v3948, %v3399
  %v3950 = vmul.f32 %v3949, %v3948
  %v3951 = vmul.f32 0.5, %v3950
  %v3952 = vsub.f32 1.5, %v3951
  %v3953 = vmul.f32 %v3948, %v3952
  %v3954 = vmul.f32 %v3399, %v3953
  %vm3955 = vcmp.eq.f32.partialorder %v3399, inf
  %v3956 = vsel %vm3955, %v3399, %v3954
  %vm3957 = vcmp.eq.f32.partialorder %v3399, 0.0
  %v3958 = vand.u32 %v3399, 2147483648
  %v3959 = vsel %vm3957, %v3958, %v3956
  %v3960 = vrsqrt.pop %v3409
  %v3961 = vmul.f32 %v3960, %v3409
  %v3962 = vmul.f32 %v3961, %v3960
  %v3963 = vmul.f32 0.5, %v3962
  %v3964 = vsub.f32 1.5, %v3963
  %v3965 = vmul.f32 %v3960, %v3964
  %v3966 = vmul.f32 %v3409, %v3965
  %vm3967 = vcmp.eq.f32.partialorder %v3409, inf
  %v3968 = vsel %vm3967, %v3409, %v3966
  %vm3969 = vcmp.eq.f32.partialorder %v3409, 0.0
  %v3970 = vand.u32 %v3409, 2147483648
  %v3971 = vsel %vm3969, %v3970, %v3968
  %v3972 = vrsqrt.pop %v3419
  %v3973 = vmul.f32 %v3972, %v3419
  %v3974 = vmul.f32 %v3973, %v3972
  %v3975 = vmul.f32 0.5, %v3974
  %v3976 = vsub.f32 1.5, %v3975
  %v3977 = vmul.f32 %v3972, %v3976
  %v3978 = vmul.f32 %v3419, %v3977
  %vm3979 = vcmp.eq.f32.partialorder %v3419, inf
  %v3980 = vsel %vm3979, %v3419, %v3978
  %vm3981 = vcmp.eq.f32.partialorder %v3419, 0.0
  %v3982 = vand.u32 %v3419, 2147483648
  %v3983 = vsel %vm3981, %v3982, %v3980
  %v3984 = vrsqrt.pop %v3429
  %v3985 = vmul.f32 %v3984, %v3429
  %v3986 = vmul.f32 %v3985, %v3984
  %v3987 = vmul.f32 0.5, %v3986
  %v3988 = vsub.f32 1.5, %v3987
  %v3989 = vmul.f32 %v3984, %v3988
  %v3990 = vmul.f32 %v3429, %v3989
  %vm3991 = vcmp.eq.f32.partialorder %v3429, inf
  %v3992 = vsel %vm3991, %v3429, %v3990
  %vm3993 = vcmp.eq.f32.partialorder %v3429, 0.0
  %v3994 = vand.u32 %v3429, 2147483648
  %v3995 = vsel %vm3993, %v3994, %v3992
  %v3996 = vrsqrt.pop %v3439
  %v3997 = vmul.f32 %v3996, %v3439
  %v3998 = vmul.f32 %v3997, %v3996
  %v3999 = vmul.f32 0.5, %v3998
  %v4000 = vsub.f32 1.5, %v3999
  %v4001 = vmul.f32 %v3996, %v4000
  %v4002 = vmul.f32 %v3439, %v4001
  %vm4003 = vcmp.eq.f32.partialorder %v3439, inf
  %v4004 = vsel %vm4003, %v3439, %v4002
  %vm4005 = vcmp.eq.f32.partialorder %v3439, 0.0
  %v4006 = vand.u32 %v3439, 2147483648
  %v4007 = vsel %vm4005, %v4006, %v4004
  %v4008 = vrsqrt.pop %v3449
  %v4009 = vmul.f32 %v4008, %v3449
  %v4010 = vmul.f32 %v4009, %v4008
  %v4011 = vmul.f32 0.5, %v4010
  %v4012 = vsub.f32 1.5, %v4011
  %v4013 = vmul.f32 %v4008, %v4012
  %v4014 = vmul.f32 %v3449, %v4013
  %vm4015 = vcmp.eq.f32.partialorder %v3449, inf
  %v4016 = vsel %vm4015, %v3449, %v4014
  %vm4017 = vcmp.eq.f32.partialorder %v3449, 0.0
  %v4018 = vand.u32 %v3449, 2147483648
  %v4019 = vsel %vm4017, %v4018, %v4016
  %v4020 = vrsqrt.pop %v3459
  %v4021 = vmul.f32 %v4020, %v3459
  %v4022 = vmul.f32 %v4021, %v4020
  %v4023 = vmul.f32 0.5, %v4022
  %v4024 = vsub.f32 1.5, %v4023
  %v4025 = vmul.f32 %v4020, %v4024
  %v4026 = vmul.f32 %v3459, %v4025
  %vm4027 = vcmp.eq.f32.partialorder %v3459, inf
  %v4028 = vsel %vm4027, %v3459, %v4026
  %vm4029 = vcmp.eq.f32.partialorder %v3459, 0.0
  %v4030 = vand.u32 %v3459, 2147483648
  %v4031 = vsel %vm4029, %v4030, %v4028
  %v4032 = vrsqrt.pop %v3469
  %v4033 = vmul.f32 %v4032, %v3469
  %v4034 = vmul.f32 %v4033, %v4032
  %v4035 = vmul.f32 0.5, %v4034
  %v4036 = vsub.f32 1.5, %v4035
  %v4037 = vmul.f32 %v4032, %v4036
  %v4038 = vmul.f32 %v3469, %v4037
  %vm4039 = vcmp.eq.f32.partialorder %v3469, inf
  %v4040 = vsel %vm4039, %v3469, %v4038
  %vm4041 = vcmp.eq.f32.partialorder %v3469, 0.0
  %v4042 = vand.u32 %v3469, 2147483648
  %v4043 = vsel %vm4041, %v4042, %v4040
  %v4044 = vrsqrt.pop %v3479
  %v4045 = vmul.f32 %v4044, %v3479
  %v4046 = vmul.f32 %v4045, %v4044
  %v4047 = vmul.f32 0.5, %v4046
  %v4048 = vsub.f32 1.5, %v4047
  %v4049 = vmul.f32 %v4044, %v4048
  %v4050 = vmul.f32 %v3479, %v4049
  %vm4051 = vcmp.eq.f32.partialorder %v3479, inf
  %v4052 = vsel %vm4051, %v3479, %v4050
  %vm4053 = vcmp.eq.f32.partialorder %v3479, 0.0
  %v4054 = vand.u32 %v3479, 2147483648
  %v4055 = vsel %vm4053, %v4054, %v4052
  %v4056 = vrsqrt.pop %v3489
  %v4057 = vmul.f32 %v4056, %v3489
  %v4058 = vmul.f32 %v4057, %v4056
  %v4059 = vmul.f32 0.5, %v4058
  %v4060 = vsub.f32 1.5, %v4059
  %v4061 = vmul.f32 %v4056, %v4060
  %v4062 = vmul.f32 %v3489, %v4061
  %vm4063 = vcmp.eq.f32.partialorder %v3489, inf
  %v4064 = vsel %vm4063, %v3489, %v4062
  %vm4065 = vcmp.eq.f32.partialorder %v3489, 0.0
  %v4066 = vand.u32 %v3489, 2147483648
  %v4067 = vsel %vm4065, %v4066, %v4064
  %v4068 = vrsqrt.pop %v3499
  %v4069 = vmul.f32 %v4068, %v3499
  %v4070 = vmul.f32 %v4069, %v4068
  %v4071 = vmul.f32 0.5, %v4070
  %v4072 = vsub.f32 1.5, %v4071
  %v4073 = vmul.f32 %v4068, %v4072
  %v4074 = vmul.f32 %v3499, %v4073
  %vm4075 = vcmp.eq.f32.partialorder %v3499, inf
  %v4076 = vsel %vm4075, %v3499, %v4074
  %vm4077 = vcmp.eq.f32.partialorder %v3499, 0.0
  %v4078 = vand.u32 %v3499, 2147483648
  %v4079 = vsel %vm4077, %v4078, %v4076
  %v4080 = vrsqrt.pop %v3509
  %v4081 = vmul.f32 %v4080, %v3509
  %v4082 = vmul.f32 %v4081, %v4080
  %v4083 = vmul.f32 0.5, %v4082
  %v4084 = vsub.f32 1.5, %v4083
  %v4085 = vmul.f32 %v4080, %v4084
  %v4086 = vmul.f32 %v3509, %v4085
  %vm4087 = vcmp.eq.f32.partialorder %v3509, inf
  %v4088 = vsel %vm4087, %v3509, %v4086
  %vm4089 = vcmp.eq.f32.partialorder %v3509, 0.0
  %v4090 = vand.u32 %v3509, 2147483648
  %v4091 = vsel %vm4089, %v4090, %v4088
  %v4092 = vrsqrt.pop %v3519
  %v4093 = vmul.f32 %v4092, %v3519
  %v4094 = vmul.f32 %v4093, %v4092
  %v4095 = vmul.f32 0.5, %v4094
  %v4096 = vsub.f32 1.5, %v4095
  %v4097 = vmul.f32 %v4092, %v4096
  %v4098 = vmul.f32 %v3519, %v4097
  %vm4099 = vcmp.eq.f32.partialorder %v3519, inf
  %v4100 = vsel %vm4099, %v3519, %v4098
  %vm4101 = vcmp.eq.f32.partialorder %v3519, 0.0
  %v4102 = vand.u32 %v3519, 2147483648
  %v4103 = vsel %vm4101, %v4102, %v4100
  %v4104 = vrsqrt.pop %v3529
  %v4105 = vmul.f32 %v4104, %v3529
  %v4106 = vmul.f32 %v4105, %v4104
  %v4107 = vmul.f32 0.5, %v4106
  %v4108 = vsub.f32 1.5, %v4107
  %v4109 = vmul.f32 %v4104, %v4108
  %v4110 = vmul.f32 %v3529, %v4109
  %vm4111 = vcmp.eq.f32.partialorder %v3529, inf
  %v4112 = vsel %vm4111, %v3529, %v4110
  %vm4113 = vcmp.eq.f32.partialorder %v3529, 0.0
  %v4114 = vand.u32 %v3529, 2147483648
  %v4115 = vsel %vm4113, %v4114, %v4112
  %v4116 = vrsqrt.pop %v3539
  %v4117 = vmul.f32 %v4116, %v3539
  %v4118 = vmul.f32 %v4117, %v4116
  %v4119 = vmul.f32 0.5, %v4118
  %v4120 = vsub.f32 1.5, %v4119
  %v4121 = vmul.f32 %v4116, %v4120
  %v4122 = vmul.f32 %v3539, %v4121
  %vm4123 = vcmp.eq.f32.partialorder %v3539, inf
  %v4124 = vsel %vm4123, %v3539, %v4122
  %vm4125 = vcmp.eq.f32.partialorder %v3539, 0.0
  %v4126 = vand.u32 %v3539, 2147483648
  %v4127 = vsel %vm4125, %v4126, %v4124
  %v4128 = vmul.f32 %v3059, %v3551
  %v4129 = vmul.f32 %v3069, %v3563
  %v4130 = vmul.f32 %v3079, %v3575
  %v4131 = vmul.f32 %v3089, %v3587
  %v4132 = vmul.f32 %v3099, %v3599
  %v4133 = vmul.f32 %v3109, %v3611
  %v4134 = vmul.f32 %v3119, %v3623
  %v4135 = vmul.f32 %v3129, %v3635
  %v4136 = vmul.f32 %v3139, %v3647
  %v4137 = vmul.f32 %v3149, %v3659
  %v4138 = vmul.f32 %v3159, %v3671
  %v4139 = vmul.f32 %v3169, %v3683
  %v4140 = vmul.f32 %v3179, %v3695
  %v4141 = vmul.f32 %v3189, %v3707
  %v4142 = vmul.f32 %v3199, %v3719
  %v4143 = vmul.f32 %v3209, %v3731
  %v4144 = vmul.f32 %v3219, %v3743
  %v4145 = vmul.f32 %v3229, %v3755
  %v4146 = vmul.f32 %v3239, %v3767
  %v4147 = vmul.f32 %v3249, %v3779
  %v4148 = vmul.f32 %v3259, %v3791
  %v4149 = vmul.f32 %v3269, %v3803
  %v4150 = vmul.f32 %v3279, %v3815
  %v4151 = vmul.f32 %v3289, %v3827
  %v4152 = vmul.f32 %v3299, %v3839
  %v4153 = vmul.f32 %v3309, %v3851
  %v4154 = vmul.f32 %v3319, %v3863
  %v4155 = vmul.f32 %v3329, %v3875
  %v4156 = vmul.f32 %v3339, %v3887
  %v4157 = vmul.f32 %v3349, %v3899
  %v4158 = vmul.f32 %v3359, %v3911
  %v4159 = vmul.f32 %v3369, %v3923
  %v4160 = vmul.f32 %v3379, %v3935
  %v4161 = vmul.f32 %v3389, %v3947
  %v4162 = vmul.f32 %v3399, %v3959
  %v4163 = vmul.f32 %v3409, %v3971
  %v4164 = vmul.f32 %v3419, %v3983
  %v4165 = vmul.f32 %v3429, %v3995
  %v4166 = vmul.f32 %v3439, %v4007
  %v4167 = vmul.f32 %v3449, %v4019
  %v4168 = vmul.f32 %v3459, %v4031
  %v4169 = vmul.f32 %v3469, %v4043
  %v4170 = vmul.f32 %v3479, %v4055
  %v4171 = vmul.f32 %v3489, %v4067
  %v4172 = vmul.f32 %v3499, %v4079
  %v4173 = vmul.f32 %v3509, %v4091
  %v4174 = vmul.f32 %v3519, %v4103
  %v4175 = vmul.f32 %v3529, %v4115
  %v4176 = vmul.f32 %v3539, %v4127
  %v4177 = vmul.f32 %v2534, %v4128
  %v4178 = vmul.f32 %v2535, %v4129
  %v4179 = vmul.f32 %v2536, %v4130
  %v4180 = vmul.f32 %v2537, %v4131
  %v4181 = vmul.f32 %v2538, %v4132
  %v4182 = vmul.f32 %v2539, %v4133
  %v4183 = vmul.f32 %v2540, %v4134
  %v4184 = vmul.f32 %v2541, %v4135
  %v4185 = vmul.f32 %v2542, %v4136
  %v4186 = vmul.f32 %v2543, %v4137
  %v4187 = vmul.f32 %v2544, %v4138
  %v4188 = vmul.f32 %v2545, %v4139
  %v4189 = vmul.f32 %v2546, %v4140
  %v4190 = vmul.f32 %v2547, %v4141
  %v4191 = vmul.f32 %v2548, %v4142
  %v4192 = vmul.f32 %v2549, %v4143
  %v4193 = vmul.f32 %v2550, %v4144
  %v4194 = vmul.f32 %v2551, %v4145
  %v4195 = vmul.f32 %v2552, %v4146
  %v4196 = vmul.f32 %v2553, %v4147
  %v4197 = vmul.f32 %v2554, %v4148
  %v4198 = vmul.f32 %v2555, %v4149
  %v4199 = vmul.f32 %v2556, %v4150
  %v4200 = vmul.f32 %v2557, %v4151
  %v4201 = vmul.f32 %v2558, %v4152
  %v4202 = vmul.f32 %v2559, %v4153
  %v4203 = vmul.f32 %v2560, %v4154
  %v4204 = vmul.f32 %v2561, %v4155
  %v4205 = vmul.f32 %v2562, %v4156
  %v4206 = vmul.f32 %v2563, %v4157
  %v4207 = vmul.f32 %v2564, %v4158
  %v4208 = vmul.f32 %v2565, %v4159
  %v4209 = vmul.f32 %v2566, %v4160
  %v4210 = vmul.f32 %v2567, %v4161
  %v4211 = vmul.f32 %v2568, %v4162
  %v4212 = vmul.f32 %v2569, %v4163
  %v4213 = vmul.f32 %v2570, %v4164
  %v4214 = vmul.f32 %v2571, %v4165
  %v4215 = vmul.f32 %v2572, %v4166
  %v4216 = vmul.f32 %v2573, %v4167
  %v4217 = vmul.f32 %v2574, %v4168
  %v4218 = vmul.f32 %v2575, %v4169
  %v4219 = vmul.f32 %v2576, %v4170
  %v4220 = vmul.f32 %v2577, %v4171
  %v4221 = vmul.f32 %v2578, %v4172
  %v4222 = vmul.f32 %v2579, %v4173
  %v4223 = vmul.f32 %v2580, %v4174
  %v4224 = vmul.f32 %v2581, %v4175
  %v4225 = vmul.f32 %v2582, %v4176
  %v4226 = vpack.c.bf16 %v4177, %v4177
  %v4227 = vpack.c.bf16 %v4178, %v4178
  %v4228 = vpack.c.bf16 %v4179, %v4179
  %v4229 = vpack.c.bf16 %v4180, %v4180
  %v4230 = vpack.c.bf16 %v4181, %v4181
  %v4231 = vpack.c.bf16 %v4182, %v4182
  %v4232 = vpack.c.bf16 %v4183, %v4183
  %v4233 = vpack.c.bf16 %v4184, %v4184
  %v4234 = vpack.c.bf16 %v4185, %v4185
  %v4235 = vpack.c.bf16 %v4186, %v4186
  %v4236 = vpack.c.bf16 %v4187, %v4187
  %v4237 = vpack.c.bf16 %v4188, %v4188
  %v4238 = vpack.c.bf16 %v4189, %v4189
  %v4239 = vpack.c.bf16 %v4190, %v4190
  %v4240 = vpack.c.bf16 %v4191, %v4191
  %v4241 = vpack.c.bf16 %v4192, %v4192
  %v4242 = vpack.c.bf16 %v4193, %v4193
  %v4243 = vpack.c.bf16 %v4194, %v4194
  %v4244 = vpack.c.bf16 %v4195, %v4195
  %v4245 = vpack.c.bf16 %v4196, %v4196
  %v4246 = vpack.c.bf16 %v4197, %v4197
  %v4247 = vpack.c.bf16 %v4198, %v4198
  %v4248 = vpack.c.bf16 %v4199, %v4199
  %v4249 = vpack.c.bf16 %v4200, %v4200
  %v4250 = vpack.c.bf16 %v4201, %v4201
  %v4251 = vpack.c.bf16 %v4202, %v4202
  %v4252 = vpack.c.bf16 %v4203, %v4203
  %v4253 = vpack.c.bf16 %v4204, %v4204
  %v4254 = vpack.c.bf16 %v4205, %v4205
  %v4255 = vpack.c.bf16 %v4206, %v4206
  %v4256 = vpack.c.bf16 %v4207, %v4207
  %v4257 = vpack.c.bf16 %v4208, %v4208
  %v4258 = vpack.c.bf16 %v4209, %v4209
  %v4259 = vpack.c.bf16 %v4210, %v4210
  %v4260 = vpack.c.bf16 %v4211, %v4211
  %v4261 = vpack.c.bf16 %v4212, %v4212
  %v4262 = vpack.c.bf16 %v4213, %v4213
  %v4263 = vpack.c.bf16 %v4214, %v4214
  %v4264 = vpack.c.bf16 %v4215, %v4215
  %v4265 = vpack.c.bf16 %v4216, %v4216
  %v4266 = vpack.c.bf16 %v4217, %v4217
  %v4267 = vpack.c.bf16 %v4218, %v4218
  %v4268 = vpack.c.bf16 %v4219, %v4219
  %v4269 = vpack.c.bf16 %v4220, %v4220
  %v4270 = vpack.c.bf16 %v4221, %v4221
  %v4271 = vpack.c.bf16 %v4222, %v4222
  %v4272 = vpack.c.bf16 %v4223, %v4223
  %v4273 = vpack.c.bf16 %v4224, %v4224
  %v4274 = vpack.c.bf16 %v4225, %v4225
  %vm4275 = vcmask 519168
  %4276 = vst.msk [vmem:[%s4] sm:$0xf] %vm4275, %v4226
  %4277 = vst.msk [vmem:[%s4 + $0x4] sm:$0xf] %vm4275, %v4227
  %4278 = vst.msk [vmem:[%s4 + $0x8] sm:$0xf] %vm4275, %v4228
  %4279 = vst.msk [vmem:[%s4 + $0xc] sm:$0xf] %vm4275, %v4229
  %4280 = vst.msk [vmem:[%s4 + $0x10] sm:$0xf] %vm4275, %v4230
  %4281 = vst.msk [vmem:[%s4 + $0x14] sm:$0xf] %vm4275, %v4231
  %4282 = vst.msk [vmem:[%s4 + $0x18] sm:$0xf] %vm4275, %v4232
  %4283 = vst.msk [vmem:[%s4 + $0x1c] sm:$0xf] %vm4275, %v4233
  %4284 = vst.msk [vmem:[%s4 + $0x20] sm:$0xf] %vm4275, %v4234
  %4285 = vst.msk [vmem:[%s4 + $0x24] sm:$0xf] %vm4275, %v4235
  %4286 = vst.msk [vmem:[%s4 + $0x28] sm:$0xf] %vm4275, %v4236
  %4287 = vst.msk [vmem:[%s4 + $0x2c] sm:$0xf] %vm4275, %v4237
  %4288 = vst.msk [vmem:[%s4 + $0x30] sm:$0xf] %vm4275, %v4238
  %4289 = vst.msk [vmem:[%s4 + $0x34] sm:$0xf] %vm4275, %v4239
  %4290 = vst.msk [vmem:[%s4 + $0x38] sm:$0xf] %vm4275, %v4240
  %4291 = vst.msk [vmem:[%s4 + $0x3c] sm:$0xf] %vm4275, %v4241
  %4292 = vst.msk [vmem:[%s4 + $0x40] sm:$0xf] %vm4275, %v4242
  %4293 = vst.msk [vmem:[%s4 + $0x44] sm:$0xf] %vm4275, %v4243
  %4294 = vst.msk [vmem:[%s4 + $0x48] sm:$0xf] %vm4275, %v4244
  %4295 = vst.msk [vmem:[%s4 + $0x4c] sm:$0xf] %vm4275, %v4245
  %4296 = vst.msk [vmem:[%s4 + $0x50] sm:$0xf] %vm4275, %v4246
  %4297 = vst.msk [vmem:[%s4 + $0x54] sm:$0xf] %vm4275, %v4247
  %4298 = vst.msk [vmem:[%s4 + $0x58] sm:$0xf] %vm4275, %v4248
  %4299 = vst.msk [vmem:[%s4 + $0x5c] sm:$0xf] %vm4275, %v4249
  %4300 = vst.msk [vmem:[%s4 + $0x60] sm:$0xf] %vm4275, %v4250
  %4301 = vst.msk [vmem:[%s4 + $0x64] sm:$0xf] %vm4275, %v4251
  %4302 = vst.msk [vmem:[%s4 + $0x68] sm:$0xf] %vm4275, %v4252
  %4303 = vst.msk [vmem:[%s4 + $0x6c] sm:$0xf] %vm4275, %v4253
  %4304 = vst.msk [vmem:[%s4 + $0x70] sm:$0xf] %vm4275, %v4254
  %4305 = vst.msk [vmem:[%s4 + $0x74] sm:$0xf] %vm4275, %v4255
  %4306 = vst.msk [vmem:[%s4 + $0x78] sm:$0xf] %vm4275, %v4256
  %4307 = vst.msk [vmem:[%s4 + $0x7c] sm:$0xf] %vm4275, %v4257
  %4308 = vst.msk [vmem:[%s4 + $0x80] sm:$0xf] %vm4275, %v4258
  %4309 = vst.msk [vmem:[%s4 + $0x84] sm:$0xf] %vm4275, %v4259
  %4310 = vst.msk [vmem:[%s4 + $0x88] sm:$0xf] %vm4275, %v4260
  %4311 = vst.msk [vmem:[%s4 + $0x8c] sm:$0xf] %vm4275, %v4261
  %4312 = vst.msk [vmem:[%s4 + $0x90] sm:$0xf] %vm4275, %v4262
  %4313 = vst.msk [vmem:[%s4 + $0x94] sm:$0xf] %vm4275, %v4263
  %4314 = vst.msk [vmem:[%s4 + $0x98] sm:$0xf] %vm4275, %v4264
  %4315 = vst.msk [vmem:[%s4 + $0x9c] sm:$0xf] %vm4275, %v4265
  %4316 = vst.msk [vmem:[%s4 + $0xa0] sm:$0xf] %vm4275, %v4266
  %4317 = vst.msk [vmem:[%s4 + $0xa4] sm:$0xf] %vm4275, %v4267
  %4318 = vst.msk [vmem:[%s4 + $0xa8] sm:$0xf] %vm4275, %v4268
  %4319 = vst.msk [vmem:[%s4 + $0xac] sm:$0xf] %vm4275, %v4269
  %4320 = vst.msk [vmem:[%s4 + $0xb0] sm:$0xf] %vm4275, %v4270
  %4321 = vst.msk [vmem:[%s4 + $0xb4] sm:$0xf] %vm4275, %v4271
  %4322 = vst.msk [vmem:[%s4 + $0xb8] sm:$0xf] %vm4275, %v4272
  %4323 = vst.msk [vmem:[%s4 + $0xbc] sm:$0xf] %vm4275, %v4273
  %4324 = vst.msk [vmem:[%s4 + $0xc0] sm:$0xf] %vm4275, %v4274
  // Predicated region
  $region18: #{itracker_forward.5} parent=0 // pred_check
    _
  $region19: #{itracker_forward.5} parent=0 // pred_check_branch
    %4326 = sbr.rel (0) target = $region21
  $region20: #{itracker_forward.5} parent=0 // pred_region
    _
  $region21: #{itracker_forward.5} parent=0 // pred_fallthru
    _
  // Predicated region
  $region22: #{itracker_forward.5} parent=0 // pred_check
    _
  $region23: #{itracker_forward.5} parent=0 // pred_check_branch
    %4328 = sbr.rel (0) target = $region25
  $region24: #{itracker_forward.5} parent=0 // pred_region
    _
  $region25: #{itracker_forward.5} parent=0 // pred_fallthru
    _

// kernel: itracker_forward.6
$region0: #{itracker_forward.6}
  #allocation0 [shape = 'u32[]', space=smem, size = 0x4, offset = 0x4, fixed_abs, tag = 'smem constant byte address 0x4 - core index']
  #allocation1 [shape = 'u32[72,128]{1,0:T(1,128)}', space=vmem, size = 0x9000, scoped, tag = 'internal scratch']
  %s0 = inlined_call_operand.vmem [shape: bf16[72,1664], index: 0, kind: input, shape index: {}]
  %s1 = inlined_call_operand.vmem [shape: bf16[1664,32], index: 1, kind: input, shape index: {}]
  %s2 = inlined_call_operand.vmem [shape: f32[1,32], index: 2, kind: input, shape index: {}]
  %s3 = inlined_call_operand.vmem [shape: bf16[72,32], index: 3, kind: output, shape index: {}]
  %s4 = sld [smem:[#allocation0]]
  $region22: #{itracker_forward.6} parent=0
    _
  %s6 = ssub.s32 1, %s4
  %s7 = scalar_select 0, %s6, %s4
  // Predicated region
  $region2: #{itracker_forward.6} parent=0 // pred_check
    _
  $region3: #{itracker_forward.6} parent=0 // pred_check_branch
    %9 = sbr.rel (0) target = $region5
  $region4: #{itracker_forward.6} parent=0 // pred_region
    _
  $region5: #{itracker_forward.6} parent=0 // pred_fallthru
    _
  // Predicated region
  $region6: #{itracker_forward.6} parent=0 // pred_check
    _
  $region7: #{itracker_forward.6} parent=0 // pred_check_branch
    %11 = sbr.rel (0) target = $region9
  $region8: #{itracker_forward.6} parent=0 // pred_region
    _
  $region9: #{itracker_forward.6} parent=0 // pred_fallthru
    _
  // Predicated region
  $region10: #{itracker_forward.6} parent=0 // pred_check
    _
  $region11: #{itracker_forward.6} parent=0 // pred_check_branch
    %13 = sbr.rel (0) target = $region13
  $region12: #{itracker_forward.6} parent=0 // pred_region
    _
  $region13: #{itracker_forward.6} parent=0 // pred_fallthru
    _
  %v14 = vld [vmem:[%s0] sm:$0xff]
  %v15 = vld [vmem:[%s0 + $0x8] sm:$0xff]
  %v16 = vld [vmem:[%s0 + $0x10] sm:$0xff]
  %v17 = vld [vmem:[%s0 + $0x18] sm:$0xff]
  %v18 = vld [vmem:[%s0 + $0x20] sm:$0xff]
  %v19 = vld [vmem:[%s0 + $0x28] sm:$0xff]
  %v20 = vld [vmem:[%s0 + $0x30] sm:$0xf]
  %v21 = vld [vmem:[%s0 + $0x34] sm:$0xff]
  %v22 = vld [vmem:[%s0 + $0x3c] sm:$0xff]
  %v23 = vld [vmem:[%s0 + $0x44] sm:$0xff]
  %v24 = vld [vmem:[%s0 + $0x4c] sm:$0xff]
  %v25 = vld [vmem:[%s0 + $0x54] sm:$0xff]
  %v26 = vld [vmem:[%s0 + $0x5c] sm:$0xff]
  %v27 = vld [vmem:[%s0 + $0x64] sm:$0xf]
  %v28 = vld [vmem:[%s0 + $0x68] sm:$0xff]
  %v29 = vld [vmem:[%s0 + $0x70] sm:$0xff]
  %v30 = vld [vmem:[%s0 + $0x78] sm:$0xff]
  %v31 = vld [vmem:[%s0 + $0x80] sm:$0xff]
  %v32 = vld [vmem:[%s0 + $0x88] sm:$0xff]
  %v33 = vld [vmem:[%s0 + $0x90] sm:$0xff]
  %v34 = vld [vmem:[%s0 + $0x98] sm:$0xf]
  %v35 = vld [vmem:[%s0 + $0x9c] sm:$0xff]
  %v36 = vld [vmem:[%s0 + $0xa4] sm:$0xff]
  %v37 = vld [vmem:[%s0 + $0xac] sm:$0xff]
  %v38 = vld [vmem:[%s0 + $0xb4] sm:$0xff]
  %v39 = vld [vmem:[%s0 + $0xbc] sm:$0xff]
  %v40 = vld [vmem:[%s0 + $0xc4] sm:$0xff]
  %v41 = vld [vmem:[%s0 + $0xcc] sm:$0xf]
  %v42 = vld [vmem:[%s0 + $0xd0] sm:$0xff]
  %v43 = vld [vmem:[%s0 + $0xd8] sm:$0xff]
  %v44 = vld [vmem:[%s0 + $0xe0] sm:$0xff]
  %v45 = vld [vmem:[%s0 + $0xe8] sm:$0xff]
  %v46 = vld [vmem:[%s0 + $0xf0] sm:$0xff]
  %v47 = vld [vmem:[%s0 + $0xf8] sm:$0xff]
  %v48 = vld [vmem:[%s0 + $0x100] sm:$0xf]
  %v49 = vld [vmem:[%s0 + $0x104] sm:$0xff]
  %v50 = vld [vmem:[%s0 + $0x10c] sm:$0xff]
  %v51 = vld [vmem:[%s0 + $0x114] sm:$0xff]
  %v52 = vld [vmem:[%s0 + $0x11c] sm:$0xff]
  %v53 = vld [vmem:[%s0 + $0x124] sm:$0xff]
  %v54 = vld [vmem:[%s0 + $0x12c] sm:$0xff]
  %v55 = vld [vmem:[%s0 + $0x134] sm:$0xf]
  %v56 = vld [vmem:[%s0 + $0x138] sm:$0xff]
  %v57 = vld [vmem:[%s0 + $0x140] sm:$0xff]
  %v58 = vld [vmem:[%s0 + $0x148] sm:$0xff]
  %v59 = vld [vmem:[%s0 + $0x150] sm:$0xff]
  %v60 = vld [vmem:[%s0 + $0x158] sm:$0xff]
  %v61 = vld [vmem:[%s0 + $0x160] sm:$0xff]
  %v62 = vld [vmem:[%s0 + $0x168] sm:$0xf]
  %v63 = vld [vmem:[%s0 + $0x16c] sm:$0xff]
  %v64 = vld [vmem:[%s0 + $0x174] sm:$0xff]
  %v65 = vld [vmem:[%s0 + $0x17c] sm:$0xff]
  %v66 = vld [vmem:[%s0 + $0x184] sm:$0xff]
  %v67 = vld [vmem:[%s0 + $0x18c] sm:$0xff]
  %v68 = vld [vmem:[%s0 + $0x194] sm:$0xff]
  %v69 = vld [vmem:[%s0 + $0x19c] sm:$0xf]
  %v70 = vld [vmem:[%s0 + $0x1a0] sm:$0xff]
  %v71 = vld [vmem:[%s0 + $0x1a8] sm:$0xff]
  %v72 = vld [vmem:[%s0 + $0x1b0] sm:$0xff]
  %v73 = vld [vmem:[%s0 + $0x1b8] sm:$0xff]
  %v74 = vld [vmem:[%s0 + $0x1c0] sm:$0xff]
  %v75 = vld [vmem:[%s0 + $0x1c8] sm:$0xff]
  %v76 = vld [vmem:[%s0 + $0x1d0] sm:$0xf]
  %v77 = vld [vmem:[%s1] sm:$0xf]
  %v78 = vld [vmem:[%s1 + $0x4] sm:$0xf]
  %v79 = vld [vmem:[%s1 + $0x8] sm:$0xf]
  %v80 = vld [vmem:[%s1 + $0xc] sm:$0xf]
  %v81 = vld [vmem:[%s1 + $0x10] sm:$0xf]
  %v82 = vld [vmem:[%s1 + $0x14] sm:$0xf]
  %v83 = vld [vmem:[%s1 + $0x18] sm:$0xf]
  %v84 = vld [vmem:[%s1 + $0x1c] sm:$0xf]
  %v85 = vld [vmem:[%s1 + $0x20] sm:$0xf]
  %v86 = vld [vmem:[%s1 + $0x24] sm:$0xf]
  %v87 = vld [vmem:[%s1 + $0x28] sm:$0xf]
  %v88 = vld [vmem:[%s1 + $0x2c] sm:$0xf]
  %v89 = vld [vmem:[%s1 + $0x30] sm:$0xf]
  %v90 = vld [vmem:[%s1 + $0x34] sm:$0xf]
  %v91 = vld [vmem:[%s1 + $0x38] sm:$0xf]
  %v92 = vld [vmem:[%s1 + $0x3c] sm:$0xf]
  %v93 = vld [vmem:[%s1 + $0x40] sm:$0xf]
  %v94 = vld [vmem:[%s1 + $0x44] sm:$0xf]
  %v95 = vld [vmem:[%s1 + $0x48] sm:$0xf]
  %v96 = vld [vmem:[%s1 + $0x4c] sm:$0xf]
  %v97 = vld [vmem:[%s1 + $0x50] sm:$0xf]
  %v98 = vld [vmem:[%s1 + $0x54] sm:$0xf]
  %v99 = vld [vmem:[%s1 + $0x58] sm:$0xf]
  %v100 = vld [vmem:[%s1 + $0x5c] sm:$0xf]
  %v101 = vld [vmem:[%s1 + $0x60] sm:$0xf]
  %v102 = vld [vmem:[%s1 + $0x64] sm:$0xf]
  %v103 = vld [vmem:[%s1 + $0x68] sm:$0xf]
  %v104 = vld [vmem:[%s1 + $0x6c] sm:$0xf]
  %v105 = vld [vmem:[%s1 + $0x70] sm:$0xf]
  %v106 = vld [vmem:[%s1 + $0x74] sm:$0xf]
  %v107 = vld [vmem:[%s1 + $0x78] sm:$0xf]
  %v108 = vld [vmem:[%s1 + $0x7c] sm:$0xf]
  %v109 = vld [vmem:[%s1 + $0x80] sm:$0xf]
  %v110 = vld [vmem:[%s1 + $0x84] sm:$0xf]
  %v111 = vld [vmem:[%s1 + $0x88] sm:$0xf]
  %v112 = vld [vmem:[%s1 + $0x8c] sm:$0xf]
  %v113 = vld [vmem:[%s1 + $0x90] sm:$0xf]
  %v114 = vld [vmem:[%s1 + $0x94] sm:$0xf]
  %v115 = vld [vmem:[%s1 + $0x98] sm:$0xf]
  %v116 = vld [vmem:[%s1 + $0x9c] sm:$0xf]
  %v117 = vld [vmem:[%s1 + $0xa0] sm:$0xf]
  %v118 = vld [vmem:[%s1 + $0xa4] sm:$0xf]
  %v119 = vld [vmem:[%s1 + $0xa8] sm:$0xf]
  %v120 = vld [vmem:[%s1 + $0xac] sm:$0xf]
  %v121 = vld [vmem:[%s1 + $0xb0] sm:$0xf]
  %v122 = vld [vmem:[%s1 + $0xb4] sm:$0xf]
  %v123 = vld [vmem:[%s1 + $0xb8] sm:$0xf]
  %v124 = vld [vmem:[%s1 + $0xbc] sm:$0xf]
  %v125 = vld [vmem:[%s1 + $0xc0] sm:$0xf]
  %v126 = vld [vmem:[%s1 + $0xc4] sm:$0xf]
  %v127 = vld [vmem:[%s1 + $0xc8] sm:$0xf]
  %v128 = vld [vmem:[%s1 + $0xcc] sm:$0xf]
  %v129 = vld [vmem:[%s1 + $0xd0] sm:$0xf]
  %v130 = vld [vmem:[%s1 + $0xd4] sm:$0xf]
  %v131 = vld [vmem:[%s1 + $0xd8] sm:$0xf]
  %v132 = vld [vmem:[%s1 + $0xdc] sm:$0xf]
  %v133 = vld [vmem:[%s1 + $0xe0] sm:$0xf]
  %v134 = vld [vmem:[%s1 + $0xe4] sm:$0xf]
  %v135 = vld [vmem:[%s1 + $0xe8] sm:$0xf]
  %v136 = vld [vmem:[%s1 + $0xec] sm:$0xf]
  %v137 = vld [vmem:[%s1 + $0xf0] sm:$0xf]
  %v138 = vld [vmem:[%s1 + $0xf4] sm:$0xf]
  %v139 = vld [vmem:[%s1 + $0xf8] sm:$0xf]
  %v140 = vld [vmem:[%s1 + $0xfc] sm:$0xf]
  %v141 = vld [vmem:[%s1 + $0x100] sm:$0xf]
  %v142 = vld [vmem:[%s1 + $0x104] sm:$0xf]
  %v143 = vld [vmem:[%s1 + $0x108] sm:$0xf]
  %v144 = vld [vmem:[%s1 + $0x10c] sm:$0xf]
  %v145 = vld [vmem:[%s1 + $0x110] sm:$0xf]
  %v146 = vld [vmem:[%s1 + $0x114] sm:$0xf]
  %v147 = vld [vmem:[%s1 + $0x118] sm:$0xf]
  %v148 = vld [vmem:[%s1 + $0x11c] sm:$0xf]
  %v149 = vld [vmem:[%s1 + $0x120] sm:$0xf]
  %v150 = vld [vmem:[%s1 + $0x124] sm:$0xf]
  %v151 = vld [vmem:[%s1 + $0x128] sm:$0xf]
  %v152 = vld [vmem:[%s1 + $0x12c] sm:$0xf]
  %v153 = vld [vmem:[%s1 + $0x130] sm:$0xf]
  %v154 = vld [vmem:[%s1 + $0x134] sm:$0xf]
  %v155 = vld [vmem:[%s1 + $0x138] sm:$0xf]
  %v156 = vld [vmem:[%s1 + $0x13c] sm:$0xf]
  %v157 = vld [vmem:[%s1 + $0x140] sm:$0xf]
  %v158 = vld [vmem:[%s1 + $0x144] sm:$0xf]
  %v159 = vld [vmem:[%s1 + $0x148] sm:$0xf]
  %v160 = vld [vmem:[%s1 + $0x14c] sm:$0xf]
  %v161 = vld [vmem:[%s1 + $0x150] sm:$0xf]
  %v162 = vld [vmem:[%s1 + $0x154] sm:$0xf]
  %v163 = vld [vmem:[%s1 + $0x158] sm:$0xf]
  %v164 = vld [vmem:[%s1 + $0x15c] sm:$0xf]
  %v165 = vld [vmem:[%s1 + $0x160] sm:$0xf]
  %v166 = vld [vmem:[%s1 + $0x164] sm:$0xf]
  %v167 = vld [vmem:[%s1 + $0x168] sm:$0xf]
  %v168 = vld [vmem:[%s1 + $0x16c] sm:$0xf]
  %v169 = vld [vmem:[%s1 + $0x170] sm:$0xf]
  %v170 = vld [vmem:[%s1 + $0x174] sm:$0xf]
  %v171 = vld [vmem:[%s1 + $0x178] sm:$0xf]
  %v172 = vld [vmem:[%s1 + $0x17c] sm:$0xf]
  %v173 = vld [vmem:[%s1 + $0x180] sm:$0xf]
  %v174 = vld [vmem:[%s1 + $0x184] sm:$0xf]
  %v175 = vld [vmem:[%s1 + $0x188] sm:$0xf]
  %v176 = vld [vmem:[%s1 + $0x18c] sm:$0xf]
  %v177 = vld [vmem:[%s1 + $0x190] sm:$0xf]
  %v178 = vld [vmem:[%s1 + $0x194] sm:$0xf]
  %v179 = vld [vmem:[%s1 + $0x198] sm:$0xf]
  %v180 = vld [vmem:[%s1 + $0x19c] sm:$0xf]
  %v181 = vld [vmem:[%s1 + $0x1a0] sm:$0xf]
  %v182 = vld [vmem:[%s1 + $0x1a4] sm:$0xf]
  %v183 = vld [vmem:[%s1 + $0x1a8] sm:$0xf]
  %v184 = vld [vmem:[%s1 + $0x1ac] sm:$0xf]
  %v185 = vld [vmem:[%s1 + $0x1b0] sm:$0xf]
  %v186 = vld [vmem:[%s1 + $0x1b4] sm:$0xf]
  %v187 = vld [vmem:[%s1 + $0x1b8] sm:$0xf]
  %v188 = vld [vmem:[%s1 + $0x1bc] sm:$0xf]
  %v189 = vld [vmem:[%s1 + $0x1c0] sm:$0xf]
  %v190 = vld [vmem:[%s1 + $0x1c4] sm:$0xf]
  %v191 = vld [vmem:[%s1 + $0x1c8] sm:$0xf]
  %v192 = vld [vmem:[%s1 + $0x1cc] sm:$0xf]
  %v193 = vld [vmem:[%s1 + $0x1d0] sm:$0xf]
  %v194 = vld [vmem:[%s1 + $0x1d4] sm:$0xf]
  %v195 = vld [vmem:[%s1 + $0x1d8] sm:$0xf]
  %v196 = vld [vmem:[%s1 + $0x1dc] sm:$0xf]
  %v197 = vld [vmem:[%s1 + $0x1e0] sm:$0xf]
  %v198 = vld [vmem:[%s1 + $0x1e4] sm:$0xf]
  %v199 = vld [vmem:[%s1 + $0x1e8] sm:$0xf]
  %v200 = vld [vmem:[%s1 + $0x1ec] sm:$0xf]
  %v201 = vld [vmem:[%s1 + $0x1f0] sm:$0xf]
  %v202 = vld [vmem:[%s1 + $0x1f4] sm:$0xf]
  %v203 = vld [vmem:[%s1 + $0x1f8] sm:$0xf]
  %v204 = vld [vmem:[%s1 + $0x1fc] sm:$0xf]
  %v205 = vld [vmem:[%s1 + $0x200] sm:$0xf]
  %v206 = vld [vmem:[%s1 + $0x204] sm:$0xf]
  %v207 = vld [vmem:[%s1 + $0x208] sm:$0xf]
  %v208 = vld [vmem:[%s1 + $0x20c] sm:$0xf]
  %v209 = vld [vmem:[%s1 + $0x210] sm:$0xf]
  %v210 = vld [vmem:[%s1 + $0x214] sm:$0xf]
  %v211 = vld [vmem:[%s1 + $0x218] sm:$0xf]
  %v212 = vld [vmem:[%s1 + $0x21c] sm:$0xf]
  %v213 = vld [vmem:[%s1 + $0x220] sm:$0xf]
  %v214 = vld [vmem:[%s1 + $0x224] sm:$0xf]
  %v215 = vld [vmem:[%s1 + $0x228] sm:$0xf]
  %v216 = vld [vmem:[%s1 + $0x22c] sm:$0xf]
  %v217 = vld [vmem:[%s1 + $0x230] sm:$0xf]
  %v218 = vld [vmem:[%s1 + $0x234] sm:$0xf]
  %v219 = vld [vmem:[%s1 + $0x238] sm:$0xf]
  %v220 = vld [vmem:[%s1 + $0x23c] sm:$0xf]
  %v221 = vld [vmem:[%s1 + $0x240] sm:$0xf]
  %v222 = vld [vmem:[%s1 + $0x244] sm:$0xf]
  %v223 = vld [vmem:[%s1 + $0x248] sm:$0xf]
  %v224 = vld [vmem:[%s1 + $0x24c] sm:$0xf]
  %v225 = vld [vmem:[%s1 + $0x250] sm:$0xf]
  %v226 = vld [vmem:[%s1 + $0x254] sm:$0xf]
  %v227 = vld [vmem:[%s1 + $0x258] sm:$0xf]
  %v228 = vld [vmem:[%s1 + $0x25c] sm:$0xf]
  %v229 = vld [vmem:[%s1 + $0x260] sm:$0xf]
  %v230 = vld [vmem:[%s1 + $0x264] sm:$0xf]
  %v231 = vld [vmem:[%s1 + $0x268] sm:$0xf]
  %v232 = vld [vmem:[%s1 + $0x26c] sm:$0xf]
  %v233 = vld [vmem:[%s1 + $0x270] sm:$0xf]
  %v234 = vld [vmem:[%s1 + $0x274] sm:$0xf]
  %v235 = vld [vmem:[%s1 + $0x278] sm:$0xf]
  %v236 = vld [vmem:[%s1 + $0x27c] sm:$0xf]
  %v237 = vld [vmem:[%s1 + $0x280] sm:$0xf]
  %v238 = vld [vmem:[%s1 + $0x284] sm:$0xf]
  %v239 = vld [vmem:[%s1 + $0x288] sm:$0xf]
  %v240 = vld [vmem:[%s1 + $0x28c] sm:$0xf]
  %v241 = vld [vmem:[%s1 + $0x290] sm:$0xf]
  %v242 = vld [vmem:[%s1 + $0x294] sm:$0xf]
  %v243 = vld [vmem:[%s1 + $0x298] sm:$0xf]
  %v244 = vld [vmem:[%s1 + $0x29c] sm:$0xf]
  %v245 = vld [vmem:[%s1 + $0x2a0] sm:$0xf]
  %v246 = vld [vmem:[%s1 + $0x2a4] sm:$0xf]
  %v247 = vld [vmem:[%s1 + $0x2a8] sm:$0xf]
  %v248 = vld [vmem:[%s1 + $0x2ac] sm:$0xf]
  %v249 = vld [vmem:[%s1 + $0x2b0] sm:$0xf]
  %v250 = vld [vmem:[%s1 + $0x2b4] sm:$0xf]
  %v251 = vld [vmem:[%s1 + $0x2b8] sm:$0xf]
  %v252 = vld [vmem:[%s1 + $0x2bc] sm:$0xf]
  %v253 = vld [vmem:[%s1 + $0x2c0] sm:$0xf]
  %v254 = vld [vmem:[%s1 + $0x2c4] sm:$0xf]
  %v255 = vld [vmem:[%s1 + $0x2c8] sm:$0xf]
  %v256 = vld [vmem:[%s1 + $0x2cc] sm:$0xf]
  %v257 = vld [vmem:[%s1 + $0x2d0] sm:$0xf]
  %v258 = vld [vmem:[%s1 + $0x2d4] sm:$0xf]
  %v259 = vld [vmem:[%s1 + $0x2d8] sm:$0xf]
  %v260 = vld [vmem:[%s1 + $0x2dc] sm:$0xf]
  %v261 = vld [vmem:[%s1 + $0x2e0] sm:$0xf]
  %v262 = vld [vmem:[%s1 + $0x2e4] sm:$0xf]
  %v263 = vld [vmem:[%s1 + $0x2e8] sm:$0xf]
  %v264 = vld [vmem:[%s1 + $0x2ec] sm:$0xf]
  %v265 = vld [vmem:[%s1 + $0x2f0] sm:$0xf]
  %v266 = vld [vmem:[%s1 + $0x2f4] sm:$0xf]
  %v267 = vld [vmem:[%s1 + $0x2f8] sm:$0xf]
  %v268 = vld [vmem:[%s1 + $0x2fc] sm:$0xf]
  %v269 = vld [vmem:[%s1 + $0x300] sm:$0xf]
  %v270 = vld [vmem:[%s1 + $0x304] sm:$0xf]
  %v271 = vld [vmem:[%s1 + $0x308] sm:$0xf]
  %v272 = vld [vmem:[%s1 + $0x30c] sm:$0xf]
  %v273 = vld [vmem:[%s1 + $0x310] sm:$0xf]
  %v274 = vld [vmem:[%s1 + $0x314] sm:$0xf]
  %v275 = vld [vmem:[%s1 + $0x318] sm:$0xf]
  %v276 = vld [vmem:[%s1 + $0x31c] sm:$0xf]
  %v277 = vld [vmem:[%s1 + $0x320] sm:$0xf]
  %v278 = vld [vmem:[%s1 + $0x324] sm:$0xf]
  %v279 = vld [vmem:[%s1 + $0x328] sm:$0xf]
  %v280 = vld [vmem:[%s1 + $0x32c] sm:$0xf]
  %v281 = vld [vmem:[%s1 + $0x330] sm:$0xf]
  %v282 = vld [vmem:[%s1 + $0x334] sm:$0xf]
  %v283 = vld [vmem:[%s1 + $0x338] sm:$0xf]
  %v284 = vld [vmem:[%s1 + $0x33c] sm:$0xf]
  %v285 = vld [vmem:[%s2] sm:$0x1]
  %v287 = vperm.slane %v285, 0
  %v352 = vunpack.c.l.b16 %v14
  %v353 = vunpack.c.h.b16 %v14
  %v354 = vunpack.c.l.b16 %v15
  %v355 = vunpack.c.h.b16 %v15
  %v356 = vunpack.c.l.b16 %v16
  %v357 = vunpack.c.h.b16 %v16
  %v358 = vunpack.c.l.b16 %v17
  %v359 = vunpack.c.h.b16 %v17
  %v360 = vunpack.c.l.b16 %v18
  %v361 = vunpack.c.h.b16 %v18
  %v362 = vunpack.c.l.b16 %v19
  %v363 = vunpack.c.h.b16 %v19
  %v364 = vunpack.c.l.b16 %v20
  %v365 = vunpack.c.l.b16 %v21
  %v366 = vunpack.c.h.b16 %v21
  %v367 = vunpack.c.l.b16 %v22
  %v368 = vunpack.c.h.b16 %v22
  %v369 = vunpack.c.l.b16 %v23
  %v370 = vunpack.c.h.b16 %v23
  %v371 = vunpack.c.l.b16 %v24
  %v372 = vunpack.c.h.b16 %v24
  %v373 = vunpack.c.l.b16 %v25
  %v374 = vunpack.c.h.b16 %v25
  %v375 = vunpack.c.l.b16 %v26
  %v376 = vunpack.c.h.b16 %v26
  %v377 = vunpack.c.l.b16 %v27
  %v378 = vunpack.c.l.b16 %v28
  %v379 = vunpack.c.h.b16 %v28
  %v380 = vunpack.c.l.b16 %v29
  %v381 = vunpack.c.h.b16 %v29
  %v382 = vunpack.c.l.b16 %v30
  %v383 = vunpack.c.h.b16 %v30
  %v384 = vunpack.c.l.b16 %v31
  %v385 = vunpack.c.h.b16 %v31
  %v386 = vunpack.c.l.b16 %v32
  %v387 = vunpack.c.h.b16 %v32
  %v388 = vunpack.c.l.b16 %v33
  %v389 = vunpack.c.h.b16 %v33
  %v390 = vunpack.c.l.b16 %v34
  %v391 = vunpack.c.l.b16 %v35
  %v392 = vunpack.c.h.b16 %v35
  %v393 = vunpack.c.l.b16 %v36
  %v394 = vunpack.c.h.b16 %v36
  %v395 = vunpack.c.l.b16 %v37
  %v396 = vunpack.c.h.b16 %v37
  %v397 = vunpack.c.l.b16 %v38
  %v398 = vunpack.c.h.b16 %v38
  %v399 = vunpack.c.l.b16 %v39
  %v400 = vunpack.c.h.b16 %v39
  %v401 = vunpack.c.l.b16 %v40
  %v402 = vunpack.c.h.b16 %v40
  %v403 = vunpack.c.l.b16 %v41
  %v404 = vunpack.c.l.b16 %v42
  %v405 = vunpack.c.h.b16 %v42
  %v406 = vunpack.c.l.b16 %v43
  %v407 = vunpack.c.h.b16 %v43
  %v408 = vunpack.c.l.b16 %v44
  %v409 = vunpack.c.h.b16 %v44
  %v410 = vunpack.c.l.b16 %v45
  %v411 = vunpack.c.h.b16 %v45
  %v412 = vunpack.c.l.b16 %v46
  %v413 = vunpack.c.h.b16 %v46
  %v414 = vunpack.c.l.b16 %v47
  %v415 = vunpack.c.h.b16 %v47
  %v416 = vunpack.c.l.b16 %v48
  %v417 = vunpack.c.l.b16 %v49
  %v418 = vunpack.c.h.b16 %v49
  %v419 = vunpack.c.l.b16 %v50
  %v420 = vunpack.c.h.b16 %v50
  %v421 = vunpack.c.l.b16 %v51
  %v422 = vunpack.c.h.b16 %v51
  %v423 = vunpack.c.l.b16 %v52
  %v424 = vunpack.c.h.b16 %v52
  %v425 = vunpack.c.l.b16 %v53
  %v426 = vunpack.c.h.b16 %v53
  %v427 = vunpack.c.l.b16 %v54
  %v428 = vunpack.c.h.b16 %v54
  %v429 = vunpack.c.l.b16 %v55
  %v430 = vunpack.c.l.b16 %v56
  %v431 = vunpack.c.h.b16 %v56
  %v432 = vunpack.c.l.b16 %v57
  %v433 = vunpack.c.h.b16 %v57
  %v434 = vunpack.c.l.b16 %v58
  %v435 = vunpack.c.h.b16 %v58
  %v436 = vunpack.c.l.b16 %v59
  %v437 = vunpack.c.h.b16 %v59
  %v438 = vunpack.c.l.b16 %v60
  %v439 = vunpack.c.h.b16 %v60
  %v440 = vunpack.c.l.b16 %v61
  %v441 = vunpack.c.h.b16 %v61
  %v442 = vunpack.c.l.b16 %v62
  %v443 = vunpack.c.l.b16 %v63
  %v444 = vunpack.c.h.b16 %v63
  %v445 = vunpack.c.l.b16 %v64
  %v446 = vunpack.c.h.b16 %v64
  %v447 = vunpack.c.l.b16 %v65
  %v448 = vunpack.c.h.b16 %v65
  %v449 = vunpack.c.l.b16 %v66
  %v450 = vunpack.c.h.b16 %v66
  %v451 = vunpack.c.l.b16 %v67
  %v452 = vunpack.c.h.b16 %v67
  %v453 = vunpack.c.l.b16 %v68
  %v454 = vunpack.c.h.b16 %v68
  %v455 = vunpack.c.l.b16 %v69
  %v456 = vunpack.c.l.b16 %v70
  %v457 = vunpack.c.h.b16 %v70
  %v458 = vunpack.c.l.b16 %v71
  %v459 = vunpack.c.h.b16 %v71
  %v460 = vunpack.c.l.b16 %v72
  %v461 = vunpack.c.h.b16 %v72
  %v462 = vunpack.c.l.b16 %v73
  %v463 = vunpack.c.h.b16 %v73
  %v464 = vunpack.c.l.b16 %v74
  %v465 = vunpack.c.h.b16 %v74
  %v466 = vunpack.c.l.b16 %v75
  %v467 = vunpack.c.h.b16 %v75
  %v468 = vunpack.c.l.b16 %v76
  %v469 = vpack.c.b16 %v365, %v352
  %v470 = vpack.c.b16 %v366, %v353
  %v471 = vpack.c.b16 %v367, %v354
  %v472 = vpack.c.b16 %v368, %v355
  %v473 = vpack.c.b16 %v369, %v356
  %v474 = vpack.c.b16 %v370, %v357
  %v475 = vpack.c.b16 %v371, %v358
  %v476 = vpack.c.b16 %v372, %v359
  %v477 = vpack.c.b16 %v373, %v360
  %v478 = vpack.c.b16 %v374, %v361
  %v479 = vpack.c.b16 %v375, %v362
  %v480 = vpack.c.b16 %v376, %v363
  %v481 = vpack.c.b16 %v377, %v364
  %v482 = vpack.c.b16 %v391, %v378
  %v483 = vpack.c.b16 %v392, %v379
  %v484 = vpack.c.b16 %v393, %v380
  %v485 = vpack.c.b16 %v394, %v381
  %v486 = vpack.c.b16 %v395, %v382
  %v487 = vpack.c.b16 %v396, %v383
  %v488 = vpack.c.b16 %v397, %v384
  %v489 = vpack.c.b16 %v398, %v385
  %v490 = vpack.c.b16 %v399, %v386
  %v491 = vpack.c.b16 %v400, %v387
  %v492 = vpack.c.b16 %v401, %v388
  %v493 = vpack.c.b16 %v402, %v389
  %v494 = vpack.c.b16 %v403, %v390
  %v495 = vpack.c.b16 %v417, %v404
  %v496 = vpack.c.b16 %v418, %v405
  %v497 = vpack.c.b16 %v419, %v406
  %v498 = vpack.c.b16 %v420, %v407
  %v499 = vpack.c.b16 %v421, %v408
  %v500 = vpack.c.b16 %v422, %v409
  %v501 = vpack.c.b16 %v423, %v410
  %v502 = vpack.c.b16 %v424, %v411
  %v503 = vpack.c.b16 %v425, %v412
  %v504 = vpack.c.b16 %v426, %v413
  %v505 = vpack.c.b16 %v427, %v414
  %v506 = vpack.c.b16 %v428, %v415
  %v507 = vpack.c.b16 %v429, %v416
  %v508 = vpack.c.b16 %v443, %v430
  %v509 = vpack.c.b16 %v444, %v431
  %v510 = vpack.c.b16 %v445, %v432
  %v511 = vpack.c.b16 %v446, %v433
  %v512 = vpack.c.b16 %v447, %v434
  %v513 = vpack.c.b16 %v448, %v435
  %v514 = vpack.c.b16 %v449, %v436
  %v515 = vpack.c.b16 %v450, %v437
  %v516 = vpack.c.b16 %v451, %v438
  %v517 = vpack.c.b16 %v452, %v439
  %v518 = vpack.c.b16 %v453, %v440
  %v519 = vpack.c.b16 %v454, %v441
  %v520 = vpack.c.b16 %v455, %v442
  %v521 = vpack.c.b16 %v456, %v456
  %v522 = vpack.c.b16 %v457, %v457
  %v523 = vpack.c.b16 %v458, %v458
  %v524 = vpack.c.b16 %v459, %v459
  %v525 = vpack.c.b16 %v460, %v460
  %v526 = vpack.c.b16 %v461, %v461
  %v527 = vpack.c.b16 %v462, %v462
  %v528 = vpack.c.b16 %v463, %v463
  %v529 = vpack.c.b16 %v464, %v464
  %v530 = vpack.c.b16 %v465, %v465
  %v531 = vpack.c.b16 %v466, %v466
  %v532 = vpack.c.b16 %v467, %v467
  %v533 = vpack.c.b16 %v468, %v468
  %v807 = vunpack.c.l.b16 %v77
  %v808 = vunpack.c.l.b16 %v78
  %v809 = vunpack.c.l.b16 %v79
  %v810 = vunpack.c.l.b16 %v80
  %v811 = vunpack.c.l.b16 %v81
  %v812 = vunpack.c.l.b16 %v82
  %v813 = vunpack.c.l.b16 %v83
  %v814 = vunpack.c.l.b16 %v84
  %v815 = vunpack.c.l.b16 %v85
  %v816 = vunpack.c.l.b16 %v86
  %v817 = vunpack.c.l.b16 %v87
  %v818 = vunpack.c.l.b16 %v88
  %v819 = vunpack.c.l.b16 %v89
  %v820 = vunpack.c.l.b16 %v90
  %v821 = vunpack.c.l.b16 %v91
  %v822 = vunpack.c.l.b16 %v92
  %v823 = vunpack.c.l.b16 %v93
  %v824 = vunpack.c.l.b16 %v94
  %v825 = vunpack.c.l.b16 %v95
  %v826 = vunpack.c.l.b16 %v96
  %v827 = vunpack.c.l.b16 %v97
  %v828 = vunpack.c.l.b16 %v98
  %v829 = vunpack.c.l.b16 %v99
  %v830 = vunpack.c.l.b16 %v100
  %v831 = vunpack.c.l.b16 %v101
  %v832 = vunpack.c.l.b16 %v102
  %v833 = vunpack.c.l.b16 %v103
  %v834 = vunpack.c.l.b16 %v104
  %v835 = vunpack.c.l.b16 %v105
  %v836 = vunpack.c.l.b16 %v106
  %v837 = vunpack.c.l.b16 %v107
  %v838 = vunpack.c.l.b16 %v108
  %v839 = vunpack.c.l.b16 %v109
  %v840 = vunpack.c.l.b16 %v110
  %v841 = vunpack.c.l.b16 %v111
  %v842 = vunpack.c.l.b16 %v112
  %v843 = vunpack.c.l.b16 %v113
  %v844 = vunpack.c.l.b16 %v114
  %v845 = vunpack.c.l.b16 %v115
  %v846 = vunpack.c.l.b16 %v116
  %v847 = vunpack.c.l.b16 %v117
  %v848 = vunpack.c.l.b16 %v118
  %v849 = vunpack.c.l.b16 %v119
  %v850 = vunpack.c.l.b16 %v120
  %v851 = vunpack.c.l.b16 %v121
  %v852 = vunpack.c.l.b16 %v122
  %v853 = vunpack.c.l.b16 %v123
  %v854 = vunpack.c.l.b16 %v124
  %v855 = vunpack.c.l.b16 %v125
  %v856 = vunpack.c.l.b16 %v126
  %v857 = vunpack.c.l.b16 %v127
  %v858 = vunpack.c.l.b16 %v128
  %v859 = vunpack.c.l.b16 %v129
  %v860 = vunpack.c.l.b16 %v130
  %v861 = vunpack.c.l.b16 %v131
  %v862 = vunpack.c.l.b16 %v132
  %v863 = vunpack.c.l.b16 %v133
  %v864 = vunpack.c.l.b16 %v134
  %v865 = vunpack.c.l.b16 %v135
  %v866 = vunpack.c.l.b16 %v136
  %v867 = vunpack.c.l.b16 %v137
  %v868 = vunpack.c.l.b16 %v138
  %v869 = vunpack.c.l.b16 %v139
  %v870 = vunpack.c.l.b16 %v140
  %v871 = vunpack.c.l.b16 %v141
  %v872 = vunpack.c.l.b16 %v142
  %v873 = vunpack.c.l.b16 %v143
  %v874 = vunpack.c.l.b16 %v144
  %v875 = vunpack.c.l.b16 %v145
  %v876 = vunpack.c.l.b16 %v146
  %v877 = vunpack.c.l.b16 %v147
  %v878 = vunpack.c.l.b16 %v148
  %v879 = vunpack.c.l.b16 %v149
  %v880 = vunpack.c.l.b16 %v150
  %v881 = vunpack.c.l.b16 %v151
  %v882 = vunpack.c.l.b16 %v152
  %v883 = vunpack.c.l.b16 %v153
  %v884 = vunpack.c.l.b16 %v154
  %v885 = vunpack.c.l.b16 %v155
  %v886 = vunpack.c.l.b16 %v156
  %v887 = vunpack.c.l.b16 %v157
  %v888 = vunpack.c.l.b16 %v158
  %v889 = vunpack.c.l.b16 %v159
  %v890 = vunpack.c.l.b16 %v160
  %v891 = vunpack.c.l.b16 %v161
  %v892 = vunpack.c.l.b16 %v162
  %v893 = vunpack.c.l.b16 %v163
  %v894 = vunpack.c.l.b16 %v164
  %v895 = vunpack.c.l.b16 %v165
  %v896 = vunpack.c.l.b16 %v166
  %v897 = vunpack.c.l.b16 %v167
  %v898 = vunpack.c.l.b16 %v168
  %v899 = vunpack.c.l.b16 %v169
  %v900 = vunpack.c.l.b16 %v170
  %v901 = vunpack.c.l.b16 %v171
  %v902 = vunpack.c.l.b16 %v172
  %v903 = vunpack.c.l.b16 %v173
  %v904 = vunpack.c.l.b16 %v174
  %v905 = vunpack.c.l.b16 %v175
  %v906 = vunpack.c.l.b16 %v176
  %v907 = vunpack.c.l.b16 %v177
  %v908 = vunpack.c.l.b16 %v178
  %v909 = vunpack.c.l.b16 %v179
  %v910 = vunpack.c.l.b16 %v180
  %v911 = vunpack.c.l.b16 %v181
  %v912 = vunpack.c.l.b16 %v182
  %v913 = vunpack.c.l.b16 %v183
  %v914 = vunpack.c.l.b16 %v184
  %v915 = vunpack.c.l.b16 %v185
  %v916 = vunpack.c.l.b16 %v186
  %v917 = vunpack.c.l.b16 %v187
  %v918 = vunpack.c.l.b16 %v188
  %v919 = vunpack.c.l.b16 %v189
  %v920 = vunpack.c.l.b16 %v190
  %v921 = vunpack.c.l.b16 %v191
  %v922 = vunpack.c.l.b16 %v192
  %v923 = vunpack.c.l.b16 %v193
  %v924 = vunpack.c.l.b16 %v194
  %v925 = vunpack.c.l.b16 %v195
  %v926 = vunpack.c.l.b16 %v196
  %v927 = vunpack.c.l.b16 %v197
  %v928 = vunpack.c.l.b16 %v198
  %v929 = vunpack.c.l.b16 %v199
  %v930 = vunpack.c.l.b16 %v200
  %v931 = vunpack.c.l.b16 %v201
  %v932 = vunpack.c.l.b16 %v202
  %v933 = vunpack.c.l.b16 %v203
  %v934 = vunpack.c.l.b16 %v204
  %v935 = vunpack.c.l.b16 %v205
  %v936 = vunpack.c.l.b16 %v206
  %v937 = vunpack.c.l.b16 %v207
  %v938 = vunpack.c.l.b16 %v208
  %v939 = vunpack.c.l.b16 %v209
  %v940 = vunpack.c.l.b16 %v210
  %v941 = vunpack.c.l.b16 %v211
  %v942 = vunpack.c.l.b16 %v212
  %v943 = vunpack.c.l.b16 %v213
  %v944 = vunpack.c.l.b16 %v214
  %v945 = vunpack.c.l.b16 %v215
  %v946 = vunpack.c.l.b16 %v216
  %v947 = vunpack.c.l.b16 %v217
  %v948 = vunpack.c.l.b16 %v218
  %v949 = vunpack.c.l.b16 %v219
  %v950 = vunpack.c.l.b16 %v220
  %v951 = vunpack.c.l.b16 %v221
  %v952 = vunpack.c.l.b16 %v222
  %v953 = vunpack.c.l.b16 %v223
  %v954 = vunpack.c.l.b16 %v224
  %v955 = vunpack.c.l.b16 %v225
  %v956 = vunpack.c.l.b16 %v226
  %v957 = vunpack.c.l.b16 %v227
  %v958 = vunpack.c.l.b16 %v228
  %v959 = vunpack.c.l.b16 %v229
  %v960 = vunpack.c.l.b16 %v230
  %v961 = vunpack.c.l.b16 %v231
  %v962 = vunpack.c.l.b16 %v232
  %v963 = vunpack.c.l.b16 %v233
  %v964 = vunpack.c.l.b16 %v234
  %v965 = vunpack.c.l.b16 %v235
  %v966 = vunpack.c.l.b16 %v236
  %v967 = vunpack.c.l.b16 %v237
  %v968 = vunpack.c.l.b16 %v238
  %v969 = vunpack.c.l.b16 %v239
  %v970 = vunpack.c.l.b16 %v240
  %v971 = vunpack.c.l.b16 %v241
  %v972 = vunpack.c.l.b16 %v242
  %v973 = vunpack.c.l.b16 %v243
  %v974 = vunpack.c.l.b16 %v244
  %v975 = vunpack.c.l.b16 %v245
  %v976 = vunpack.c.l.b16 %v246
  %v977 = vunpack.c.l.b16 %v247
  %v978 = vunpack.c.l.b16 %v248
  %v979 = vunpack.c.l.b16 %v249
  %v980 = vunpack.c.l.b16 %v250
  %v981 = vunpack.c.l.b16 %v251
  %v982 = vunpack.c.l.b16 %v252
  %v983 = vunpack.c.l.b16 %v253
  %v984 = vunpack.c.l.b16 %v254
  %v985 = vunpack.c.l.b16 %v255
  %v986 = vunpack.c.l.b16 %v256
  %v987 = vunpack.c.l.b16 %v257
  %v988 = vunpack.c.l.b16 %v258
  %v989 = vunpack.c.l.b16 %v259
  %v990 = vunpack.c.l.b16 %v260
  %v991 = vunpack.c.l.b16 %v261
  %v992 = vunpack.c.l.b16 %v262
  %v993 = vunpack.c.l.b16 %v263
  %v994 = vunpack.c.l.b16 %v264
  %v995 = vunpack.c.l.b16 %v265
  %v996 = vunpack.c.l.b16 %v266
  %v997 = vunpack.c.l.b16 %v267
  %v998 = vunpack.c.l.b16 %v268
  %v999 = vunpack.c.l.b16 %v269
  %v1000 = vunpack.c.l.b16 %v270
  %v1001 = vunpack.c.l.b16 %v271
  %v1002 = vunpack.c.l.b16 %v272
  %v1003 = vunpack.c.l.b16 %v273
  %v1004 = vunpack.c.l.b16 %v274
  %v1005 = vunpack.c.l.b16 %v275
  %v1006 = vunpack.c.l.b16 %v276
  %v1007 = vunpack.c.l.b16 %v277
  %v1008 = vunpack.c.l.b16 %v278
  %v1009 = vunpack.c.l.b16 %v279
  %v1010 = vunpack.c.l.b16 %v280
  %v1011 = vunpack.c.l.b16 %v281
  %v1012 = vunpack.c.l.b16 %v282
  %v1013 = vunpack.c.l.b16 %v283
  %v1014 = vunpack.c.l.b16 %v284
  %v1015 = vpack.c.b16 %v808, %v807
  %v1016 = vpack.c.b16 %v810, %v809
  %v1017 = vpack.c.b16 %v812, %v811
  %v1018 = vpack.c.b16 %v814, %v813
  %v1019 = vpack.c.b16 %v816, %v815
  %v1020 = vpack.c.b16 %v818, %v817
  %v1021 = vpack.c.b16 %v820, %v819
  %v1022 = vpack.c.b16 %v822, %v821
  %v1023 = vpack.c.b16 %v824, %v823
  %v1024 = vpack.c.b16 %v826, %v825
  %v1025 = vpack.c.b16 %v828, %v827
  %v1026 = vpack.c.b16 %v830, %v829
  %v1027 = vpack.c.b16 %v832, %v831
  %v1028 = vpack.c.b16 %v834, %v833
  %v1029 = vpack.c.b16 %v836, %v835
  %v1030 = vpack.c.b16 %v838, %v837
  %v1031 = vpack.c.b16 %v840, %v839
  %v1032 = vpack.c.b16 %v842, %v841
  %v1033 = vpack.c.b16 %v844, %v843
  %v1034 = vpack.c.b16 %v846, %v845
  %v1035 = vpack.c.b16 %v848, %v847
  %v1036 = vpack.c.b16 %v850, %v849
  %v1037 = vpack.c.b16 %v852, %v851
  %v1038 = vpack.c.b16 %v854, %v853
  %v1039 = vpack.c.b16 %v856, %v855
  %v1040 = vpack.c.b16 %v858, %v857
  %v1041 = vpack.c.b16 %v860, %v859
  %v1042 = vpack.c.b16 %v862, %v861
  %v1043 = vpack.c.b16 %v864, %v863
  %v1044 = vpack.c.b16 %v866, %v865
  %v1045 = vpack.c.b16 %v868, %v867
  %v1046 = vpack.c.b16 %v870, %v869
  %v1047 = vpack.c.b16 %v872, %v871
  %v1048 = vpack.c.b16 %v874, %v873
  %v1049 = vpack.c.b16 %v876, %v875
  %v1050 = vpack.c.b16 %v878, %v877
  %v1051 = vpack.c.b16 %v880, %v879
  %v1052 = vpack.c.b16 %v882, %v881
  %v1053 = vpack.c.b16 %v884, %v883
  %v1054 = vpack.c.b16 %v886, %v885
  %v1055 = vpack.c.b16 %v888, %v887
  %v1056 = vpack.c.b16 %v890, %v889
  %v1057 = vpack.c.b16 %v892, %v891
  %v1058 = vpack.c.b16 %v894, %v893
  %v1059 = vpack.c.b16 %v896, %v895
  %v1060 = vpack.c.b16 %v898, %v897
  %v1061 = vpack.c.b16 %v900, %v899
  %v1062 = vpack.c.b16 %v902, %v901
  %v1063 = vpack.c.b16 %v904, %v903
  %v1064 = vpack.c.b16 %v906, %v905
  %v1065 = vpack.c.b16 %v908, %v907
  %v1066 = vpack.c.b16 %v910, %v909
  %v1067 = vpack.c.b16 %v912, %v911
  %v1068 = vpack.c.b16 %v914, %v913
  %v1069 = vpack.c.b16 %v916, %v915
  %v1070 = vpack.c.b16 %v918, %v917
  %v1071 = vpack.c.b16 %v920, %v919
  %v1072 = vpack.c.b16 %v922, %v921
  %v1073 = vpack.c.b16 %v924, %v923
  %v1074 = vpack.c.b16 %v926, %v925
  %v1075 = vpack.c.b16 %v928, %v927
  %v1076 = vpack.c.b16 %v930, %v929
  %v1077 = vpack.c.b16 %v932, %v931
  %v1078 = vpack.c.b16 %v934, %v933
  %v1079 = vpack.c.b16 %v936, %v935
  %v1080 = vpack.c.b16 %v938, %v937
  %v1081 = vpack.c.b16 %v940, %v939
  %v1082 = vpack.c.b16 %v942, %v941
  %v1083 = vpack.c.b16 %v944, %v943
  %v1084 = vpack.c.b16 %v946, %v945
  %v1085 = vpack.c.b16 %v948, %v947
  %v1086 = vpack.c.b16 %v950, %v949
  %v1087 = vpack.c.b16 %v952, %v951
  %v1088 = vpack.c.b16 %v954, %v953
  %v1089 = vpack.c.b16 %v956, %v955
  %v1090 = vpack.c.b16 %v958, %v957
  %v1091 = vpack.c.b16 %v960, %v959
  %v1092 = vpack.c.b16 %v962, %v961
  %v1093 = vpack.c.b16 %v964, %v963
  %v1094 = vpack.c.b16 %v966, %v965
  %v1095 = vpack.c.b16 %v968, %v967
  %v1096 = vpack.c.b16 %v970, %v969
  %v1097 = vpack.c.b16 %v972, %v971
  %v1098 = vpack.c.b16 %v974, %v973
  %v1099 = vpack.c.b16 %v976, %v975
  %v1100 = vpack.c.b16 %v978, %v977
  %v1101 = vpack.c.b16 %v980, %v979
  %v1102 = vpack.c.b16 %v982, %v981
  %v1103 = vpack.c.b16 %v984, %v983
  %v1104 = vpack.c.b16 %v986, %v985
  %v1105 = vpack.c.b16 %v988, %v987
  %v1106 = vpack.c.b16 %v990, %v989
  %v1107 = vpack.c.b16 %v992, %v991
  %v1108 = vpack.c.b16 %v994, %v993
  %v1109 = vpack.c.b16 %v996, %v995
  %v1110 = vpack.c.b16 %v998, %v997
  %v1111 = vpack.c.b16 %v1000, %v999
  %v1112 = vpack.c.b16 %v1002, %v1001
  %v1113 = vpack.c.b16 %v1004, %v1003
  %v1114 = vpack.c.b16 %v1006, %v1005
  %v1115 = vpack.c.b16 %v1008, %v1007
  %v1116 = vpack.c.b16 %v1010, %v1009
  %v1117 = vpack.c.b16 %v1012, %v1011
  %v1118 = vpack.c.b16 %v1014, %v1013
  %1223 = vmatpush.bf16.msra.mxu0 %v1022
  %1224 = vmatpush.bf16.msra.mxu0 %v1021
  %1225 = vmatpush.bf16.msra.mxu0 %v1020
  %1226 = vmatpush.bf16.msra.mxu0 %v1019
  %1227 = vmatpush.bf16.msra.mxu0 %v1018
  %1228 = vmatpush.bf16.msra.mxu0 %v1017
  %1229 = vmatpush.bf16.msra.mxu0 %v1016
  %1230 = vmatpush.bf16.msra.mxu0 %v1015
  %1231 = vmatmul.bf16.gmra.mxu0 %v469
  %v1232 = vpop.f32.mrf.mxu0
  %v1233 = vadd.f32 %v287, %v1232
  %v1234 = vpop.f32.mrf.mxu0
  %v1235 = vadd.f32 %v287, %v1234
  %1236 = vmatmul.bf16.gmra.mxu0 %v482
  %v1237 = vpop.f32.mrf.mxu0
  %v1238 = vadd.f32 %v287, %v1237
  %v1239 = vpop.f32.mrf.mxu0
  %v1240 = vadd.f32 %v287, %v1239
  %1241 = vmatmul.bf16.gmra.mxu0 %v495
  %v1242 = vpop.f32.mrf.mxu0
  %v1243 = vadd.f32 %v287, %v1242
  %v1244 = vpop.f32.mrf.mxu0
  %v1245 = vadd.f32 %v287, %v1244
  %1246 = vmatmul.bf16.gmra.mxu0 %v508
  %v1247 = vpop.f32.mrf.mxu0
  %v1248 = vadd.f32 %v287, %v1247
  %v1249 = vpop.f32.mrf.mxu0
  %v1250 = vadd.f32 %v287, %v1249
  %1251 = vmatmul.bf16.gmra.mxu0 %v521
  %v1252 = vpop.f32.mrf.mxu0
  %v1253 = vadd.f32 %v287, %v1252
  %v1254 = vpop.f32.mrf.mxu0
  %1255 = vdwg.mxu0
  %1256 = vmatpush.bf16.msra.mxu0 %v1030
  %1257 = vmatpush.bf16.msra.mxu0 %v1029
  %1258 = vmatpush.bf16.msra.mxu0 %v1028
  %1259 = vmatpush.bf16.msra.mxu0 %v1027
  %1260 = vmatpush.bf16.msra.mxu0 %v1026
  %1261 = vmatpush.bf16.msra.mxu0 %v1025
  %1262 = vmatpush.bf16.msra.mxu0 %v1024
  %1263 = vmatpush.bf16.msra.mxu0 %v1023
  %1264 = vmatmul.bf16.gmra.mxu0 %v470
  %v1265 = vpop.f32.mrf.mxu0
  %v1266 = vadd.f32 %v1233, %v1265
  %v1267 = vpop.f32.mrf.mxu0
  %v1268 = vadd.f32 %v1235, %v1267
  %1269 = vmatmul.bf16.gmra.mxu0 %v483
  %v1270 = vpop.f32.mrf.mxu0
  %v1271 = vadd.f32 %v1238, %v1270
  %v1272 = vpop.f32.mrf.mxu0
  %v1273 = vadd.f32 %v1240, %v1272
  %1274 = vmatmul.bf16.gmra.mxu0 %v496
  %v1275 = vpop.f32.mrf.mxu0
  %v1276 = vadd.f32 %v1243, %v1275
  %v1277 = vpop.f32.mrf.mxu0
  %v1278 = vadd.f32 %v1245, %v1277
  %1279 = vmatmul.bf16.gmra.mxu0 %v509
  %v1280 = vpop.f32.mrf.mxu0
  %v1281 = vadd.f32 %v1248, %v1280
  %v1282 = vpop.f32.mrf.mxu0
  %v1283 = vadd.f32 %v1250, %v1282
  %1284 = vmatmul.bf16.gmra.mxu0 %v522
  %v1285 = vpop.f32.mrf.mxu0
  %v1286 = vadd.f32 %v1253, %v1285
  %v1287 = vpop.f32.mrf.mxu0
  %1288 = vdwg.mxu0
  %1289 = vmatpush.bf16.msra.mxu0 %v1038
  %1290 = vmatpush.bf16.msra.mxu0 %v1037
  %1291 = vmatpush.bf16.msra.mxu0 %v1036
  %1292 = vmatpush.bf16.msra.mxu0 %v1035
  %1293 = vmatpush.bf16.msra.mxu0 %v1034
  %1294 = vmatpush.bf16.msra.mxu0 %v1033
  %1295 = vmatpush.bf16.msra.mxu0 %v1032
  %1296 = vmatpush.bf16.msra.mxu0 %v1031
  %1297 = vmatmul.bf16.gmra.mxu0 %v471
  %v1298 = vpop.f32.mrf.mxu0
  %v1299 = vadd.f32 %v1266, %v1298
  %v1300 = vpop.f32.mrf.mxu0
  %v1301 = vadd.f32 %v1268, %v1300
  %1302 = vmatmul.bf16.gmra.mxu0 %v484
  %v1303 = vpop.f32.mrf.mxu0
  %v1304 = vadd.f32 %v1271, %v1303
  %v1305 = vpop.f32.mrf.mxu0
  %v1306 = vadd.f32 %v1273, %v1305
  %1307 = vmatmul.bf16.gmra.mxu0 %v497
  %v1308 = vpop.f32.mrf.mxu0
  %v1309 = vadd.f32 %v1276, %v1308
  %v1310 = vpop.f32.mrf.mxu0
  %v1311 = vadd.f32 %v1278, %v1310
  %1312 = vmatmul.bf16.gmra.mxu0 %v510
  %v1313 = vpop.f32.mrf.mxu0
  %v1314 = vadd.f32 %v1281, %v1313
  %v1315 = vpop.f32.mrf.mxu0
  %v1316 = vadd.f32 %v1283, %v1315
  %1317 = vmatmul.bf16.gmra.mxu0 %v523
  %v1318 = vpop.f32.mrf.mxu0
  %v1319 = vadd.f32 %v1286, %v1318
  %v1320 = vpop.f32.mrf.mxu0
  %1321 = vdwg.mxu0
  %1322 = vmatpush.bf16.msra.mxu0 %v1046
  %1323 = vmatpush.bf16.msra.mxu0 %v1045
  %1324 = vmatpush.bf16.msra.mxu0 %v1044
  %1325 = vmatpush.bf16.msra.mxu0 %v1043
  %1326 = vmatpush.bf16.msra.mxu0 %v1042
  %1327 = vmatpush.bf16.msra.mxu0 %v1041
  %1328 = vmatpush.bf16.msra.mxu0 %v1040
  %1329 = vmatpush.bf16.msra.mxu0 %v1039
  %1330 = vmatmul.bf16.gmra.mxu0 %v472
  %v1331 = vpop.f32.mrf.mxu0
  %v1332 = vadd.f32 %v1299, %v1331
  %v1333 = vpop.f32.mrf.mxu0
  %v1334 = vadd.f32 %v1301, %v1333
  %1335 = vmatmul.bf16.gmra.mxu0 %v485
  %v1336 = vpop.f32.mrf.mxu0
  %v1337 = vadd.f32 %v1304, %v1336
  %v1338 = vpop.f32.mrf.mxu0
  %v1339 = vadd.f32 %v1306, %v1338
  %1340 = vmatmul.bf16.gmra.mxu0 %v498
  %v1341 = vpop.f32.mrf.mxu0
  %v1342 = vadd.f32 %v1309, %v1341
  %v1343 = vpop.f32.mrf.mxu0
  %v1344 = vadd.f32 %v1311, %v1343
  %1345 = vmatmul.bf16.gmra.mxu0 %v511
  %v1346 = vpop.f32.mrf.mxu0
  %v1347 = vadd.f32 %v1314, %v1346
  %v1348 = vpop.f32.mrf.mxu0
  %v1349 = vadd.f32 %v1316, %v1348
  %1350 = vmatmul.bf16.gmra.mxu0 %v524
  %v1351 = vpop.f32.mrf.mxu0
  %v1352 = vadd.f32 %v1319, %v1351
  %v1353 = vpop.f32.mrf.mxu0
  %1354 = vdwg.mxu0
  %1355 = vmatpush.bf16.msra.mxu0 %v1054
  %1356 = vmatpush.bf16.msra.mxu0 %v1053
  %1357 = vmatpush.bf16.msra.mxu0 %v1052
  %1358 = vmatpush.bf16.msra.mxu0 %v1051
  %1359 = vmatpush.bf16.msra.mxu0 %v1050
  %1360 = vmatpush.bf16.msra.mxu0 %v1049
  %1361 = vmatpush.bf16.msra.mxu0 %v1048
  %1362 = vmatpush.bf16.msra.mxu0 %v1047
  %1363 = vmatmul.bf16.gmra.mxu0 %v473
  %v1364 = vpop.f32.mrf.mxu0
  %v1365 = vadd.f32 %v1332, %v1364
  %v1366 = vpop.f32.mrf.mxu0
  %v1367 = vadd.f32 %v1334, %v1366
  %1368 = vmatmul.bf16.gmra.mxu0 %v486
  %v1369 = vpop.f32.mrf.mxu0
  %v1370 = vadd.f32 %v1337, %v1369
  %v1371 = vpop.f32.mrf.mxu0
  %v1372 = vadd.f32 %v1339, %v1371
  %1373 = vmatmul.bf16.gmra.mxu0 %v499
  %v1374 = vpop.f32.mrf.mxu0
  %v1375 = vadd.f32 %v1342, %v1374
  %v1376 = vpop.f32.mrf.mxu0
  %v1377 = vadd.f32 %v1344, %v1376
  %1378 = vmatmul.bf16.gmra.mxu0 %v512
  %v1379 = vpop.f32.mrf.mxu0
  %v1380 = vadd.f32 %v1347, %v1379
  %v1381 = vpop.f32.mrf.mxu0
  %v1382 = vadd.f32 %v1349, %v1381
  %1383 = vmatmul.bf16.gmra.mxu0 %v525
  %v1384 = vpop.f32.mrf.mxu0
  %v1385 = vadd.f32 %v1352, %v1384
  %v1386 = vpop.f32.mrf.mxu0
  %1387 = vdwg.mxu0
  %1388 = vmatpush.bf16.msra.mxu0 %v1062
  %1389 = vmatpush.bf16.msra.mxu0 %v1061
  %1390 = vmatpush.bf16.msra.mxu0 %v1060
  %1391 = vmatpush.bf16.msra.mxu0 %v1059
  %1392 = vmatpush.bf16.msra.mxu0 %v1058
  %1393 = vmatpush.bf16.msra.mxu0 %v1057
  %1394 = vmatpush.bf16.msra.mxu0 %v1056
  %1395 = vmatpush.bf16.msra.mxu0 %v1055
  %1396 = vmatmul.bf16.gmra.mxu0 %v474
  %v1397 = vpop.f32.mrf.mxu0
  %v1398 = vadd.f32 %v1365, %v1397
  %v1399 = vpop.f32.mrf.mxu0
  %v1400 = vadd.f32 %v1367, %v1399
  %1401 = vmatmul.bf16.gmra.mxu0 %v487
  %v1402 = vpop.f32.mrf.mxu0
  %v1403 = vadd.f32 %v1370, %v1402
  %v1404 = vpop.f32.mrf.mxu0
  %v1405 = vadd.f32 %v1372, %v1404
  %1406 = vmatmul.bf16.gmra.mxu0 %v500
  %v1407 = vpop.f32.mrf.mxu0
  %v1408 = vadd.f32 %v1375, %v1407
  %v1409 = vpop.f32.mrf.mxu0
  %v1410 = vadd.f32 %v1377, %v1409
  %1411 = vmatmul.bf16.gmra.mxu0 %v513
  %v1412 = vpop.f32.mrf.mxu0
  %v1413 = vadd.f32 %v1380, %v1412
  %v1414 = vpop.f32.mrf.mxu0
  %v1415 = vadd.f32 %v1382, %v1414
  %1416 = vmatmul.bf16.gmra.mxu0 %v526
  %v1417 = vpop.f32.mrf.mxu0
  %v1418 = vadd.f32 %v1385, %v1417
  %v1419 = vpop.f32.mrf.mxu0
  %1420 = vdwg.mxu0
  %1421 = vmatpush.bf16.msra.mxu0 %v1070
  %1422 = vmatpush.bf16.msra.mxu0 %v1069
  %1423 = vmatpush.bf16.msra.mxu0 %v1068
  %1424 = vmatpush.bf16.msra.mxu0 %v1067
  %1425 = vmatpush.bf16.msra.mxu0 %v1066
  %1426 = vmatpush.bf16.msra.mxu0 %v1065
  %1427 = vmatpush.bf16.msra.mxu0 %v1064
  %1428 = vmatpush.bf16.msra.mxu0 %v1063
  %1429 = vmatmul.bf16.gmra.mxu0 %v475
  %v1430 = vpop.f32.mrf.mxu0
  %v1431 = vadd.f32 %v1398, %v1430
  %v1432 = vpop.f32.mrf.mxu0
  %v1433 = vadd.f32 %v1400, %v1432
  %1434 = vmatmul.bf16.gmra.mxu0 %v488
  %v1435 = vpop.f32.mrf.mxu0
  %v1436 = vadd.f32 %v1403, %v1435
  %v1437 = vpop.f32.mrf.mxu0
  %v1438 = vadd.f32 %v1405, %v1437
  %1439 = vmatmul.bf16.gmra.mxu0 %v501
  %v1440 = vpop.f32.mrf.mxu0
  %v1441 = vadd.f32 %v1408, %v1440
  %v1442 = vpop.f32.mrf.mxu0
  %v1443 = vadd.f32 %v1410, %v1442
  %1444 = vmatmul.bf16.gmra.mxu0 %v514
  %v1445 = vpop.f32.mrf.mxu0
  %v1446 = vadd.f32 %v1413, %v1445
  %v1447 = vpop.f32.mrf.mxu0
  %v1448 = vadd.f32 %v1415, %v1447
  %1449 = vmatmul.bf16.gmra.mxu0 %v527
  %v1450 = vpop.f32.mrf.mxu0
  %v1451 = vadd.f32 %v1418, %v1450
  %v1452 = vpop.f32.mrf.mxu0
  %1453 = vdwg.mxu0
  %1454 = vmatpush.bf16.msra.mxu0 %v1078
  %1455 = vmatpush.bf16.msra.mxu0 %v1077
  %1456 = vmatpush.bf16.msra.mxu0 %v1076
  %1457 = vmatpush.bf16.msra.mxu0 %v1075
  %1458 = vmatpush.bf16.msra.mxu0 %v1074
  %1459 = vmatpush.bf16.msra.mxu0 %v1073
  %1460 = vmatpush.bf16.msra.mxu0 %v1072
  %1461 = vmatpush.bf16.msra.mxu0 %v1071
  %1462 = vmatmul.bf16.gmra.mxu0 %v476
  %v1463 = vpop.f32.mrf.mxu0
  %v1464 = vadd.f32 %v1431, %v1463
  %v1465 = vpop.f32.mrf.mxu0
  %v1466 = vadd.f32 %v1433, %v1465
  %1467 = vmatmul.bf16.gmra.mxu0 %v489
  %v1468 = vpop.f32.mrf.mxu0
  %v1469 = vadd.f32 %v1436, %v1468
  %v1470 = vpop.f32.mrf.mxu0
  %v1471 = vadd.f32 %v1438, %v1470
  %1472 = vmatmul.bf16.gmra.mxu0 %v502
  %v1473 = vpop.f32.mrf.mxu0
  %v1474 = vadd.f32 %v1441, %v1473
  %v1475 = vpop.f32.mrf.mxu0
  %v1476 = vadd.f32 %v1443, %v1475
  %1477 = vmatmul.bf16.gmra.mxu0 %v515
  %v1478 = vpop.f32.mrf.mxu0
  %v1479 = vadd.f32 %v1446, %v1478
  %v1480 = vpop.f32.mrf.mxu0
  %v1481 = vadd.f32 %v1448, %v1480
  %1482 = vmatmul.bf16.gmra.mxu0 %v528
  %v1483 = vpop.f32.mrf.mxu0
  %v1484 = vadd.f32 %v1451, %v1483
  %v1485 = vpop.f32.mrf.mxu0
  %1486 = vdwg.mxu0
  %1487 = vmatpush.bf16.msra.mxu0 %v1086
  %1488 = vmatpush.bf16.msra.mxu0 %v1085
  %1489 = vmatpush.bf16.msra.mxu0 %v1084
  %1490 = vmatpush.bf16.msra.mxu0 %v1083
  %1491 = vmatpush.bf16.msra.mxu0 %v1082
  %1492 = vmatpush.bf16.msra.mxu0 %v1081
  %1493 = vmatpush.bf16.msra.mxu0 %v1080
  %1494 = vmatpush.bf16.msra.mxu0 %v1079
  %1495 = vmatmul.bf16.gmra.mxu0 %v477
  %v1496 = vpop.f32.mrf.mxu0
  %v1497 = vadd.f32 %v1464, %v1496
  %v1498 = vpop.f32.mrf.mxu0
  %v1499 = vadd.f32 %v1466, %v1498
  %1500 = vmatmul.bf16.gmra.mxu0 %v490
  %v1501 = vpop.f32.mrf.mxu0
  %v1502 = vadd.f32 %v1469, %v1501
  %v1503 = vpop.f32.mrf.mxu0
  %v1504 = vadd.f32 %v1471, %v1503
  %1505 = vmatmul.bf16.gmra.mxu0 %v503
  %v1506 = vpop.f32.mrf.mxu0
  %v1507 = vadd.f32 %v1474, %v1506
  %v1508 = vpop.f32.mrf.mxu0
  %v1509 = vadd.f32 %v1476, %v1508
  %1510 = vmatmul.bf16.gmra.mxu0 %v516
  %v1511 = vpop.f32.mrf.mxu0
  %v1512 = vadd.f32 %v1479, %v1511
  %v1513 = vpop.f32.mrf.mxu0
  %v1514 = vadd.f32 %v1481, %v1513
  %1515 = vmatmul.bf16.gmra.mxu0 %v529
  %v1516 = vpop.f32.mrf.mxu0
  %v1517 = vadd.f32 %v1484, %v1516
  %v1518 = vpop.f32.mrf.mxu0
  %1519 = vdwg.mxu0
  %1520 = vmatpush.bf16.msra.mxu0 %v1094
  %1521 = vmatpush.bf16.msra.mxu0 %v1093
  %1522 = vmatpush.bf16.msra.mxu0 %v1092
  %1523 = vmatpush.bf16.msra.mxu0 %v1091
  %1524 = vmatpush.bf16.msra.mxu0 %v1090
  %1525 = vmatpush.bf16.msra.mxu0 %v1089
  %1526 = vmatpush.bf16.msra.mxu0 %v1088
  %1527 = vmatpush.bf16.msra.mxu0 %v1087
  %1528 = vmatmul.bf16.gmra.mxu0 %v478
  %v1529 = vpop.f32.mrf.mxu0
  %v1530 = vadd.f32 %v1497, %v1529
  %v1531 = vpop.f32.mrf.mxu0
  %v1532 = vadd.f32 %v1499, %v1531
  %1533 = vmatmul.bf16.gmra.mxu0 %v491
  %v1534 = vpop.f32.mrf.mxu0
  %v1535 = vadd.f32 %v1502, %v1534
  %v1536 = vpop.f32.mrf.mxu0
  %v1537 = vadd.f32 %v1504, %v1536
  %1538 = vmatmul.bf16.gmra.mxu0 %v504
  %v1539 = vpop.f32.mrf.mxu0
  %v1540 = vadd.f32 %v1507, %v1539
  %v1541 = vpop.f32.mrf.mxu0
  %v1542 = vadd.f32 %v1509, %v1541
  %1543 = vmatmul.bf16.gmra.mxu0 %v517
  %v1544 = vpop.f32.mrf.mxu0
  %v1545 = vadd.f32 %v1512, %v1544
  %v1546 = vpop.f32.mrf.mxu0
  %v1547 = vadd.f32 %v1514, %v1546
  %1548 = vmatmul.bf16.gmra.mxu0 %v530
  %v1549 = vpop.f32.mrf.mxu0
  %v1550 = vadd.f32 %v1517, %v1549
  %v1551 = vpop.f32.mrf.mxu0
  %1552 = vdwg.mxu0
  %1553 = vmatpush.bf16.msra.mxu0 %v1102
  %1554 = vmatpush.bf16.msra.mxu0 %v1101
  %1555 = vmatpush.bf16.msra.mxu0 %v1100
  %1556 = vmatpush.bf16.msra.mxu0 %v1099
  %1557 = vmatpush.bf16.msra.mxu0 %v1098
  %1558 = vmatpush.bf16.msra.mxu0 %v1097
  %1559 = vmatpush.bf16.msra.mxu0 %v1096
  %1560 = vmatpush.bf16.msra.mxu0 %v1095
  %1561 = vmatmul.bf16.gmra.mxu0 %v479
  %v1562 = vpop.f32.mrf.mxu0
  %v1563 = vadd.f32 %v1530, %v1562
  %v1564 = vpop.f32.mrf.mxu0
  %v1565 = vadd.f32 %v1532, %v1564
  %1566 = vmatmul.bf16.gmra.mxu0 %v492
  %v1567 = vpop.f32.mrf.mxu0
  %v1568 = vadd.f32 %v1535, %v1567
  %v1569 = vpop.f32.mrf.mxu0
  %v1570 = vadd.f32 %v1537, %v1569
  %1571 = vmatmul.bf16.gmra.mxu0 %v505
  %v1572 = vpop.f32.mrf.mxu0
  %v1573 = vadd.f32 %v1540, %v1572
  %v1574 = vpop.f32.mrf.mxu0
  %v1575 = vadd.f32 %v1542, %v1574
  %1576 = vmatmul.bf16.gmra.mxu0 %v518
  %v1577 = vpop.f32.mrf.mxu0
  %v1578 = vadd.f32 %v1545, %v1577
  %v1579 = vpop.f32.mrf.mxu0
  %v1580 = vadd.f32 %v1547, %v1579
  %1581 = vmatmul.bf16.gmra.mxu0 %v531
  %v1582 = vpop.f32.mrf.mxu0
  %v1583 = vadd.f32 %v1550, %v1582
  %v1584 = vpop.f32.mrf.mxu0
  %1585 = vdwg.mxu0
  %1586 = vmatpush.bf16.msra.mxu0 %v1110
  %1587 = vmatpush.bf16.msra.mxu0 %v1109
  %1588 = vmatpush.bf16.msra.mxu0 %v1108
  %1589 = vmatpush.bf16.msra.mxu0 %v1107
  %1590 = vmatpush.bf16.msra.mxu0 %v1106
  %1591 = vmatpush.bf16.msra.mxu0 %v1105
  %1592 = vmatpush.bf16.msra.mxu0 %v1104
  %1593 = vmatpush.bf16.msra.mxu0 %v1103
  %1594 = vmatmul.bf16.gmra.mxu0 %v480
  %v1595 = vpop.f32.mrf.mxu0
  %v1596 = vadd.f32 %v1563, %v1595
  %v1597 = vpop.f32.mrf.mxu0
  %v1598 = vadd.f32 %v1565, %v1597
  %1599 = vmatmul.bf16.gmra.mxu0 %v493
  %v1600 = vpop.f32.mrf.mxu0
  %v1601 = vadd.f32 %v1568, %v1600
  %v1602 = vpop.f32.mrf.mxu0
  %v1603 = vadd.f32 %v1570, %v1602
  %1604 = vmatmul.bf16.gmra.mxu0 %v506
  %v1605 = vpop.f32.mrf.mxu0
  %v1606 = vadd.f32 %v1573, %v1605
  %v1607 = vpop.f32.mrf.mxu0
  %v1608 = vadd.f32 %v1575, %v1607
  %1609 = vmatmul.bf16.gmra.mxu0 %v519
  %v1610 = vpop.f32.mrf.mxu0
  %v1611 = vadd.f32 %v1578, %v1610
  %v1612 = vpop.f32.mrf.mxu0
  %v1613 = vadd.f32 %v1580, %v1612
  %1614 = vmatmul.bf16.gmra.mxu0 %v532
  %v1615 = vpop.f32.mrf.mxu0
  %v1616 = vadd.f32 %v1583, %v1615
  %v1617 = vpop.f32.mrf.mxu0
  %1618 = vdwg.mxu0
  %1619 = vmatpush.bf16.msra.mxu0 %v1118
  %1620 = vmatpush.bf16.msra.mxu0 %v1117
  %1621 = vmatpush.bf16.msra.mxu0 %v1116
  %1622 = vmatpush.bf16.msra.mxu0 %v1115
  %1623 = vmatpush.bf16.msra.mxu0 %v1114
  %1624 = vmatpush.bf16.msra.mxu0 %v1113
  %1625 = vmatpush.bf16.msra.mxu0 %v1112
  %1626 = vmatpush.bf16.msra.mxu0 %v1111
  %1627 = vmatmul.bf16.gmra.mxu0 %v481
  %v1628 = vpop.f32.mrf.mxu0
  %v1629 = vadd.f32 %v1596, %v1628
  %v1630 = vpop.f32.mrf.mxu0
  %v1631 = vadd.f32 %v1598, %v1630
  %1632 = vmatmul.bf16.gmra.mxu0 %v494
  %v1633 = vpop.f32.mrf.mxu0
  %v1634 = vadd.f32 %v1601, %v1633
  %v1635 = vpop.f32.mrf.mxu0
  %v1636 = vadd.f32 %v1603, %v1635
  %1637 = vmatmul.bf16.gmra.mxu0 %v507
  %v1638 = vpop.f32.mrf.mxu0
  %v1639 = vadd.f32 %v1606, %v1638
  %v1640 = vpop.f32.mrf.mxu0
  %v1641 = vadd.f32 %v1608, %v1640
  %1642 = vmatmul.bf16.gmra.mxu0 %v520
  %v1643 = vpop.f32.mrf.mxu0
  %v1644 = vadd.f32 %v1611, %v1643
  %v1645 = vpop.f32.mrf.mxu0
  %v1646 = vadd.f32 %v1613, %v1645
  %1647 = vmatmul.bf16.gmra.mxu0 %v533
  %v1648 = vpop.f32.mrf.mxu0
  %v1649 = vadd.f32 %v1616, %v1648
  %v1650 = vpop.f32.mrf.mxu0
  %1651 = vdwg.mxu0
  %v1652 = vmul.f32 %v1629, 0.01
  %v1653 = vmul.f32 %v1631, 0.01
  %v1654 = vmul.f32 %v1634, 0.01
  %v1655 = vmul.f32 %v1636, 0.01
  %v1656 = vmul.f32 %v1639, 0.01
  %v1657 = vmul.f32 %v1641, 0.01
  %v1658 = vmul.f32 %v1644, 0.01
  %v1659 = vmul.f32 %v1646, 0.01
  %v1660 = vmul.f32 %v1649, 0.01
  %v1661 = vmax.f32 %v1629, %v1652
  %v1662 = vmax.f32 %v1631, %v1653
  %v1663 = vmax.f32 %v1634, %v1654
  %v1664 = vmax.f32 %v1636, %v1655
  %v1665 = vmax.f32 %v1639, %v1656
  %v1666 = vmax.f32 %v1641, %v1657
  %v1667 = vmax.f32 %v1644, %v1658
  %v1668 = vmax.f32 %v1646, %v1659
  %v1669 = vmax.f32 %v1649, %v1660
  %v1670 = vpack.c.bf16 %v1661, %v1661
  %v1671 = vpack.c.bf16 %v1662, %v1662
  %v1672 = vpack.c.bf16 %v1663, %v1663
  %v1673 = vpack.c.bf16 %v1664, %v1664
  %v1674 = vpack.c.bf16 %v1665, %v1665
  %v1675 = vpack.c.bf16 %v1666, %v1666
  %v1676 = vpack.c.bf16 %v1667, %v1667
  %v1677 = vpack.c.bf16 %v1668, %v1668
  %v1678 = vpack.c.bf16 %v1669, %v1669
  %vm1679 = vcmask 257024
  %1680 = vst.msk [vmem:[%s3] sm:$0xf] %vm1679, %v1670
  %1681 = vst.msk [vmem:[%s3 + $0x4] sm:$0xf] %vm1679, %v1671
  %1682 = vst.msk [vmem:[%s3 + $0x8] sm:$0xf] %vm1679, %v1672
  %1683 = vst.msk [vmem:[%s3 + $0xc] sm:$0xf] %vm1679, %v1673
  %1684 = vst.msk [vmem:[%s3 + $0x10] sm:$0xf] %vm1679, %v1674
  %1685 = vst.msk [vmem:[%s3 + $0x14] sm:$0xf] %vm1679, %v1675
  %1686 = vst.msk [vmem:[%s3 + $0x18] sm:$0xf] %vm1679, %v1676
  %1687 = vst.msk [vmem:[%s3 + $0x1c] sm:$0xf] %vm1679, %v1677
  %1688 = vst.msk [vmem:[%s3 + $0x20] sm:$0xf] %vm1679, %v1678
  // Predicated region
  $region14: #{itracker_forward.6} parent=0 // pred_check
    _
  $region15: #{itracker_forward.6} parent=0 // pred_check_branch
    %1690 = sbr.rel (0) target = $region17
  $region16: #{itracker_forward.6} parent=0 // pred_region
    _
  $region17: #{itracker_forward.6} parent=0 // pred_fallthru
    _
  // Predicated region
  $region18: #{itracker_forward.6} parent=0 // pred_check
    _
  $region19: #{itracker_forward.6} parent=0 // pred_check_branch
    %1692 = sbr.rel (0) target = $region21
  $region20: #{itracker_forward.6} parent=0 // pred_region
    _
  $region21: #{itracker_forward.6} parent=0 // pred_fallthru
    _

// kernel: itracker_forward.7
$region0: #{itracker_forward.7}
  #allocation0 [shape = 'u32[]', space=smem, size = 0x4, offset = 0x4, fixed_abs, tag = 'smem constant byte address 0x4 - core index']
  #allocation1 [shape = 'u32[72,128]{1,0:T(1,128)}', space=vmem, size = 0x9000, scoped, tag = 'internal scratch']
  %s0 = inlined_call_operand.vmem [shape: bf16[384,128], index: 0, kind: input, shape index: {}]
  %s1 = inlined_call_operand.vmem [shape: bf16[16,384], index: 1, kind: input, shape index: {}]
  %s2 = inlined_call_operand.vmem [shape: f32[16,1], index: 2, kind: input, shape index: {}]
  %s3 = inlined_call_operand.vmem [shape: bf16[8,16], index: 3, kind: input, shape index: {}]
  %s4 = inlined_call_operand.vmem [shape: f32[8,1], index: 4, kind: input, shape index: {}]
  %s5 = inlined_call_operand.vmem [shape: f32[8,128], index: 5, kind: output, shape index: {}]
  %s6 = sld [smem:[#allocation0]]
  $region30: #{itracker_forward.7} parent=0
    _
  %s8 = ssub.s32 1, %s6
  %s9 = scalar_select 0, %s8, %s6
  // Predicated region
  $region2: #{itracker_forward.7} parent=0 // pred_check
    _
  $region3: #{itracker_forward.7} parent=0 // pred_check_branch
    %11 = sbr.rel (0) target = $region5
  $region4: #{itracker_forward.7} parent=0 // pred_region
    _
  $region5: #{itracker_forward.7} parent=0 // pred_fallthru
    _
  // Predicated region
  $region6: #{itracker_forward.7} parent=0 // pred_check
    _
  $region7: #{itracker_forward.7} parent=0 // pred_check_branch
    %13 = sbr.rel (0) target = $region9
  $region8: #{itracker_forward.7} parent=0 // pred_region
    _
  $region9: #{itracker_forward.7} parent=0 // pred_fallthru
    _
  // Predicated region
  $region10: #{itracker_forward.7} parent=0 // pred_check
    _
  $region11: #{itracker_forward.7} parent=0 // pred_check_branch
    %15 = sbr.rel (0) target = $region13
  $region12: #{itracker_forward.7} parent=0 // pred_region
    _
  $region13: #{itracker_forward.7} parent=0 // pred_fallthru
    _
  // Predicated region
  $region14: #{itracker_forward.7} parent=0 // pred_check
    _
  $region15: #{itracker_forward.7} parent=0 // pred_check_branch
    %17 = sbr.rel (0) target = $region17
  $region16: #{itracker_forward.7} parent=0 // pred_region
    _
  $region17: #{itracker_forward.7} parent=0 // pred_fallthru
    _
  // Predicated region
  $region18: #{itracker_forward.7} parent=0 // pred_check
    _
  $region19: #{itracker_forward.7} parent=0 // pred_check_branch
    %19 = sbr.rel (0) target = $region21
  $region20: #{itracker_forward.7} parent=0 // pred_region
    _
  $region21: #{itracker_forward.7} parent=0 // pred_fallthru
    _
  %v21 = vld [vmem:[%s1] sm:$0xff]
  %v22 = vld [vmem:[%s1 + $0x8] sm:$0xf]
  %v23 = vld [vmem:[%s1 + $0xc] sm:$0xff]
  %v24 = vld [vmem:[%s1 + $0x14] sm:$0xf]
  %v25 = vld [vmem:[%s0] sm:$0xf]
  %v26 = vld [vmem:[%s0 + $0x4] sm:$0xf]
  %v27 = vld [vmem:[%s0 + $0x8] sm:$0xf]
  %v28 = vld [vmem:[%s0 + $0xc] sm:$0xf]
  %v29 = vld [vmem:[%s0 + $0x10] sm:$0xf]
  %v30 = vld [vmem:[%s0 + $0x14] sm:$0xf]
  %v31 = vld [vmem:[%s0 + $0x18] sm:$0xf]
  %v32 = vld [vmem:[%s0 + $0x1c] sm:$0xf]
  %v33 = vld [vmem:[%s0 + $0x20] sm:$0xf]
  %v34 = vld [vmem:[%s0 + $0x24] sm:$0xf]
  %v35 = vld [vmem:[%s0 + $0x28] sm:$0xf]
  %v36 = vld [vmem:[%s0 + $0x2c] sm:$0xf]
  %v37 = vld [vmem:[%s0 + $0x30] sm:$0xf]
  %v38 = vld [vmem:[%s0 + $0x34] sm:$0xf]
  %v39 = vld [vmem:[%s0 + $0x38] sm:$0xf]
  %v40 = vld [vmem:[%s0 + $0x3c] sm:$0xf]
  %v41 = vld [vmem:[%s0 + $0x40] sm:$0xf]
  %v42 = vld [vmem:[%s0 + $0x44] sm:$0xf]
  %v43 = vld [vmem:[%s0 + $0x48] sm:$0xf]
  %v44 = vld [vmem:[%s0 + $0x4c] sm:$0xf]
  %v45 = vld [vmem:[%s0 + $0x50] sm:$0xf]
  %v46 = vld [vmem:[%s0 + $0x54] sm:$0xf]
  %v47 = vld [vmem:[%s0 + $0x58] sm:$0xf]
  %v48 = vld [vmem:[%s0 + $0x5c] sm:$0xf]
  %v49 = vld [vmem:[%s0 + $0x60] sm:$0xf]
  %v50 = vld [vmem:[%s0 + $0x64] sm:$0xf]
  %v51 = vld [vmem:[%s0 + $0x68] sm:$0xf]
  %v52 = vld [vmem:[%s0 + $0x6c] sm:$0xf]
  %v53 = vld [vmem:[%s0 + $0x70] sm:$0xf]
  %v54 = vld [vmem:[%s0 + $0x74] sm:$0xf]
  %v55 = vld [vmem:[%s0 + $0x78] sm:$0xf]
  %v56 = vld [vmem:[%s0 + $0x7c] sm:$0xf]
  %v57 = vld [vmem:[%s0 + $0x80] sm:$0xf]
  %v58 = vld [vmem:[%s0 + $0x84] sm:$0xf]
  %v59 = vld [vmem:[%s0 + $0x88] sm:$0xf]
  %v60 = vld [vmem:[%s0 + $0x8c] sm:$0xf]
  %v61 = vld [vmem:[%s0 + $0x90] sm:$0xf]
  %v62 = vld [vmem:[%s0 + $0x94] sm:$0xf]
  %v63 = vld [vmem:[%s0 + $0x98] sm:$0xf]
  %v64 = vld [vmem:[%s0 + $0x9c] sm:$0xf]
  %v65 = vld [vmem:[%s0 + $0xa0] sm:$0xf]
  %v66 = vld [vmem:[%s0 + $0xa4] sm:$0xf]
  %v67 = vld [vmem:[%s0 + $0xa8] sm:$0xf]
  %v68 = vld [vmem:[%s0 + $0xac] sm:$0xf]
  %v69 = vld [vmem:[%s0 + $0xb0] sm:$0xf]
  %v70 = vld [vmem:[%s0 + $0xb4] sm:$0xf]
  %v71 = vld [vmem:[%s0 + $0xb8] sm:$0xf]
  %v72 = vld [vmem:[%s0 + $0xbc] sm:$0xf]
  %v73 = vld [vmem:[%s2] sm:$0xff]
  %v74 = vld [vmem:[%s2 + $0x8] sm:$0xff]
  %76 = vset.pattern.permute.xlu0 0
  %77 = vperm.xlu0 %76, %v73
  %v78 = vpop.permute.xlu0 %77
  %81 = vset.pattern.permute.xlu0 0
  %82 = vperm.xlu0 %81, %v74
  %v83 = vpop.permute.xlu0 %82
  %v89 = vunpack.c.l.b16 %v21
  %v90 = vunpack.c.h.b16 %v21
  %v91 = vunpack.c.l.b16 %v22
  %v92 = vunpack.c.l.b16 %v23
  %v93 = vunpack.c.h.b16 %v23
  %v94 = vunpack.c.l.b16 %v24
  %v95 = vpack.c.b16 %v92, %v89
  %v96 = vpack.c.b16 %v93, %v90
  %v97 = vpack.c.b16 %v94, %v91
  %v149 = vunpack.c.l.b16 %v25
  %v150 = vunpack.c.l.b16 %v26
  %v151 = vunpack.c.l.b16 %v27
  %v152 = vunpack.c.l.b16 %v28
  %v153 = vunpack.c.l.b16 %v29
  %v154 = vunpack.c.l.b16 %v30
  %v155 = vunpack.c.l.b16 %v31
  %v156 = vunpack.c.l.b16 %v32
  %v157 = vunpack.c.l.b16 %v33
  %v158 = vunpack.c.l.b16 %v34
  %v159 = vunpack.c.l.b16 %v35
  %v160 = vunpack.c.l.b16 %v36
  %v161 = vunpack.c.l.b16 %v37
  %v162 = vunpack.c.l.b16 %v38
  %v163 = vunpack.c.l.b16 %v39
  %v164 = vunpack.c.l.b16 %v40
  %v165 = vunpack.c.l.b16 %v41
  %v166 = vunpack.c.l.b16 %v42
  %v167 = vunpack.c.l.b16 %v43
  %v168 = vunpack.c.l.b16 %v44
  %v169 = vunpack.c.l.b16 %v45
  %v170 = vunpack.c.l.b16 %v46
  %v171 = vunpack.c.l.b16 %v47
  %v172 = vunpack.c.l.b16 %v48
  %v173 = vunpack.c.l.b16 %v49
  %v174 = vunpack.c.l.b16 %v50
  %v175 = vunpack.c.l.b16 %v51
  %v176 = vunpack.c.l.b16 %v52
  %v177 = vunpack.c.l.b16 %v53
  %v178 = vunpack.c.l.b16 %v54
  %v179 = vunpack.c.l.b16 %v55
  %v180 = vunpack.c.l.b16 %v56
  %v181 = vunpack.c.l.b16 %v57
  %v182 = vunpack.c.l.b16 %v58
  %v183 = vunpack.c.l.b16 %v59
  %v184 = vunpack.c.l.b16 %v60
  %v185 = vunpack.c.l.b16 %v61
  %v186 = vunpack.c.l.b16 %v62
  %v187 = vunpack.c.l.b16 %v63
  %v188 = vunpack.c.l.b16 %v64
  %v189 = vunpack.c.l.b16 %v65
  %v190 = vunpack.c.l.b16 %v66
  %v191 = vunpack.c.l.b16 %v67
  %v192 = vunpack.c.l.b16 %v68
  %v193 = vunpack.c.l.b16 %v69
  %v194 = vunpack.c.l.b16 %v70
  %v195 = vunpack.c.l.b16 %v71
  %v196 = vunpack.c.l.b16 %v72
  %v197 = vpack.c.b16 %v150, %v149
  %v198 = vpack.c.b16 %v152, %v151
  %v199 = vpack.c.b16 %v154, %v153
  %v200 = vpack.c.b16 %v156, %v155
  %v201 = vpack.c.b16 %v158, %v157
  %v202 = vpack.c.b16 %v160, %v159
  %v203 = vpack.c.b16 %v162, %v161
  %v204 = vpack.c.b16 %v164, %v163
  %v205 = vpack.c.b16 %v166, %v165
  %v206 = vpack.c.b16 %v168, %v167
  %v207 = vpack.c.b16 %v170, %v169
  %v208 = vpack.c.b16 %v172, %v171
  %v209 = vpack.c.b16 %v174, %v173
  %v210 = vpack.c.b16 %v176, %v175
  %v211 = vpack.c.b16 %v178, %v177
  %v212 = vpack.c.b16 %v180, %v179
  %v213 = vpack.c.b16 %v182, %v181
  %v214 = vpack.c.b16 %v184, %v183
  %v215 = vpack.c.b16 %v186, %v185
  %v216 = vpack.c.b16 %v188, %v187
  %v217 = vpack.c.b16 %v190, %v189
  %v218 = vpack.c.b16 %v192, %v191
  %v219 = vpack.c.b16 %v194, %v193
  %v220 = vpack.c.b16 %v196, %v195
  %245 = vmatpush.bf16.msra.mxu0 %v204
  %246 = vmatpush.bf16.msra.mxu0 %v203
  %247 = vmatpush.bf16.msra.mxu0 %v202
  %248 = vmatpush.bf16.msra.mxu0 %v201
  %249 = vmatpush.bf16.msra.mxu0 %v200
  %250 = vmatpush.bf16.msra.mxu0 %v199
  %251 = vmatpush.bf16.msra.mxu0 %v198
  %252 = vmatpush.bf16.msra.mxu0 %v197
  %253 = vmatmul.bf16.gmra.mxu0 %v95
  %v254 = vpop.f32.mrf.mxu0
  %v255 = vadd.f32 %v78, %v254
  %v256 = vpop.f32.mrf.mxu0
  %v257 = vadd.f32 %v83, %v256
  %258 = vdwg.mxu0
  %259 = vmatpush.bf16.msra.mxu0 %v212
  %260 = vmatpush.bf16.msra.mxu0 %v211
  %261 = vmatpush.bf16.msra.mxu0 %v210
  %262 = vmatpush.bf16.msra.mxu0 %v209
  %263 = vmatpush.bf16.msra.mxu0 %v208
  %264 = vmatpush.bf16.msra.mxu0 %v207
  %265 = vmatpush.bf16.msra.mxu0 %v206
  %266 = vmatpush.bf16.msra.mxu0 %v205
  %267 = vmatmul.bf16.gmra.mxu0 %v96
  %v268 = vpop.f32.mrf.mxu0
  %v269 = vadd.f32 %v255, %v268
  %v270 = vpop.f32.mrf.mxu0
  %v271 = vadd.f32 %v257, %v270
  %272 = vdwg.mxu0
  %273 = vmatpush.bf16.msra.mxu0 %v220
  %274 = vmatpush.bf16.msra.mxu0 %v219
  %275 = vmatpush.bf16.msra.mxu0 %v218
  %276 = vmatpush.bf16.msra.mxu0 %v217
  %277 = vmatpush.bf16.msra.mxu0 %v216
  %278 = vmatpush.bf16.msra.mxu0 %v215
  %279 = vmatpush.bf16.msra.mxu0 %v214
  %280 = vmatpush.bf16.msra.mxu0 %v213
  %281 = vmatmul.bf16.gmra.mxu0 %v97
  %v282 = vpop.f32.mrf.mxu0
  %v283 = vadd.f32 %v269, %v282
  %v284 = vpop.f32.mrf.mxu0
  %v285 = vadd.f32 %v271, %v284
  %286 = vdwg.mxu0
  %v287 = vmax.f32 %v283, 0.0
  %v288 = vmax.f32 %v285, 0.0
  %v289 = vld [vmem:[%s3] sm:$0xf]
  %v290 = vpack.c.bf16 %v288, %v287
  %v291 = vld [vmem:[%s4] sm:$0xff]
  %293 = vset.pattern.permute.xlu0 0
  %294 = vperm.xlu0 %293, %v291
  %v295 = vpop.permute.xlu0 %294
  %vm297 = vcmask 130048
  %v299 = vsel %vm297, %v289, 0
  %301 = vmatpush.bf16.msra.mxu0 0
  %302 = vmatpush.bf16.msra.mxu0 0
  %303 = vmatpush.bf16.msra.mxu0 0
  %304 = vmatpush.bf16.msra.mxu0 0
  %305 = vmatpush.bf16.msra.mxu0 0
  %306 = vmatpush.bf16.msra.mxu0 0
  %307 = vmatpush.bf16.msra.mxu0 0
  %308 = vmatpush.bf16.msra.mxu0 %v290
  %309 = vmatmul.bf16.gmra.mxu0 %v299
  %v310 = vpop.f32.mrf.mxu0
  %v311 = vadd.f32 %v295, %v310
  %v312 = vpop.f32.mrf.mxu0
  %313 = vdwg.mxu0
  %v314 = vmax.f32 %v311, 0.0
  %315 = vst [vmem:[%s5] sm:$0xff] %v314
  // Predicated region
  $region22: #{itracker_forward.7} parent=0 // pred_check
    _
  $region23: #{itracker_forward.7} parent=0 // pred_check_branch
    %317 = sbr.rel (0) target = $region25
  $region24: #{itracker_forward.7} parent=0 // pred_region
    _
  $region25: #{itracker_forward.7} parent=0 // pred_fallthru
    _
  // Predicated region
  $region26: #{itracker_forward.7} parent=0 // pred_check
    _
  $region27: #{itracker_forward.7} parent=0 // pred_check_branch
    %319 = sbr.rel (0) target = $region29
  $region28: #{itracker_forward.7} parent=0 // pred_region
    _
  $region29: #{itracker_forward.7} parent=0 // pred_fallthru
    _

</llo_original>
